<compile_context>
chip_gen: v5e
topology: v5e:2x2
jax: 0.10.0
libtpu: 0.0.40
codegen_flags: <defaults>
</compile_context>

<pallas_src>
import functools

import jax
import jax.numpy as jnp
from jax import lax
from jax.experimental import pallas as pl
from jax.experimental.pallas import tpu as pltpu

LN_EPS = 1e-5
BN_EPS = 1e-5
NEG_BIG = -1e30

# ConvTranspose2d(k=4, s=2, p=1) geometry:
#   output (oy, ox) = (2*iy + ky - 1, 2*ix + kx - 1)
#   parity p of oy selects taps ky in {1,3} (p=0) / {0,2} (p=1); the source
#   input row offset is dy(ky) = (+1, 0, 0, -1)[ky]; same along x.
_D_OF_K = (1, 0, 0, -1)
_K_FOR_PARITY = {0: (1, 3), 1: (0, 2)}


def _shift_rows(v, s):
    """out[r] = v[r + s] if 0 <= r + s < R else 0 (static s, exact semantics)."""
    if s == 0:
        return v
    rows, cols = v.shape
    z = jnp.zeros((abs(s), cols), v.dtype)
    if s > 0:
        return jnp.concatenate([v[s:], z], axis=0)
    return jnp.concatenate([z, v[:s]], axis=0)


# -----------------------------------------------------------------------------
# Fused kernel: LayerNorm -> multi-head cross-attention -> residual ->
# ConvTranspose2d -> BatchNorm2d (batch stats) -> ReLU.
# Runs once (no grid); every operand lives entirely in VMEM (< ~1 MiB here).
# -----------------------------------------------------------------------------
def _decoder_block_kernel(x_ref, enc_ref, lng_ref, lnb_ref, wq_ref, bq_ref,
                          wk_ref, bk_ref, wvo_ref, bout_ref, hsel_ref,
                          wtap_ref, cb_ref, keep_ref, bng_ref, bnb_ref,
                          out_ref, aw_ref,
                          *, B, W, Co, nh, Lk, Lk_pad):
    f32 = jnp.float32
    inv_nh = 1.0 / nh

    ln_g = lng_ref[...]
    ln_b = lnb_ref[...]
    wq = wq_ref[...]          # (C, C), 1/sqrt(dh) already folded in
    bq = bq_ref[...]
    wk = wk_ref[...]
    bk = bk_ref[...]
    hsel = hsel_ref[...]      # (nh*Lk_pad, C) 0/1 block-diagonal head selector
    bout = bout_ref[...]      # (1, C) = bv @ Wo + bo

    # key-validity mask (pad keys get exactly zero softmax weight)
    kcol = lax.broadcasted_iota(jnp.int32, (1, Lk_pad), 1)
    kvalid = kcol < Lk
    kvalid_f = kvalid.astype(f32)

    # ------------------- attention (per batch element, B is tiny) ------------
    y_rows = []
    for b in range(B):
        x = x_ref[b]                       # (Lq, C)   residual path
        enc = enc_ref[b]                   # (Lk_pad, C), pad rows are zero

        # LayerNorm over channels (biased variance)
        mu = jnp.mean(x, axis=-1, keepdims=True)
        var = jnp.mean((x - mu) ** 2, axis=-1, keepdims=True)
        xn = (x - mu) * lax.rsqrt(var + LN_EPS) * ln_g + ln_b

        q = jnp.dot(xn, wq, preferred_element_type=f32) + bq      # (Lq, C)
        k = jnp.dot(enc, wk, preferred_element_type=f32) + bk     # (Lk_pad, C)

        # all-head scores in ONE contraction: block-diag replicated keys
        k_bd = jnp.concatenate([k] * nh, axis=0) * hsel           # (nh*Lk_pad, C)
        s = lax.dot_general(q, k_bd, (((1,), (1,)), ((), ())),
                            preferred_element_type=f32)           # (Lq, nh*Lk_pad)

        # per-head softmax over 128-lane-aligned blocks
        p_blocks = []
        aw_acc = None
        for h in range(nh):
            sh = s[:, h * Lk_pad:(h + 1) * Lk_pad]
            m = jnp.max(jnp.where(kvalid, sh, NEG_BIG), axis=-1, keepdims=True)
            e = jnp.exp(sh - m) * kvalid_f
            p_h = e / jnp.sum(e, axis=-1, keepdims=True)   # exact reciprocal
            p_blocks.append(p_h)
            aw_acc = p_h if aw_acc is None else aw_acc + p_h
        # head-averaged weights, stored directly at the true key length
        aw_ref[b] = (aw_acc * inv_nh)[:, :Lk]

        # output projection folded into V (prepare time): one K = nh*Lk_pad matmul
        m_blocks = [jnp.dot(enc, wvo_ref[h], preferred_element_type=f32)
                    for h in range(nh)]                            # each (Lk_pad, C)
        p_cat = jnp.concatenate(p_blocks, axis=1)                  # (Lq, nh*Lk_pad)
        m_cat = jnp.concatenate(m_blocks, axis=0)                  # (nh*Lk_pad, C)
        attn_out = jnp.dot(p_cat, m_cat, preferred_element_type=f32) + bout
        y_rows.append(x + attn_out)                                # residual

    # ------------- ConvTranspose2d: one matmul + static shift/mask scatter ---
    y_flat = jnp.concatenate(y_rows, axis=0)                       # (B*H*W, C)
    taps = jnp.dot(y_flat, wtap_ref[...], preferred_element_type=f32)  # (BHW,16*Co)

    bhw = y_flat.shape[0]
    keep = jnp.concatenate([keep_ref[...]] * B, axis=2)            # (3, 3, BHW, 1)

    def shifted_tap(ky, kx):
        dy = _D_OF_K[ky]
        dx = _D_OF_K[kx]
        t = ky * 4 + kx
        v = taps[:, t * Co:(t + 1) * Co]                           # (BHW, Co)
        v = _shift_rows(v, dy * W + dx)
        if dy != 0 or dx != 0:
            v = v * keep[dy + 1, dx + 1]                           # single 0/1 mask
        return v

    planes = []
    for p_par in (0, 1):
        for q_par in (0, 1):
            acc = None
            for ky in _K_FOR_PARITY[p_par]:
                for kx in _K_FOR_PARITY[q_par]:
                    tv = shifted_tap(ky, kx)
                    acc = tv if acc is None else acc + tv
            planes.append(acc)                                     # (BHW, Co)

    pre_bn = jnp.concatenate(planes, axis=0) + cb_ref[...]         # (4*BHW, Co)

    # ------------- BatchNorm2d (training batch stats, biased var) + ReLU -----
    mu_c = jnp.mean(pre_bn, axis=0, keepdims=True)                 # (1, Co)
    var_c = jnp.mean((pre_bn - mu_c) ** 2, axis=0, keepdims=True)
    yb = (pre_bn - mu_c) * lax.rsqrt(var_c + BN_EPS) * bng_ref[...] + bnb_ref[...]
    # NOTE: output rows are [p][q][b][h][w], lanes are channels (16-wide store;
    # total output is 32 KiB so lane density is irrelevant at this size).
    out_ref[...] = jnp.maximum(yb, 0.0)


# -----------------------------------------------------------------------------
# One-time parameter preparation (review item #1: not executed per forward).
# -----------------------------------------------------------------------------
def prepare_params(params, *, nhead, H, W, Lk):
    C = params["wq"].shape[0]
    Co = params["conv_b"].shape[-1]
    dh = C // nhead
    Lk_pad = max(128, ((Lk + 127) // 128) * 128)
    scale = 1.0 / (dh ** 0.5)

    # fold the output projection into V:  Wvo_h = Wv[:, h] @ Wo[h, :]
    wvo = jnp.stack(
        [params["wv"][:, h * dh:(h + 1) * dh] @ params["wo"][h * dh:(h + 1) * dh, :]
         for h in range(nhead)], axis=0)                           # (nh, C, C)
    # sum_h bv_h @ Wo_h == bv @ Wo  (softmax rows sum to 1), plus out-proj bias
    b_out = params["bv"] @ params["wo"] + params["bo"]             # (1, C)

    # 0/1 block-diagonal head selector for the stacked key matrix
    ridx = jnp.arange(nhead * Lk_pad)
    cidx = jnp.arange(C)
    head_sel = ((ridx[:, None] // Lk_pad) == (cidx[None, :] // dh)).astype(jnp.float32)

    # ConvTranspose2d weight (C, Co, 4, 4) -> per-tap blocks along lanes:
    # lane index = (ky*4 + kx)*Co + co
    w_tap = jnp.transpose(params["w_conv"], (0, 2, 3, 1)).reshape(C, 16 * Co)

    # shift-validity masks for the k=4/s=2/p=1 scatter, indexed [dy+1, dx+1]
    tok = jnp.arange(H * W)
    iy = tok // W
    wx = tok % W
    rows = []
    for dy in (-1, 0, 1):
        cols = []
        for dx in (-1, 0, 1):
            ok = ((iy + dy >= 0) & (iy + dy < H) &
                  (wx + dx >= 0) & (wx + dx < W))
            cols.append(ok.astype(jnp.float32))
        rows.append(jnp.stack(cols, axis=0))
    keep_mask = jnp.stack(rows, axis=0).reshape(3, 3, H * W, 1)

    return dict(
        ln_g=params["ln_g"], ln_b=params["ln_b"],
        wq_s=params["wq"] * scale, bq_s=params["bq"] * scale,
        wk=params["wk"], bk=params["bk"],
        wvo=wvo, b_out=b_out, head_sel=head_sel,
        w_tap=w_tap, conv_b=params["conv_b"],
        keep_mask=keep_mask,
        bn_g=params["bn_g"], bn_b=params["bn_b"])


# -----------------------------------------------------------------------------
# Wrapper: minimal per-call work (input layout transpose, key padding, one
# pallas_call, final NCHW transpose).
# -----------------------------------------------------------------------------
def decoder_block_forward(x_nchw, encoder_output, prep, *, nhead):
    B, C, H, W = x_nchw.shape
    Lk = encoder_output.shape[1]
    Lq = H * W
    Co = prep["conv_b"].shape[-1]
    Lk_pad = prep["head_sel"].shape[0] // nhead
    assert 1 <= Lk <= Lk_pad

    x_seq = jnp.transpose(x_nchw, (0, 2, 3, 1)).reshape(B, Lq, C)
    if Lk == Lk_pad:
        enc_pad = encoder_output
    else:
        enc_pad = jnp.pad(encoder_output, ((0, 0), (0, Lk_pad - Lk), (0, 0)))

    kernel = functools.partial(_decoder_block_kernel,
                               B=B, W=W, Co=Co, nh=nhead, Lk=Lk, Lk_pad=Lk_pad)

    out_flat, attn_w = pl.pallas_call(
        kernel,
        out_shape=(jax.ShapeDtypeStruct((4 * B * H * W, Co), jnp.float32),
                   jax.ShapeDtypeStruct((B, Lq, Lk), jnp.float32)),
        compiler_params=pltpu.CompilerParams(
            vmem_limit_bytes=32 * 1024 * 1024),
    )(x_seq, enc_pad, prep["ln_g"], prep["ln_b"], prep["wq_s"], prep["bq_s"],
      prep["wk"], prep["bk"], prep["wvo"], prep["b_out"], prep["head_sel"],
      prep["w_tap"], prep["conv_b"], prep["keep_mask"], prep["bn_g"],
      prep["bn_b"])

    # rows are ordered [p][q][b][h][w]; a single transpose yields NCHW
    out6 = out_flat.reshape(2, 2, B, H, W, Co)
    out = jnp.transpose(out6, (2, 5, 3, 0, 4, 1)).reshape(B, Co, 2 * H, 2 * W)
    return out, attn_w


# -----------------------------------------------------------------------------
# Deterministic synthetic parameters (shapes per DecoderBlock.__init__).
# Projection weights stored as (C_in, C_out) (transpose of PyTorch layout).
# -----------------------------------------------------------------------------
def init_params(key, C, Co):
    ks = jax.random.split(key, 12)

    def rnd(k, shape, scale=0.1):
        return scale * jax.random.normal(k, shape, jnp.float32)

    params = dict(
        ln_g=1.0 + rnd(ks[0], (1, C), 0.05),
        ln_b=rnd(ks[1], (1, C), 0.05),
        wq=rnd(ks[2], (C, C)), wk=rnd(ks[3], (C, C)), wv=rnd(ks[4], (C, C)),
        bq=rnd(ks[5], (1, C), 0.05), bk=rnd(ks[6], (1, C), 0.05),
        bv=rnd(ks[7], (1, C), 0.05),
        wo=rnd(ks[8], (C, C)), bo=rnd(ks[9], (1, C), 0.05),
    )
    params["w_conv"] = rnd(ks[10], (C, Co, 4, 4))   # PyTorch (C_in, C_out, kH, kW)
    params["conv_b"] = rnd(ks[11], (1, Co), 0.05)
    params["bn_g"] = jnp.full((1, Co), 1.1, jnp.float32)
    params["bn_b"] = jnp.full((1, Co), 0.05, jnp.float32)
    return params


# -----------------------------------------------------------------------------
# Pure-JAX reference (for validation), from the raw (unprepared) parameters.
# -----------------------------------------------------------------------------
def reference_forward(x_nchw, enc, params, *, nhead):
    B, C, H, W = x_nchw.shape
    Lq = H * W
    dh = C // nhead
    xs = jnp.transpose(x_nchw, (0, 2, 3, 1)).reshape(B, Lq, C)
    mu = xs.mean(-1, keepdims=True)
    var = ((xs - mu) ** 2).mean(-1, keepdims=True)
    xn = (xs - mu) / jnp.sqrt(var + LN_EPS) * params["ln_g"][0] + params["ln_b"][0]
    q = xn @ params["wq"] + params["bq"][0]
    k = enc @ params["wk"] + params["bk"][0]
    v = enc @ params["wv"] + params["bv"][0]

    def split(t):
        b, l, _ = t.shape
        return t.reshape(b, l, nhead, dh).transpose(0, 2, 1, 3)

    qh, kh, vh = split(q), split(k), split(v)
    s = jnp.einsum("bhqd,bhkd->bhqk", qh * (1.0 / dh ** 0.5), kh)
    p = jax.nn.softmax(s, axis=-1)
    aw = p.mean(axis=1)
    oh = jnp.einsum("bhqk,bhkd->bhqd", p, vh)
    o = oh.transpose(0, 2, 1, 3).reshape(B, Lq, C) @ params["wo"] + params["bo"][0]
    y = (xs + o).reshape(B, H, W, C)

    # ConvTranspose2d(k=4, s=2, p=1) as a dilated conv with flipped kernel
    w_conv = params["w_conv"]
    w_flip = jnp.transpose(w_conv[:, :, ::-1, ::-1], (2, 3, 0, 1))  # HWIO
    conv = lax.conv_general_dilated(
        y, w_flip, window_strides=(1, 1), padding=[(2, 2), (2, 2)],
        lhs_dilation=(2, 2), rhs_dilation=(1, 1),
        dimension_numbers=("NHWC", "HWIO", "NHWC"),
        precision=lax.Precision.HIGHEST)
    conv = conv + params["conv_b"][0]

    mu_c = conv.mean(axis=(0, 1, 2), keepdims=True)
    var_c = ((conv - mu_c) ** 2).mean(axis=(0, 1, 2), keepdims=True)
    bn = (conv - mu_c) / jnp.sqrt(var_c + BN_EPS) * params["bn_g"][0] + params["bn_b"][0]
    out = jnp.maximum(bn, 0.0)
    return jnp.transpose(out, (0, 3, 1, 2)), aw


if __name__ == "__main__":
    B, C, H, W = 2, 32, 8, 8        # in_channels = text_embedding_dim = 32
    Co = 16                         # out_channels
    nhead = 4
    Lk = 8                          # text sequence length

    key = jax.random.PRNGKey(0)
    kx, ke, kp = jax.random.split(key, 3)
    x = jax.random.normal(kx, (B, C, H, W), jnp.float32)
    enc = jax.random.normal(ke, (B, Lk, C), jnp.float32)
    params = init_params(kp, C, Co)

    # one-time parameter preparation (not part of the per-call forward)
    prep = prepare_params(params, nhead=nhead, H=H, W=W, Lk=Lk)
    prep = jax.tree_util.tree_map(jax.block_until_ready, prep)

    fwd = jax.jit(functools.partial(decoder_block_forward, nhead=nhead))
    out, attn_w = fwd(x, enc, prep)
    out = jax.block_until_ready(out)
    attn_w = jax.block_until_ready(attn_w)

    assert out.shape == (B, Co, 2 * H, 2 * W), out.shape
    assert attn_w.shape == (B, H * W, Lk), attn_w.shape

    with jax.default_matmul_precision("highest"):
        ref_out, ref_aw = reference_forward(x, enc, params, nhead=nhead)
    err_aw = float(jnp.max(jnp.abs(attn_w - ref_aw)))
    err_out = float(jnp.max(jnp.abs(out - ref_out)))
    assert jnp.allclose(attn_w, ref_aw, atol=1e-3, rtol=1e-3), err_aw
    assert jnp.allclose(out, ref_out, atol=1e-2, rtol=1e-2), err_out

    print("KERNEL_OK")
</pallas_src>

<mosaic_0001>
module attributes {stable_mosaic.version = 11 : i64} {
  func.func @_decoder_block_kernel(%arg0: memref<2x64x32xf32, #tpu.memory_space<vmem>>, %arg1: memref<2x128x32xf32, #tpu.memory_space<vmem>>, %arg2: memref<1x32xf32, #tpu.memory_space<vmem>>, %arg3: memref<1x32xf32, #tpu.memory_space<vmem>>, %arg4: memref<32x32xf32, #tpu.memory_space<vmem>>, %arg5: memref<1x32xf32, #tpu.memory_space<vmem>>, %arg6: memref<32x32xf32, #tpu.memory_space<vmem>>, %arg7: memref<1x32xf32, #tpu.memory_space<vmem>>, %arg8: memref<4x32x32xf32, #tpu.memory_space<vmem>>, %arg9: memref<1x32xf32, #tpu.memory_space<vmem>>, %arg10: memref<512x32xf32, #tpu.memory_space<vmem>>, %arg11: memref<32x256xf32, #tpu.memory_space<vmem>>, %arg12: memref<1x16xf32, #tpu.memory_space<vmem>>, %arg13: memref<3x3x64x1xf32, #tpu.memory_space<vmem>>, %arg14: memref<1x16xf32, #tpu.memory_space<vmem>>, %arg15: memref<1x16xf32, #tpu.memory_space<vmem>>, %arg16: memref<512x16xf32, #tpu.memory_space<vmem>>, %arg17: memref<2x64x8xf32, #tpu.memory_space<vmem>>) attributes {dimension_semantics = [], scalar_prefetch = 0 : i64, scratch_operands = 0 : i64, tpu.core_type = #tpu.core_type<tc>} {
    %c0 = arith.constant 0 : index
    %c0_0 = arith.constant 0 : index
    %0 = vector.load %arg2[%c0, %c0_0] : memref<1x32xf32, #tpu.memory_space<vmem>>, vector<1x32xf32>
    %c0_1 = arith.constant 0 : index
    %c0_2 = arith.constant 0 : index
    %1 = vector.load %arg3[%c0_1, %c0_2] : memref<1x32xf32, #tpu.memory_space<vmem>>, vector<1x32xf32>
    %c0_3 = arith.constant 0 : index
    %c0_4 = arith.constant 0 : index
    %2 = vector.load %arg4[%c0_3, %c0_4] : memref<32x32xf32, #tpu.memory_space<vmem>>, vector<32x32xf32>
    %c0_5 = arith.constant 0 : index
    %c0_6 = arith.constant 0 : index
    %3 = vector.load %arg5[%c0_5, %c0_6] : memref<1x32xf32, #tpu.memory_space<vmem>>, vector<1x32xf32>
    %c0_7 = arith.constant 0 : index
    %c0_8 = arith.constant 0 : index
    %4 = vector.load %arg6[%c0_7, %c0_8] : memref<32x32xf32, #tpu.memory_space<vmem>>, vector<32x32xf32>
    %c0_9 = arith.constant 0 : index
    %c0_10 = arith.constant 0 : index
    %5 = vector.load %arg7[%c0_9, %c0_10] : memref<1x32xf32, #tpu.memory_space<vmem>>, vector<1x32xf32>
    %c0_11 = arith.constant 0 : index
    %c0_12 = arith.constant 0 : index
    %6 = vector.load %arg10[%c0_11, %c0_12] : memref<512x32xf32, #tpu.memory_space<vmem>>, vector<512x32xf32>
    %c0_13 = arith.constant 0 : index
    %c0_14 = arith.constant 0 : index
    %7 = vector.load %arg9[%c0_13, %c0_14] : memref<1x32xf32, #tpu.memory_space<vmem>>, vector<1x32xf32>
    %8 = tpu.iota {dimensions = array<i32: 1>} : vector<1x128xi32>
    %c8_i32 = arith.constant 8 : i32
    %9 = vector.broadcast %c8_i32 : i32 to vector<1x128xi32>
    %10 = arith.cmpi slt, %8, %9 : vector<1x128xi32>
    %11 = arith.extui %10 : vector<1x128xi1> to vector<1x128xi32>
    %12 = arith.sitofp %11 : vector<1x128xi32> to vector<1x128xf32>
    %c0_15 = arith.constant 0 : index
    %c0_16 = arith.constant 0 : index
    %c0_17 = arith.constant 0 : index
    %13 = vector.load %arg0[%c0_15, %c0_16, %c0_17] : memref<2x64x32xf32, #tpu.memory_space<vmem>>, vector<1x64x32xf32>
    %14 = vector.shape_cast %13 : vector<1x64x32xf32> to vector<64x32xf32>
    %c0_18 = arith.constant 0 : index
    %c0_19 = arith.constant 0 : index
    %c0_20 = arith.constant 0 : index
    %15 = vector.load %arg1[%c0_18, %c0_19, %c0_20] : memref<2x128x32xf32, #tpu.memory_space<vmem>>, vector<1x128x32xf32>
    %16 = vector.shape_cast %15 : vector<1x128x32xf32> to vector<128x32xf32>
    %cst = arith.constant dense<0.000000e+00> : vector<64xf32>
    %17 = vector.multi_reduction <add>, %14, %cst [1] : vector<64x32xf32> to vector<64xf32>
    %18 = vector.shape_cast %17 : vector<64xf32> to vector<64x1xf32>
    %cst_21 = arith.constant 3.200000e+01 : f32
    %19 = vector.broadcast %cst_21 : f32 to vector<64x1xf32>
    %20 = arith.divf %18, %19 : vector<64x1xf32>
    %21 = vector.broadcast %20 : vector<64x1xf32> to vector<64x32xf32>
    %22 = arith.subf %14, %21 : vector<64x32xf32>
    %23 = arith.mulf %22, %22 : vector<64x32xf32>
    %cst_22 = arith.constant dense<0.000000e+00> : vector<64xf32>
    %24 = vector.multi_reduction <add>, %23, %cst_22 [1] : vector<64x32xf32> to vector<64xf32>
    %25 = vector.shape_cast %24 : vector<64xf32> to vector<64x1xf32>
    %cst_23 = arith.constant 3.200000e+01 : f32
    %26 = vector.broadcast %cst_23 : f32 to vector<64x1xf32>
    %27 = arith.divf %25, %26 : vector<64x1xf32>
    %28 = vector.broadcast %20 : vector<64x1xf32> to vector<64x32xf32>
    %29 = arith.subf %14, %28 : vector<64x32xf32>
    %cst_24 = arith.constant 9.99999974E-6 : f32
    %30 = vector.broadcast %cst_24 : f32 to vector<64x1xf32>
    %31 = arith.addf %27, %30 : vector<64x1xf32>
    %32 = math.rsqrt %31 : vector<64x1xf32>
    %33 = vector.broadcast %32 : vector<64x1xf32> to vector<64x32xf32>
    %34 = arith.mulf %29, %33 : vector<64x32xf32>
    %35 = vector.broadcast %0 : vector<1x32xf32> to vector<64x32xf32>
    %36 = arith.mulf %34, %35 : vector<64x32xf32>
    %37 = vector.broadcast %1 : vector<1x32xf32> to vector<64x32xf32>
    %38 = arith.addf %36, %37 : vector<64x32xf32>
    %cst_25 = arith.constant dense<0.000000e+00> : vector<64x32xf32>
    %39 = tpu.matmul %38, %2, %cst_25 {dimension_numbers = #tpu.dot_dimension_numbers<[1], [0], [0], [1], [0, 0, 1, 1], [], []>} : vector<64x32xf32>, vector<32x32xf32>, vector<64x32xf32> -> vector<64x32xf32>
    %40 = vector.broadcast %3 : vector<1x32xf32> to vector<64x32xf32>
    %41 = arith.addf %39, %40 : vector<64x32xf32>
    %cst_26 = arith.constant dense<0.000000e+00> : vector<128x32xf32>
    %42 = tpu.matmul %16, %4, %cst_26 {dimension_numbers = #tpu.dot_dimension_numbers<[1], [0], [0], [1], [0, 0, 1, 1], [], []>} : vector<128x32xf32>, vector<32x32xf32>, vector<128x32xf32> -> vector<128x32xf32>
    %43 = vector.broadcast %5 : vector<1x32xf32> to vector<128x32xf32>
    %44 = arith.addf %42, %43 : vector<128x32xf32>
    %45 = tpu.concatenate %44, %44, %44, %44 in 0 : vector<128x32xf32>, vector<128x32xf32>, vector<128x32xf32>, vector<128x32xf32> -> vector<512x32xf32>
    %46 = arith.mulf %45, %6 : vector<512x32xf32>
    %cst_27 = arith.constant dense<0.000000e+00> : vector<64x512xf32>
    %47 = tpu.matmul %41, %46, %cst_27 {dimension_numbers = #tpu.dot_dimension_numbers<[1], [1], [0], [0], [0, 0, 1, 0], [], []>} : vector<64x32xf32>, vector<512x32xf32>, vector<64x512xf32> -> vector<64x512xf32>
    %48 = vector.extract_strided_slice %47 {offsets = [0, 0], sizes = [64, 128], strides = [1, 1]} : vector<64x512xf32> to vector<64x128xf32>
    %cst_28 = arith.constant -1.000000e+30 : f32
    %49 = vector.shape_cast %10 : vector<1x128xi1> to vector<1x128xi1>
    %50 = vector.broadcast %49 : vector<1x128xi1> to vector<64x128xi1>
    %51 = vector.broadcast %cst_28 : f32 to vector<64x128xf32>
    %52 = arith.select %50, %48, %51 : vector<64x128xi1>, vector<64x128xf32>
    %cst_29 = arith.constant dense<0xFF800000> : vector<64xf32>
    %53 = vector.multi_reduction <maximumf>, %52, %cst_29 [1] : vector<64x128xf32> to vector<64xf32>
    %54 = vector.shape_cast %53 : vector<64xf32> to vector<64x1xf32>
    %55 = vector.broadcast %54 : vector<64x1xf32> to vector<64x128xf32>
    %56 = arith.subf %48, %55 : vector<64x128xf32>
    %57 = math.exp %56 : vector<64x128xf32>
    %58 = vector.broadcast %12 : vector<1x128xf32> to vector<64x128xf32>
    %59 = arith.mulf %57, %58 : vector<64x128xf32>
    %cst_30 = arith.constant dense<0.000000e+00> : vector<64xf32>
    %60 = vector.multi_reduction <add>, %59, %cst_30 [1] : vector<64x128xf32> to vector<64xf32>
    %61 = vector.shape_cast %60 : vector<64xf32> to vector<64x1xf32>
    %62 = vector.broadcast %61 : vector<64x1xf32> to vector<64x128xf32>
    %63 = arith.divf %59, %62 : vector<64x128xf32>
    %64 = vector.extract_strided_slice %47 {offsets = [0, 128], sizes = [64, 128], strides = [1, 1]} : vector<64x512xf32> to vector<64x128xf32>
    %cst_31 = arith.constant -1.000000e+30 : f32
    %65 = vector.shape_cast %10 : vector<1x128xi1> to vector<1x128xi1>
    %66 = vector.broadcast %65 : vector<1x128xi1> to vector<64x128xi1>
    %67 = vector.broadcast %cst_31 : f32 to vector<64x128xf32>
    %68 = arith.select %66, %64, %67 : vector<64x128xi1>, vector<64x128xf32>
    %cst_32 = arith.constant dense<0xFF800000> : vector<64xf32>
    %69 = vector.multi_reduction <maximumf>, %68, %cst_32 [1] : vector<64x128xf32> to vector<64xf32>
    %70 = vector.shape_cast %69 : vector<64xf32> to vector<64x1xf32>
    %71 = vector.broadcast %70 : vector<64x1xf32> to vector<64x128xf32>
    %72 = arith.subf %64, %71 : vector<64x128xf32>
    %73 = math.exp %72 : vector<64x128xf32>
    %74 = vector.broadcast %12 : vector<1x128xf32> to vector<64x128xf32>
    %75 = arith.mulf %73, %74 : vector<64x128xf32>
    %cst_33 = arith.constant dense<0.000000e+00> : vector<64xf32>
    %76 = vector.multi_reduction <add>, %75, %cst_33 [1] : vector<64x128xf32> to vector<64xf32>
    %77 = vector.shape_cast %76 : vector<64xf32> to vector<64x1xf32>
    %78 = vector.broadcast %77 : vector<64x1xf32> to vector<64x128xf32>
    %79 = arith.divf %75, %78 : vector<64x128xf32>
    %80 = arith.addf %63, %79 : vector<64x128xf32>
    %81 = vector.extract_strided_slice %47 {offsets = [0, 256], sizes = [64, 128], strides = [1, 1]} : vector<64x512xf32> to vector<64x128xf32>
    %cst_34 = arith.constant -1.000000e+30 : f32
    %82 = vector.shape_cast %10 : vector<1x128xi1> to vector<1x128xi1>
    %83 = vector.broadcast %82 : vector<1x128xi1> to vector<64x128xi1>
    %84 = vector.broadcast %cst_34 : f32 to vector<64x128xf32>
    %85 = arith.select %83, %81, %84 : vector<64x128xi1>, vector<64x128xf32>
    %cst_35 = arith.constant dense<0xFF800000> : vector<64xf32>
    %86 = vector.multi_reduction <maximumf>, %85, %cst_35 [1] : vector<64x128xf32> to vector<64xf32>
    %87 = vector.shape_cast %86 : vector<64xf32> to vector<64x1xf32>
    %88 = vector.broadcast %87 : vector<64x1xf32> to vector<64x128xf32>
    %89 = arith.subf %81, %88 : vector<64x128xf32>
    %90 = math.exp %89 : vector<64x128xf32>
    %91 = vector.broadcast %12 : vector<1x128xf32> to vector<64x128xf32>
    %92 = arith.mulf %90, %91 : vector<64x128xf32>
    %cst_36 = arith.constant dense<0.000000e+00> : vector<64xf32>
    %93 = vector.multi_reduction <add>, %92, %cst_36 [1] : vector<64x128xf32> to vector<64xf32>
    %94 = vector.shape_cast %93 : vector<64xf32> to vector<64x1xf32>
    %95 = vector.broadcast %94 : vector<64x1xf32> to vector<64x128xf32>
    %96 = arith.divf %92, %95 : vector<64x128xf32>
    %97 = arith.addf %80, %96 : vector<64x128xf32>
    %98 = vector.extract_strided_slice %47 {offsets = [0, 384], sizes = [64, 128], strides = [1, 1]} : vector<64x512xf32> to vector<64x128xf32>
    %cst_37 = arith.constant -1.000000e+30 : f32
    %99 = vector.shape_cast %10 : vector<1x128xi1> to vector<1x128xi1>
    %100 = vector.broadcast %99 : vector<1x128xi1> to vector<64x128xi1>
    %101 = vector.broadcast %cst_37 : f32 to vector<64x128xf32>
    %102 = arith.select %100, %98, %101 : vector<64x128xi1>, vector<64x128xf32>
    %cst_38 = arith.constant dense<0xFF800000> : vector<64xf32>
    %103 = vector.multi_reduction <maximumf>, %102, %cst_38 [1] : vector<64x128xf32> to vector<64xf32>
    %104 = vector.shape_cast %103 : vector<64xf32> to vector<64x1xf32>
    %105 = vector.broadcast %104 : vector<64x1xf32> to vector<64x128xf32>
    %106 = arith.subf %98, %105 : vector<64x128xf32>
    %107 = math.exp %106 : vector<64x128xf32>
    %108 = vector.broadcast %12 : vector<1x128xf32> to vector<64x128xf32>
    %109 = arith.mulf %107, %108 : vector<64x128xf32>
    %cst_39 = arith.constant dense<0.000000e+00> : vector<64xf32>
    %110 = vector.multi_reduction <add>, %109, %cst_39 [1] : vector<64x128xf32> to vector<64xf32>
    %111 = vector.shape_cast %110 : vector<64xf32> to vector<64x1xf32>
    %112 = vector.broadcast %111 : vector<64x1xf32> to vector<64x128xf32>
    %113 = arith.divf %109, %112 : vector<64x128xf32>
    %114 = arith.addf %97, %113 : vector<64x128xf32>
    %cst_40 = arith.constant 2.500000e-01 : f32
    %115 = vector.broadcast %cst_40 : f32 to vector<64x128xf32>
    %116 = arith.mulf %114, %115 : vector<64x128xf32>
    %117 = vector.extract_strided_slice %116 {offsets = [0, 0], sizes = [64, 8], strides = [1, 1]} : vector<64x128xf32> to vector<64x8xf32>
    %c0_41 = arith.constant 0 : index
    %c0_42 = arith.constant 0 : index
    %c0_43 = arith.constant 0 : index
    %118 = vector.load %arg17[%c0_41, %c0_42, %c0_43] : memref<2x64x8xf32, #tpu.memory_space<vmem>>, vector<1x64x8xf32>
    %119 = vector.shape_cast %118 : vector<1x64x8xf32> to vector<64x8xf32>
    %120 = vector.shape_cast %117 : vector<64x8xf32> to vector<1x64x8xf32>
    tpu.vector_store %arg17[%c0_41, %c0_42, %c0_43], %120 {strides = array<i32>} : memref<2x64x8xf32, #tpu.memory_space<vmem>>, vector<1x64x8xf32>,
    %c0_44 = arith.constant 0 : index
    %c0_45 = arith.constant 0 : index
    %c0_46 = arith.constant 0 : index
    %121 = vector.load %arg8[%c0_44, %c0_45, %c0_46] : memref<4x32x32xf32, #tpu.memory_space<vmem>>, vector<1x32x32xf32>
    %122 = vector.shape_cast %121 : vector<1x32x32xf32> to vector<32x32xf32>
    %cst_47 = arith.constant dense<0.000000e+00> : vector<128x32xf32>
    %123 = tpu.matmul %16, %122, %cst_47 {dimension_numbers = #tpu.dot_dimension_numbers<[1], [0], [0], [1], [0, 0, 1, 1], [], []>} : vector<128x32xf32>, vector<32x32xf32>, vector<128x32xf32> -> vector<128x32xf32>
    %c1 = arith.constant 1 : index
    %c0_48 = arith.constant 0 : index
    %c0_49 = arith.constant 0 : index
    %124 = vector.load %arg8[%c1, %c0_48, %c0_49] : memref<4x32x32xf32, #tpu.memory_space<vmem>>, vector<1x32x32xf32>
    %125 = vector.shape_cast %124 : vector<1x32x32xf32> to vector<32x32xf32>
    %cst_50 = arith.constant dense<0.000000e+00> : vector<128x32xf32>
    %126 = tpu.matmul %16, %125, %cst_50 {dimension_numbers = #tpu.dot_dimension_numbers<[1], [0], [0], [1], [0, 0, 1, 1], [], []>} : vector<128x32xf32>, vector<32x32xf32>, vector<128x32xf32> -> vector<128x32xf32>
    %c2 = arith.constant 2 : index
    %c0_51 = arith.constant 0 : index
    %c0_52 = arith.constant 0 : index
    %127 = vector.load %arg8[%c2, %c0_51, %c0_52] : memref<4x32x32xf32, #tpu.memory_space<vmem>>, vector<1x32x32xf32>
    %128 = vector.shape_cast %127 : vector<1x32x32xf32> to vector<32x32xf32>
    %cst_53 = arith.constant dense<0.000000e+00> : vector<128x32xf32>
    %129 = tpu.matmul %16, %128, %cst_53 {dimension_numbers = #tpu.dot_dimension_numbers<[1], [0], [0], [1], [0, 0, 1, 1], [], []>} : vector<128x32xf32>, vector<32x32xf32>, vector<128x32xf32> -> vector<128x32xf32>
    %c3 = arith.constant 3 : index
    %c0_54 = arith.constant 0 : index
    %c0_55 = arith.constant 0 : index
    %130 = vector.load %arg8[%c3, %c0_54, %c0_55] : memref<4x32x32xf32, #tpu.memory_space<vmem>>, vector<1x32x32xf32>
    %131 = vector.shape_cast %130 : vector<1x32x32xf32> to vector<32x32xf32>
    %cst_56 = arith.constant dense<0.000000e+00> : vector<128x32xf32>
    %132 = tpu.matmul %16, %131, %cst_56 {dimension_numbers = #tpu.dot_dimension_numbers<[1], [0], [0], [1], [0, 0, 1, 1], [], []>} : vector<128x32xf32>, vector<32x32xf32>, vector<128x32xf32> -> vector<128x32xf32>
    %133 = tpu.concatenate %63, %79, %96, %113 in 1 : vector<64x128xf32>, vector<64x128xf32>, vector<64x128xf32>, vector<64x128xf32> -> vector<64x512xf32>
    %134 = tpu.concatenate %123, %126, %129, %132 in 0 : vector<128x32xf32>, vector<128x32xf32>, vector<128x32xf32>, vector<128x32xf32> -> vector<512x32xf32>
    %cst_57 = arith.constant dense<0.000000e+00> : vector<64x32xf32>
    %135 = tpu.matmul %133, %134, %cst_57 {dimension_numbers = #tpu.dot_dimension_numbers<[1], [0], [0], [1], [0, 0, 1, 1], [], []>} : vector<64x512xf32>, vector<512x32xf32>, vector<64x32xf32> -> vector<64x32xf32>
    %136 = vector.broadcast %7 : vector<1x32xf32> to vector<64x32xf32>
    %137 = arith.addf %135, %136 : vector<64x32xf32>
    %138 = arith.addf %14, %137 : vector<64x32xf32>
    %c1_58 = arith.constant 1 : index
    %c0_59 = arith.constant 0 : index
    %c0_60 = arith.constant 0 : index
    %139 = vector.load %arg0[%c1_58, %c0_59, %c0_60] : memref<2x64x32xf32, #tpu.memory_space<vmem>>, vector<1x64x32xf32>
    %140 = vector.shape_cast %139 : vector<1x64x32xf32> to vector<64x32xf32>
    %c1_61 = arith.constant 1 : index
    %c0_62 = arith.constant 0 : index
    %c0_63 = arith.constant 0 : index
    %141 = vector.load %arg1[%c1_61, %c0_62, %c0_63] : memref<2x128x32xf32, #tpu.memory_space<vmem>>, vector<1x128x32xf32>
    %142 = vector.shape_cast %141 : vector<1x128x32xf32> to vector<128x32xf32>
    %cst_64 = arith.constant dense<0.000000e+00> : vector<64xf32>
    %143 = vector.multi_reduction <add>, %140, %cst_64 [1] : vector<64x32xf32> to vector<64xf32>
    %144 = vector.shape_cast %143 : vector<64xf32> to vector<64x1xf32>
    %cst_65 = arith.constant 3.200000e+01 : f32
    %145 = vector.broadcast %cst_65 : f32 to vector<64x1xf32>
    %146 = arith.divf %144, %145 : vector<64x1xf32>
    %147 = vector.broadcast %146 : vector<64x1xf32> to vector<64x32xf32>
    %148 = arith.subf %140, %147 : vector<64x32xf32>
    %149 = arith.mulf %148, %148 : vector<64x32xf32>
    %cst_66 = arith.constant dense<0.000000e+00> : vector<64xf32>
    %150 = vector.multi_reduction <add>, %149, %cst_66 [1] : vector<64x32xf32> to vector<64xf32>
    %151 = vector.shape_cast %150 : vector<64xf32> to vector<64x1xf32>
    %cst_67 = arith.constant 3.200000e+01 : f32
    %152 = vector.broadcast %cst_67 : f32 to vector<64x1xf32>
    %153 = arith.divf %151, %152 : vector<64x1xf32>
    %154 = vector.broadcast %146 : vector<64x1xf32> to vector<64x32xf32>
    %155 = arith.subf %140, %154 : vector<64x32xf32>
    %cst_68 = arith.constant 9.99999974E-6 : f32
    %156 = vector.broadcast %cst_68 : f32 to vector<64x1xf32>
    %157 = arith.addf %153, %156 : vector<64x1xf32>
    %158 = math.rsqrt %157 : vector<64x1xf32>
    %159 = vector.broadcast %158 : vector<64x1xf32> to vector<64x32xf32>
    %160 = arith.mulf %155, %159 : vector<64x32xf32>
    %161 = vector.broadcast %0 : vector<1x32xf32> to vector<64x32xf32>
    %162 = arith.mulf %160, %161 : vector<64x32xf32>
    %163 = vector.broadcast %1 : vector<1x32xf32> to vector<64x32xf32>
    %164 = arith.addf %162, %163 : vector<64x32xf32>
    %cst_69 = arith.constant dense<0.000000e+00> : vector<64x32xf32>
    %165 = tpu.matmul %164, %2, %cst_69 {dimension_numbers = #tpu.dot_dimension_numbers<[1], [0], [0], [1], [0, 0, 1, 1], [], []>} : vector<64x32xf32>, vector<32x32xf32>, vector<64x32xf32> -> vector<64x32xf32>
    %166 = vector.broadcast %3 : vector<1x32xf32> to vector<64x32xf32>
    %167 = arith.addf %165, %166 : vector<64x32xf32>
    %cst_70 = arith.constant dense<0.000000e+00> : vector<128x32xf32>
    %168 = tpu.matmul %142, %4, %cst_70 {dimension_numbers = #tpu.dot_dimension_numbers<[1], [0], [0], [1], [0, 0, 1, 1], [], []>} : vector<128x32xf32>, vector<32x32xf32>, vector<128x32xf32> -> vector<128x32xf32>
    %169 = vector.broadcast %5 : vector<1x32xf32> to vector<128x32xf32>
    %170 = arith.addf %168, %169 : vector<128x32xf32>
    %171 = tpu.concatenate %170, %170, %170, %170 in 0 : vector<128x32xf32>, vector<128x32xf32>, vector<128x32xf32>, vector<128x32xf32> -> vector<512x32xf32>
    %172 = arith.mulf %171, %6 : vector<512x32xf32>
    %cst_71 = arith.constant dense<0.000000e+00> : vector<64x512xf32>
    %173 = tpu.matmul %167, %172, %cst_71 {dimension_numbers = #tpu.dot_dimension_numbers<[1], [1], [0], [0], [0, 0, 1, 0], [], []>} : vector<64x32xf32>, vector<512x32xf32>, vector<64x512xf32> -> vector<64x512xf32>
    %174 = vector.extract_strided_slice %173 {offsets = [0, 0], sizes = [64, 128], strides = [1, 1]} : vector<64x512xf32> to vector<64x128xf32>
    %cst_72 = arith.constant -1.000000e+30 : f32
    %175 = vector.shape_cast %10 : vector<1x128xi1> to vector<1x128xi1>
    %176 = vector.broadcast %175 : vector<1x128xi1> to vector<64x128xi1>
    %177 = vector.broadcast %cst_72 : f32 to vector<64x128xf32>
    %178 = arith.select %176, %174, %177 : vector<64x128xi1>, vector<64x128xf32>
    %cst_73 = arith.constant dense<0xFF800000> : vector<64xf32>
    %179 = vector.multi_reduction <maximumf>, %178, %cst_73 [1] : vector<64x128xf32> to vector<64xf32>
    %180 = vector.shape_cast %179 : vector<64xf32> to vector<64x1xf32>
    %181 = vector.broadcast %180 : vector<64x1xf32> to vector<64x128xf32>
    %182 = arith.subf %174, %181 : vector<64x128xf32>
    %183 = math.exp %182 : vector<64x128xf32>
    %184 = vector.broadcast %12 : vector<1x128xf32> to vector<64x128xf32>
    %185 = arith.mulf %183, %184 : vector<64x128xf32>
    %cst_74 = arith.constant dense<0.000000e+00> : vector<64xf32>
    %186 = vector.multi_reduction <add>, %185, %cst_74 [1] : vector<64x128xf32> to vector<64xf32>
    %187 = vector.shape_cast %186 : vector<64xf32> to vector<64x1xf32>
    %188 = vector.broadcast %187 : vector<64x1xf32> to vector<64x128xf32>
    %189 = arith.divf %185, %188 : vector<64x128xf32>
    %190 = vector.extract_strided_slice %173 {offsets = [0, 128], sizes = [64, 128], strides = [1, 1]} : vector<64x512xf32> to vector<64x128xf32>
    %cst_75 = arith.constant -1.000000e+30 : f32
    %191 = vector.shape_cast %10 : vector<1x128xi1> to vector<1x128xi1>
    %192 = vector.broadcast %191 : vector<1x128xi1> to vector<64x128xi1>
    %193 = vector.broadcast %cst_75 : f32 to vector<64x128xf32>
    %194 = arith.select %192, %190, %193 : vector<64x128xi1>, vector<64x128xf32>
    %cst_76 = arith.constant dense<0xFF800000> : vector<64xf32>
    %195 = vector.multi_reduction <maximumf>, %194, %cst_76 [1] : vector<64x128xf32> to vector<64xf32>
    %196 = vector.shape_cast %195 : vector<64xf32> to vector<64x1xf32>
    %197 = vector.broadcast %196 : vector<64x1xf32> to vector<64x128xf32>
    %198 = arith.subf %190, %197 : vector<64x128xf32>
    %199 = math.exp %198 : vector<64x128xf32>
    %200 = vector.broadcast %12 : vector<1x128xf32> to vector<64x128xf32>
    %201 = arith.mulf %199, %200 : vector<64x128xf32>
    %cst_77 = arith.constant dense<0.000000e+00> : vector<64xf32>
    %202 = vector.multi_reduction <add>, %201, %cst_77 [1] : vector<64x128xf32> to vector<64xf32>
    %203 = vector.shape_cast %202 : vector<64xf32> to vector<64x1xf32>
    %204 = vector.broadcast %203 : vector<64x1xf32> to vector<64x128xf32>
    %205 = arith.divf %201, %204 : vector<64x128xf32>
    %206 = arith.addf %189, %205 : vector<64x128xf32>
    %207 = vector.extract_strided_slice %173 {offsets = [0, 256], sizes = [64, 128], strides = [1, 1]} : vector<64x512xf32> to vector<64x128xf32>
    %cst_78 = arith.constant -1.000000e+30 : f32
    %208 = vector.shape_cast %10 : vector<1x128xi1> to vector<1x128xi1>
    %209 = vector.broadcast %208 : vector<1x128xi1> to vector<64x128xi1>
    %210 = vector.broadcast %cst_78 : f32 to vector<64x128xf32>
    %211 = arith.select %209, %207, %210 : vector<64x128xi1>, vector<64x128xf32>
    %cst_79 = arith.constant dense<0xFF800000> : vector<64xf32>
    %212 = vector.multi_reduction <maximumf>, %211, %cst_79 [1] : vector<64x128xf32> to vector<64xf32>
    %213 = vector.shape_cast %212 : vector<64xf32> to vector<64x1xf32>
    %214 = vector.broadcast %213 : vector<64x1xf32> to vector<64x128xf32>
    %215 = arith.subf %207, %214 : vector<64x128xf32>
    %216 = math.exp %215 : vector<64x128xf32>
    %217 = vector.broadcast %12 : vector<1x128xf32> to vector<64x128xf32>
    %218 = arith.mulf %216, %217 : vector<64x128xf32>
    %cst_80 = arith.constant dense<0.000000e+00> : vector<64xf32>
    %219 = vector.multi_reduction <add>, %218, %cst_80 [1] : vector<64x128xf32> to vector<64xf32>
    %220 = vector.shape_cast %219 : vector<64xf32> to vector<64x1xf32>
    %221 = vector.broadcast %220 : vector<64x1xf32> to vector<64x128xf32>
    %222 = arith.divf %218, %221 : vector<64x128xf32>
    %223 = arith.addf %206, %222 : vector<64x128xf32>
    %224 = vector.extract_strided_slice %173 {offsets = [0, 384], sizes = [64, 128], strides = [1, 1]} : vector<64x512xf32> to vector<64x128xf32>
    %cst_81 = arith.constant -1.000000e+30 : f32
    %225 = vector.shape_cast %10 : vector<1x128xi1> to vector<1x128xi1>
    %226 = vector.broadcast %225 : vector<1x128xi1> to vector<64x128xi1>
    %227 = vector.broadcast %cst_81 : f32 to vector<64x128xf32>
    %228 = arith.select %226, %224, %227 : vector<64x128xi1>, vector<64x128xf32>
    %cst_82 = arith.constant dense<0xFF800000> : vector<64xf32>
    %229 = vector.multi_reduction <maximumf>, %228, %cst_82 [1] : vector<64x128xf32> to vector<64xf32>
    %230 = vector.shape_cast %229 : vector<64xf32> to vector<64x1xf32>
    %231 = vector.broadcast %230 : vector<64x1xf32> to vector<64x128xf32>
    %232 = arith.subf %224, %231 : vector<64x128xf32>
    %233 = math.exp %232 : vector<64x128xf32>
    %234 = vector.broadcast %12 : vector<1x128xf32> to vector<64x128xf32>
    %235 = arith.mulf %233, %234 : vector<64x128xf32>
    %cst_83 = arith.constant dense<0.000000e+00> : vector<64xf32>
    %236 = vector.multi_reduction <add>, %235, %cst_83 [1] : vector<64x128xf32> to vector<64xf32>
    %237 = vector.shape_cast %236 : vector<64xf32> to vector<64x1xf32>
    %238 = vector.broadcast %237 : vector<64x1xf32> to vector<64x128xf32>
    %239 = arith.divf %235, %238 : vector<64x128xf32>
    %240 = arith.addf %223, %239 : vector<64x128xf32>
    %cst_84 = arith.constant 2.500000e-01 : f32
    %241 = vector.broadcast %cst_84 : f32 to vector<64x128xf32>
    %242 = arith.mulf %240, %241 : vector<64x128xf32>
    %243 = vector.extract_strided_slice %242 {offsets = [0, 0], sizes = [64, 8], strides = [1, 1]} : vector<64x128xf32> to vector<64x8xf32>
    %c1_85 = arith.constant 1 : index
    %c0_86 = arith.constant 0 : index
    %c0_87 = arith.constant 0 : index
    %244 = vector.load %arg17[%c1_85, %c0_86, %c0_87] : memref<2x64x8xf32, #tpu.memory_space<vmem>>, vector<1x64x8xf32>
    %245 = vector.shape_cast %244 : vector<1x64x8xf32> to vector<64x8xf32>
    %246 = vector.shape_cast %243 : vector<64x8xf32> to vector<1x64x8xf32>
    tpu.vector_store %arg17[%c1_85, %c0_86, %c0_87], %246 {strides = array<i32>} : memref<2x64x8xf32, #tpu.memory_space<vmem>>, vector<1x64x8xf32>,
    %c0_88 = arith.constant 0 : index
    %c0_89 = arith.constant 0 : index
    %c0_90 = arith.constant 0 : index
    %247 = vector.load %arg8[%c0_88, %c0_89, %c0_90] : memref<4x32x32xf32, #tpu.memory_space<vmem>>, vector<1x32x32xf32>
    %248 = vector.shape_cast %247 : vector<1x32x32xf32> to vector<32x32xf32>
    %cst_91 = arith.constant dense<0.000000e+00> : vector<128x32xf32>
    %249 = tpu.matmul %142, %248, %cst_91 {dimension_numbers = #tpu.dot_dimension_numbers<[1], [0], [0], [1], [0, 0, 1, 1], [], []>} : vector<128x32xf32>, vector<32x32xf32>, vector<128x32xf32> -> vector<128x32xf32>
    %c1_92 = arith.constant 1 : index
    %c0_93 = arith.constant 0 : index
    %c0_94 = arith.constant 0 : index
    %250 = vector.load %arg8[%c1_92, %c0_93, %c0_94] : memref<4x32x32xf32, #tpu.memory_space<vmem>>, vector<1x32x32xf32>
    %251 = vector.shape_cast %250 : vector<1x32x32xf32> to vector<32x32xf32>
    %cst_95 = arith.constant dense<0.000000e+00> : vector<128x32xf32>
    %252 = tpu.matmul %142, %251, %cst_95 {dimension_numbers = #tpu.dot_dimension_numbers<[1], [0], [0], [1], [0, 0, 1, 1], [], []>} : vector<128x32xf32>, vector<32x32xf32>, vector<128x32xf32> -> vector<128x32xf32>
    %c2_96 = arith.constant 2 : index
    %c0_97 = arith.constant 0 : index
    %c0_98 = arith.constant 0 : index
    %253 = vector.load %arg8[%c2_96, %c0_97, %c0_98] : memref<4x32x32xf32, #tpu.memory_space<vmem>>, vector<1x32x32xf32>
    %254 = vector.shape_cast %253 : vector<1x32x32xf32> to vector<32x32xf32>
    %cst_99 = arith.constant dense<0.000000e+00> : vector<128x32xf32>
    %255 = tpu.matmul %142, %254, %cst_99 {dimension_numbers = #tpu.dot_dimension_numbers<[1], [0], [0], [1], [0, 0, 1, 1], [], []>} : vector<128x32xf32>, vector<32x32xf32>, vector<128x32xf32> -> vector<128x32xf32>
    %c3_100 = arith.constant 3 : index
    %c0_101 = arith.constant 0 : index
    %c0_102 = arith.constant 0 : index
    %256 = vector.load %arg8[%c3_100, %c0_101, %c0_102] : memref<4x32x32xf32, #tpu.memory_space<vmem>>, vector<1x32x32xf32>
    %257 = vector.shape_cast %256 : vector<1x32x32xf32> to vector<32x32xf32>
    %cst_103 = arith.constant dense<0.000000e+00> : vector<128x32xf32>
    %258 = tpu.matmul %142, %257, %cst_103 {dimension_numbers = #tpu.dot_dimension_numbers<[1], [0], [0], [1], [0, 0, 1, 1], [], []>} : vector<128x32xf32>, vector<32x32xf32>, vector<128x32xf32> -> vector<128x32xf32>
    %259 = tpu.concatenate %189, %205, %222, %239 in 1 : vector<64x128xf32>, vector<64x128xf32>, vector<64x128xf32>, vector<64x128xf32> -> vector<64x512xf32>
    %260 = tpu.concatenate %249, %252, %255, %258 in 0 : vector<128x32xf32>, vector<128x32xf32>, vector<128x32xf32>, vector<128x32xf32> -> vector<512x32xf32>
    %cst_104 = arith.constant dense<0.000000e+00> : vector<64x32xf32>
    %261 = tpu.matmul %259, %260, %cst_104 {dimension_numbers = #tpu.dot_dimension_numbers<[1], [0], [0], [1], [0, 0, 1, 1], [], []>} : vector<64x512xf32>, vector<512x32xf32>, vector<64x32xf32> -> vector<64x32xf32>
    %262 = vector.broadcast %7 : vector<1x32xf32> to vector<64x32xf32>
    %263 = arith.addf %261, %262 : vector<64x32xf32>
    %264 = arith.addf %140, %263 : vector<64x32xf32>
    %265 = tpu.concatenate %138, %264 in 0 : vector<64x32xf32>, vector<64x32xf32> -> vector<128x32xf32>
    %c0_105 = arith.constant 0 : index
    %c0_106 = arith.constant 0 : index
    %266 = vector.load %arg11[%c0_105, %c0_106] : memref<32x256xf32, #tpu.memory_space<vmem>>, vector<32x256xf32>
    %cst_107 = arith.constant dense<0.000000e+00> : vector<128x256xf32>
    %267 = tpu.matmul %265, %266, %cst_107 {dimension_numbers = #tpu.dot_dimension_numbers<[1], [0], [0], [1], [0, 0, 1, 1], [], []>} : vector<128x32xf32>, vector<32x256xf32>, vector<128x256xf32> -> vector<128x256xf32>
    %c0_108 = arith.constant 0 : index
    %c0_109 = arith.constant 0 : index
    %c0_110 = arith.constant 0 : index
    %c0_111 = arith.constant 0 : index
    %268 = vector.load %arg13[%c0_108, %c0_109, %c0_110, %c0_111] : memref<3x3x64x1xf32, #tpu.memory_space<vmem>>, vector<3x3x64x1xf32>
    %269 = tpu.concatenate %268, %268 in 2 : vector<3x3x64x1xf32>, vector<3x3x64x1xf32> -> vector<3x3x128x1xf32>
    %270 = vector.extract_strided_slice %267 {offsets = [0, 80], sizes = [128, 16], strides = [1, 1]} : vector<128x256xf32> to vector<128x16xf32>
    %271 = vector.extract_strided_slice %267 {offsets = [0, 112], sizes = [128, 16], strides = [1, 1]} : vector<128x256xf32> to vector<128x16xf32>
    %cst_112 = arith.constant 0.000000e+00 : f32
    %272 = vector.broadcast %cst_112 : f32 to vector<1x16xf32>
    %273 = vector.extract_strided_slice %271 {offsets = [0, 0], sizes = [127, 16], strides = [1, 1]} : vector<128x16xf32> to vector<127x16xf32>
    %274 = tpu.concatenate %272, %273 in 0 : vector<1x16xf32>, vector<127x16xf32> -> vector<128x16xf32>
    %275 = vector.extract_strided_slice %269 {offsets = [1, 0, 0, 0], sizes = [1, 1, 128, 1], strides = [1, 1, 1, 1]} : vector<3x3x128x1xf32> to vector<1x1x128x1xf32>
    %276 = vector.shape_cast %275 : vector<1x1x128x1xf32> to vector<128x1xf32>
    %277 = vector.broadcast %276 : vector<128x1xf32> to vector<128x16xf32>
    %278 = arith.mulf %274, %277 : vector<128x16xf32>
    %279 = arith.addf %270, %278 : vector<128x16xf32>
    %280 = vector.extract_strided_slice %267 {offsets = [0, 208], sizes = [128, 16], strides = [1, 1]} : vector<128x256xf32> to vector<128x16xf32>
    %cst_113 = arith.constant 0.000000e+00 : f32
    %281 = vector.broadcast %cst_113 : f32 to vector<8x16xf32>
    %282 = vector.extract_strided_slice %280 {offsets = [0, 0], sizes = [120, 16], strides = [1, 1]} : vector<128x16xf32> to vector<120x16xf32>
    %283 = tpu.concatenate %281, %282 in 0 : vector<8x16xf32>, vector<120x16xf32> -> vector<128x16xf32>
    %284 = vector.extract_strided_slice %269 {offsets = [0, 1, 0, 0], sizes = [1, 1, 128, 1], strides = [1, 1, 1, 1]} : vector<3x3x128x1xf32> to vector<1x1x128x1xf32>
    %285 = vector.shape_cast %284 : vector<1x1x128x1xf32> to vector<128x1xf32>
    %286 = vector.broadcast %285 : vector<128x1xf32> to vector<128x16xf32>
    %287 = arith.mulf %283, %286 : vector<128x16xf32>
    %288 = arith.addf %279, %287 : vector<128x16xf32>
    %289 = vector.extract_strided_slice %267 {offsets = [0, 240], sizes = [128, 16], strides = [1, 1]} : vector<128x256xf32> to vector<128x16xf32>
    %cst_114 = arith.constant 0.000000e+00 : f32
    %290 = vector.broadcast %cst_114 : f32 to vector<9x16xf32>
    %291 = vector.extract_strided_slice %289 {offsets = [0, 0], sizes = [119, 16], strides = [1, 1]} : vector<128x16xf32> to vector<119x16xf32>
    %292 = tpu.concatenate %290, %291 in 0 : vector<9x16xf32>, vector<119x16xf32> -> vector<128x16xf32>
    %293 = vector.extract_strided_slice %269 {offsets = [0, 0, 0, 0], sizes = [1, 1, 128, 1], strides = [1, 1, 1, 1]} : vector<3x3x128x1xf32> to vector<1x1x128x1xf32>
    %294 = vector.shape_cast %293 : vector<1x1x128x1xf32> to vector<128x1xf32>
    %295 = vector.broadcast %294 : vector<128x1xf32> to vector<128x16xf32>
    %296 = arith.mulf %292, %295 : vector<128x16xf32>
    %297 = arith.addf %288, %296 : vector<128x16xf32>
    %298 = vector.extract_strided_slice %267 {offsets = [0, 64], sizes = [128, 16], strides = [1, 1]} : vector<128x256xf32> to vector<128x16xf32>
    %cst_115 = arith.constant 0.000000e+00 : f32
    %299 = vector.broadcast %cst_115 : f32 to vector<1x16xf32>
    %300 = vector.extract_strided_slice %298 {offsets = [1, 0], sizes = [127, 16], strides = [1, 1]} : vector<128x16xf32> to vector<127x16xf32>
    %301 = tpu.concatenate %300, %299 in 0 : vector<127x16xf32>, vector<1x16xf32> -> vector<128x16xf32>
    %302 = vector.extract_strided_slice %269 {offsets = [1, 2, 0, 0], sizes = [1, 1, 128, 1], strides = [1, 1, 1, 1]} : vector<3x3x128x1xf32> to vector<1x1x128x1xf32>
    %303 = vector.shape_cast %302 : vector<1x1x128x1xf32> to vector<128x1xf32>
    %304 = vector.broadcast %303 : vector<128x1xf32> to vector<128x16xf32>
    %305 = arith.mulf %301, %304 : vector<128x16xf32>
    %306 = vector.extract_strided_slice %267 {offsets = [0, 96], sizes = [128, 16], strides = [1, 1]} : vector<128x256xf32> to vector<128x16xf32>
    %307 = arith.addf %305, %306 : vector<128x16xf32>
    %308 = vector.extract_strided_slice %267 {offsets = [0, 192], sizes = [128, 16], strides = [1, 1]} : vector<128x256xf32> to vector<128x16xf32>
    %cst_116 = arith.constant 0.000000e+00 : f32
    %309 = vector.broadcast %cst_116 : f32 to vector<7x16xf32>
    %310 = vector.extract_strided_slice %308 {offsets = [0, 0], sizes = [121, 16], strides = [1, 1]} : vector<128x16xf32> to vector<121x16xf32>
    %311 = tpu.concatenate %309, %310 in 0 : vector<7x16xf32>, vector<121x16xf32> -> vector<128x16xf32>
    %312 = vector.extract_strided_slice %269 {offsets = [0, 2, 0, 0], sizes = [1, 1, 128, 1], strides = [1, 1, 1, 1]} : vector<3x3x128x1xf32> to vector<1x1x128x1xf32>
    %313 = vector.shape_cast %312 : vector<1x1x128x1xf32> to vector<128x1xf32>
    %314 = vector.broadcast %313 : vector<128x1xf32> to vector<128x16xf32>
    %315 = arith.mulf %311, %314 : vector<128x16xf32>
    %316 = arith.addf %307, %315 : vector<128x16xf32>
    %317 = vector.extract_strided_slice %267 {offsets = [0, 224], sizes = [128, 16], strides = [1, 1]} : vector<128x256xf32> to vector<128x16xf32>
    %cst_117 = arith.constant 0.000000e+00 : f32
    %318 = vector.broadcast %cst_117 : f32 to vector<8x16xf32>
    %319 = vector.extract_strided_slice %317 {offsets = [0, 0], sizes = [120, 16], strides = [1, 1]} : vector<128x16xf32> to vector<120x16xf32>
    %320 = tpu.concatenate %318, %319 in 0 : vector<8x16xf32>, vector<120x16xf32> -> vector<128x16xf32>
    %321 = vector.extract_strided_slice %269 {offsets = [0, 1, 0, 0], sizes = [1, 1, 128, 1], strides = [1, 1, 1, 1]} : vector<3x3x128x1xf32> to vector<1x1x128x1xf32>
    %322 = vector.shape_cast %321 : vector<1x1x128x1xf32> to vector<128x1xf32>
    %323 = vector.broadcast %322 : vector<128x1xf32> to vector<128x16xf32>
    %324 = arith.mulf %320, %323 : vector<128x16xf32>
    %325 = arith.addf %316, %324 : vector<128x16xf32>
    %326 = vector.extract_strided_slice %267 {offsets = [0, 16], sizes = [128, 16], strides = [1, 1]} : vector<128x256xf32> to vector<128x16xf32>
    %cst_118 = arith.constant 0.000000e+00 : f32
    %327 = vector.broadcast %cst_118 : f32 to vector<8x16xf32>
    %328 = vector.extract_strided_slice %326 {offsets = [8, 0], sizes = [120, 16], strides = [1, 1]} : vector<128x16xf32> to vector<120x16xf32>
    %329 = tpu.concatenate %328, %327 in 0 : vector<120x16xf32>, vector<8x16xf32> -> vector<128x16xf32>
    %330 = vector.extract_strided_slice %269 {offsets = [2, 1, 0, 0], sizes = [1, 1, 128, 1], strides = [1, 1, 1, 1]} : vector<3x3x128x1xf32> to vector<1x1x128x1xf32>
    %331 = vector.shape_cast %330 : vector<1x1x128x1xf32> to vector<128x1xf32>
    %332 = vector.broadcast %331 : vector<128x1xf32> to vector<128x16xf32>
    %333 = arith.mulf %329, %332 : vector<128x16xf32>
    %334 = vector.extract_strided_slice %267 {offsets = [0, 48], sizes = [128, 16], strides = [1, 1]} : vector<128x256xf32> to vector<128x16xf32>
    %cst_119 = arith.constant 0.000000e+00 : f32
    %335 = vector.broadcast %cst_119 : f32 to vector<7x16xf32>
    %336 = vector.extract_strided_slice %334 {offsets = [7, 0], sizes = [121, 16], strides = [1, 1]} : vector<128x16xf32> to vector<121x16xf32>
    %337 = tpu.concatenate %336, %335 in 0 : vector<121x16xf32>, vector<7x16xf32> -> vector<128x16xf32>
    %338 = vector.extract_strided_slice %269 {offsets = [2, 0, 0, 0], sizes = [1, 1, 128, 1], strides = [1, 1, 1, 1]} : vector<3x3x128x1xf32> to vector<1x1x128x1xf32>
    %339 = vector.shape_cast %338 : vector<1x1x128x1xf32> to vector<128x1xf32>
    %340 = vector.broadcast %339 : vector<128x1xf32> to vector<128x16xf32>
    %341 = arith.mulf %337, %340 : vector<128x16xf32>
    %342 = arith.addf %333, %341 : vector<128x16xf32>
    %343 = vector.extract_strided_slice %267 {offsets = [0, 144], sizes = [128, 16], strides = [1, 1]} : vector<128x256xf32> to vector<128x16xf32>
    %344 = arith.addf %342, %343 : vector<128x16xf32>
    %345 = vector.extract_strided_slice %267 {offsets = [0, 176], sizes = [128, 16], strides = [1, 1]} : vector<128x256xf32> to vector<128x16xf32>
    %cst_120 = arith.constant 0.000000e+00 : f32
    %346 = vector.broadcast %cst_120 : f32 to vector<1x16xf32>
    %347 = vector.extract_strided_slice %345 {offsets = [0, 0], sizes = [127, 16], strides = [1, 1]} : vector<128x16xf32> to vector<127x16xf32>
    %348 = tpu.concatenate %346, %347 in 0 : vector<1x16xf32>, vector<127x16xf32> -> vector<128x16xf32>
    %349 = vector.extract_strided_slice %269 {offsets = [1, 0, 0, 0], sizes = [1, 1, 128, 1], strides = [1, 1, 1, 1]} : vector<3x3x128x1xf32> to vector<1x1x128x1xf32>
    %350 = vector.shape_cast %349 : vector<1x1x128x1xf32> to vector<128x1xf32>
    %351 = vector.broadcast %350 : vector<128x1xf32> to vector<128x16xf32>
    %352 = arith.mulf %348, %351 : vector<128x16xf32>
    %353 = arith.addf %344, %352 : vector<128x16xf32>
    %354 = vector.extract_strided_slice %267 {offsets = [0, 0], sizes = [128, 16], strides = [1, 1]} : vector<128x256xf32> to vector<128x16xf32>
    %cst_121 = arith.constant 0.000000e+00 : f32
    %355 = vector.broadcast %cst_121 : f32 to vector<9x16xf32>
    %356 = vector.extract_strided_slice %354 {offsets = [9, 0], sizes = [119, 16], strides = [1, 1]} : vector<128x16xf32> to vector<119x16xf32>
    %357 = tpu.concatenate %356, %355 in 0 : vector<119x16xf32>, vector<9x16xf32> -> vector<128x16xf32>
    %358 = vector.extract_strided_slice %269 {offsets = [2, 2, 0, 0], sizes = [1, 1, 128, 1], strides = [1, 1, 1, 1]} : vector<3x3x128x1xf32> to vector<1x1x128x1xf32>
    %359 = vector.shape_cast %358 : vector<1x1x128x1xf32> to vector<128x1xf32>
    %360 = vector.broadcast %359 : vector<128x1xf32> to vector<128x16xf32>
    %361 = arith.mulf %357, %360 : vector<128x16xf32>
    %362 = vector.extract_strided_slice %267 {offsets = [0, 32], sizes = [128, 16], strides = [1, 1]} : vector<128x256xf32> to vector<128x16xf32>
    %cst_122 = arith.constant 0.000000e+00 : f32
    %363 = vector.broadcast %cst_122 : f32 to vector<8x16xf32>
    %364 = vector.extract_strided_slice %362 {offsets = [8, 0], sizes = [120, 16], strides = [1, 1]} : vector<128x16xf32> to vector<120x16xf32>
    %365 = tpu.concatenate %364, %363 in 0 : vector<120x16xf32>, vector<8x16xf32> -> vector<128x16xf32>
    %366 = vector.extract_strided_slice %269 {offsets = [2, 1, 0, 0], sizes = [1, 1, 128, 1], strides = [1, 1, 1, 1]} : vector<3x3x128x1xf32> to vector<1x1x128x1xf32>
    %367 = vector.shape_cast %366 : vector<1x1x128x1xf32> to vector<128x1xf32>
    %368 = vector.broadcast %367 : vector<128x1xf32> to vector<128x16xf32>
    %369 = arith.mulf %365, %368 : vector<128x16xf32>
    %370 = arith.addf %361, %369 : vector<128x16xf32>
    %371 = vector.extract_strided_slice %267 {offsets = [0, 128], sizes = [128, 16], strides = [1, 1]} : vector<128x256xf32> to vector<128x16xf32>
    %cst_123 = arith.constant 0.000000e+00 : f32
    %372 = vector.broadcast %cst_123 : f32 to vector<1x16xf32>
    %373 = vector.extract_strided_slice %371 {offsets = [1, 0], sizes = [127, 16], strides = [1, 1]} : vector<128x16xf32> to vector<127x16xf32>
    %374 = tpu.concatenate %373, %372 in 0 : vector<127x16xf32>, vector<1x16xf32> -> vector<128x16xf32>
    %375 = vector.extract_strided_slice %269 {offsets = [1, 2, 0, 0], sizes = [1, 1, 128, 1], strides = [1, 1, 1, 1]} : vector<3x3x128x1xf32> to vector<1x1x128x1xf32>
    %376 = vector.shape_cast %375 : vector<1x1x128x1xf32> to vector<128x1xf32>
    %377 = vector.broadcast %376 : vector<128x1xf32> to vector<128x16xf32>
    %378 = arith.mulf %374, %377 : vector<128x16xf32>
    %379 = arith.addf %370, %378 : vector<128x16xf32>
    %380 = vector.extract_strided_slice %267 {offsets = [0, 160], sizes = [128, 16], strides = [1, 1]} : vector<128x256xf32> to vector<128x16xf32>
    %381 = arith.addf %379, %380 : vector<128x16xf32>
    %382 = tpu.concatenate %297, %325, %353, %381 in 0 : vector<128x16xf32>, vector<128x16xf32>, vector<128x16xf32>, vector<128x16xf32> -> vector<512x16xf32>
    %c0_124 = arith.constant 0 : index
    %c0_125 = arith.constant 0 : index
    %383 = vector.load %arg12[%c0_124, %c0_125] : memref<1x16xf32, #tpu.memory_space<vmem>>, vector<1x16xf32>
    %384 = vector.broadcast %383 : vector<1x16xf32> to vector<512x16xf32>
    %385 = arith.addf %382, %384 : vector<512x16xf32>
    %cst_126 = arith.constant dense<0.000000e+00> : vector<16xf32>
    %386 = vector.multi_reduction <add>, %385, %cst_126 [0] : vector<512x16xf32> to vector<16xf32>
    %387 = vector.shape_cast %386 : vector<16xf32> to vector<1x16xf32>
    %cst_127 = arith.constant 5.120000e+02 : f32
    %388 = vector.broadcast %cst_127 : f32 to vector<1x16xf32>
    %389 = arith.divf %387, %388 : vector<1x16xf32>
    %390 = vector.broadcast %389 : vector<1x16xf32> to vector<512x16xf32>
    %391 = arith.subf %385, %390 : vector<512x16xf32>
    %392 = arith.mulf %391, %391 : vector<512x16xf32>
    %cst_128 = arith.constant dense<0.000000e+00> : vector<16xf32>
    %393 = vector.multi_reduction <add>, %392, %cst_128 [0] : vector<512x16xf32> to vector<16xf32>
    %394 = vector.shape_cast %393 : vector<16xf32> to vector<1x16xf32>
    %cst_129 = arith.constant 5.120000e+02 : f32
    %395 = vector.broadcast %cst_129 : f32 to vector<1x16xf32>
    %396 = arith.divf %394, %395 : vector<1x16xf32>
    %397 = vector.broadcast %389 : vector<1x16xf32> to vector<512x16xf32>
    %398 = arith.subf %385, %397 : vector<512x16xf32>
    %cst_130 = arith.constant 9.99999974E-6 : f32
    %399 = vector.broadcast %cst_130 : f32 to vector<1x16xf32>
    %400 = arith.addf %396, %399 : vector<1x16xf32>
    %401 = math.rsqrt %400 : vector<1x16xf32>
    %402 = vector.broadcast %401 : vector<1x16xf32> to vector<512x16xf32>
    %403 = arith.mulf %398, %402 : vector<512x16xf32>
    %c0_131 = arith.constant 0 : index
    %c0_132 = arith.constant 0 : index
    %404 = vector.load %arg14[%c0_131, %c0_132] : memref<1x16xf32, #tpu.memory_space<vmem>>, vector<1x16xf32>
    %405 = vector.broadcast %404 : vector<1x16xf32> to vector<512x16xf32>
    %406 = arith.mulf %403, %405 : vector<512x16xf32>
    %c0_133 = arith.constant 0 : index
    %c0_134 = arith.constant 0 : index
    %407 = vector.load %arg15[%c0_133, %c0_134] : memref<1x16xf32, #tpu.memory_space<vmem>>, vector<1x16xf32>
    %408 = vector.broadcast %407 : vector<1x16xf32> to vector<512x16xf32>
    %409 = arith.addf %406, %408 : vector<512x16xf32>
    %cst_135 = arith.constant 0.000000e+00 : f32
    %410 = vector.broadcast %cst_135 : f32 to vector<512x16xf32>
    %411 = arith.maximumf %409, %410 : vector<512x16xf32>
    %c0_136 = arith.constant 0 : index
    %c0_137 = arith.constant 0 : index
    %412 = vector.load %arg16[%c0_136, %c0_137] : memref<512x16xf32, #tpu.memory_space<vmem>>, vector<512x16xf32>
    tpu.vector_store %arg16[%c0_136, %c0_137], %411 {strides = array<i32>} : memref<512x16xf32, #tpu.memory_space<vmem>>, vector<512x16xf32>,
    return
  }
}

</mosaic_0001>

<llo_original>
// kernel: decoder_block_forward.1
$region0: #{decoder_block_forward.1}
  #allocation0 [shape = 'u32[]', space=smem, size = 0x4, offset = 0x4, fixed_abs, tag = 'smem constant byte address 0x4 - core index']
  #allocation1 [shape = 'u32[72,128]{1,0:T(1,128)}', space=vmem, size = 0x9000, scoped, tag = 'internal scratch']
  %s0 = inlined_call_operand.vmem [shape: f32[2,64,32], index: 0, kind: input, shape index: {}]
  %s1 = inlined_call_operand.vmem [shape: f32[2,128,32], index: 1, kind: input, shape index: {}]
  %s2 = inlined_call_operand.vmem [shape: f32[1,32], index: 2, kind: input, shape index: {}]
  %s3 = inlined_call_operand.vmem [shape: f32[1,32], index: 3, kind: input, shape index: {}]
  %s4 = inlined_call_operand.vmem [shape: f32[32,32], index: 4, kind: input, shape index: {}]
  %s5 = inlined_call_operand.vmem [shape: f32[1,32], index: 5, kind: input, shape index: {}]
  %s6 = inlined_call_operand.vmem [shape: f32[32,32], index: 6, kind: input, shape index: {}]
  %s7 = inlined_call_operand.vmem [shape: f32[1,32], index: 7, kind: input, shape index: {}]
  %s8 = inlined_call_operand.vmem [shape: f32[4,32,32], index: 8, kind: input, shape index: {}]
  %s9 = inlined_call_operand.vmem [shape: f32[1,32], index: 9, kind: input, shape index: {}]
  %s10 = inlined_call_operand.vmem [shape: f32[512,32], index: 10, kind: input, shape index: {}]
  %s11 = inlined_call_operand.vmem [shape: f32[32,256], index: 11, kind: input, shape index: {}]
  %s12 = inlined_call_operand.vmem [shape: f32[1,16], index: 12, kind: input, shape index: {}]
  %s13 = inlined_call_operand.vmem [shape: f32[3,3,64,1], index: 13, kind: input, shape index: {}]
  %s14 = inlined_call_operand.vmem [shape: f32[1,16], index: 14, kind: input, shape index: {}]
  %s15 = inlined_call_operand.vmem [shape: f32[1,16], index: 15, kind: input, shape index: {}]
  %s16 = inlined_call_operand.vmem [shape: f32[512,16], index: 16, kind: output, shape index: {0}]
  %s17 = inlined_call_operand.vmem [shape: f32[2,64,8], index: 17, kind: output, shape index: {1}]
  %18 = xla_tuple %s16, %s17
  %s19 = sld [smem:[#allocation0]]
  $region82: #{decoder_block_forward.1} parent=0
    _
  %s21 = ssub.s32 1, %s19
  %s22 = scalar_select 0, %s21, %s19
  // Predicated region
  $region2: #{decoder_block_forward.1} parent=0 // pred_check
    _
  $region3: #{decoder_block_forward.1} parent=0 // pred_check_branch
    %24 = sbr.rel (0) target = $region5
  $region4: #{decoder_block_forward.1} parent=0 // pred_region
    _
  $region5: #{decoder_block_forward.1} parent=0 // pred_fallthru
    _
  // Predicated region
  $region6: #{decoder_block_forward.1} parent=0 // pred_check
    _
  $region7: #{decoder_block_forward.1} parent=0 // pred_check_branch
    %26 = sbr.rel (0) target = $region9
  $region8: #{decoder_block_forward.1} parent=0 // pred_region
    _
  $region9: #{decoder_block_forward.1} parent=0 // pred_fallthru
    _
  // Predicated region
  $region10: #{decoder_block_forward.1} parent=0 // pred_check
    _
  $region11: #{decoder_block_forward.1} parent=0 // pred_check_branch
    %28 = sbr.rel (0) target = $region13
  $region12: #{decoder_block_forward.1} parent=0 // pred_region
    _
  $region13: #{decoder_block_forward.1} parent=0 // pred_fallthru
    _
  // Predicated region
  $region14: #{decoder_block_forward.1} parent=0 // pred_check
    _
  $region15: #{decoder_block_forward.1} parent=0 // pred_check_branch
    %30 = sbr.rel (0) target = $region17
  $region16: #{decoder_block_forward.1} parent=0 // pred_region
    _
  $region17: #{decoder_block_forward.1} parent=0 // pred_fallthru
    _
  // Predicated region
  $region18: #{decoder_block_forward.1} parent=0 // pred_check
    _
  $region19: #{decoder_block_forward.1} parent=0 // pred_check_branch
    %32 = sbr.rel (0) target = $region21
  $region20: #{decoder_block_forward.1} parent=0 // pred_region
    _
  $region21: #{decoder_block_forward.1} parent=0 // pred_fallthru
    _
  // Predicated region
  $region22: #{decoder_block_forward.1} parent=0 // pred_check
    _
  $region23: #{decoder_block_forward.1} parent=0 // pred_check_branch
    %34 = sbr.rel (0) target = $region25
  $region24: #{decoder_block_forward.1} parent=0 // pred_region
    _
  $region25: #{decoder_block_forward.1} parent=0 // pred_fallthru
    _
  // Predicated region
  $region26: #{decoder_block_forward.1} parent=0 // pred_check
    _
  $region27: #{decoder_block_forward.1} parent=0 // pred_check_branch
    %36 = sbr.rel (0) target = $region29
  $region28: #{decoder_block_forward.1} parent=0 // pred_region
    _
  $region29: #{decoder_block_forward.1} parent=0 // pred_fallthru
    _
  // Predicated region
  $region30: #{decoder_block_forward.1} parent=0 // pred_check
    _
  $region31: #{decoder_block_forward.1} parent=0 // pred_check_branch
    %38 = sbr.rel (0) target = $region33
  $region32: #{decoder_block_forward.1} parent=0 // pred_region
    _
  $region33: #{decoder_block_forward.1} parent=0 // pred_fallthru
    _
  // Predicated region
  $region34: #{decoder_block_forward.1} parent=0 // pred_check
    _
  $region35: #{decoder_block_forward.1} parent=0 // pred_check_branch
    %40 = sbr.rel (0) target = $region37
  $region36: #{decoder_block_forward.1} parent=0 // pred_region
    _
  $region37: #{decoder_block_forward.1} parent=0 // pred_fallthru
    _
  // Predicated region
  $region38: #{decoder_block_forward.1} parent=0 // pred_check
    _
  $region39: #{decoder_block_forward.1} parent=0 // pred_check_branch
    %42 = sbr.rel (0) target = $region41
  $region40: #{decoder_block_forward.1} parent=0 // pred_region
    _
  $region41: #{decoder_block_forward.1} parent=0 // pred_fallthru
    _
  // Predicated region
  $region42: #{decoder_block_forward.1} parent=0 // pred_check
    _
  $region43: #{decoder_block_forward.1} parent=0 // pred_check_branch
    %44 = sbr.rel (0) target = $region45
  $region44: #{decoder_block_forward.1} parent=0 // pred_region
    _
  $region45: #{decoder_block_forward.1} parent=0 // pred_fallthru
    _
  // Predicated region
  $region46: #{decoder_block_forward.1} parent=0 // pred_check
    _
  $region47: #{decoder_block_forward.1} parent=0 // pred_check_branch
    %46 = sbr.rel (0) target = $region49
  $region48: #{decoder_block_forward.1} parent=0 // pred_region
    _
  $region49: #{decoder_block_forward.1} parent=0 // pred_fallthru
    _
  // Predicated region
  $region50: #{decoder_block_forward.1} parent=0 // pred_check
    _
  $region51: #{decoder_block_forward.1} parent=0 // pred_check_branch
    %48 = sbr.rel (0) target = $region53
  $region52: #{decoder_block_forward.1} parent=0 // pred_region
    _
  $region53: #{decoder_block_forward.1} parent=0 // pred_fallthru
    _
  // Predicated region
  $region54: #{decoder_block_forward.1} parent=0 // pred_check
    _
  $region55: #{decoder_block_forward.1} parent=0 // pred_check_branch
    %50 = sbr.rel (0) target = $region57
  $region56: #{decoder_block_forward.1} parent=0 // pred_region
    _
  $region57: #{decoder_block_forward.1} parent=0 // pred_fallthru
    _
  // Predicated region
  $region58: #{decoder_block_forward.1} parent=0 // pred_check
    _
  $region59: #{decoder_block_forward.1} parent=0 // pred_check_branch
    %52 = sbr.rel (0) target = $region61
  $region60: #{decoder_block_forward.1} parent=0 // pred_region
    _
  $region61: #{decoder_block_forward.1} parent=0 // pred_fallthru
    _
  // Predicated region
  $region62: #{decoder_block_forward.1} parent=0 // pred_check
    _
  $region63: #{decoder_block_forward.1} parent=0 // pred_check_branch
    %54 = sbr.rel (0) target = $region65
  $region64: #{decoder_block_forward.1} parent=0 // pred_region
    _
  $region65: #{decoder_block_forward.1} parent=0 // pred_fallthru
    _
  %v55 = vld [vmem:[%s2] sm:$0x1]
  %v56 = vld [vmem:[%s3] sm:$0x1]
  %v57 = vld [vmem:[%s4] sm:$0xff]
  %v58 = vld [vmem:[%s4 + $0x8] sm:$0xff]
  %v59 = vld [vmem:[%s4 + $0x10] sm:$0xff]
  %v60 = vld [vmem:[%s4 + $0x18] sm:$0xff]
  %v61 = vld [vmem:[%s5] sm:$0x1]
  %v62 = vld [vmem:[%s6] sm:$0xff]
  %v63 = vld [vmem:[%s6 + $0x8] sm:$0xff]
  %v64 = vld [vmem:[%s6 + $0x10] sm:$0xff]
  %v65 = vld [vmem:[%s6 + $0x18] sm:$0xff]
  %v66 = vld [vmem:[%s7] sm:$0x1]
  %v67 = vld [vmem:[%s10] sm:$0xff]
  %v68 = vld [vmem:[%s10 + $0x8] sm:$0xff]
  %v69 = vld [vmem:[%s10 + $0x10] sm:$0xff]
  %v70 = vld [vmem:[%s10 + $0x18] sm:$0xff]
  %v71 = vld [vmem:[%s10 + $0x20] sm:$0xff]
  %v72 = vld [vmem:[%s10 + $0x28] sm:$0xff]
  %v73 = vld [vmem:[%s10 + $0x30] sm:$0xff]
  %v74 = vld [vmem:[%s10 + $0x38] sm:$0xff]
  %v75 = vld [vmem:[%s10 + $0x40] sm:$0xff]
  %v76 = vld [vmem:[%s10 + $0x48] sm:$0xff]
  %v77 = vld [vmem:[%s10 + $0x50] sm:$0xff]
  %v78 = vld [vmem:[%s10 + $0x58] sm:$0xff]
  %v79 = vld [vmem:[%s10 + $0x60] sm:$0xff]
  %v80 = vld [vmem:[%s10 + $0x68] sm:$0xff]
  %v81 = vld [vmem:[%s10 + $0x70] sm:$0xff]
  %v82 = vld [vmem:[%s10 + $0x78] sm:$0xff]
  %v83 = vld [vmem:[%s10 + $0x80] sm:$0xff]
  %v84 = vld [vmem:[%s10 + $0x88] sm:$0xff]
  %v85 = vld [vmem:[%s10 + $0x90] sm:$0xff]
  %v86 = vld [vmem:[%s10 + $0x98] sm:$0xff]
  %v87 = vld [vmem:[%s10 + $0xa0] sm:$0xff]
  %v88 = vld [vmem:[%s10 + $0xa8] sm:$0xff]
  %v89 = vld [vmem:[%s10 + $0xb0] sm:$0xff]
  %v90 = vld [vmem:[%s10 + $0xb8] sm:$0xff]
  %v91 = vld [vmem:[%s10 + $0xc0] sm:$0xff]
  %v92 = vld [vmem:[%s10 + $0xc8] sm:$0xff]
  %v93 = vld [vmem:[%s10 + $0xd0] sm:$0xff]
  %v94 = vld [vmem:[%s10 + $0xd8] sm:$0xff]
  %v95 = vld [vmem:[%s10 + $0xe0] sm:$0xff]
  %v96 = vld [vmem:[%s10 + $0xe8] sm:$0xff]
  %v97 = vld [vmem:[%s10 + $0xf0] sm:$0xff]
  %v98 = vld [vmem:[%s10 + $0xf8] sm:$0xff]
  %v99 = vld [vmem:[%s10 + $0x100] sm:$0xff]
  %v100 = vld [vmem:[%s10 + $0x108] sm:$0xff]
  %v101 = vld [vmem:[%s10 + $0x110] sm:$0xff]
  %v102 = vld [vmem:[%s10 + $0x118] sm:$0xff]
  %v103 = vld [vmem:[%s10 + $0x120] sm:$0xff]
  %v104 = vld [vmem:[%s10 + $0x128] sm:$0xff]
  %v105 = vld [vmem:[%s10 + $0x130] sm:$0xff]
  %v106 = vld [vmem:[%s10 + $0x138] sm:$0xff]
  %v107 = vld [vmem:[%s10 + $0x140] sm:$0xff]
  %v108 = vld [vmem:[%s10 + $0x148] sm:$0xff]
  %v109 = vld [vmem:[%s10 + $0x150] sm:$0xff]
  %v110 = vld [vmem:[%s10 + $0x158] sm:$0xff]
  %v111 = vld [vmem:[%s10 + $0x160] sm:$0xff]
  %v112 = vld [vmem:[%s10 + $0x168] sm:$0xff]
  %v113 = vld [vmem:[%s10 + $0x170] sm:$0xff]
  %v114 = vld [vmem:[%s10 + $0x178] sm:$0xff]
  %v115 = vld [vmem:[%s10 + $0x180] sm:$0xff]
  %v116 = vld [vmem:[%s10 + $0x188] sm:$0xff]
  %v117 = vld [vmem:[%s10 + $0x190] sm:$0xff]
  %v118 = vld [vmem:[%s10 + $0x198] sm:$0xff]
  %v119 = vld [vmem:[%s10 + $0x1a0] sm:$0xff]
  %v120 = vld [vmem:[%s10 + $0x1a8] sm:$0xff]
  %v121 = vld [vmem:[%s10 + $0x1b0] sm:$0xff]
  %v122 = vld [vmem:[%s10 + $0x1b8] sm:$0xff]
  %v123 = vld [vmem:[%s10 + $0x1c0] sm:$0xff]
  %v124 = vld [vmem:[%s10 + $0x1c8] sm:$0xff]
  %v125 = vld [vmem:[%s10 + $0x1d0] sm:$0xff]
  %v126 = vld [vmem:[%s10 + $0x1d8] sm:$0xff]
  %v127 = vld [vmem:[%s10 + $0x1e0] sm:$0xff]
  %v128 = vld [vmem:[%s10 + $0x1e8] sm:$0xff]
  %v129 = vld [vmem:[%s10 + $0x1f0] sm:$0xff]
  %v130 = vld [vmem:[%s10 + $0x1f8] sm:$0xff]
  %v131 = vld [vmem:[%s9] sm:$0x1]
  %v132 = vlaneseq
  %v133 = vand.u32 %v132, 127
  %vm134 = vcmp.lt.s32.totalorder %v133, 8
  %v135 = vsel %vm134, 1, 0
  %v136 = vcvt.s32.f32 %v135
  %v137 = vld [vmem:[%s0] sm:$0xff]
  %v138 = vld [vmem:[%s0 + $0x8] sm:$0xff]
  %v139 = vld [vmem:[%s0 + $0x10] sm:$0xff]
  %v140 = vld [vmem:[%s0 + $0x18] sm:$0xff]
  %v141 = vld [vmem:[%s0 + $0x20] sm:$0xff]
  %v142 = vld [vmem:[%s0 + $0x28] sm:$0xff]
  %v143 = vld [vmem:[%s0 + $0x30] sm:$0xff]
  %v144 = vld [vmem:[%s0 + $0x38] sm:$0xff]
  %v145 = vld [vmem:[%s1] sm:$0xff]
  %v146 = vld [vmem:[%s1 + $0x8] sm:$0xff]
  %v147 = vld [vmem:[%s1 + $0x10] sm:$0xff]
  %v148 = vld [vmem:[%s1 + $0x18] sm:$0xff]
  %v149 = vld [vmem:[%s1 + $0x20] sm:$0xff]
  %v150 = vld [vmem:[%s1 + $0x28] sm:$0xff]
  %v151 = vld [vmem:[%s1 + $0x30] sm:$0xff]
  %v152 = vld [vmem:[%s1 + $0x38] sm:$0xff]
  %v153 = vld [vmem:[%s1 + $0x40] sm:$0xff]
  %v154 = vld [vmem:[%s1 + $0x48] sm:$0xff]
  %v155 = vld [vmem:[%s1 + $0x50] sm:$0xff]
  %v156 = vld [vmem:[%s1 + $0x58] sm:$0xff]
  %v157 = vld [vmem:[%s1 + $0x60] sm:$0xff]
  %v158 = vld [vmem:[%s1 + $0x68] sm:$0xff]
  %v159 = vld [vmem:[%s1 + $0x70] sm:$0xff]
  %v160 = vld [vmem:[%s1 + $0x78] sm:$0xff]
  %vm161 = vcmask 261120
  %v162 = vsel %vm161, %v137, 0.0
  %163 = vadd.xlane.f32.xlu0 %v162
  %v164 = vpop.xlane.xlu0 %163
  %v165 = vsel %vm161, %v138, 0.0
  %166 = vadd.xlane.f32.xlu0 %v165
  %v167 = vpop.xlane.xlu0 %166
  %v168 = vsel %vm161, %v139, 0.0
  %169 = vadd.xlane.f32.xlu0 %v168
  %v170 = vpop.xlane.xlu0 %169
  %v171 = vsel %vm161, %v140, 0.0
  %172 = vadd.xlane.f32.xlu0 %v171
  %v173 = vpop.xlane.xlu0 %172
  %v174 = vsel %vm161, %v141, 0.0
  %175 = vadd.xlane.f32.xlu0 %v174
  %v176 = vpop.xlane.xlu0 %175
  %v177 = vsel %vm161, %v142, 0.0
  %178 = vadd.xlane.f32.xlu0 %v177
  %v179 = vpop.xlane.xlu0 %178
  %v180 = vsel %vm161, %v143, 0.0
  %181 = vadd.xlane.f32.xlu0 %v180
  %v182 = vpop.xlane.xlu0 %181
  %v183 = vsel %vm161, %v144, 0.0
  %184 = vadd.xlane.f32.xlu0 %v183
  %v185 = vpop.xlane.xlu0 %184
  %v186 = vrcp.pop 32.0
  %v187 = vmul.f32 32.0, %v186
  %v188 = vsub.f32 1.0, %v187
  %v189 = vmul.f32 %v186, %v188
  %v190 = vadd.f32 %v186, %v189
  %vm191 = vweird.f32 %v186
  %v192 = vsel %vm191, %v186, %v190
  %v193 = vmul.f32 %v164, %v192
  %v194 = vmul.f32 %v167, %v192
  %v195 = vmul.f32 %v170, %v192
  %v196 = vmul.f32 %v173, %v192
  %v197 = vmul.f32 %v176, %v192
  %v198 = vmul.f32 %v179, %v192
  %v199 = vmul.f32 %v182, %v192
  %v200 = vmul.f32 %v185, %v192
  %v201 = vsub.f32 %v137, %v193
  %v202 = vsub.f32 %v138, %v194
  %v203 = vsub.f32 %v139, %v195
  %v204 = vsub.f32 %v140, %v196
  %v205 = vsub.f32 %v141, %v197
  %v206 = vsub.f32 %v142, %v198
  %v207 = vsub.f32 %v143, %v199
  %v208 = vsub.f32 %v144, %v200
  %v209 = vmul.f32 %v201, %v201
  %v210 = vmul.f32 %v202, %v202
  %v211 = vmul.f32 %v203, %v203
  %v212 = vmul.f32 %v204, %v204
  %v213 = vmul.f32 %v205, %v205
  %v214 = vmul.f32 %v206, %v206
  %v215 = vmul.f32 %v207, %v207
  %v216 = vmul.f32 %v208, %v208
  %v217 = vsel %vm161, %v209, 0.0
  %218 = vadd.xlane.f32.xlu0 %v217
  %v219 = vpop.xlane.xlu0 %218
  %v220 = vsel %vm161, %v210, 0.0
  %221 = vadd.xlane.f32.xlu0 %v220
  %v222 = vpop.xlane.xlu0 %221
  %v223 = vsel %vm161, %v211, 0.0
  %224 = vadd.xlane.f32.xlu0 %v223
  %v225 = vpop.xlane.xlu0 %224
  %v226 = vsel %vm161, %v212, 0.0
  %227 = vadd.xlane.f32.xlu0 %v226
  %v228 = vpop.xlane.xlu0 %227
  %v229 = vsel %vm161, %v213, 0.0
  %230 = vadd.xlane.f32.xlu0 %v229
  %v231 = vpop.xlane.xlu0 %230
  %v232 = vsel %vm161, %v214, 0.0
  %233 = vadd.xlane.f32.xlu0 %v232
  %v234 = vpop.xlane.xlu0 %233
  %v235 = vsel %vm161, %v215, 0.0
  %236 = vadd.xlane.f32.xlu0 %v235
  %v237 = vpop.xlane.xlu0 %236
  %v238 = vsel %vm161, %v216, 0.0
  %239 = vadd.xlane.f32.xlu0 %v238
  %v240 = vpop.xlane.xlu0 %239
  %v241 = vmul.f32 %v219, %v192
  %v242 = vmul.f32 %v222, %v192
  %v243 = vmul.f32 %v225, %v192
  %v244 = vmul.f32 %v228, %v192
  %v245 = vmul.f32 %v231, %v192
  %v246 = vmul.f32 %v234, %v192
  %v247 = vmul.f32 %v237, %v192
  %v248 = vmul.f32 %v240, %v192
  %v249 = vadd.f32 %v241, 1e-05
  %v250 = vadd.f32 %v242, 1e-05
  %v251 = vadd.f32 %v243, 1e-05
  %v252 = vadd.f32 %v244, 1e-05
  %v253 = vadd.f32 %v245, 1e-05
  %v254 = vadd.f32 %v246, 1e-05
  %v255 = vadd.f32 %v247, 1e-05
  %v256 = vadd.f32 %v248, 1e-05
  %v257 = vrsqrt.pop %v249
  %v258 = vmul.f32 %v257, %v249
  %v259 = vmul.f32 %v258, %v257
  %v260 = vmul.f32 0.5, %v259
  %v261 = vsub.f32 1.5, %v260
  %v262 = vmul.f32 %v257, %v261
  %vm263 = vweird.f32 %v249
  %vm264 = vweird.f32 %v257
  %vm265 = vmor %vm263, %vm264
  %v266 = vsel %vm265, %v257, %v262
  %v267 = vrsqrt.pop %v250
  %v268 = vmul.f32 %v267, %v250
  %v269 = vmul.f32 %v268, %v267
  %v270 = vmul.f32 0.5, %v269
  %v271 = vsub.f32 1.5, %v270
  %v272 = vmul.f32 %v267, %v271
  %vm273 = vweird.f32 %v250
  %vm274 = vweird.f32 %v267
  %vm275 = vmor %vm273, %vm274
  %v276 = vsel %vm275, %v267, %v272
  %v277 = vrsqrt.pop %v251
  %v278 = vmul.f32 %v277, %v251
  %v279 = vmul.f32 %v278, %v277
  %v280 = vmul.f32 0.5, %v279
  %v281 = vsub.f32 1.5, %v280
  %v282 = vmul.f32 %v277, %v281
  %vm283 = vweird.f32 %v251
  %vm284 = vweird.f32 %v277
  %vm285 = vmor %vm283, %vm284
  %v286 = vsel %vm285, %v277, %v282
  %v287 = vrsqrt.pop %v252
  %v288 = vmul.f32 %v287, %v252
  %v289 = vmul.f32 %v288, %v287
  %v290 = vmul.f32 0.5, %v289
  %v291 = vsub.f32 1.5, %v290
  %v292 = vmul.f32 %v287, %v291
  %vm293 = vweird.f32 %v252
  %vm294 = vweird.f32 %v287
  %vm295 = vmor %vm293, %vm294
  %v296 = vsel %vm295, %v287, %v292
  %v297 = vrsqrt.pop %v253
  %v298 = vmul.f32 %v297, %v253
  %v299 = vmul.f32 %v298, %v297
  %v300 = vmul.f32 0.5, %v299
  %v301 = vsub.f32 1.5, %v300
  %v302 = vmul.f32 %v297, %v301
  %vm303 = vweird.f32 %v253
  %vm304 = vweird.f32 %v297
  %vm305 = vmor %vm303, %vm304
  %v306 = vsel %vm305, %v297, %v302
  %v307 = vrsqrt.pop %v254
  %v308 = vmul.f32 %v307, %v254
  %v309 = vmul.f32 %v308, %v307
  %v310 = vmul.f32 0.5, %v309
  %v311 = vsub.f32 1.5, %v310
  %v312 = vmul.f32 %v307, %v311
  %vm313 = vweird.f32 %v254
  %vm314 = vweird.f32 %v307
  %vm315 = vmor %vm313, %vm314
  %v316 = vsel %vm315, %v307, %v312
  %v317 = vrsqrt.pop %v255
  %v318 = vmul.f32 %v317, %v255
  %v319 = vmul.f32 %v318, %v317
  %v320 = vmul.f32 0.5, %v319
  %v321 = vsub.f32 1.5, %v320
  %v322 = vmul.f32 %v317, %v321
  %vm323 = vweird.f32 %v255
  %vm324 = vweird.f32 %v317
  %vm325 = vmor %vm323, %vm324
  %v326 = vsel %vm325, %v317, %v322
  %v327 = vrsqrt.pop %v256
  %v328 = vmul.f32 %v327, %v256
  %v329 = vmul.f32 %v328, %v327
  %v330 = vmul.f32 0.5, %v329
  %v331 = vsub.f32 1.5, %v330
  %v332 = vmul.f32 %v327, %v331
  %vm333 = vweird.f32 %v256
  %vm334 = vweird.f32 %v327
  %vm335 = vmor %vm333, %vm334
  %v336 = vsel %vm335, %v327, %v332
  %v337 = vmul.f32 %v201, %v266
  %v338 = vmul.f32 %v202, %v276
  %v339 = vmul.f32 %v203, %v286
  %v340 = vmul.f32 %v204, %v296
  %v341 = vmul.f32 %v205, %v306
  %v342 = vmul.f32 %v206, %v316
  %v343 = vmul.f32 %v207, %v326
  %v344 = vmul.f32 %v208, %v336
  %v346 = vperm.slane %v55, 0
  %v348 = vmul.f32 %v337, %v346
  %v349 = vmul.f32 %v338, %v346
  %v350 = vmul.f32 %v339, %v346
  %v351 = vmul.f32 %v340, %v346
  %v352 = vmul.f32 %v341, %v346
  %v353 = vmul.f32 %v342, %v346
  %v354 = vmul.f32 %v343, %v346
  %v355 = vmul.f32 %v344, %v346
  %v357 = vperm.slane %v56, 0
  %v359 = vadd.f32 %v348, %v357
  %v360 = vadd.f32 %v349, %v357
  %v361 = vadd.f32 %v350, %v357
  %v362 = vadd.f32 %v351, %v357
  %v363 = vadd.f32 %v352, %v357
  %v364 = vadd.f32 %v353, %v357
  %v365 = vadd.f32 %v354, %v357
  %v366 = vadd.f32 %v355, %v357
  %v368 = vperm.slane %v61, 0
  %v371 = vsel %vm161, %v359, 0
  %v374 = vsel %vm161, %v360, 0
  %v377 = vsel %vm161, %v361, 0
  %v380 = vsel %vm161, %v362, 0
  %v383 = vsel %vm161, %v363, 0
  %v386 = vsel %vm161, %v364, 0
  %v389 = vsel %vm161, %v365, 0
  %v392 = vsel %vm161, %v366, 0
  %394 = vmatpush.msra.mxu0 0.0
  %395 = vmatpush.msra.mxu0 0.0
  %396 = vmatpush.msra.mxu0 0.0
  %397 = vmatpush.msra.mxu0 0.0
  %398 = vmatpush.msra.mxu0 0.0
  %399 = vmatpush.msra.mxu0 0.0
  %400 = vmatpush.msra.mxu0 0.0
  %401 = vmatpush.msra.mxu0 0.0
  %402 = vmatpush.msra.mxu0 0.0
  %403 = vmatpush.msra.mxu0 0.0
  %404 = vmatpush.msra.mxu0 0.0
  %405 = vmatpush.msra.mxu0 0.0
  %406 = vmatpush.msra.mxu0 %v60
  %407 = vmatpush.msra.mxu0 %v59
  %408 = vmatpush.msra.mxu0 %v58
  %409 = vmatpush.msra.mxu0 %v57
  %410 = vmatmul.f32.gmra.mxu0 %v371
  %v411 = vpop.f32.mrf.mxu0
  %v412 = vadd.f32 %v368, %v411
  %413 = vmatmul.f32.gmra.mxu0 %v374
  %v414 = vpop.f32.mrf.mxu0
  %v415 = vadd.f32 %v368, %v414
  %416 = vmatmul.f32.gmra.mxu0 %v377
  %v417 = vpop.f32.mrf.mxu0
  %v418 = vadd.f32 %v368, %v417
  %419 = vmatmul.f32.gmra.mxu0 %v380
  %v420 = vpop.f32.mrf.mxu0
  %v421 = vadd.f32 %v368, %v420
  %422 = vmatmul.f32.gmra.mxu0 %v383
  %v423 = vpop.f32.mrf.mxu0
  %v424 = vadd.f32 %v368, %v423
  %425 = vmatmul.f32.gmra.mxu0 %v386
  %v426 = vpop.f32.mrf.mxu0
  %v427 = vadd.f32 %v368, %v426
  %428 = vmatmul.f32.gmra.mxu0 %v389
  %v429 = vpop.f32.mrf.mxu0
  %v430 = vadd.f32 %v368, %v429
  %431 = vmatmul.f32.gmra.mxu0 %v392
  %v432 = vpop.f32.mrf.mxu0
  %v433 = vadd.f32 %v368, %v432
  %434 = vdwg.mxu0
  %v436 = vperm.slane %v66, 0
  %v439 = vsel %vm161, %v145, 0
  %v442 = vsel %vm161, %v146, 0
  %v445 = vsel %vm161, %v147, 0
  %v448 = vsel %vm161, %v148, 0
  %v451 = vsel %vm161, %v149, 0
  %v454 = vsel %vm161, %v150, 0
  %v457 = vsel %vm161, %v151, 0
  %v460 = vsel %vm161, %v152, 0
  %v463 = vsel %vm161, %v153, 0
  %v466 = vsel %vm161, %v154, 0
  %v469 = vsel %vm161, %v155, 0
  %v472 = vsel %vm161, %v156, 0
  %v475 = vsel %vm161, %v157, 0
  %v478 = vsel %vm161, %v158, 0
  %v481 = vsel %vm161, %v159, 0
  %v484 = vsel %vm161, %v160, 0
  %486 = vmatpush.msra.mxu0 0.0
  %487 = vmatpush.msra.mxu0 0.0
  %488 = vmatpush.msra.mxu0 0.0
  %489 = vmatpush.msra.mxu0 0.0
  %490 = vmatpush.msra.mxu0 0.0
  %491 = vmatpush.msra.mxu0 0.0
  %492 = vmatpush.msra.mxu0 0.0
  %493 = vmatpush.msra.mxu0 0.0
  %494 = vmatpush.msra.mxu0 0.0
  %495 = vmatpush.msra.mxu0 0.0
  %496 = vmatpush.msra.mxu0 0.0
  %497 = vmatpush.msra.mxu0 0.0
  %498 = vmatpush.msra.mxu0 %v65
  %499 = vmatpush.msra.mxu0 %v64
  %500 = vmatpush.msra.mxu0 %v63
  %501 = vmatpush.msra.mxu0 %v62
  %502 = vmatmul.f32.gmra.mxu0 %v439
  %v503 = vpop.f32.mrf.mxu0
  %v504 = vadd.f32 %v436, %v503
  %505 = vmatmul.f32.gmra.mxu0 %v442
  %v506 = vpop.f32.mrf.mxu0
  %v507 = vadd.f32 %v436, %v506
  %508 = vmatmul.f32.gmra.mxu0 %v445
  %v509 = vpop.f32.mrf.mxu0
  %v510 = vadd.f32 %v436, %v509
  %511 = vmatmul.f32.gmra.mxu0 %v448
  %v512 = vpop.f32.mrf.mxu0
  %v513 = vadd.f32 %v436, %v512
  %514 = vmatmul.f32.gmra.mxu0 %v451
  %v515 = vpop.f32.mrf.mxu0
  %v516 = vadd.f32 %v436, %v515
  %517 = vmatmul.f32.gmra.mxu0 %v454
  %v518 = vpop.f32.mrf.mxu0
  %v519 = vadd.f32 %v436, %v518
  %520 = vmatmul.f32.gmra.mxu0 %v457
  %v521 = vpop.f32.mrf.mxu0
  %v522 = vadd.f32 %v436, %v521
  %523 = vmatmul.f32.gmra.mxu0 %v460
  %v524 = vpop.f32.mrf.mxu0
  %v525 = vadd.f32 %v436, %v524
  %526 = vmatmul.f32.gmra.mxu0 %v463
  %v527 = vpop.f32.mrf.mxu0
  %v528 = vadd.f32 %v436, %v527
  %529 = vmatmul.f32.gmra.mxu0 %v466
  %v530 = vpop.f32.mrf.mxu0
  %v531 = vadd.f32 %v436, %v530
  %532 = vmatmul.f32.gmra.mxu0 %v469
  %v533 = vpop.f32.mrf.mxu0
  %v534 = vadd.f32 %v436, %v533
  %535 = vmatmul.f32.gmra.mxu0 %v472
  %v536 = vpop.f32.mrf.mxu0
  %v537 = vadd.f32 %v436, %v536
  %538 = vmatmul.f32.gmra.mxu0 %v475
  %v539 = vpop.f32.mrf.mxu0
  %v540 = vadd.f32 %v436, %v539
  %541 = vmatmul.f32.gmra.mxu0 %v478
  %v542 = vpop.f32.mrf.mxu0
  %v543 = vadd.f32 %v436, %v542
  %544 = vmatmul.f32.gmra.mxu0 %v481
  %v545 = vpop.f32.mrf.mxu0
  %v546 = vadd.f32 %v436, %v545
  %547 = vmatmul.f32.gmra.mxu0 %v484
  %v548 = vpop.f32.mrf.mxu0
  %v549 = vadd.f32 %v436, %v548
  %550 = vdwg.mxu0
  %v551 = vmul.f32 %v504, %v67
  %v552 = vmul.f32 %v507, %v68
  %v553 = vmul.f32 %v510, %v69
  %v554 = vmul.f32 %v513, %v70
  %v555 = vmul.f32 %v516, %v71
  %v556 = vmul.f32 %v519, %v72
  %v557 = vmul.f32 %v522, %v73
  %v558 = vmul.f32 %v525, %v74
  %v559 = vmul.f32 %v528, %v75
  %v560 = vmul.f32 %v531, %v76
  %v561 = vmul.f32 %v534, %v77
  %v562 = vmul.f32 %v537, %v78
  %v563 = vmul.f32 %v540, %v79
  %v564 = vmul.f32 %v543, %v80
  %v565 = vmul.f32 %v546, %v81
  %v566 = vmul.f32 %v549, %v82
  %v567 = vmul.f32 %v504, %v83
  %v568 = vmul.f32 %v507, %v84
  %v569 = vmul.f32 %v510, %v85
  %v570 = vmul.f32 %v513, %v86
  %v571 = vmul.f32 %v516, %v87
  %v572 = vmul.f32 %v519, %v88
  %v573 = vmul.f32 %v522, %v89
  %v574 = vmul.f32 %v525, %v90
  %v575 = vmul.f32 %v528, %v91
  %v576 = vmul.f32 %v531, %v92
  %v577 = vmul.f32 %v534, %v93
  %v578 = vmul.f32 %v537, %v94
  %v579 = vmul.f32 %v540, %v95
  %v580 = vmul.f32 %v543, %v96
  %v581 = vmul.f32 %v546, %v97
  %v582 = vmul.f32 %v549, %v98
  %v583 = vmul.f32 %v504, %v99
  %v584 = vmul.f32 %v507, %v100
  %v585 = vmul.f32 %v510, %v101
  %v586 = vmul.f32 %v513, %v102
  %v587 = vmul.f32 %v516, %v103
  %v588 = vmul.f32 %v519, %v104
  %v589 = vmul.f32 %v522, %v105
  %v590 = vmul.f32 %v525, %v106
  %v591 = vmul.f32 %v528, %v107
  %v592 = vmul.f32 %v531, %v108
  %v593 = vmul.f32 %v534, %v109
  %v594 = vmul.f32 %v537, %v110
  %v595 = vmul.f32 %v540, %v111
  %v596 = vmul.f32 %v543, %v112
  %v597 = vmul.f32 %v546, %v113
  %v598 = vmul.f32 %v549, %v114
  %v599 = vmul.f32 %v504, %v115
  %v600 = vmul.f32 %v507, %v116
  %v601 = vmul.f32 %v510, %v117
  %v602 = vmul.f32 %v513, %v118
  %v603 = vmul.f32 %v516, %v119
  %v604 = vmul.f32 %v519, %v120
  %v605 = vmul.f32 %v522, %v121
  %v606 = vmul.f32 %v525, %v122
  %v607 = vmul.f32 %v528, %v123
  %v608 = vmul.f32 %v531, %v124
  %v609 = vmul.f32 %v534, %v125
  %v610 = vmul.f32 %v537, %v126
  %v611 = vmul.f32 %v540, %v127
  %v612 = vmul.f32 %v543, %v128
  %v613 = vmul.f32 %v546, %v129
  %v614 = vmul.f32 %v549, %v130
  %v616 = vsel %vm161, %v412, 0
  %v619 = vsel %vm161, %v415, 0
  %v622 = vsel %vm161, %v418, 0
  %v625 = vsel %vm161, %v421, 0
  %v628 = vsel %vm161, %v424, 0
  %v631 = vsel %vm161, %v427, 0
  %v634 = vsel %vm161, %v430, 0
  %v637 = vsel %vm161, %v433, 0
  %v640 = vsel %vm161, %v551, 0
  %v643 = vsel %vm161, %v552, 0
  %v646 = vsel %vm161, %v553, 0
  %v649 = vsel %vm161, %v554, 0
  %v652 = vsel %vm161, %v555, 0
  %v655 = vsel %vm161, %v556, 0
  %v658 = vsel %vm161, %v557, 0
  %v661 = vsel %vm161, %v558, 0
  %v664 = vsel %vm161, %v559, 0
  %v667 = vsel %vm161, %v560, 0
  %v670 = vsel %vm161, %v561, 0
  %v673 = vsel %vm161, %v562, 0
  %v676 = vsel %vm161, %v563, 0
  %v679 = vsel %vm161, %v564, 0
  %v682 = vsel %vm161, %v565, 0
  %v685 = vsel %vm161, %v566, 0
  %v688 = vsel %vm161, %v567, 0
  %v691 = vsel %vm161, %v568, 0
  %v694 = vsel %vm161, %v569, 0
  %v697 = vsel %vm161, %v570, 0
  %v700 = vsel %vm161, %v571, 0
  %v703 = vsel %vm161, %v572, 0
  %v706 = vsel %vm161, %v573, 0
  %v709 = vsel %vm161, %v574, 0
  %v712 = vsel %vm161, %v575, 0
  %v715 = vsel %vm161, %v576, 0
  %v718 = vsel %vm161, %v577, 0
  %v721 = vsel %vm161, %v578, 0
  %v724 = vsel %vm161, %v579, 0
  %v727 = vsel %vm161, %v580, 0
  %v730 = vsel %vm161, %v581, 0
  %v733 = vsel %vm161, %v582, 0
  %v736 = vsel %vm161, %v583, 0
  %v739 = vsel %vm161, %v584, 0
  %v742 = vsel %vm161, %v585, 0
  %v745 = vsel %vm161, %v586, 0
  %v748 = vsel %vm161, %v587, 0
  %v751 = vsel %vm161, %v588, 0
  %v754 = vsel %vm161, %v589, 0
  %v757 = vsel %vm161, %v590, 0
  %v760 = vsel %vm161, %v591, 0
  %v763 = vsel %vm161, %v592, 0
  %v766 = vsel %vm161, %v593, 0
  %v769 = vsel %vm161, %v594, 0
  %v772 = vsel %vm161, %v595, 0
  %v775 = vsel %vm161, %v596, 0
  %v778 = vsel %vm161, %v597, 0
  %v781 = vsel %vm161, %v598, 0
  %v784 = vsel %vm161, %v599, 0
  %v787 = vsel %vm161, %v600, 0
  %v790 = vsel %vm161, %v601, 0
  %v793 = vsel %vm161, %v602, 0
  %v796 = vsel %vm161, %v603, 0
  %v799 = vsel %vm161, %v604, 0
  %v802 = vsel %vm161, %v605, 0
  %v805 = vsel %vm161, %v606, 0
  %v808 = vsel %vm161, %v607, 0
  %v811 = vsel %vm161, %v608, 0
  %v814 = vsel %vm161, %v609, 0
  %v817 = vsel %vm161, %v610, 0
  %v820 = vsel %vm161, %v611, 0
  %v823 = vsel %vm161, %v612, 0
  %v826 = vsel %vm161, %v613, 0
  %v829 = vsel %vm161, %v614, 0
  %831 = vmatpush.xpose.msra.mxu0 %v685
  %832 = vmatpush.xpose.msra.mxu0 %v682
  %833 = vmatpush.xpose.msra.mxu0 %v679
  %834 = vmatpush.xpose.msra.mxu0 %v676
  %835 = vmatpush.xpose.msra.mxu0 %v673
  %836 = vmatpush.xpose.msra.mxu0 %v670
  %837 = vmatpush.xpose.msra.mxu0 %v667
  %838 = vmatpush.xpose.msra.mxu0 %v664
  %839 = vmatpush.xpose.msra.mxu0 %v661
  %840 = vmatpush.xpose.msra.mxu0 %v658
  %841 = vmatpush.xpose.msra.mxu0 %v655
  %842 = vmatpush.xpose.msra.mxu0 %v652
  %843 = vmatpush.xpose.msra.mxu0 %v649
  %844 = vmatpush.xpose.msra.mxu0 %v646
  %845 = vmatpush.xpose.msra.mxu0 %v643
  %846 = vmatpush.xpose.msra.mxu0 %v640
  %847 = vmatmul.f32.gmra.mxu0 %v616
  %v848 = vpop.f32.mrf.mxu0
  %v849 = vadd.f32 0.0, %v848
  %850 = vmatmul.f32.gmra.mxu0 %v619
  %v851 = vpop.f32.mrf.mxu0
  %v852 = vadd.f32 0.0, %v851
  %853 = vmatmul.f32.gmra.mxu0 %v622
  %v854 = vpop.f32.mrf.mxu0
  %v855 = vadd.f32 0.0, %v854
  %856 = vmatmul.f32.gmra.mxu0 %v625
  %v857 = vpop.f32.mrf.mxu0
  %v858 = vadd.f32 0.0, %v857
  %859 = vmatmul.f32.gmra.mxu0 %v628
  %v860 = vpop.f32.mrf.mxu0
  %v861 = vadd.f32 0.0, %v860
  %862 = vmatmul.f32.gmra.mxu0 %v631
  %v863 = vpop.f32.mrf.mxu0
  %v864 = vadd.f32 0.0, %v863
  %865 = vmatmul.f32.gmra.mxu0 %v634
  %v866 = vpop.f32.mrf.mxu0
  %v867 = vadd.f32 0.0, %v866
  %868 = vmatmul.f32.gmra.mxu0 %v637
  %v869 = vpop.f32.mrf.mxu0
  %v870 = vadd.f32 0.0, %v869
  %871 = vdwg.mxu0
  %872 = vmatpush.xpose.msra.mxu0 %v733
  %873 = vmatpush.xpose.msra.mxu0 %v730
  %874 = vmatpush.xpose.msra.mxu0 %v727
  %875 = vmatpush.xpose.msra.mxu0 %v724
  %876 = vmatpush.xpose.msra.mxu0 %v721
  %877 = vmatpush.xpose.msra.mxu0 %v718
  %878 = vmatpush.xpose.msra.mxu0 %v715
  %879 = vmatpush.xpose.msra.mxu0 %v712
  %880 = vmatpush.xpose.msra.mxu0 %v709
  %881 = vmatpush.xpose.msra.mxu0 %v706
  %882 = vmatpush.xpose.msra.mxu0 %v703
  %883 = vmatpush.xpose.msra.mxu0 %v700
  %884 = vmatpush.xpose.msra.mxu0 %v697
  %885 = vmatpush.xpose.msra.mxu0 %v694
  %886 = vmatpush.xpose.msra.mxu0 %v691
  %887 = vmatpush.xpose.msra.mxu0 %v688
  %888 = vmatmul.f32.gmra.mxu0 %v616
  %v889 = vpop.f32.mrf.mxu0
  %v890 = vadd.f32 0.0, %v889
  %891 = vmatmul.f32.gmra.mxu0 %v619
  %v892 = vpop.f32.mrf.mxu0
  %v893 = vadd.f32 0.0, %v892
  %894 = vmatmul.f32.gmra.mxu0 %v622
  %v895 = vpop.f32.mrf.mxu0
  %v896 = vadd.f32 0.0, %v895
  %897 = vmatmul.f32.gmra.mxu0 %v625
  %v898 = vpop.f32.mrf.mxu0
  %v899 = vadd.f32 0.0, %v898
  %900 = vmatmul.f32.gmra.mxu0 %v628
  %v901 = vpop.f32.mrf.mxu0
  %v902 = vadd.f32 0.0, %v901
  %903 = vmatmul.f32.gmra.mxu0 %v631
  %v904 = vpop.f32.mrf.mxu0
  %v905 = vadd.f32 0.0, %v904
  %906 = vmatmul.f32.gmra.mxu0 %v634
  %v907 = vpop.f32.mrf.mxu0
  %v908 = vadd.f32 0.0, %v907
  %909 = vmatmul.f32.gmra.mxu0 %v637
  %v910 = vpop.f32.mrf.mxu0
  %v911 = vadd.f32 0.0, %v910
  %912 = vdwg.mxu0
  %913 = vmatpush.xpose.msra.mxu0 %v781
  %914 = vmatpush.xpose.msra.mxu0 %v778
  %915 = vmatpush.xpose.msra.mxu0 %v775
  %916 = vmatpush.xpose.msra.mxu0 %v772
  %917 = vmatpush.xpose.msra.mxu0 %v769
  %918 = vmatpush.xpose.msra.mxu0 %v766
  %919 = vmatpush.xpose.msra.mxu0 %v763
  %920 = vmatpush.xpose.msra.mxu0 %v760
  %921 = vmatpush.xpose.msra.mxu0 %v757
  %922 = vmatpush.xpose.msra.mxu0 %v754
  %923 = vmatpush.xpose.msra.mxu0 %v751
  %924 = vmatpush.xpose.msra.mxu0 %v748
  %925 = vmatpush.xpose.msra.mxu0 %v745
  %926 = vmatpush.xpose.msra.mxu0 %v742
  %927 = vmatpush.xpose.msra.mxu0 %v739
  %928 = vmatpush.xpose.msra.mxu0 %v736
  %929 = vmatmul.f32.gmra.mxu0 %v616
  %v930 = vpop.f32.mrf.mxu0
  %v931 = vadd.f32 0.0, %v930
  %932 = vmatmul.f32.gmra.mxu0 %v619
  %v933 = vpop.f32.mrf.mxu0
  %v934 = vadd.f32 0.0, %v933
  %935 = vmatmul.f32.gmra.mxu0 %v622
  %v936 = vpop.f32.mrf.mxu0
  %v937 = vadd.f32 0.0, %v936
  %938 = vmatmul.f32.gmra.mxu0 %v625
  %v939 = vpop.f32.mrf.mxu0
  %v940 = vadd.f32 0.0, %v939
  %941 = vmatmul.f32.gmra.mxu0 %v628
  %v942 = vpop.f32.mrf.mxu0
  %v943 = vadd.f32 0.0, %v942
  %944 = vmatmul.f32.gmra.mxu0 %v631
  %v945 = vpop.f32.mrf.mxu0
  %v946 = vadd.f32 0.0, %v945
  %947 = vmatmul.f32.gmra.mxu0 %v634
  %v948 = vpop.f32.mrf.mxu0
  %v949 = vadd.f32 0.0, %v948
  %950 = vmatmul.f32.gmra.mxu0 %v637
  %v951 = vpop.f32.mrf.mxu0
  %v952 = vadd.f32 0.0, %v951
  %953 = vdwg.mxu0
  %954 = vmatpush.xpose.msra.mxu0 %v829
  %955 = vmatpush.xpose.msra.mxu0 %v826
  %956 = vmatpush.xpose.msra.mxu0 %v823
  %957 = vmatpush.xpose.msra.mxu0 %v820
  %958 = vmatpush.xpose.msra.mxu0 %v817
  %959 = vmatpush.xpose.msra.mxu0 %v814
  %960 = vmatpush.xpose.msra.mxu0 %v811
  %961 = vmatpush.xpose.msra.mxu0 %v808
  %962 = vmatpush.xpose.msra.mxu0 %v805
  %963 = vmatpush.xpose.msra.mxu0 %v802
  %964 = vmatpush.xpose.msra.mxu0 %v799
  %965 = vmatpush.xpose.msra.mxu0 %v796
  %966 = vmatpush.xpose.msra.mxu0 %v793
  %967 = vmatpush.xpose.msra.mxu0 %v790
  %968 = vmatpush.xpose.msra.mxu0 %v787
  %969 = vmatpush.xpose.msra.mxu0 %v784
  %970 = vmatmul.f32.gmra.mxu0 %v616
  %v971 = vpop.f32.mrf.mxu0
  %v972 = vadd.f32 0.0, %v971
  %973 = vmatmul.f32.gmra.mxu0 %v619
  %v974 = vpop.f32.mrf.mxu0
  %v975 = vadd.f32 0.0, %v974
  %976 = vmatmul.f32.gmra.mxu0 %v622
  %v977 = vpop.f32.mrf.mxu0
  %v978 = vadd.f32 0.0, %v977
  %979 = vmatmul.f32.gmra.mxu0 %v625
  %v980 = vpop.f32.mrf.mxu0
  %v981 = vadd.f32 0.0, %v980
  %982 = vmatmul.f32.gmra.mxu0 %v628
  %v983 = vpop.f32.mrf.mxu0
  %v984 = vadd.f32 0.0, %v983
  %985 = vmatmul.f32.gmra.mxu0 %v631
  %v986 = vpop.f32.mrf.mxu0
  %v987 = vadd.f32 0.0, %v986
  %988 = vmatmul.f32.gmra.mxu0 %v634
  %v989 = vpop.f32.mrf.mxu0
  %v990 = vadd.f32 0.0, %v989
  %991 = vmatmul.f32.gmra.mxu0 %v637
  %v992 = vpop.f32.mrf.mxu0
  %v993 = vadd.f32 0.0, %v992
  %994 = vdwg.mxu0
  %vm995 = vcmp.eq.s32.totalorder %v135, 1
  %v996 = vsel %vm995, %v849, -1e+30
  %v997 = vsel %vm995, %v852, -1e+30
  %v998 = vsel %vm995, %v855, -1e+30
  %v999 = vsel %vm995, %v858, -1e+30
  %v1000 = vsel %vm995, %v861, -1e+30
  %v1001 = vsel %vm995, %v864, -1e+30
  %v1002 = vsel %vm995, %v867, -1e+30
  %v1003 = vsel %vm995, %v870, -1e+30
  %1004 = vmax.xlane.f32.xlu0 %v996
  %v1005 = vpop.xlane.xlu0 %1004
  %1006 = vmax.xlane.f32.xlu0 %v997
  %v1007 = vpop.xlane.xlu0 %1006
  %1008 = vmax.xlane.f32.xlu0 %v998
  %v1009 = vpop.xlane.xlu0 %1008
  %1010 = vmax.xlane.f32.xlu0 %v999
  %v1011 = vpop.xlane.xlu0 %1010
  %1012 = vmax.xlane.f32.xlu0 %v1000
  %v1013 = vpop.xlane.xlu0 %1012
  %1014 = vmax.xlane.f32.xlu0 %v1001
  %v1015 = vpop.xlane.xlu0 %1014
  %1016 = vmax.xlane.f32.xlu0 %v1002
  %v1017 = vpop.xlane.xlu0 %1016
  %1018 = vmax.xlane.f32.xlu0 %v1003
  %v1019 = vpop.xlane.xlu0 %1018
  %v1020 = vsub.f32 %v849, %v1005
  %v1021 = vsub.f32 %v852, %v1007
  %v1022 = vsub.f32 %v855, %v1009
  %v1023 = vsub.f32 %v858, %v1011
  %v1024 = vsub.f32 %v861, %v1013
  %v1025 = vsub.f32 %v864, %v1015
  %v1026 = vsub.f32 %v867, %v1017
  %v1027 = vsub.f32 %v870, %v1019
  %v1028 = vmul.f32 %v1020, 1.442695
  %v1029 = vpow.pop %v1028
  %v1030 = vmul.f32 %v1021, 1.442695
  %v1031 = vpow.pop %v1030
  %v1032 = vmul.f32 %v1022, 1.442695
  %v1033 = vpow.pop %v1032
  %v1034 = vmul.f32 %v1023, 1.442695
  %v1035 = vpow.pop %v1034
  %v1036 = vmul.f32 %v1024, 1.442695
  %v1037 = vpow.pop %v1036
  %v1038 = vmul.f32 %v1025, 1.442695
  %v1039 = vpow.pop %v1038
  %v1040 = vmul.f32 %v1026, 1.442695
  %v1041 = vpow.pop %v1040
  %v1042 = vmul.f32 %v1027, 1.442695
  %v1043 = vpow.pop %v1042
  %v1044 = vmul.f32 %v1029, %v136
  %v1045 = vmul.f32 %v1031, %v136
  %v1046 = vmul.f32 %v1033, %v136
  %v1047 = vmul.f32 %v1035, %v136
  %v1048 = vmul.f32 %v1037, %v136
  %v1049 = vmul.f32 %v1039, %v136
  %v1050 = vmul.f32 %v1041, %v136
  %v1051 = vmul.f32 %v1043, %v136
  %1052 = vadd.xlane.f32.xlu0 %v1044
  %v1053 = vpop.xlane.xlu0 %1052
  %1054 = vadd.xlane.f32.xlu0 %v1045
  %v1055 = vpop.xlane.xlu0 %1054
  %1056 = vadd.xlane.f32.xlu0 %v1046
  %v1057 = vpop.xlane.xlu0 %1056
  %1058 = vadd.xlane.f32.xlu0 %v1047
  %v1059 = vpop.xlane.xlu0 %1058
  %1060 = vadd.xlane.f32.xlu0 %v1048
  %v1061 = vpop.xlane.xlu0 %1060
  %1062 = vadd.xlane.f32.xlu0 %v1049
  %v1063 = vpop.xlane.xlu0 %1062
  %1064 = vadd.xlane.f32.xlu0 %v1050
  %v1065 = vpop.xlane.xlu0 %1064
  %1066 = vadd.xlane.f32.xlu0 %v1051
  %v1067 = vpop.xlane.xlu0 %1066
  %v1068 = vrcp.pop %v1053
  %v1069 = vmul.f32 %v1053, %v1068
  %v1070 = vsub.f32 1.0, %v1069
  %v1071 = vmul.f32 %v1068, %v1070
  %v1072 = vadd.f32 %v1068, %v1071
  %vm1073 = vweird.f32 %v1053
  %vm1074 = vweird.f32 %v1068
  %vm1075 = vmor %vm1073, %vm1074
  %v1076 = vsel %vm1075, %v1068, %v1072
  %v1077 = vand.u32 2147483647, %v1053
  %vm1078 = vcmp.eq.f32.partialorder %v1077, 8.507059e+37
  %v1079 = vand.u32 %v1053, 2147483648
  %v1080 = vor.u32 1.1754944e-38, %v1079
  %v1081 = vsel %vm1078, %v1080, %v1076
  %v1082 = vmul.f32 %v1044, %v1081
  %v1083 = vrcp.pop %v1055
  %v1084 = vmul.f32 %v1055, %v1083
  %v1085 = vsub.f32 1.0, %v1084
  %v1086 = vmul.f32 %v1083, %v1085
  %v1087 = vadd.f32 %v1083, %v1086
  %vm1088 = vweird.f32 %v1055
  %vm1089 = vweird.f32 %v1083
  %vm1090 = vmor %vm1088, %vm1089
  %v1091 = vsel %vm1090, %v1083, %v1087
  %v1092 = vand.u32 2147483647, %v1055
  %vm1093 = vcmp.eq.f32.partialorder %v1092, 8.507059e+37
  %v1094 = vand.u32 %v1055, 2147483648
  %v1095 = vor.u32 1.1754944e-38, %v1094
  %v1096 = vsel %vm1093, %v1095, %v1091
  %v1097 = vmul.f32 %v1045, %v1096
  %v1098 = vrcp.pop %v1057
  %v1099 = vmul.f32 %v1057, %v1098
  %v1100 = vsub.f32 1.0, %v1099
  %v1101 = vmul.f32 %v1098, %v1100
  %v1102 = vadd.f32 %v1098, %v1101
  %vm1103 = vweird.f32 %v1057
  %vm1104 = vweird.f32 %v1098
  %vm1105 = vmor %vm1103, %vm1104
  %v1106 = vsel %vm1105, %v1098, %v1102
  %v1107 = vand.u32 2147483647, %v1057
  %vm1108 = vcmp.eq.f32.partialorder %v1107, 8.507059e+37
  %v1109 = vand.u32 %v1057, 2147483648
  %v1110 = vor.u32 1.1754944e-38, %v1109
  %v1111 = vsel %vm1108, %v1110, %v1106
  %v1112 = vmul.f32 %v1046, %v1111
  %v1113 = vrcp.pop %v1059
  %v1114 = vmul.f32 %v1059, %v1113
  %v1115 = vsub.f32 1.0, %v1114
  %v1116 = vmul.f32 %v1113, %v1115
  %v1117 = vadd.f32 %v1113, %v1116
  %vm1118 = vweird.f32 %v1059
  %vm1119 = vweird.f32 %v1113
  %vm1120 = vmor %vm1118, %vm1119
  %v1121 = vsel %vm1120, %v1113, %v1117
  %v1122 = vand.u32 2147483647, %v1059
  %vm1123 = vcmp.eq.f32.partialorder %v1122, 8.507059e+37
  %v1124 = vand.u32 %v1059, 2147483648
  %v1125 = vor.u32 1.1754944e-38, %v1124
  %v1126 = vsel %vm1123, %v1125, %v1121
  %v1127 = vmul.f32 %v1047, %v1126
  %v1128 = vrcp.pop %v1061
  %v1129 = vmul.f32 %v1061, %v1128
  %v1130 = vsub.f32 1.0, %v1129
  %v1131 = vmul.f32 %v1128, %v1130
  %v1132 = vadd.f32 %v1128, %v1131
  %vm1133 = vweird.f32 %v1061
  %vm1134 = vweird.f32 %v1128
  %vm1135 = vmor %vm1133, %vm1134
  %v1136 = vsel %vm1135, %v1128, %v1132
  %v1137 = vand.u32 2147483647, %v1061
  %vm1138 = vcmp.eq.f32.partialorder %v1137, 8.507059e+37
  %v1139 = vand.u32 %v1061, 2147483648
  %v1140 = vor.u32 1.1754944e-38, %v1139
  %v1141 = vsel %vm1138, %v1140, %v1136
  %v1142 = vmul.f32 %v1048, %v1141
  %v1143 = vrcp.pop %v1063
  %v1144 = vmul.f32 %v1063, %v1143
  %v1145 = vsub.f32 1.0, %v1144
  %v1146 = vmul.f32 %v1143, %v1145
  %v1147 = vadd.f32 %v1143, %v1146
  %vm1148 = vweird.f32 %v1063
  %vm1149 = vweird.f32 %v1143
  %vm1150 = vmor %vm1148, %vm1149
  %v1151 = vsel %vm1150, %v1143, %v1147
  %v1152 = vand.u32 2147483647, %v1063
  %vm1153 = vcmp.eq.f32.partialorder %v1152, 8.507059e+37
  %v1154 = vand.u32 %v1063, 2147483648
  %v1155 = vor.u32 1.1754944e-38, %v1154
  %v1156 = vsel %vm1153, %v1155, %v1151
  %v1157 = vmul.f32 %v1049, %v1156
  %v1158 = vrcp.pop %v1065
  %v1159 = vmul.f32 %v1065, %v1158
  %v1160 = vsub.f32 1.0, %v1159
  %v1161 = vmul.f32 %v1158, %v1160
  %v1162 = vadd.f32 %v1158, %v1161
  %vm1163 = vweird.f32 %v1065
  %vm1164 = vweird.f32 %v1158
  %vm1165 = vmor %vm1163, %vm1164
  %v1166 = vsel %vm1165, %v1158, %v1162
  %v1167 = vand.u32 2147483647, %v1065
  %vm1168 = vcmp.eq.f32.partialorder %v1167, 8.507059e+37
  %v1169 = vand.u32 %v1065, 2147483648
  %v1170 = vor.u32 1.1754944e-38, %v1169
  %v1171 = vsel %vm1168, %v1170, %v1166
  %v1172 = vmul.f32 %v1050, %v1171
  %v1173 = vrcp.pop %v1067
  %v1174 = vmul.f32 %v1067, %v1173
  %v1175 = vsub.f32 1.0, %v1174
  %v1176 = vmul.f32 %v1173, %v1175
  %v1177 = vadd.f32 %v1173, %v1176
  %vm1178 = vweird.f32 %v1067
  %vm1179 = vweird.f32 %v1173
  %vm1180 = vmor %vm1178, %vm1179
  %v1181 = vsel %vm1180, %v1173, %v1177
  %v1182 = vand.u32 2147483647, %v1067
  %vm1183 = vcmp.eq.f32.partialorder %v1182, 8.507059e+37
  %v1184 = vand.u32 %v1067, 2147483648
  %v1185 = vor.u32 1.1754944e-38, %v1184
  %v1186 = vsel %vm1183, %v1185, %v1181
  %v1187 = vmul.f32 %v1051, %v1186
  %v1188 = vsel %vm995, %v890, -1e+30
  %v1189 = vsel %vm995, %v893, -1e+30
  %v1190 = vsel %vm995, %v896, -1e+30
  %v1191 = vsel %vm995, %v899, -1e+30
  %v1192 = vsel %vm995, %v902, -1e+30
  %v1193 = vsel %vm995, %v905, -1e+30
  %v1194 = vsel %vm995, %v908, -1e+30
  %v1195 = vsel %vm995, %v911, -1e+30
  %1196 = vmax.xlane.f32.xlu0 %v1188
  %v1197 = vpop.xlane.xlu0 %1196
  %1198 = vmax.xlane.f32.xlu0 %v1189
  %v1199 = vpop.xlane.xlu0 %1198
  %1200 = vmax.xlane.f32.xlu0 %v1190
  %v1201 = vpop.xlane.xlu0 %1200
  %1202 = vmax.xlane.f32.xlu0 %v1191
  %v1203 = vpop.xlane.xlu0 %1202
  %1204 = vmax.xlane.f32.xlu0 %v1192
  %v1205 = vpop.xlane.xlu0 %1204
  %1206 = vmax.xlane.f32.xlu0 %v1193
  %v1207 = vpop.xlane.xlu0 %1206
  %1208 = vmax.xlane.f32.xlu0 %v1194
  %v1209 = vpop.xlane.xlu0 %1208
  %1210 = vmax.xlane.f32.xlu0 %v1195
  %v1211 = vpop.xlane.xlu0 %1210
  %v1212 = vsub.f32 %v890, %v1197
  %v1213 = vsub.f32 %v893, %v1199
  %v1214 = vsub.f32 %v896, %v1201
  %v1215 = vsub.f32 %v899, %v1203
  %v1216 = vsub.f32 %v902, %v1205
  %v1217 = vsub.f32 %v905, %v1207
  %v1218 = vsub.f32 %v908, %v1209
  %v1219 = vsub.f32 %v911, %v1211
  %v1220 = vmul.f32 %v1212, 1.442695
  %v1221 = vpow.pop %v1220
  %v1222 = vmul.f32 %v1213, 1.442695
  %v1223 = vpow.pop %v1222
  %v1224 = vmul.f32 %v1214, 1.442695
  %v1225 = vpow.pop %v1224
  %v1226 = vmul.f32 %v1215, 1.442695
  %v1227 = vpow.pop %v1226
  %v1228 = vmul.f32 %v1216, 1.442695
  %v1229 = vpow.pop %v1228
  %v1230 = vmul.f32 %v1217, 1.442695
  %v1231 = vpow.pop %v1230
  %v1232 = vmul.f32 %v1218, 1.442695
  %v1233 = vpow.pop %v1232
  %v1234 = vmul.f32 %v1219, 1.442695
  %v1235 = vpow.pop %v1234
  %v1236 = vmul.f32 %v1221, %v136
  %v1237 = vmul.f32 %v1223, %v136
  %v1238 = vmul.f32 %v1225, %v136
  %v1239 = vmul.f32 %v1227, %v136
  %v1240 = vmul.f32 %v1229, %v136
  %v1241 = vmul.f32 %v1231, %v136
  %v1242 = vmul.f32 %v1233, %v136
  %v1243 = vmul.f32 %v1235, %v136
  %1244 = vadd.xlane.f32.xlu0 %v1236
  %v1245 = vpop.xlane.xlu0 %1244
  %1246 = vadd.xlane.f32.xlu0 %v1237
  %v1247 = vpop.xlane.xlu0 %1246
  %1248 = vadd.xlane.f32.xlu0 %v1238
  %v1249 = vpop.xlane.xlu0 %1248
  %1250 = vadd.xlane.f32.xlu0 %v1239
  %v1251 = vpop.xlane.xlu0 %1250
  %1252 = vadd.xlane.f32.xlu0 %v1240
  %v1253 = vpop.xlane.xlu0 %1252
  %1254 = vadd.xlane.f32.xlu0 %v1241
  %v1255 = vpop.xlane.xlu0 %1254
  %1256 = vadd.xlane.f32.xlu0 %v1242
  %v1257 = vpop.xlane.xlu0 %1256
  %1258 = vadd.xlane.f32.xlu0 %v1243
  %v1259 = vpop.xlane.xlu0 %1258
  %v1260 = vrcp.pop %v1245
  %v1261 = vmul.f32 %v1245, %v1260
  %v1262 = vsub.f32 1.0, %v1261
  %v1263 = vmul.f32 %v1260, %v1262
  %v1264 = vadd.f32 %v1260, %v1263
  %vm1265 = vweird.f32 %v1245
  %vm1266 = vweird.f32 %v1260
  %vm1267 = vmor %vm1265, %vm1266
  %v1268 = vsel %vm1267, %v1260, %v1264
  %v1269 = vand.u32 2147483647, %v1245
  %vm1270 = vcmp.eq.f32.partialorder %v1269, 8.507059e+37
  %v1271 = vand.u32 %v1245, 2147483648
  %v1272 = vor.u32 1.1754944e-38, %v1271
  %v1273 = vsel %vm1270, %v1272, %v1268
  %v1274 = vmul.f32 %v1236, %v1273
  %v1275 = vrcp.pop %v1247
  %v1276 = vmul.f32 %v1247, %v1275
  %v1277 = vsub.f32 1.0, %v1276
  %v1278 = vmul.f32 %v1275, %v1277
  %v1279 = vadd.f32 %v1275, %v1278
  %vm1280 = vweird.f32 %v1247
  %vm1281 = vweird.f32 %v1275
  %vm1282 = vmor %vm1280, %vm1281
  %v1283 = vsel %vm1282, %v1275, %v1279
  %v1284 = vand.u32 2147483647, %v1247
  %vm1285 = vcmp.eq.f32.partialorder %v1284, 8.507059e+37
  %v1286 = vand.u32 %v1247, 2147483648
  %v1287 = vor.u32 1.1754944e-38, %v1286
  %v1288 = vsel %vm1285, %v1287, %v1283
  %v1289 = vmul.f32 %v1237, %v1288
  %v1290 = vrcp.pop %v1249
  %v1291 = vmul.f32 %v1249, %v1290
  %v1292 = vsub.f32 1.0, %v1291
  %v1293 = vmul.f32 %v1290, %v1292
  %v1294 = vadd.f32 %v1290, %v1293
  %vm1295 = vweird.f32 %v1249
  %vm1296 = vweird.f32 %v1290
  %vm1297 = vmor %vm1295, %vm1296
  %v1298 = vsel %vm1297, %v1290, %v1294
  %v1299 = vand.u32 2147483647, %v1249
  %vm1300 = vcmp.eq.f32.partialorder %v1299, 8.507059e+37
  %v1301 = vand.u32 %v1249, 2147483648
  %v1302 = vor.u32 1.1754944e-38, %v1301
  %v1303 = vsel %vm1300, %v1302, %v1298
  %v1304 = vmul.f32 %v1238, %v1303
  %v1305 = vrcp.pop %v1251
  %v1306 = vmul.f32 %v1251, %v1305
  %v1307 = vsub.f32 1.0, %v1306
  %v1308 = vmul.f32 %v1305, %v1307
  %v1309 = vadd.f32 %v1305, %v1308
  %vm1310 = vweird.f32 %v1251
  %vm1311 = vweird.f32 %v1305
  %vm1312 = vmor %vm1310, %vm1311
  %v1313 = vsel %vm1312, %v1305, %v1309
  %v1314 = vand.u32 2147483647, %v1251
  %vm1315 = vcmp.eq.f32.partialorder %v1314, 8.507059e+37
  %v1316 = vand.u32 %v1251, 2147483648
  %v1317 = vor.u32 1.1754944e-38, %v1316
  %v1318 = vsel %vm1315, %v1317, %v1313
  %v1319 = vmul.f32 %v1239, %v1318
  %v1320 = vrcp.pop %v1253
  %v1321 = vmul.f32 %v1253, %v1320
  %v1322 = vsub.f32 1.0, %v1321
  %v1323 = vmul.f32 %v1320, %v1322
  %v1324 = vadd.f32 %v1320, %v1323
  %vm1325 = vweird.f32 %v1253
  %vm1326 = vweird.f32 %v1320
  %vm1327 = vmor %vm1325, %vm1326
  %v1328 = vsel %vm1327, %v1320, %v1324
  %v1329 = vand.u32 2147483647, %v1253
  %vm1330 = vcmp.eq.f32.partialorder %v1329, 8.507059e+37
  %v1331 = vand.u32 %v1253, 2147483648
  %v1332 = vor.u32 1.1754944e-38, %v1331
  %v1333 = vsel %vm1330, %v1332, %v1328
  %v1334 = vmul.f32 %v1240, %v1333
  %v1335 = vrcp.pop %v1255
  %v1336 = vmul.f32 %v1255, %v1335
  %v1337 = vsub.f32 1.0, %v1336
  %v1338 = vmul.f32 %v1335, %v1337
  %v1339 = vadd.f32 %v1335, %v1338
  %vm1340 = vweird.f32 %v1255
  %vm1341 = vweird.f32 %v1335
  %vm1342 = vmor %vm1340, %vm1341
  %v1343 = vsel %vm1342, %v1335, %v1339
  %v1344 = vand.u32 2147483647, %v1255
  %vm1345 = vcmp.eq.f32.partialorder %v1344, 8.507059e+37
  %v1346 = vand.u32 %v1255, 2147483648
  %v1347 = vor.u32 1.1754944e-38, %v1346
  %v1348 = vsel %vm1345, %v1347, %v1343
  %v1349 = vmul.f32 %v1241, %v1348
  %v1350 = vrcp.pop %v1257
  %v1351 = vmul.f32 %v1257, %v1350
  %v1352 = vsub.f32 1.0, %v1351
  %v1353 = vmul.f32 %v1350, %v1352
  %v1354 = vadd.f32 %v1350, %v1353
  %vm1355 = vweird.f32 %v1257
  %vm1356 = vweird.f32 %v1350
  %vm1357 = vmor %vm1355, %vm1356
  %v1358 = vsel %vm1357, %v1350, %v1354
  %v1359 = vand.u32 2147483647, %v1257
  %vm1360 = vcmp.eq.f32.partialorder %v1359, 8.507059e+37
  %v1361 = vand.u32 %v1257, 2147483648
  %v1362 = vor.u32 1.1754944e-38, %v1361
  %v1363 = vsel %vm1360, %v1362, %v1358
  %v1364 = vmul.f32 %v1242, %v1363
  %v1365 = vrcp.pop %v1259
  %v1366 = vmul.f32 %v1259, %v1365
  %v1367 = vsub.f32 1.0, %v1366
  %v1368 = vmul.f32 %v1365, %v1367
  %v1369 = vadd.f32 %v1365, %v1368
  %vm1370 = vweird.f32 %v1259
  %vm1371 = vweird.f32 %v1365
  %vm1372 = vmor %vm1370, %vm1371
  %v1373 = vsel %vm1372, %v1365, %v1369
  %v1374 = vand.u32 2147483647, %v1259
  %vm1375 = vcmp.eq.f32.partialorder %v1374, 8.507059e+37
  %v1376 = vand.u32 %v1259, 2147483648
  %v1377 = vor.u32 1.1754944e-38, %v1376
  %v1378 = vsel %vm1375, %v1377, %v1373
  %v1379 = vmul.f32 %v1243, %v1378
  %v1380 = vadd.f32 %v1082, %v1274
  %v1381 = vadd.f32 %v1097, %v1289
  %v1382 = vadd.f32 %v1112, %v1304
  %v1383 = vadd.f32 %v1127, %v1319
  %v1384 = vadd.f32 %v1142, %v1334
  %v1385 = vadd.f32 %v1157, %v1349
  %v1386 = vadd.f32 %v1172, %v1364
  %v1387 = vadd.f32 %v1187, %v1379
  %v1388 = vsel %vm995, %v931, -1e+30
  %v1389 = vsel %vm995, %v934, -1e+30
  %v1390 = vsel %vm995, %v937, -1e+30
  %v1391 = vsel %vm995, %v940, -1e+30
  %v1392 = vsel %vm995, %v943, -1e+30
  %v1393 = vsel %vm995, %v946, -1e+30
  %v1394 = vsel %vm995, %v949, -1e+30
  %v1395 = vsel %vm995, %v952, -1e+30
  %1396 = vmax.xlane.f32.xlu0 %v1388
  %v1397 = vpop.xlane.xlu0 %1396
  %1398 = vmax.xlane.f32.xlu0 %v1389
  %v1399 = vpop.xlane.xlu0 %1398
  %1400 = vmax.xlane.f32.xlu0 %v1390
  %v1401 = vpop.xlane.xlu0 %1400
  %1402 = vmax.xlane.f32.xlu0 %v1391
  %v1403 = vpop.xlane.xlu0 %1402
  %1404 = vmax.xlane.f32.xlu0 %v1392
  %v1405 = vpop.xlane.xlu0 %1404
  %1406 = vmax.xlane.f32.xlu0 %v1393
  %v1407 = vpop.xlane.xlu0 %1406
  %1408 = vmax.xlane.f32.xlu0 %v1394
  %v1409 = vpop.xlane.xlu0 %1408
  %1410 = vmax.xlane.f32.xlu0 %v1395
  %v1411 = vpop.xlane.xlu0 %1410
  %v1412 = vsub.f32 %v931, %v1397
  %v1413 = vsub.f32 %v934, %v1399
  %v1414 = vsub.f32 %v937, %v1401
  %v1415 = vsub.f32 %v940, %v1403
  %v1416 = vsub.f32 %v943, %v1405
  %v1417 = vsub.f32 %v946, %v1407
  %v1418 = vsub.f32 %v949, %v1409
  %v1419 = vsub.f32 %v952, %v1411
  %v1420 = vmul.f32 %v1412, 1.442695
  %v1421 = vpow.pop %v1420
  %v1422 = vmul.f32 %v1413, 1.442695
  %v1423 = vpow.pop %v1422
  %v1424 = vmul.f32 %v1414, 1.442695
  %v1425 = vpow.pop %v1424
  %v1426 = vmul.f32 %v1415, 1.442695
  %v1427 = vpow.pop %v1426
  %v1428 = vmul.f32 %v1416, 1.442695
  %v1429 = vpow.pop %v1428
  %v1430 = vmul.f32 %v1417, 1.442695
  %v1431 = vpow.pop %v1430
  %v1432 = vmul.f32 %v1418, 1.442695
  %v1433 = vpow.pop %v1432
  %v1434 = vmul.f32 %v1419, 1.442695
  %v1435 = vpow.pop %v1434
  %v1436 = vmul.f32 %v1421, %v136
  %v1437 = vmul.f32 %v1423, %v136
  %v1438 = vmul.f32 %v1425, %v136
  %v1439 = vmul.f32 %v1427, %v136
  %v1440 = vmul.f32 %v1429, %v136
  %v1441 = vmul.f32 %v1431, %v136
  %v1442 = vmul.f32 %v1433, %v136
  %v1443 = vmul.f32 %v1435, %v136
  %1444 = vadd.xlane.f32.xlu0 %v1436
  %v1445 = vpop.xlane.xlu0 %1444
  %1446 = vadd.xlane.f32.xlu0 %v1437
  %v1447 = vpop.xlane.xlu0 %1446
  %1448 = vadd.xlane.f32.xlu0 %v1438
  %v1449 = vpop.xlane.xlu0 %1448
  %1450 = vadd.xlane.f32.xlu0 %v1439
  %v1451 = vpop.xlane.xlu0 %1450
  %1452 = vadd.xlane.f32.xlu0 %v1440
  %v1453 = vpop.xlane.xlu0 %1452
  %1454 = vadd.xlane.f32.xlu0 %v1441
  %v1455 = vpop.xlane.xlu0 %1454
  %1456 = vadd.xlane.f32.xlu0 %v1442
  %v1457 = vpop.xlane.xlu0 %1456
  %1458 = vadd.xlane.f32.xlu0 %v1443
  %v1459 = vpop.xlane.xlu0 %1458
  %v1460 = vrcp.pop %v1445
  %v1461 = vmul.f32 %v1445, %v1460
  %v1462 = vsub.f32 1.0, %v1461
  %v1463 = vmul.f32 %v1460, %v1462
  %v1464 = vadd.f32 %v1460, %v1463
  %vm1465 = vweird.f32 %v1445
  %vm1466 = vweird.f32 %v1460
  %vm1467 = vmor %vm1465, %vm1466
  %v1468 = vsel %vm1467, %v1460, %v1464
  %v1469 = vand.u32 2147483647, %v1445
  %vm1470 = vcmp.eq.f32.partialorder %v1469, 8.507059e+37
  %v1471 = vand.u32 %v1445, 2147483648
  %v1472 = vor.u32 1.1754944e-38, %v1471
  %v1473 = vsel %vm1470, %v1472, %v1468
  %v1474 = vmul.f32 %v1436, %v1473
  %v1475 = vrcp.pop %v1447
  %v1476 = vmul.f32 %v1447, %v1475
  %v1477 = vsub.f32 1.0, %v1476
  %v1478 = vmul.f32 %v1475, %v1477
  %v1479 = vadd.f32 %v1475, %v1478
  %vm1480 = vweird.f32 %v1447
  %vm1481 = vweird.f32 %v1475
  %vm1482 = vmor %vm1480, %vm1481
  %v1483 = vsel %vm1482, %v1475, %v1479
  %v1484 = vand.u32 2147483647, %v1447
  %vm1485 = vcmp.eq.f32.partialorder %v1484, 8.507059e+37
  %v1486 = vand.u32 %v1447, 2147483648
  %v1487 = vor.u32 1.1754944e-38, %v1486
  %v1488 = vsel %vm1485, %v1487, %v1483
  %v1489 = vmul.f32 %v1437, %v1488
  %v1490 = vrcp.pop %v1449
  %v1491 = vmul.f32 %v1449, %v1490
  %v1492 = vsub.f32 1.0, %v1491
  %v1493 = vmul.f32 %v1490, %v1492
  %v1494 = vadd.f32 %v1490, %v1493
  %vm1495 = vweird.f32 %v1449
  %vm1496 = vweird.f32 %v1490
  %vm1497 = vmor %vm1495, %vm1496
  %v1498 = vsel %vm1497, %v1490, %v1494
  %v1499 = vand.u32 2147483647, %v1449
  %vm1500 = vcmp.eq.f32.partialorder %v1499, 8.507059e+37
  %v1501 = vand.u32 %v1449, 2147483648
  %v1502 = vor.u32 1.1754944e-38, %v1501
  %v1503 = vsel %vm1500, %v1502, %v1498
  %v1504 = vmul.f32 %v1438, %v1503
  %v1505 = vrcp.pop %v1451
  %v1506 = vmul.f32 %v1451, %v1505
  %v1507 = vsub.f32 1.0, %v1506
  %v1508 = vmul.f32 %v1505, %v1507
  %v1509 = vadd.f32 %v1505, %v1508
  %vm1510 = vweird.f32 %v1451
  %vm1511 = vweird.f32 %v1505
  %vm1512 = vmor %vm1510, %vm1511
  %v1513 = vsel %vm1512, %v1505, %v1509
  %v1514 = vand.u32 2147483647, %v1451
  %vm1515 = vcmp.eq.f32.partialorder %v1514, 8.507059e+37
  %v1516 = vand.u32 %v1451, 2147483648
  %v1517 = vor.u32 1.1754944e-38, %v1516
  %v1518 = vsel %vm1515, %v1517, %v1513
  %v1519 = vmul.f32 %v1439, %v1518
  %v1520 = vrcp.pop %v1453
  %v1521 = vmul.f32 %v1453, %v1520
  %v1522 = vsub.f32 1.0, %v1521
  %v1523 = vmul.f32 %v1520, %v1522
  %v1524 = vadd.f32 %v1520, %v1523
  %vm1525 = vweird.f32 %v1453
  %vm1526 = vweird.f32 %v1520
  %vm1527 = vmor %vm1525, %vm1526
  %v1528 = vsel %vm1527, %v1520, %v1524
  %v1529 = vand.u32 2147483647, %v1453
  %vm1530 = vcmp.eq.f32.partialorder %v1529, 8.507059e+37
  %v1531 = vand.u32 %v1453, 2147483648
  %v1532 = vor.u32 1.1754944e-38, %v1531
  %v1533 = vsel %vm1530, %v1532, %v1528
  %v1534 = vmul.f32 %v1440, %v1533
  %v1535 = vrcp.pop %v1455
  %v1536 = vmul.f32 %v1455, %v1535
  %v1537 = vsub.f32 1.0, %v1536
  %v1538 = vmul.f32 %v1535, %v1537
  %v1539 = vadd.f32 %v1535, %v1538
  %vm1540 = vweird.f32 %v1455
  %vm1541 = vweird.f32 %v1535
  %vm1542 = vmor %vm1540, %vm1541
  %v1543 = vsel %vm1542, %v1535, %v1539
  %v1544 = vand.u32 2147483647, %v1455
  %vm1545 = vcmp.eq.f32.partialorder %v1544, 8.507059e+37
  %v1546 = vand.u32 %v1455, 2147483648
  %v1547 = vor.u32 1.1754944e-38, %v1546
  %v1548 = vsel %vm1545, %v1547, %v1543
  %v1549 = vmul.f32 %v1441, %v1548
  %v1550 = vrcp.pop %v1457
  %v1551 = vmul.f32 %v1457, %v1550
  %v1552 = vsub.f32 1.0, %v1551
  %v1553 = vmul.f32 %v1550, %v1552
  %v1554 = vadd.f32 %v1550, %v1553
  %vm1555 = vweird.f32 %v1457
  %vm1556 = vweird.f32 %v1550
  %vm1557 = vmor %vm1555, %vm1556
  %v1558 = vsel %vm1557, %v1550, %v1554
  %v1559 = vand.u32 2147483647, %v1457
  %vm1560 = vcmp.eq.f32.partialorder %v1559, 8.507059e+37
  %v1561 = vand.u32 %v1457, 2147483648
  %v1562 = vor.u32 1.1754944e-38, %v1561
  %v1563 = vsel %vm1560, %v1562, %v1558
  %v1564 = vmul.f32 %v1442, %v1563
  %v1565 = vrcp.pop %v1459
  %v1566 = vmul.f32 %v1459, %v1565
  %v1567 = vsub.f32 1.0, %v1566
  %v1568 = vmul.f32 %v1565, %v1567
  %v1569 = vadd.f32 %v1565, %v1568
  %vm1570 = vweird.f32 %v1459
  %vm1571 = vweird.f32 %v1565
  %vm1572 = vmor %vm1570, %vm1571
  %v1573 = vsel %vm1572, %v1565, %v1569
  %v1574 = vand.u32 2147483647, %v1459
  %vm1575 = vcmp.eq.f32.partialorder %v1574, 8.507059e+37
  %v1576 = vand.u32 %v1459, 2147483648
  %v1577 = vor.u32 1.1754944e-38, %v1576
  %v1578 = vsel %vm1575, %v1577, %v1573
  %v1579 = vmul.f32 %v1443, %v1578
  %v1580 = vadd.f32 %v1380, %v1474
  %v1581 = vadd.f32 %v1381, %v1489
  %v1582 = vadd.f32 %v1382, %v1504
  %v1583 = vadd.f32 %v1383, %v1519
  %v1584 = vadd.f32 %v1384, %v1534
  %v1585 = vadd.f32 %v1385, %v1549
  %v1586 = vadd.f32 %v1386, %v1564
  %v1587 = vadd.f32 %v1387, %v1579
  %v1588 = vsel %vm995, %v972, -1e+30
  %v1589 = vsel %vm995, %v975, -1e+30
  %v1590 = vsel %vm995, %v978, -1e+30
  %v1591 = vsel %vm995, %v981, -1e+30
  %v1592 = vsel %vm995, %v984, -1e+30
  %v1593 = vsel %vm995, %v987, -1e+30
  %v1594 = vsel %vm995, %v990, -1e+30
  %v1595 = vsel %vm995, %v993, -1e+30
  %1596 = vmax.xlane.f32.xlu0 %v1588
  %v1597 = vpop.xlane.xlu0 %1596
  %1598 = vmax.xlane.f32.xlu0 %v1589
  %v1599 = vpop.xlane.xlu0 %1598
  %1600 = vmax.xlane.f32.xlu0 %v1590
  %v1601 = vpop.xlane.xlu0 %1600
  %1602 = vmax.xlane.f32.xlu0 %v1591
  %v1603 = vpop.xlane.xlu0 %1602
  %1604 = vmax.xlane.f32.xlu0 %v1592
  %v1605 = vpop.xlane.xlu0 %1604
  %1606 = vmax.xlane.f32.xlu0 %v1593
  %v1607 = vpop.xlane.xlu0 %1606
  %1608 = vmax.xlane.f32.xlu0 %v1594
  %v1609 = vpop.xlane.xlu0 %1608
  %1610 = vmax.xlane.f32.xlu0 %v1595
  %v1611 = vpop.xlane.xlu0 %1610
  %v1612 = vsub.f32 %v972, %v1597
  %v1613 = vsub.f32 %v975, %v1599
  %v1614 = vsub.f32 %v978, %v1601
  %v1615 = vsub.f32 %v981, %v1603
  %v1616 = vsub.f32 %v984, %v1605
  %v1617 = vsub.f32 %v987, %v1607
  %v1618 = vsub.f32 %v990, %v1609
  %v1619 = vsub.f32 %v993, %v1611
  %v1620 = vmul.f32 %v1612, 1.442695
  %v1621 = vpow.pop %v1620
  %v1622 = vmul.f32 %v1613, 1.442695
  %v1623 = vpow.pop %v1622
  %v1624 = vmul.f32 %v1614, 1.442695
  %v1625 = vpow.pop %v1624
  %v1626 = vmul.f32 %v1615, 1.442695
  %v1627 = vpow.pop %v1626
  %v1628 = vmul.f32 %v1616, 1.442695
  %v1629 = vpow.pop %v1628
  %v1630 = vmul.f32 %v1617, 1.442695
  %v1631 = vpow.pop %v1630
  %v1632 = vmul.f32 %v1618, 1.442695
  %v1633 = vpow.pop %v1632
  %v1634 = vmul.f32 %v1619, 1.442695
  %v1635 = vpow.pop %v1634
  %v1636 = vmul.f32 %v1621, %v136
  %v1637 = vmul.f32 %v1623, %v136
  %v1638 = vmul.f32 %v1625, %v136
  %v1639 = vmul.f32 %v1627, %v136
  %v1640 = vmul.f32 %v1629, %v136
  %v1641 = vmul.f32 %v1631, %v136
  %v1642 = vmul.f32 %v1633, %v136
  %v1643 = vmul.f32 %v1635, %v136
  %1644 = vadd.xlane.f32.xlu0 %v1636
  %v1645 = vpop.xlane.xlu0 %1644
  %1646 = vadd.xlane.f32.xlu0 %v1637
  %v1647 = vpop.xlane.xlu0 %1646
  %1648 = vadd.xlane.f32.xlu0 %v1638
  %v1649 = vpop.xlane.xlu0 %1648
  %1650 = vadd.xlane.f32.xlu0 %v1639
  %v1651 = vpop.xlane.xlu0 %1650
  %1652 = vadd.xlane.f32.xlu0 %v1640
  %v1653 = vpop.xlane.xlu0 %1652
  %1654 = vadd.xlane.f32.xlu0 %v1641
  %v1655 = vpop.xlane.xlu0 %1654
  %1656 = vadd.xlane.f32.xlu0 %v1642
  %v1657 = vpop.xlane.xlu0 %1656
  %1658 = vadd.xlane.f32.xlu0 %v1643
  %v1659 = vpop.xlane.xlu0 %1658
  %v1660 = vrcp.pop %v1645
  %v1661 = vmul.f32 %v1645, %v1660
  %v1662 = vsub.f32 1.0, %v1661
  %v1663 = vmul.f32 %v1660, %v1662
  %v1664 = vadd.f32 %v1660, %v1663
  %vm1665 = vweird.f32 %v1645
  %vm1666 = vweird.f32 %v1660
  %vm1667 = vmor %vm1665, %vm1666
  %v1668 = vsel %vm1667, %v1660, %v1664
  %v1669 = vand.u32 2147483647, %v1645
  %vm1670 = vcmp.eq.f32.partialorder %v1669, 8.507059e+37
  %v1671 = vand.u32 %v1645, 2147483648
  %v1672 = vor.u32 1.1754944e-38, %v1671
  %v1673 = vsel %vm1670, %v1672, %v1668
  %v1674 = vmul.f32 %v1636, %v1673
  %v1675 = vrcp.pop %v1647
  %v1676 = vmul.f32 %v1647, %v1675
  %v1677 = vsub.f32 1.0, %v1676
  %v1678 = vmul.f32 %v1675, %v1677
  %v1679 = vadd.f32 %v1675, %v1678
  %vm1680 = vweird.f32 %v1647
  %vm1681 = vweird.f32 %v1675
  %vm1682 = vmor %vm1680, %vm1681
  %v1683 = vsel %vm1682, %v1675, %v1679
  %v1684 = vand.u32 2147483647, %v1647
  %vm1685 = vcmp.eq.f32.partialorder %v1684, 8.507059e+37
  %v1686 = vand.u32 %v1647, 2147483648
  %v1687 = vor.u32 1.1754944e-38, %v1686
  %v1688 = vsel %vm1685, %v1687, %v1683
  %v1689 = vmul.f32 %v1637, %v1688
  %v1690 = vrcp.pop %v1649
  %v1691 = vmul.f32 %v1649, %v1690
  %v1692 = vsub.f32 1.0, %v1691
  %v1693 = vmul.f32 %v1690, %v1692
  %v1694 = vadd.f32 %v1690, %v1693
  %vm1695 = vweird.f32 %v1649
  %vm1696 = vweird.f32 %v1690
  %vm1697 = vmor %vm1695, %vm1696
  %v1698 = vsel %vm1697, %v1690, %v1694
  %v1699 = vand.u32 2147483647, %v1649
  %vm1700 = vcmp.eq.f32.partialorder %v1699, 8.507059e+37
  %v1701 = vand.u32 %v1649, 2147483648
  %v1702 = vor.u32 1.1754944e-38, %v1701
  %v1703 = vsel %vm1700, %v1702, %v1698
  %v1704 = vmul.f32 %v1638, %v1703
  %v1705 = vrcp.pop %v1651
  %v1706 = vmul.f32 %v1651, %v1705
  %v1707 = vsub.f32 1.0, %v1706
  %v1708 = vmul.f32 %v1705, %v1707
  %v1709 = vadd.f32 %v1705, %v1708
  %vm1710 = vweird.f32 %v1651
  %vm1711 = vweird.f32 %v1705
  %vm1712 = vmor %vm1710, %vm1711
  %v1713 = vsel %vm1712, %v1705, %v1709
  %v1714 = vand.u32 2147483647, %v1651
  %vm1715 = vcmp.eq.f32.partialorder %v1714, 8.507059e+37
  %v1716 = vand.u32 %v1651, 2147483648
  %v1717 = vor.u32 1.1754944e-38, %v1716
  %v1718 = vsel %vm1715, %v1717, %v1713
  %v1719 = vmul.f32 %v1639, %v1718
  %v1720 = vrcp.pop %v1653
  %v1721 = vmul.f32 %v1653, %v1720
  %v1722 = vsub.f32 1.0, %v1721
  %v1723 = vmul.f32 %v1720, %v1722
  %v1724 = vadd.f32 %v1720, %v1723
  %vm1725 = vweird.f32 %v1653
  %vm1726 = vweird.f32 %v1720
  %vm1727 = vmor %vm1725, %vm1726
  %v1728 = vsel %vm1727, %v1720, %v1724
  %v1729 = vand.u32 2147483647, %v1653
  %vm1730 = vcmp.eq.f32.partialorder %v1729, 8.507059e+37
  %v1731 = vand.u32 %v1653, 2147483648
  %v1732 = vor.u32 1.1754944e-38, %v1731
  %v1733 = vsel %vm1730, %v1732, %v1728
  %v1734 = vmul.f32 %v1640, %v1733
  %v1735 = vrcp.pop %v1655
  %v1736 = vmul.f32 %v1655, %v1735
  %v1737 = vsub.f32 1.0, %v1736
  %v1738 = vmul.f32 %v1735, %v1737
  %v1739 = vadd.f32 %v1735, %v1738
  %vm1740 = vweird.f32 %v1655
  %vm1741 = vweird.f32 %v1735
  %vm1742 = vmor %vm1740, %vm1741
  %v1743 = vsel %vm1742, %v1735, %v1739
  %v1744 = vand.u32 2147483647, %v1655
  %vm1745 = vcmp.eq.f32.partialorder %v1744, 8.507059e+37
  %v1746 = vand.u32 %v1655, 2147483648
  %v1747 = vor.u32 1.1754944e-38, %v1746
  %v1748 = vsel %vm1745, %v1747, %v1743
  %v1749 = vmul.f32 %v1641, %v1748
  %v1750 = vrcp.pop %v1657
  %v1751 = vmul.f32 %v1657, %v1750
  %v1752 = vsub.f32 1.0, %v1751
  %v1753 = vmul.f32 %v1750, %v1752
  %v1754 = vadd.f32 %v1750, %v1753
  %vm1755 = vweird.f32 %v1657
  %vm1756 = vweird.f32 %v1750
  %vm1757 = vmor %vm1755, %vm1756
  %v1758 = vsel %vm1757, %v1750, %v1754
  %v1759 = vand.u32 2147483647, %v1657
  %vm1760 = vcmp.eq.f32.partialorder %v1759, 8.507059e+37
  %v1761 = vand.u32 %v1657, 2147483648
  %v1762 = vor.u32 1.1754944e-38, %v1761
  %v1763 = vsel %vm1760, %v1762, %v1758
  %v1764 = vmul.f32 %v1642, %v1763
  %v1765 = vrcp.pop %v1659
  %v1766 = vmul.f32 %v1659, %v1765
  %v1767 = vsub.f32 1.0, %v1766
  %v1768 = vmul.f32 %v1765, %v1767
  %v1769 = vadd.f32 %v1765, %v1768
  %vm1770 = vweird.f32 %v1659
  %vm1771 = vweird.f32 %v1765
  %vm1772 = vmor %vm1770, %vm1771
  %v1773 = vsel %vm1772, %v1765, %v1769
  %v1774 = vand.u32 2147483647, %v1659
  %vm1775 = vcmp.eq.f32.partialorder %v1774, 8.507059e+37
  %v1776 = vand.u32 %v1659, 2147483648
  %v1777 = vor.u32 1.1754944e-38, %v1776
  %v1778 = vsel %vm1775, %v1777, %v1773
  %v1779 = vmul.f32 %v1643, %v1778
  %v1780 = vadd.f32 %v1580, %v1674
  %v1781 = vadd.f32 %v1581, %v1689
  %v1782 = vadd.f32 %v1582, %v1704
  %v1783 = vadd.f32 %v1583, %v1719
  %v1784 = vadd.f32 %v1584, %v1734
  %v1785 = vadd.f32 %v1585, %v1749
  %v1786 = vadd.f32 %v1586, %v1764
  %v1787 = vadd.f32 %v1587, %v1779
  %v1788 = vmul.f32 %v1780, 0.25
  %v1789 = vmul.f32 %v1781, 0.25
  %v1790 = vmul.f32 %v1782, 0.25
  %v1791 = vmul.f32 %v1783, 0.25
  %v1792 = vmul.f32 %v1784, 0.25
  %v1793 = vmul.f32 %v1785, 0.25
  %v1794 = vmul.f32 %v1786, 0.25
  %v1795 = vmul.f32 %v1787, 0.25
  %vm1796 = vcmask 64512
  %1797 = vst.msk [vmem:[%s17] sm:$0xff] %vm1796, %v1788
  %1798 = vst.msk [vmem:[%s17 + $0x8] sm:$0xff] %vm1796, %v1789
  %1799 = vst.msk [vmem:[%s17 + $0x10] sm:$0xff] %vm1796, %v1790
  %1800 = vst.msk [vmem:[%s17 + $0x18] sm:$0xff] %vm1796, %v1791
  %1801 = vst.msk [vmem:[%s17 + $0x20] sm:$0xff] %vm1796, %v1792
  %1802 = vst.msk [vmem:[%s17 + $0x28] sm:$0xff] %vm1796, %v1793
  %1803 = vst.msk [vmem:[%s17 + $0x30] sm:$0xff] %vm1796, %v1794
  %1804 = vst.msk [vmem:[%s17 + $0x38] sm:$0xff] %vm1796, %v1795
  %v1805 = vld [vmem:[%s8] sm:$0xff]
  %v1806 = vld [vmem:[%s8 + $0x8] sm:$0xff]
  %v1807 = vld [vmem:[%s8 + $0x10] sm:$0xff]
  %v1808 = vld [vmem:[%s8 + $0x18] sm:$0xff]
  %1809 = vmatpush.msra.mxu0 0.0
  %1810 = vmatpush.msra.mxu0 0.0
  %1811 = vmatpush.msra.mxu0 0.0
  %1812 = vmatpush.msra.mxu0 0.0
  %1813 = vmatpush.msra.mxu0 0.0
  %1814 = vmatpush.msra.mxu0 0.0
  %1815 = vmatpush.msra.mxu0 0.0
  %1816 = vmatpush.msra.mxu0 0.0
  %1817 = vmatpush.msra.mxu0 0.0
  %1818 = vmatpush.msra.mxu0 0.0
  %1819 = vmatpush.msra.mxu0 0.0
  %1820 = vmatpush.msra.mxu0 0.0
  %1821 = vmatpush.msra.mxu0 %v1808
  %1822 = vmatpush.msra.mxu0 %v1807
  %1823 = vmatpush.msra.mxu0 %v1806
  %1824 = vmatpush.msra.mxu0 %v1805
  %1825 = vmatmul.f32.gmra.mxu0 %v439
  %v1826 = vpop.f32.mrf.mxu0
  %v1827 = vadd.f32 0.0, %v1826
  %1828 = vmatmul.f32.gmra.mxu0 %v442
  %v1829 = vpop.f32.mrf.mxu0
  %v1830 = vadd.f32 0.0, %v1829
  %1831 = vmatmul.f32.gmra.mxu0 %v445
  %v1832 = vpop.f32.mrf.mxu0
  %v1833 = vadd.f32 0.0, %v1832
  %1834 = vmatmul.f32.gmra.mxu0 %v448
  %v1835 = vpop.f32.mrf.mxu0
  %v1836 = vadd.f32 0.0, %v1835
  %1837 = vmatmul.f32.gmra.mxu0 %v451
  %v1838 = vpop.f32.mrf.mxu0
  %v1839 = vadd.f32 0.0, %v1838
  %1840 = vmatmul.f32.gmra.mxu0 %v454
  %v1841 = vpop.f32.mrf.mxu0
  %v1842 = vadd.f32 0.0, %v1841
  %1843 = vmatmul.f32.gmra.mxu0 %v457
  %v1844 = vpop.f32.mrf.mxu0
  %v1845 = vadd.f32 0.0, %v1844
  %1846 = vmatmul.f32.gmra.mxu0 %v460
  %v1847 = vpop.f32.mrf.mxu0
  %v1848 = vadd.f32 0.0, %v1847
  %1849 = vmatmul.f32.gmra.mxu0 %v463
  %v1850 = vpop.f32.mrf.mxu0
  %v1851 = vadd.f32 0.0, %v1850
  %1852 = vmatmul.f32.gmra.mxu0 %v466
  %v1853 = vpop.f32.mrf.mxu0
  %v1854 = vadd.f32 0.0, %v1853
  %1855 = vmatmul.f32.gmra.mxu0 %v469
  %v1856 = vpop.f32.mrf.mxu0
  %v1857 = vadd.f32 0.0, %v1856
  %1858 = vmatmul.f32.gmra.mxu0 %v472
  %v1859 = vpop.f32.mrf.mxu0
  %v1860 = vadd.f32 0.0, %v1859
  %1861 = vmatmul.f32.gmra.mxu0 %v475
  %v1862 = vpop.f32.mrf.mxu0
  %v1863 = vadd.f32 0.0, %v1862
  %1864 = vmatmul.f32.gmra.mxu0 %v478
  %v1865 = vpop.f32.mrf.mxu0
  %v1866 = vadd.f32 0.0, %v1865
  %1867 = vmatmul.f32.gmra.mxu0 %v481
  %v1868 = vpop.f32.mrf.mxu0
  %v1869 = vadd.f32 0.0, %v1868
  %1870 = vmatmul.f32.gmra.mxu0 %v484
  %v1871 = vpop.f32.mrf.mxu0
  %v1872 = vadd.f32 0.0, %v1871
  %1873 = vdwg.mxu0
  %s1874 = scalar_lea.vmem %s8, 32
  %v1875 = vld [vmem:[%s1874] sm:$0xff]
  %v1876 = vld [vmem:[%s1874 + $0x8] sm:$0xff]
  %v1877 = vld [vmem:[%s1874 + $0x10] sm:$0xff]
  %v1878 = vld [vmem:[%s1874 + $0x18] sm:$0xff]
  %1879 = vmatpush.msra.mxu0 0.0
  %1880 = vmatpush.msra.mxu0 0.0
  %1881 = vmatpush.msra.mxu0 0.0
  %1882 = vmatpush.msra.mxu0 0.0
  %1883 = vmatpush.msra.mxu0 0.0
  %1884 = vmatpush.msra.mxu0 0.0
  %1885 = vmatpush.msra.mxu0 0.0
  %1886 = vmatpush.msra.mxu0 0.0
  %1887 = vmatpush.msra.mxu0 0.0
  %1888 = vmatpush.msra.mxu0 0.0
  %1889 = vmatpush.msra.mxu0 0.0
  %1890 = vmatpush.msra.mxu0 0.0
  %1891 = vmatpush.msra.mxu0 %v1878
  %1892 = vmatpush.msra.mxu0 %v1877
  %1893 = vmatpush.msra.mxu0 %v1876
  %1894 = vmatpush.msra.mxu0 %v1875
  %1895 = vmatmul.f32.gmra.mxu0 %v439
  %v1896 = vpop.f32.mrf.mxu0
  %v1897 = vadd.f32 0.0, %v1896
  %1898 = vmatmul.f32.gmra.mxu0 %v442
  %v1899 = vpop.f32.mrf.mxu0
  %v1900 = vadd.f32 0.0, %v1899
  %1901 = vmatmul.f32.gmra.mxu0 %v445
  %v1902 = vpop.f32.mrf.mxu0
  %v1903 = vadd.f32 0.0, %v1902
  %1904 = vmatmul.f32.gmra.mxu0 %v448
  %v1905 = vpop.f32.mrf.mxu0
  %v1906 = vadd.f32 0.0, %v1905
  %1907 = vmatmul.f32.gmra.mxu0 %v451
  %v1908 = vpop.f32.mrf.mxu0
  %v1909 = vadd.f32 0.0, %v1908
  %1910 = vmatmul.f32.gmra.mxu0 %v454
  %v1911 = vpop.f32.mrf.mxu0
  %v1912 = vadd.f32 0.0, %v1911
  %1913 = vmatmul.f32.gmra.mxu0 %v457
  %v1914 = vpop.f32.mrf.mxu0
  %v1915 = vadd.f32 0.0, %v1914
  %1916 = vmatmul.f32.gmra.mxu0 %v460
  %v1917 = vpop.f32.mrf.mxu0
  %v1918 = vadd.f32 0.0, %v1917
  %1919 = vmatmul.f32.gmra.mxu0 %v463
  %v1920 = vpop.f32.mrf.mxu0
  %v1921 = vadd.f32 0.0, %v1920
  %1922 = vmatmul.f32.gmra.mxu0 %v466
  %v1923 = vpop.f32.mrf.mxu0
  %v1924 = vadd.f32 0.0, %v1923
  %1925 = vmatmul.f32.gmra.mxu0 %v469
  %v1926 = vpop.f32.mrf.mxu0
  %v1927 = vadd.f32 0.0, %v1926
  %1928 = vmatmul.f32.gmra.mxu0 %v472
  %v1929 = vpop.f32.mrf.mxu0
  %v1930 = vadd.f32 0.0, %v1929
  %1931 = vmatmul.f32.gmra.mxu0 %v475
  %v1932 = vpop.f32.mrf.mxu0
  %v1933 = vadd.f32 0.0, %v1932
  %1934 = vmatmul.f32.gmra.mxu0 %v478
  %v1935 = vpop.f32.mrf.mxu0
  %v1936 = vadd.f32 0.0, %v1935
  %1937 = vmatmul.f32.gmra.mxu0 %v481
  %v1938 = vpop.f32.mrf.mxu0
  %v1939 = vadd.f32 0.0, %v1938
  %1940 = vmatmul.f32.gmra.mxu0 %v484
  %v1941 = vpop.f32.mrf.mxu0
  %v1942 = vadd.f32 0.0, %v1941
  %1943 = vdwg.mxu0
  %s1944 = scalar_lea.vmem %s8, 64
  %v1945 = vld [vmem:[%s1944] sm:$0xff]
  %v1946 = vld [vmem:[%s1944 + $0x8] sm:$0xff]
  %v1947 = vld [vmem:[%s1944 + $0x10] sm:$0xff]
  %v1948 = vld [vmem:[%s1944 + $0x18] sm:$0xff]
  %1949 = vmatpush.msra.mxu0 0.0
  %1950 = vmatpush.msra.mxu0 0.0
  %1951 = vmatpush.msra.mxu0 0.0
  %1952 = vmatpush.msra.mxu0 0.0
  %1953 = vmatpush.msra.mxu0 0.0
  %1954 = vmatpush.msra.mxu0 0.0
  %1955 = vmatpush.msra.mxu0 0.0
  %1956 = vmatpush.msra.mxu0 0.0
  %1957 = vmatpush.msra.mxu0 0.0
  %1958 = vmatpush.msra.mxu0 0.0
  %1959 = vmatpush.msra.mxu0 0.0
  %1960 = vmatpush.msra.mxu0 0.0
  %1961 = vmatpush.msra.mxu0 %v1948
  %1962 = vmatpush.msra.mxu0 %v1947
  %1963 = vmatpush.msra.mxu0 %v1946
  %1964 = vmatpush.msra.mxu0 %v1945
  %1965 = vmatmul.f32.gmra.mxu0 %v439
  %v1966 = vpop.f32.mrf.mxu0
  %v1967 = vadd.f32 0.0, %v1966
  %1968 = vmatmul.f32.gmra.mxu0 %v442
  %v1969 = vpop.f32.mrf.mxu0
  %v1970 = vadd.f32 0.0, %v1969
  %1971 = vmatmul.f32.gmra.mxu0 %v445
  %v1972 = vpop.f32.mrf.mxu0
  %v1973 = vadd.f32 0.0, %v1972
  %1974 = vmatmul.f32.gmra.mxu0 %v448
  %v1975 = vpop.f32.mrf.mxu0
  %v1976 = vadd.f32 0.0, %v1975
  %1977 = vmatmul.f32.gmra.mxu0 %v451
  %v1978 = vpop.f32.mrf.mxu0
  %v1979 = vadd.f32 0.0, %v1978
  %1980 = vmatmul.f32.gmra.mxu0 %v454
  %v1981 = vpop.f32.mrf.mxu0
  %v1982 = vadd.f32 0.0, %v1981
  %1983 = vmatmul.f32.gmra.mxu0 %v457
  %v1984 = vpop.f32.mrf.mxu0
  %v1985 = vadd.f32 0.0, %v1984
  %1986 = vmatmul.f32.gmra.mxu0 %v460
  %v1987 = vpop.f32.mrf.mxu0
  %v1988 = vadd.f32 0.0, %v1987
  %1989 = vmatmul.f32.gmra.mxu0 %v463
  %v1990 = vpop.f32.mrf.mxu0
  %v1991 = vadd.f32 0.0, %v1990
  %1992 = vmatmul.f32.gmra.mxu0 %v466
  %v1993 = vpop.f32.mrf.mxu0
  %v1994 = vadd.f32 0.0, %v1993
  %1995 = vmatmul.f32.gmra.mxu0 %v469
  %v1996 = vpop.f32.mrf.mxu0
  %v1997 = vadd.f32 0.0, %v1996
  %1998 = vmatmul.f32.gmra.mxu0 %v472
  %v1999 = vpop.f32.mrf.mxu0
  %v2000 = vadd.f32 0.0, %v1999
  %2001 = vmatmul.f32.gmra.mxu0 %v475
  %v2002 = vpop.f32.mrf.mxu0
  %v2003 = vadd.f32 0.0, %v2002
  %2004 = vmatmul.f32.gmra.mxu0 %v478
  %v2005 = vpop.f32.mrf.mxu0
  %v2006 = vadd.f32 0.0, %v2005
  %2007 = vmatmul.f32.gmra.mxu0 %v481
  %v2008 = vpop.f32.mrf.mxu0
  %v2009 = vadd.f32 0.0, %v2008
  %2010 = vmatmul.f32.gmra.mxu0 %v484
  %v2011 = vpop.f32.mrf.mxu0
  %v2012 = vadd.f32 0.0, %v2011
  %2013 = vdwg.mxu0
  %s2014 = scalar_lea.vmem %s8, 96
  %v2015 = vld [vmem:[%s2014] sm:$0xff]
  %v2016 = vld [vmem:[%s2014 + $0x8] sm:$0xff]
  %v2017 = vld [vmem:[%s2014 + $0x10] sm:$0xff]
  %v2018 = vld [vmem:[%s2014 + $0x18] sm:$0xff]
  %2019 = vmatpush.msra.mxu0 0.0
  %2020 = vmatpush.msra.mxu0 0.0
  %2021 = vmatpush.msra.mxu0 0.0
  %2022 = vmatpush.msra.mxu0 0.0
  %2023 = vmatpush.msra.mxu0 0.0
  %2024 = vmatpush.msra.mxu0 0.0
  %2025 = vmatpush.msra.mxu0 0.0
  %2026 = vmatpush.msra.mxu0 0.0
  %2027 = vmatpush.msra.mxu0 0.0
  %2028 = vmatpush.msra.mxu0 0.0
  %2029 = vmatpush.msra.mxu0 0.0
  %2030 = vmatpush.msra.mxu0 0.0
  %2031 = vmatpush.msra.mxu0 %v2018
  %2032 = vmatpush.msra.mxu0 %v2017
  %2033 = vmatpush.msra.mxu0 %v2016
  %2034 = vmatpush.msra.mxu0 %v2015
  %2035 = vmatmul.f32.gmra.mxu0 %v439
  %v2036 = vpop.f32.mrf.mxu0
  %v2037 = vadd.f32 0.0, %v2036
  %2038 = vmatmul.f32.gmra.mxu0 %v442
  %v2039 = vpop.f32.mrf.mxu0
  %v2040 = vadd.f32 0.0, %v2039
  %2041 = vmatmul.f32.gmra.mxu0 %v445
  %v2042 = vpop.f32.mrf.mxu0
  %v2043 = vadd.f32 0.0, %v2042
  %2044 = vmatmul.f32.gmra.mxu0 %v448
  %v2045 = vpop.f32.mrf.mxu0
  %v2046 = vadd.f32 0.0, %v2045
  %2047 = vmatmul.f32.gmra.mxu0 %v451
  %v2048 = vpop.f32.mrf.mxu0
  %v2049 = vadd.f32 0.0, %v2048
  %2050 = vmatmul.f32.gmra.mxu0 %v454
  %v2051 = vpop.f32.mrf.mxu0
  %v2052 = vadd.f32 0.0, %v2051
  %2053 = vmatmul.f32.gmra.mxu0 %v457
  %v2054 = vpop.f32.mrf.mxu0
  %v2055 = vadd.f32 0.0, %v2054
  %2056 = vmatmul.f32.gmra.mxu0 %v460
  %v2057 = vpop.f32.mrf.mxu0
  %v2058 = vadd.f32 0.0, %v2057
  %2059 = vmatmul.f32.gmra.mxu0 %v463
  %v2060 = vpop.f32.mrf.mxu0
  %v2061 = vadd.f32 0.0, %v2060
  %2062 = vmatmul.f32.gmra.mxu0 %v466
  %v2063 = vpop.f32.mrf.mxu0
  %v2064 = vadd.f32 0.0, %v2063
  %2065 = vmatmul.f32.gmra.mxu0 %v469
  %v2066 = vpop.f32.mrf.mxu0
  %v2067 = vadd.f32 0.0, %v2066
  %2068 = vmatmul.f32.gmra.mxu0 %v472
  %v2069 = vpop.f32.mrf.mxu0
  %v2070 = vadd.f32 0.0, %v2069
  %2071 = vmatmul.f32.gmra.mxu0 %v475
  %v2072 = vpop.f32.mrf.mxu0
  %v2073 = vadd.f32 0.0, %v2072
  %2074 = vmatmul.f32.gmra.mxu0 %v478
  %v2075 = vpop.f32.mrf.mxu0
  %v2076 = vadd.f32 0.0, %v2075
  %2077 = vmatmul.f32.gmra.mxu0 %v481
  %v2078 = vpop.f32.mrf.mxu0
  %v2079 = vadd.f32 0.0, %v2078
  %2080 = vmatmul.f32.gmra.mxu0 %v484
  %v2081 = vpop.f32.mrf.mxu0
  %v2082 = vadd.f32 0.0, %v2081
  %2083 = vdwg.mxu0
  %v2085 = vperm.slane %v131, 0
  %2087 = vmatpush.msra.mxu0 %v1872
  %2088 = vmatpush.msra.mxu0 %v1869
  %2089 = vmatpush.msra.mxu0 %v1866
  %2090 = vmatpush.msra.mxu0 %v1863
  %2091 = vmatpush.msra.mxu0 %v1860
  %2092 = vmatpush.msra.mxu0 %v1857
  %2093 = vmatpush.msra.mxu0 %v1854
  %2094 = vmatpush.msra.mxu0 %v1851
  %2095 = vmatpush.msra.mxu0 %v1848
  %2096 = vmatpush.msra.mxu0 %v1845
  %2097 = vmatpush.msra.mxu0 %v1842
  %2098 = vmatpush.msra.mxu0 %v1839
  %2099 = vmatpush.msra.mxu0 %v1836
  %2100 = vmatpush.msra.mxu0 %v1833
  %2101 = vmatpush.msra.mxu0 %v1830
  %2102 = vmatpush.msra.mxu0 %v1827
  %2103 = vmatmul.f32.gmra.mxu0 %v1082
  %v2104 = vpop.f32.mrf.mxu0
  %v2105 = vadd.f32 %v2085, %v2104
  %2106 = vmatmul.f32.gmra.mxu0 %v1097
  %v2107 = vpop.f32.mrf.mxu0
  %v2108 = vadd.f32 %v2085, %v2107
  %2109 = vmatmul.f32.gmra.mxu0 %v1112
  %v2110 = vpop.f32.mrf.mxu0
  %v2111 = vadd.f32 %v2085, %v2110
  %2112 = vmatmul.f32.gmra.mxu0 %v1127
  %v2113 = vpop.f32.mrf.mxu0
  %v2114 = vadd.f32 %v2085, %v2113
  %2115 = vmatmul.f32.gmra.mxu0 %v1142
  %v2116 = vpop.f32.mrf.mxu0
  %v2117 = vadd.f32 %v2085, %v2116
  %2118 = vmatmul.f32.gmra.mxu0 %v1157
  %v2119 = vpop.f32.mrf.mxu0
  %v2120 = vadd.f32 %v2085, %v2119
  %2121 = vmatmul.f32.gmra.mxu0 %v1172
  %v2122 = vpop.f32.mrf.mxu0
  %v2123 = vadd.f32 %v2085, %v2122
  %2124 = vmatmul.f32.gmra.mxu0 %v1187
  %v2125 = vpop.f32.mrf.mxu0
  %v2126 = vadd.f32 %v2085, %v2125
  %2127 = vdwg.mxu0
  %2128 = vmatpush.msra.mxu0 %v1942
  %2129 = vmatpush.msra.mxu0 %v1939
  %2130 = vmatpush.msra.mxu0 %v1936
  %2131 = vmatpush.msra.mxu0 %v1933
  %2132 = vmatpush.msra.mxu0 %v1930
  %2133 = vmatpush.msra.mxu0 %v1927
  %2134 = vmatpush.msra.mxu0 %v1924
  %2135 = vmatpush.msra.mxu0 %v1921
  %2136 = vmatpush.msra.mxu0 %v1918
  %2137 = vmatpush.msra.mxu0 %v1915
  %2138 = vmatpush.msra.mxu0 %v1912
  %2139 = vmatpush.msra.mxu0 %v1909
  %2140 = vmatpush.msra.mxu0 %v1906
  %2141 = vmatpush.msra.mxu0 %v1903
  %2142 = vmatpush.msra.mxu0 %v1900
  %2143 = vmatpush.msra.mxu0 %v1897
  %2144 = vmatmul.f32.gmra.mxu0 %v1274
  %v2145 = vpop.f32.mrf.mxu0
  %v2146 = vadd.f32 %v2105, %v2145
  %2147 = vmatmul.f32.gmra.mxu0 %v1289
  %v2148 = vpop.f32.mrf.mxu0
  %v2149 = vadd.f32 %v2108, %v2148
  %2150 = vmatmul.f32.gmra.mxu0 %v1304
  %v2151 = vpop.f32.mrf.mxu0
  %v2152 = vadd.f32 %v2111, %v2151
  %2153 = vmatmul.f32.gmra.mxu0 %v1319
  %v2154 = vpop.f32.mrf.mxu0
  %v2155 = vadd.f32 %v2114, %v2154
  %2156 = vmatmul.f32.gmra.mxu0 %v1334
  %v2157 = vpop.f32.mrf.mxu0
  %v2158 = vadd.f32 %v2117, %v2157
  %2159 = vmatmul.f32.gmra.mxu0 %v1349
  %v2160 = vpop.f32.mrf.mxu0
  %v2161 = vadd.f32 %v2120, %v2160
  %2162 = vmatmul.f32.gmra.mxu0 %v1364
  %v2163 = vpop.f32.mrf.mxu0
  %v2164 = vadd.f32 %v2123, %v2163
  %2165 = vmatmul.f32.gmra.mxu0 %v1379
  %v2166 = vpop.f32.mrf.mxu0
  %v2167 = vadd.f32 %v2126, %v2166
  %2168 = vdwg.mxu0
  %2169 = vmatpush.msra.mxu0 %v2012
  %2170 = vmatpush.msra.mxu0 %v2009
  %2171 = vmatpush.msra.mxu0 %v2006
  %2172 = vmatpush.msra.mxu0 %v2003
  %2173 = vmatpush.msra.mxu0 %v2000
  %2174 = vmatpush.msra.mxu0 %v1997
  %2175 = vmatpush.msra.mxu0 %v1994
  %2176 = vmatpush.msra.mxu0 %v1991
  %2177 = vmatpush.msra.mxu0 %v1988
  %2178 = vmatpush.msra.mxu0 %v1985
  %2179 = vmatpush.msra.mxu0 %v1982
  %2180 = vmatpush.msra.mxu0 %v1979
  %2181 = vmatpush.msra.mxu0 %v1976
  %2182 = vmatpush.msra.mxu0 %v1973
  %2183 = vmatpush.msra.mxu0 %v1970
  %2184 = vmatpush.msra.mxu0 %v1967
  %2185 = vmatmul.f32.gmra.mxu0 %v1474
  %v2186 = vpop.f32.mrf.mxu0
  %v2187 = vadd.f32 %v2146, %v2186
  %2188 = vmatmul.f32.gmra.mxu0 %v1489
  %v2189 = vpop.f32.mrf.mxu0
  %v2190 = vadd.f32 %v2149, %v2189
  %2191 = vmatmul.f32.gmra.mxu0 %v1504
  %v2192 = vpop.f32.mrf.mxu0
  %v2193 = vadd.f32 %v2152, %v2192
  %2194 = vmatmul.f32.gmra.mxu0 %v1519
  %v2195 = vpop.f32.mrf.mxu0
  %v2196 = vadd.f32 %v2155, %v2195
  %2197 = vmatmul.f32.gmra.mxu0 %v1534
  %v2198 = vpop.f32.mrf.mxu0
  %v2199 = vadd.f32 %v2158, %v2198
  %2200 = vmatmul.f32.gmra.mxu0 %v1549
  %v2201 = vpop.f32.mrf.mxu0
  %v2202 = vadd.f32 %v2161, %v2201
  %2203 = vmatmul.f32.gmra.mxu0 %v1564
  %v2204 = vpop.f32.mrf.mxu0
  %v2205 = vadd.f32 %v2164, %v2204
  %2206 = vmatmul.f32.gmra.mxu0 %v1579
  %v2207 = vpop.f32.mrf.mxu0
  %v2208 = vadd.f32 %v2167, %v2207
  %2209 = vdwg.mxu0
  %2210 = vmatpush.msra.mxu0 %v2082
  %2211 = vmatpush.msra.mxu0 %v2079
  %2212 = vmatpush.msra.mxu0 %v2076
  %2213 = vmatpush.msra.mxu0 %v2073
  %2214 = vmatpush.msra.mxu0 %v2070
  %2215 = vmatpush.msra.mxu0 %v2067
  %2216 = vmatpush.msra.mxu0 %v2064
  %2217 = vmatpush.msra.mxu0 %v2061
  %2218 = vmatpush.msra.mxu0 %v2058
  %2219 = vmatpush.msra.mxu0 %v2055
  %2220 = vmatpush.msra.mxu0 %v2052
  %2221 = vmatpush.msra.mxu0 %v2049
  %2222 = vmatpush.msra.mxu0 %v2046
  %2223 = vmatpush.msra.mxu0 %v2043
  %2224 = vmatpush.msra.mxu0 %v2040
  %2225 = vmatpush.msra.mxu0 %v2037
  %2226 = vmatmul.f32.gmra.mxu0 %v1674
  %v2227 = vpop.f32.mrf.mxu0
  %v2228 = vadd.f32 %v2187, %v2227
  %2229 = vmatmul.f32.gmra.mxu0 %v1689
  %v2230 = vpop.f32.mrf.mxu0
  %v2231 = vadd.f32 %v2190, %v2230
  %2232 = vmatmul.f32.gmra.mxu0 %v1704
  %v2233 = vpop.f32.mrf.mxu0
  %v2234 = vadd.f32 %v2193, %v2233
  %2235 = vmatmul.f32.gmra.mxu0 %v1719
  %v2236 = vpop.f32.mrf.mxu0
  %v2237 = vadd.f32 %v2196, %v2236
  %2238 = vmatmul.f32.gmra.mxu0 %v1734
  %v2239 = vpop.f32.mrf.mxu0
  %v2240 = vadd.f32 %v2199, %v2239
  %2241 = vmatmul.f32.gmra.mxu0 %v1749
  %v2242 = vpop.f32.mrf.mxu0
  %v2243 = vadd.f32 %v2202, %v2242
  %2244 = vmatmul.f32.gmra.mxu0 %v1764
  %v2245 = vpop.f32.mrf.mxu0
  %v2246 = vadd.f32 %v2205, %v2245
  %2247 = vmatmul.f32.gmra.mxu0 %v1779
  %v2248 = vpop.f32.mrf.mxu0
  %v2249 = vadd.f32 %v2208, %v2248
  %2250 = vdwg.mxu0
  %v2251 = vadd.f32 %v137, %v2228
  %v2252 = vadd.f32 %v138, %v2231
  %v2253 = vadd.f32 %v139, %v2234
  %v2254 = vadd.f32 %v140, %v2237
  %v2255 = vadd.f32 %v141, %v2240
  %v2256 = vadd.f32 %v142, %v2243
  %v2257 = vadd.f32 %v143, %v2246
  %v2258 = vadd.f32 %v144, %v2249
  %s2259 = scalar_lea.vmem %s0, 64
  %v2260 = vld [vmem:[%s2259] sm:$0xff]
  %v2261 = vld [vmem:[%s2259 + $0x8] sm:$0xff]
  %v2262 = vld [vmem:[%s2259 + $0x10] sm:$0xff]
  %v2263 = vld [vmem:[%s2259 + $0x18] sm:$0xff]
  %v2264 = vld [vmem:[%s2259 + $0x20] sm:$0xff]
  %v2265 = vld [vmem:[%s2259 + $0x28] sm:$0xff]
  %v2266 = vld [vmem:[%s2259 + $0x30] sm:$0xff]
  %v2267 = vld [vmem:[%s2259 + $0x38] sm:$0xff]
  %s2268 = scalar_lea.vmem %s1, 128
  %v2269 = vld [vmem:[%s2268] sm:$0xff]
  %v2270 = vld [vmem:[%s2268 + $0x8] sm:$0xff]
  %v2271 = vld [vmem:[%s2268 + $0x10] sm:$0xff]
  %v2272 = vld [vmem:[%s2268 + $0x18] sm:$0xff]
  %v2273 = vld [vmem:[%s2268 + $0x20] sm:$0xff]
  %v2274 = vld [vmem:[%s2268 + $0x28] sm:$0xff]
  %v2275 = vld [vmem:[%s2268 + $0x30] sm:$0xff]
  %v2276 = vld [vmem:[%s2268 + $0x38] sm:$0xff]
  %v2277 = vld [vmem:[%s2268 + $0x40] sm:$0xff]
  %v2278 = vld [vmem:[%s2268 + $0x48] sm:$0xff]
  %v2279 = vld [vmem:[%s2268 + $0x50] sm:$0xff]
  %v2280 = vld [vmem:[%s2268 + $0x58] sm:$0xff]
  %v2281 = vld [vmem:[%s2268 + $0x60] sm:$0xff]
  %v2282 = vld [vmem:[%s2268 + $0x68] sm:$0xff]
  %v2283 = vld [vmem:[%s2268 + $0x70] sm:$0xff]
  %v2284 = vld [vmem:[%s2268 + $0x78] sm:$0xff]
  %v2285 = vsel %vm161, %v2260, 0.0
  %2286 = vadd.xlane.f32.xlu0 %v2285
  %v2287 = vpop.xlane.xlu0 %2286
  %v2288 = vsel %vm161, %v2261, 0.0
  %2289 = vadd.xlane.f32.xlu0 %v2288
  %v2290 = vpop.xlane.xlu0 %2289
  %v2291 = vsel %vm161, %v2262, 0.0
  %2292 = vadd.xlane.f32.xlu0 %v2291
  %v2293 = vpop.xlane.xlu0 %2292
  %v2294 = vsel %vm161, %v2263, 0.0
  %2295 = vadd.xlane.f32.xlu0 %v2294
  %v2296 = vpop.xlane.xlu0 %2295
  %v2297 = vsel %vm161, %v2264, 0.0
  %2298 = vadd.xlane.f32.xlu0 %v2297
  %v2299 = vpop.xlane.xlu0 %2298
  %v2300 = vsel %vm161, %v2265, 0.0
  %2301 = vadd.xlane.f32.xlu0 %v2300
  %v2302 = vpop.xlane.xlu0 %2301
  %v2303 = vsel %vm161, %v2266, 0.0
  %2304 = vadd.xlane.f32.xlu0 %v2303
  %v2305 = vpop.xlane.xlu0 %2304
  %v2306 = vsel %vm161, %v2267, 0.0
  %2307 = vadd.xlane.f32.xlu0 %v2306
  %v2308 = vpop.xlane.xlu0 %2307
  %v2309 = vmul.f32 %v2287, %v192
  %v2310 = vmul.f32 %v2290, %v192
  %v2311 = vmul.f32 %v2293, %v192
  %v2312 = vmul.f32 %v2296, %v192
  %v2313 = vmul.f32 %v2299, %v192
  %v2314 = vmul.f32 %v2302, %v192
  %v2315 = vmul.f32 %v2305, %v192
  %v2316 = vmul.f32 %v2308, %v192
  %v2317 = vsub.f32 %v2260, %v2309
  %v2318 = vsub.f32 %v2261, %v2310
  %v2319 = vsub.f32 %v2262, %v2311
  %v2320 = vsub.f32 %v2263, %v2312
  %v2321 = vsub.f32 %v2264, %v2313
  %v2322 = vsub.f32 %v2265, %v2314
  %v2323 = vsub.f32 %v2266, %v2315
  %v2324 = vsub.f32 %v2267, %v2316
  %v2325 = vmul.f32 %v2317, %v2317
  %v2326 = vmul.f32 %v2318, %v2318
  %v2327 = vmul.f32 %v2319, %v2319
  %v2328 = vmul.f32 %v2320, %v2320
  %v2329 = vmul.f32 %v2321, %v2321
  %v2330 = vmul.f32 %v2322, %v2322
  %v2331 = vmul.f32 %v2323, %v2323
  %v2332 = vmul.f32 %v2324, %v2324
  %v2333 = vsel %vm161, %v2325, 0.0
  %2334 = vadd.xlane.f32.xlu0 %v2333
  %v2335 = vpop.xlane.xlu0 %2334
  %v2336 = vsel %vm161, %v2326, 0.0
  %2337 = vadd.xlane.f32.xlu0 %v2336
  %v2338 = vpop.xlane.xlu0 %2337
  %v2339 = vsel %vm161, %v2327, 0.0
  %2340 = vadd.xlane.f32.xlu0 %v2339
  %v2341 = vpop.xlane.xlu0 %2340
  %v2342 = vsel %vm161, %v2328, 0.0
  %2343 = vadd.xlane.f32.xlu0 %v2342
  %v2344 = vpop.xlane.xlu0 %2343
  %v2345 = vsel %vm161, %v2329, 0.0
  %2346 = vadd.xlane.f32.xlu0 %v2345
  %v2347 = vpop.xlane.xlu0 %2346
  %v2348 = vsel %vm161, %v2330, 0.0
  %2349 = vadd.xlane.f32.xlu0 %v2348
  %v2350 = vpop.xlane.xlu0 %2349
  %v2351 = vsel %vm161, %v2331, 0.0
  %2352 = vadd.xlane.f32.xlu0 %v2351
  %v2353 = vpop.xlane.xlu0 %2352
  %v2354 = vsel %vm161, %v2332, 0.0
  %2355 = vadd.xlane.f32.xlu0 %v2354
  %v2356 = vpop.xlane.xlu0 %2355
  %v2357 = vmul.f32 %v2335, %v192
  %v2358 = vmul.f32 %v2338, %v192
  %v2359 = vmul.f32 %v2341, %v192
  %v2360 = vmul.f32 %v2344, %v192
  %v2361 = vmul.f32 %v2347, %v192
  %v2362 = vmul.f32 %v2350, %v192
  %v2363 = vmul.f32 %v2353, %v192
  %v2364 = vmul.f32 %v2356, %v192
  %v2365 = vadd.f32 %v2357, 1e-05
  %v2366 = vadd.f32 %v2358, 1e-05
  %v2367 = vadd.f32 %v2359, 1e-05
  %v2368 = vadd.f32 %v2360, 1e-05
  %v2369 = vadd.f32 %v2361, 1e-05
  %v2370 = vadd.f32 %v2362, 1e-05
  %v2371 = vadd.f32 %v2363, 1e-05
  %v2372 = vadd.f32 %v2364, 1e-05
  %v2373 = vrsqrt.pop %v2365
  %v2374 = vmul.f32 %v2373, %v2365
  %v2375 = vmul.f32 %v2374, %v2373
  %v2376 = vmul.f32 0.5, %v2375
  %v2377 = vsub.f32 1.5, %v2376
  %v2378 = vmul.f32 %v2373, %v2377
  %vm2379 = vweird.f32 %v2365
  %vm2380 = vweird.f32 %v2373
  %vm2381 = vmor %vm2379, %vm2380
  %v2382 = vsel %vm2381, %v2373, %v2378
  %v2383 = vrsqrt.pop %v2366
  %v2384 = vmul.f32 %v2383, %v2366
  %v2385 = vmul.f32 %v2384, %v2383
  %v2386 = vmul.f32 0.5, %v2385
  %v2387 = vsub.f32 1.5, %v2386
  %v2388 = vmul.f32 %v2383, %v2387
  %vm2389 = vweird.f32 %v2366
  %vm2390 = vweird.f32 %v2383
  %vm2391 = vmor %vm2389, %vm2390
  %v2392 = vsel %vm2391, %v2383, %v2388
  %v2393 = vrsqrt.pop %v2367
  %v2394 = vmul.f32 %v2393, %v2367
  %v2395 = vmul.f32 %v2394, %v2393
  %v2396 = vmul.f32 0.5, %v2395
  %v2397 = vsub.f32 1.5, %v2396
  %v2398 = vmul.f32 %v2393, %v2397
  %vm2399 = vweird.f32 %v2367
  %vm2400 = vweird.f32 %v2393
  %vm2401 = vmor %vm2399, %vm2400
  %v2402 = vsel %vm2401, %v2393, %v2398
  %v2403 = vrsqrt.pop %v2368
  %v2404 = vmul.f32 %v2403, %v2368
  %v2405 = vmul.f32 %v2404, %v2403
  %v2406 = vmul.f32 0.5, %v2405
  %v2407 = vsub.f32 1.5, %v2406
  %v2408 = vmul.f32 %v2403, %v2407
  %vm2409 = vweird.f32 %v2368
  %vm2410 = vweird.f32 %v2403
  %vm2411 = vmor %vm2409, %vm2410
  %v2412 = vsel %vm2411, %v2403, %v2408
  %v2413 = vrsqrt.pop %v2369
  %v2414 = vmul.f32 %v2413, %v2369
  %v2415 = vmul.f32 %v2414, %v2413
  %v2416 = vmul.f32 0.5, %v2415
  %v2417 = vsub.f32 1.5, %v2416
  %v2418 = vmul.f32 %v2413, %v2417
  %vm2419 = vweird.f32 %v2369
  %vm2420 = vweird.f32 %v2413
  %vm2421 = vmor %vm2419, %vm2420
  %v2422 = vsel %vm2421, %v2413, %v2418
  %v2423 = vrsqrt.pop %v2370
  %v2424 = vmul.f32 %v2423, %v2370
  %v2425 = vmul.f32 %v2424, %v2423
  %v2426 = vmul.f32 0.5, %v2425
  %v2427 = vsub.f32 1.5, %v2426
  %v2428 = vmul.f32 %v2423, %v2427
  %vm2429 = vweird.f32 %v2370
  %vm2430 = vweird.f32 %v2423
  %vm2431 = vmor %vm2429, %vm2430
  %v2432 = vsel %vm2431, %v2423, %v2428
  %v2433 = vrsqrt.pop %v2371
  %v2434 = vmul.f32 %v2433, %v2371
  %v2435 = vmul.f32 %v2434, %v2433
  %v2436 = vmul.f32 0.5, %v2435
  %v2437 = vsub.f32 1.5, %v2436
  %v2438 = vmul.f32 %v2433, %v2437
  %vm2439 = vweird.f32 %v2371
  %vm2440 = vweird.f32 %v2433
  %vm2441 = vmor %vm2439, %vm2440
  %v2442 = vsel %vm2441, %v2433, %v2438
  %v2443 = vrsqrt.pop %v2372
  %v2444 = vmul.f32 %v2443, %v2372
  %v2445 = vmul.f32 %v2444, %v2443
  %v2446 = vmul.f32 0.5, %v2445
  %v2447 = vsub.f32 1.5, %v2446
  %v2448 = vmul.f32 %v2443, %v2447
  %vm2449 = vweird.f32 %v2372
  %vm2450 = vweird.f32 %v2443
  %vm2451 = vmor %vm2449, %vm2450
  %v2452 = vsel %vm2451, %v2443, %v2448
  %v2453 = vmul.f32 %v2317, %v2382
  %v2454 = vmul.f32 %v2318, %v2392
  %v2455 = vmul.f32 %v2319, %v2402
  %v2456 = vmul.f32 %v2320, %v2412
  %v2457 = vmul.f32 %v2321, %v2422
  %v2458 = vmul.f32 %v2322, %v2432
  %v2459 = vmul.f32 %v2323, %v2442
  %v2460 = vmul.f32 %v2324, %v2452
  %v2461 = vmul.f32 %v2453, %v346
  %v2462 = vmul.f32 %v2454, %v346
  %v2463 = vmul.f32 %v2455, %v346
  %v2464 = vmul.f32 %v2456, %v346
  %v2465 = vmul.f32 %v2457, %v346
  %v2466 = vmul.f32 %v2458, %v346
  %v2467 = vmul.f32 %v2459, %v346
  %v2468 = vmul.f32 %v2460, %v346
  %v2469 = vadd.f32 %v2461, %v357
  %v2470 = vadd.f32 %v2462, %v357
  %v2471 = vadd.f32 %v2463, %v357
  %v2472 = vadd.f32 %v2464, %v357
  %v2473 = vadd.f32 %v2465, %v357
  %v2474 = vadd.f32 %v2466, %v357
  %v2475 = vadd.f32 %v2467, %v357
  %v2476 = vadd.f32 %v2468, %v357
  %v2478 = vsel %vm161, %v2469, 0
  %v2481 = vsel %vm161, %v2470, 0
  %v2484 = vsel %vm161, %v2471, 0
  %v2487 = vsel %vm161, %v2472, 0
  %v2490 = vsel %vm161, %v2473, 0
  %v2493 = vsel %vm161, %v2474, 0
  %v2496 = vsel %vm161, %v2475, 0
  %v2499 = vsel %vm161, %v2476, 0
  %2501 = vmatpush.msra.mxu0 0.0
  %2502 = vmatpush.msra.mxu0 0.0
  %2503 = vmatpush.msra.mxu0 0.0
  %2504 = vmatpush.msra.mxu0 0.0
  %2505 = vmatpush.msra.mxu0 0.0
  %2506 = vmatpush.msra.mxu0 0.0
  %2507 = vmatpush.msra.mxu0 0.0
  %2508 = vmatpush.msra.mxu0 0.0
  %2509 = vmatpush.msra.mxu0 0.0
  %2510 = vmatpush.msra.mxu0 0.0
  %2511 = vmatpush.msra.mxu0 0.0
  %2512 = vmatpush.msra.mxu0 0.0
  %2513 = vmatpush.msra.mxu0 %v60
  %2514 = vmatpush.msra.mxu0 %v59
  %2515 = vmatpush.msra.mxu0 %v58
  %2516 = vmatpush.msra.mxu0 %v57
  %2517 = vmatmul.f32.gmra.mxu0 %v2478
  %v2518 = vpop.f32.mrf.mxu0
  %v2519 = vadd.f32 %v368, %v2518
  %2520 = vmatmul.f32.gmra.mxu0 %v2481
  %v2521 = vpop.f32.mrf.mxu0
  %v2522 = vadd.f32 %v368, %v2521
  %2523 = vmatmul.f32.gmra.mxu0 %v2484
  %v2524 = vpop.f32.mrf.mxu0
  %v2525 = vadd.f32 %v368, %v2524
  %2526 = vmatmul.f32.gmra.mxu0 %v2487
  %v2527 = vpop.f32.mrf.mxu0
  %v2528 = vadd.f32 %v368, %v2527
  %2529 = vmatmul.f32.gmra.mxu0 %v2490
  %v2530 = vpop.f32.mrf.mxu0
  %v2531 = vadd.f32 %v368, %v2530
  %2532 = vmatmul.f32.gmra.mxu0 %v2493
  %v2533 = vpop.f32.mrf.mxu0
  %v2534 = vadd.f32 %v368, %v2533
  %2535 = vmatmul.f32.gmra.mxu0 %v2496
  %v2536 = vpop.f32.mrf.mxu0
  %v2537 = vadd.f32 %v368, %v2536
  %2538 = vmatmul.f32.gmra.mxu0 %v2499
  %v2539 = vpop.f32.mrf.mxu0
  %v2540 = vadd.f32 %v368, %v2539
  %2541 = vdwg.mxu0
  %v2543 = vsel %vm161, %v2269, 0
  %v2546 = vsel %vm161, %v2270, 0
  %v2549 = vsel %vm161, %v2271, 0
  %v2552 = vsel %vm161, %v2272, 0
  %v2555 = vsel %vm161, %v2273, 0
  %v2558 = vsel %vm161, %v2274, 0
  %v2561 = vsel %vm161, %v2275, 0
  %v2564 = vsel %vm161, %v2276, 0
  %v2567 = vsel %vm161, %v2277, 0
  %v2570 = vsel %vm161, %v2278, 0
  %v2573 = vsel %vm161, %v2279, 0
  %v2576 = vsel %vm161, %v2280, 0
  %v2579 = vsel %vm161, %v2281, 0
  %v2582 = vsel %vm161, %v2282, 0
  %v2585 = vsel %vm161, %v2283, 0
  %v2588 = vsel %vm161, %v2284, 0
  %2590 = vmatpush.msra.mxu0 0.0
  %2591 = vmatpush.msra.mxu0 0.0
  %2592 = vmatpush.msra.mxu0 0.0
  %2593 = vmatpush.msra.mxu0 0.0
  %2594 = vmatpush.msra.mxu0 0.0
  %2595 = vmatpush.msra.mxu0 0.0
  %2596 = vmatpush.msra.mxu0 0.0
  %2597 = vmatpush.msra.mxu0 0.0
  %2598 = vmatpush.msra.mxu0 0.0
  %2599 = vmatpush.msra.mxu0 0.0
  %2600 = vmatpush.msra.mxu0 0.0
  %2601 = vmatpush.msra.mxu0 0.0
  %2602 = vmatpush.msra.mxu0 %v65
  %2603 = vmatpush.msra.mxu0 %v64
  %2604 = vmatpush.msra.mxu0 %v63
  %2605 = vmatpush.msra.mxu0 %v62
  %2606 = vmatmul.f32.gmra.mxu0 %v2543
  %v2607 = vpop.f32.mrf.mxu0
  %v2608 = vadd.f32 %v436, %v2607
  %2609 = vmatmul.f32.gmra.mxu0 %v2546
  %v2610 = vpop.f32.mrf.mxu0
  %v2611 = vadd.f32 %v436, %v2610
  %2612 = vmatmul.f32.gmra.mxu0 %v2549
  %v2613 = vpop.f32.mrf.mxu0
  %v2614 = vadd.f32 %v436, %v2613
  %2615 = vmatmul.f32.gmra.mxu0 %v2552
  %v2616 = vpop.f32.mrf.mxu0
  %v2617 = vadd.f32 %v436, %v2616
  %2618 = vmatmul.f32.gmra.mxu0 %v2555
  %v2619 = vpop.f32.mrf.mxu0
  %v2620 = vadd.f32 %v436, %v2619
  %2621 = vmatmul.f32.gmra.mxu0 %v2558
  %v2622 = vpop.f32.mrf.mxu0
  %v2623 = vadd.f32 %v436, %v2622
  %2624 = vmatmul.f32.gmra.mxu0 %v2561
  %v2625 = vpop.f32.mrf.mxu0
  %v2626 = vadd.f32 %v436, %v2625
  %2627 = vmatmul.f32.gmra.mxu0 %v2564
  %v2628 = vpop.f32.mrf.mxu0
  %v2629 = vadd.f32 %v436, %v2628
  %2630 = vmatmul.f32.gmra.mxu0 %v2567
  %v2631 = vpop.f32.mrf.mxu0
  %v2632 = vadd.f32 %v436, %v2631
  %2633 = vmatmul.f32.gmra.mxu0 %v2570
  %v2634 = vpop.f32.mrf.mxu0
  %v2635 = vadd.f32 %v436, %v2634
  %2636 = vmatmul.f32.gmra.mxu0 %v2573
  %v2637 = vpop.f32.mrf.mxu0
  %v2638 = vadd.f32 %v436, %v2637
  %2639 = vmatmul.f32.gmra.mxu0 %v2576
  %v2640 = vpop.f32.mrf.mxu0
  %v2641 = vadd.f32 %v436, %v2640
  %2642 = vmatmul.f32.gmra.mxu0 %v2579
  %v2643 = vpop.f32.mrf.mxu0
  %v2644 = vadd.f32 %v436, %v2643
  %2645 = vmatmul.f32.gmra.mxu0 %v2582
  %v2646 = vpop.f32.mrf.mxu0
  %v2647 = vadd.f32 %v436, %v2646
  %2648 = vmatmul.f32.gmra.mxu0 %v2585
  %v2649 = vpop.f32.mrf.mxu0
  %v2650 = vadd.f32 %v436, %v2649
  %2651 = vmatmul.f32.gmra.mxu0 %v2588
  %v2652 = vpop.f32.mrf.mxu0
  %v2653 = vadd.f32 %v436, %v2652
  %2654 = vdwg.mxu0
  %v2655 = vmul.f32 %v2608, %v67
  %v2656 = vmul.f32 %v2611, %v68
  %v2657 = vmul.f32 %v2614, %v69
  %v2658 = vmul.f32 %v2617, %v70
  %v2659 = vmul.f32 %v2620, %v71
  %v2660 = vmul.f32 %v2623, %v72
  %v2661 = vmul.f32 %v2626, %v73
  %v2662 = vmul.f32 %v2629, %v74
  %v2663 = vmul.f32 %v2632, %v75
  %v2664 = vmul.f32 %v2635, %v76
  %v2665 = vmul.f32 %v2638, %v77
  %v2666 = vmul.f32 %v2641, %v78
  %v2667 = vmul.f32 %v2644, %v79
  %v2668 = vmul.f32 %v2647, %v80
  %v2669 = vmul.f32 %v2650, %v81
  %v2670 = vmul.f32 %v2653, %v82
  %v2671 = vmul.f32 %v2608, %v83
  %v2672 = vmul.f32 %v2611, %v84
  %v2673 = vmul.f32 %v2614, %v85
  %v2674 = vmul.f32 %v2617, %v86
  %v2675 = vmul.f32 %v2620, %v87
  %v2676 = vmul.f32 %v2623, %v88
  %v2677 = vmul.f32 %v2626, %v89
  %v2678 = vmul.f32 %v2629, %v90
  %v2679 = vmul.f32 %v2632, %v91
  %v2680 = vmul.f32 %v2635, %v92
  %v2681 = vmul.f32 %v2638, %v93
  %v2682 = vmul.f32 %v2641, %v94
  %v2683 = vmul.f32 %v2644, %v95
  %v2684 = vmul.f32 %v2647, %v96
  %v2685 = vmul.f32 %v2650, %v97
  %v2686 = vmul.f32 %v2653, %v98
  %v2687 = vmul.f32 %v2608, %v99
  %v2688 = vmul.f32 %v2611, %v100
  %v2689 = vmul.f32 %v2614, %v101
  %v2690 = vmul.f32 %v2617, %v102
  %v2691 = vmul.f32 %v2620, %v103
  %v2692 = vmul.f32 %v2623, %v104
  %v2693 = vmul.f32 %v2626, %v105
  %v2694 = vmul.f32 %v2629, %v106
  %v2695 = vmul.f32 %v2632, %v107
  %v2696 = vmul.f32 %v2635, %v108
  %v2697 = vmul.f32 %v2638, %v109
  %v2698 = vmul.f32 %v2641, %v110
  %v2699 = vmul.f32 %v2644, %v111
  %v2700 = vmul.f32 %v2647, %v112
  %v2701 = vmul.f32 %v2650, %v113
  %v2702 = vmul.f32 %v2653, %v114
  %v2703 = vmul.f32 %v2608, %v115
  %v2704 = vmul.f32 %v2611, %v116
  %v2705 = vmul.f32 %v2614, %v117
  %v2706 = vmul.f32 %v2617, %v118
  %v2707 = vmul.f32 %v2620, %v119
  %v2708 = vmul.f32 %v2623, %v120
  %v2709 = vmul.f32 %v2626, %v121
  %v2710 = vmul.f32 %v2629, %v122
  %v2711 = vmul.f32 %v2632, %v123
  %v2712 = vmul.f32 %v2635, %v124
  %v2713 = vmul.f32 %v2638, %v125
  %v2714 = vmul.f32 %v2641, %v126
  %v2715 = vmul.f32 %v2644, %v127
  %v2716 = vmul.f32 %v2647, %v128
  %v2717 = vmul.f32 %v2650, %v129
  %v2718 = vmul.f32 %v2653, %v130
  %v2720 = vsel %vm161, %v2519, 0
  %v2723 = vsel %vm161, %v2522, 0
  %v2726 = vsel %vm161, %v2525, 0
  %v2729 = vsel %vm161, %v2528, 0
  %v2732 = vsel %vm161, %v2531, 0
  %v2735 = vsel %vm161, %v2534, 0
  %v2738 = vsel %vm161, %v2537, 0
  %v2741 = vsel %vm161, %v2540, 0
  %v2744 = vsel %vm161, %v2655, 0
  %v2747 = vsel %vm161, %v2656, 0
  %v2750 = vsel %vm161, %v2657, 0
  %v2753 = vsel %vm161, %v2658, 0
  %v2756 = vsel %vm161, %v2659, 0
  %v2759 = vsel %vm161, %v2660, 0
  %v2762 = vsel %vm161, %v2661, 0
  %v2765 = vsel %vm161, %v2662, 0
  %v2768 = vsel %vm161, %v2663, 0
  %v2771 = vsel %vm161, %v2664, 0
  %v2774 = vsel %vm161, %v2665, 0
  %v2777 = vsel %vm161, %v2666, 0
  %v2780 = vsel %vm161, %v2667, 0
  %v2783 = vsel %vm161, %v2668, 0
  %v2786 = vsel %vm161, %v2669, 0
  %v2789 = vsel %vm161, %v2670, 0
  %v2792 = vsel %vm161, %v2671, 0
  %v2795 = vsel %vm161, %v2672, 0
  %v2798 = vsel %vm161, %v2673, 0
  %v2801 = vsel %vm161, %v2674, 0
  %v2804 = vsel %vm161, %v2675, 0
  %v2807 = vsel %vm161, %v2676, 0
  %v2810 = vsel %vm161, %v2677, 0
  %v2813 = vsel %vm161, %v2678, 0
  %v2816 = vsel %vm161, %v2679, 0
  %v2819 = vsel %vm161, %v2680, 0
  %v2822 = vsel %vm161, %v2681, 0
  %v2825 = vsel %vm161, %v2682, 0
  %v2828 = vsel %vm161, %v2683, 0
  %v2831 = vsel %vm161, %v2684, 0
  %v2834 = vsel %vm161, %v2685, 0
  %v2837 = vsel %vm161, %v2686, 0
  %v2840 = vsel %vm161, %v2687, 0
  %v2843 = vsel %vm161, %v2688, 0
  %v2846 = vsel %vm161, %v2689, 0
  %v2849 = vsel %vm161, %v2690, 0
  %v2852 = vsel %vm161, %v2691, 0
  %v2855 = vsel %vm161, %v2692, 0
  %v2858 = vsel %vm161, %v2693, 0
  %v2861 = vsel %vm161, %v2694, 0
  %v2864 = vsel %vm161, %v2695, 0
  %v2867 = vsel %vm161, %v2696, 0
  %v2870 = vsel %vm161, %v2697, 0
  %v2873 = vsel %vm161, %v2698, 0
  %v2876 = vsel %vm161, %v2699, 0
  %v2879 = vsel %vm161, %v2700, 0
  %v2882 = vsel %vm161, %v2701, 0
  %v2885 = vsel %vm161, %v2702, 0
  %v2888 = vsel %vm161, %v2703, 0
  %v2891 = vsel %vm161, %v2704, 0
  %v2894 = vsel %vm161, %v2705, 0
  %v2897 = vsel %vm161, %v2706, 0
  %v2900 = vsel %vm161, %v2707, 0
  %v2903 = vsel %vm161, %v2708, 0
  %v2906 = vsel %vm161, %v2709, 0
  %v2909 = vsel %vm161, %v2710, 0
  %v2912 = vsel %vm161, %v2711, 0
  %v2915 = vsel %vm161, %v2712, 0
  %v2918 = vsel %vm161, %v2713, 0
  %v2921 = vsel %vm161, %v2714, 0
  %v2924 = vsel %vm161, %v2715, 0
  %v2927 = vsel %vm161, %v2716, 0
  %v2930 = vsel %vm161, %v2717, 0
  %v2933 = vsel %vm161, %v2718, 0
  %2935 = vmatpush.xpose.msra.mxu0 %v2789
  %2936 = vmatpush.xpose.msra.mxu0 %v2786
  %2937 = vmatpush.xpose.msra.mxu0 %v2783
  %2938 = vmatpush.xpose.msra.mxu0 %v2780
  %2939 = vmatpush.xpose.msra.mxu0 %v2777
  %2940 = vmatpush.xpose.msra.mxu0 %v2774
  %2941 = vmatpush.xpose.msra.mxu0 %v2771
  %2942 = vmatpush.xpose.msra.mxu0 %v2768
  %2943 = vmatpush.xpose.msra.mxu0 %v2765
  %2944 = vmatpush.xpose.msra.mxu0 %v2762
  %2945 = vmatpush.xpose.msra.mxu0 %v2759
  %2946 = vmatpush.xpose.msra.mxu0 %v2756
  %2947 = vmatpush.xpose.msra.mxu0 %v2753
  %2948 = vmatpush.xpose.msra.mxu0 %v2750
  %2949 = vmatpush.xpose.msra.mxu0 %v2747
  %2950 = vmatpush.xpose.msra.mxu0 %v2744
  %2951 = vmatmul.f32.gmra.mxu0 %v2720
  %v2952 = vpop.f32.mrf.mxu0
  %v2953 = vadd.f32 0.0, %v2952
  %2954 = vmatmul.f32.gmra.mxu0 %v2723
  %v2955 = vpop.f32.mrf.mxu0
  %v2956 = vadd.f32 0.0, %v2955
  %2957 = vmatmul.f32.gmra.mxu0 %v2726
  %v2958 = vpop.f32.mrf.mxu0
  %v2959 = vadd.f32 0.0, %v2958
  %2960 = vmatmul.f32.gmra.mxu0 %v2729
  %v2961 = vpop.f32.mrf.mxu0
  %v2962 = vadd.f32 0.0, %v2961
  %2963 = vmatmul.f32.gmra.mxu0 %v2732
  %v2964 = vpop.f32.mrf.mxu0
  %v2965 = vadd.f32 0.0, %v2964
  %2966 = vmatmul.f32.gmra.mxu0 %v2735
  %v2967 = vpop.f32.mrf.mxu0
  %v2968 = vadd.f32 0.0, %v2967
  %2969 = vmatmul.f32.gmra.mxu0 %v2738
  %v2970 = vpop.f32.mrf.mxu0
  %v2971 = vadd.f32 0.0, %v2970
  %2972 = vmatmul.f32.gmra.mxu0 %v2741
  %v2973 = vpop.f32.mrf.mxu0
  %v2974 = vadd.f32 0.0, %v2973
  %2975 = vdwg.mxu0
  %2976 = vmatpush.xpose.msra.mxu0 %v2837
  %2977 = vmatpush.xpose.msra.mxu0 %v2834
  %2978 = vmatpush.xpose.msra.mxu0 %v2831
  %2979 = vmatpush.xpose.msra.mxu0 %v2828
  %2980 = vmatpush.xpose.msra.mxu0 %v2825
  %2981 = vmatpush.xpose.msra.mxu0 %v2822
  %2982 = vmatpush.xpose.msra.mxu0 %v2819
  %2983 = vmatpush.xpose.msra.mxu0 %v2816
  %2984 = vmatpush.xpose.msra.mxu0 %v2813
  %2985 = vmatpush.xpose.msra.mxu0 %v2810
  %2986 = vmatpush.xpose.msra.mxu0 %v2807
  %2987 = vmatpush.xpose.msra.mxu0 %v2804
  %2988 = vmatpush.xpose.msra.mxu0 %v2801
  %2989 = vmatpush.xpose.msra.mxu0 %v2798
  %2990 = vmatpush.xpose.msra.mxu0 %v2795
  %2991 = vmatpush.xpose.msra.mxu0 %v2792
  %2992 = vmatmul.f32.gmra.mxu0 %v2720
  %v2993 = vpop.f32.mrf.mxu0
  %v2994 = vadd.f32 0.0, %v2993
  %2995 = vmatmul.f32.gmra.mxu0 %v2723
  %v2996 = vpop.f32.mrf.mxu0
  %v2997 = vadd.f32 0.0, %v2996
  %2998 = vmatmul.f32.gmra.mxu0 %v2726
  %v2999 = vpop.f32.mrf.mxu0
  %v3000 = vadd.f32 0.0, %v2999
  %3001 = vmatmul.f32.gmra.mxu0 %v2729
  %v3002 = vpop.f32.mrf.mxu0
  %v3003 = vadd.f32 0.0, %v3002
  %3004 = vmatmul.f32.gmra.mxu0 %v2732
  %v3005 = vpop.f32.mrf.mxu0
  %v3006 = vadd.f32 0.0, %v3005
  %3007 = vmatmul.f32.gmra.mxu0 %v2735
  %v3008 = vpop.f32.mrf.mxu0
  %v3009 = vadd.f32 0.0, %v3008
  %3010 = vmatmul.f32.gmra.mxu0 %v2738
  %v3011 = vpop.f32.mrf.mxu0
  %v3012 = vadd.f32 0.0, %v3011
  %3013 = vmatmul.f32.gmra.mxu0 %v2741
  %v3014 = vpop.f32.mrf.mxu0
  %v3015 = vadd.f32 0.0, %v3014
  %3016 = vdwg.mxu0
  %3017 = vmatpush.xpose.msra.mxu0 %v2885
  %3018 = vmatpush.xpose.msra.mxu0 %v2882
  %3019 = vmatpush.xpose.msra.mxu0 %v2879
  %3020 = vmatpush.xpose.msra.mxu0 %v2876
  %3021 = vmatpush.xpose.msra.mxu0 %v2873
  %3022 = vmatpush.xpose.msra.mxu0 %v2870
  %3023 = vmatpush.xpose.msra.mxu0 %v2867
  %3024 = vmatpush.xpose.msra.mxu0 %v2864
  %3025 = vmatpush.xpose.msra.mxu0 %v2861
  %3026 = vmatpush.xpose.msra.mxu0 %v2858
  %3027 = vmatpush.xpose.msra.mxu0 %v2855
  %3028 = vmatpush.xpose.msra.mxu0 %v2852
  %3029 = vmatpush.xpose.msra.mxu0 %v2849
  %3030 = vmatpush.xpose.msra.mxu0 %v2846
  %3031 = vmatpush.xpose.msra.mxu0 %v2843
  %3032 = vmatpush.xpose.msra.mxu0 %v2840
  %3033 = vmatmul.f32.gmra.mxu0 %v2720
  %v3034 = vpop.f32.mrf.mxu0
  %v3035 = vadd.f32 0.0, %v3034
  %3036 = vmatmul.f32.gmra.mxu0 %v2723
  %v3037 = vpop.f32.mrf.mxu0
  %v3038 = vadd.f32 0.0, %v3037
  %3039 = vmatmul.f32.gmra.mxu0 %v2726
  %v3040 = vpop.f32.mrf.mxu0
  %v3041 = vadd.f32 0.0, %v3040
  %3042 = vmatmul.f32.gmra.mxu0 %v2729
  %v3043 = vpop.f32.mrf.mxu0
  %v3044 = vadd.f32 0.0, %v3043
  %3045 = vmatmul.f32.gmra.mxu0 %v2732
  %v3046 = vpop.f32.mrf.mxu0
  %v3047 = vadd.f32 0.0, %v3046
  %3048 = vmatmul.f32.gmra.mxu0 %v2735
  %v3049 = vpop.f32.mrf.mxu0
  %v3050 = vadd.f32 0.0, %v3049
  %3051 = vmatmul.f32.gmra.mxu0 %v2738
  %v3052 = vpop.f32.mrf.mxu0
  %v3053 = vadd.f32 0.0, %v3052
  %3054 = vmatmul.f32.gmra.mxu0 %v2741
  %v3055 = vpop.f32.mrf.mxu0
  %v3056 = vadd.f32 0.0, %v3055
  %3057 = vdwg.mxu0
  %3058 = vmatpush.xpose.msra.mxu0 %v2933
  %3059 = vmatpush.xpose.msra.mxu0 %v2930
  %3060 = vmatpush.xpose.msra.mxu0 %v2927
  %3061 = vmatpush.xpose.msra.mxu0 %v2924
  %3062 = vmatpush.xpose.msra.mxu0 %v2921
  %3063 = vmatpush.xpose.msra.mxu0 %v2918
  %3064 = vmatpush.xpose.msra.mxu0 %v2915
  %3065 = vmatpush.xpose.msra.mxu0 %v2912
  %3066 = vmatpush.xpose.msra.mxu0 %v2909
  %3067 = vmatpush.xpose.msra.mxu0 %v2906
  %3068 = vmatpush.xpose.msra.mxu0 %v2903
  %3069 = vmatpush.xpose.msra.mxu0 %v2900
  %3070 = vmatpush.xpose.msra.mxu0 %v2897
  %3071 = vmatpush.xpose.msra.mxu0 %v2894
  %3072 = vmatpush.xpose.msra.mxu0 %v2891
  %3073 = vmatpush.xpose.msra.mxu0 %v2888
  %3074 = vmatmul.f32.gmra.mxu0 %v2720
  %v3075 = vpop.f32.mrf.mxu0
  %v3076 = vadd.f32 0.0, %v3075
  %3077 = vmatmul.f32.gmra.mxu0 %v2723
  %v3078 = vpop.f32.mrf.mxu0
  %v3079 = vadd.f32 0.0, %v3078
  %3080 = vmatmul.f32.gmra.mxu0 %v2726
  %v3081 = vpop.f32.mrf.mxu0
  %v3082 = vadd.f32 0.0, %v3081
  %3083 = vmatmul.f32.gmra.mxu0 %v2729
  %v3084 = vpop.f32.mrf.mxu0
  %v3085 = vadd.f32 0.0, %v3084
  %3086 = vmatmul.f32.gmra.mxu0 %v2732
  %v3087 = vpop.f32.mrf.mxu0
  %v3088 = vadd.f32 0.0, %v3087
  %3089 = vmatmul.f32.gmra.mxu0 %v2735
  %v3090 = vpop.f32.mrf.mxu0
  %v3091 = vadd.f32 0.0, %v3090
  %3092 = vmatmul.f32.gmra.mxu0 %v2738
  %v3093 = vpop.f32.mrf.mxu0
  %v3094 = vadd.f32 0.0, %v3093
  %3095 = vmatmul.f32.gmra.mxu0 %v2741
  %v3096 = vpop.f32.mrf.mxu0
  %v3097 = vadd.f32 0.0, %v3096
  %3098 = vdwg.mxu0
  %v3099 = vsel %vm995, %v2953, -1e+30
  %v3100 = vsel %vm995, %v2956, -1e+30
  %v3101 = vsel %vm995, %v2959, -1e+30
  %v3102 = vsel %vm995, %v2962, -1e+30
  %v3103 = vsel %vm995, %v2965, -1e+30
  %v3104 = vsel %vm995, %v2968, -1e+30
  %v3105 = vsel %vm995, %v2971, -1e+30
  %v3106 = vsel %vm995, %v2974, -1e+30
  %3107 = vmax.xlane.f32.xlu0 %v3099
  %v3108 = vpop.xlane.xlu0 %3107
  %3109 = vmax.xlane.f32.xlu0 %v3100
  %v3110 = vpop.xlane.xlu0 %3109
  %3111 = vmax.xlane.f32.xlu0 %v3101
  %v3112 = vpop.xlane.xlu0 %3111
  %3113 = vmax.xlane.f32.xlu0 %v3102
  %v3114 = vpop.xlane.xlu0 %3113
  %3115 = vmax.xlane.f32.xlu0 %v3103
  %v3116 = vpop.xlane.xlu0 %3115
  %3117 = vmax.xlane.f32.xlu0 %v3104
  %v3118 = vpop.xlane.xlu0 %3117
  %3119 = vmax.xlane.f32.xlu0 %v3105
  %v3120 = vpop.xlane.xlu0 %3119
  %3121 = vmax.xlane.f32.xlu0 %v3106
  %v3122 = vpop.xlane.xlu0 %3121
  %v3123 = vsub.f32 %v2953, %v3108
  %v3124 = vsub.f32 %v2956, %v3110
  %v3125 = vsub.f32 %v2959, %v3112
  %v3126 = vsub.f32 %v2962, %v3114
  %v3127 = vsub.f32 %v2965, %v3116
  %v3128 = vsub.f32 %v2968, %v3118
  %v3129 = vsub.f32 %v2971, %v3120
  %v3130 = vsub.f32 %v2974, %v3122
  %v3131 = vmul.f32 %v3123, 1.442695
  %v3132 = vpow.pop %v3131
  %v3133 = vmul.f32 %v3124, 1.442695
  %v3134 = vpow.pop %v3133
  %v3135 = vmul.f32 %v3125, 1.442695
  %v3136 = vpow.pop %v3135
  %v3137 = vmul.f32 %v3126, 1.442695
  %v3138 = vpow.pop %v3137
  %v3139 = vmul.f32 %v3127, 1.442695
  %v3140 = vpow.pop %v3139
  %v3141 = vmul.f32 %v3128, 1.442695
  %v3142 = vpow.pop %v3141
  %v3143 = vmul.f32 %v3129, 1.442695
  %v3144 = vpow.pop %v3143
  %v3145 = vmul.f32 %v3130, 1.442695
  %v3146 = vpow.pop %v3145
  %v3147 = vmul.f32 %v3132, %v136
  %v3148 = vmul.f32 %v3134, %v136
  %v3149 = vmul.f32 %v3136, %v136
  %v3150 = vmul.f32 %v3138, %v136
  %v3151 = vmul.f32 %v3140, %v136
  %v3152 = vmul.f32 %v3142, %v136
  %v3153 = vmul.f32 %v3144, %v136
  %v3154 = vmul.f32 %v3146, %v136
  %3155 = vadd.xlane.f32.xlu0 %v3147
  %v3156 = vpop.xlane.xlu0 %3155
  %3157 = vadd.xlane.f32.xlu0 %v3148
  %v3158 = vpop.xlane.xlu0 %3157
  %3159 = vadd.xlane.f32.xlu0 %v3149
  %v3160 = vpop.xlane.xlu0 %3159
  %3161 = vadd.xlane.f32.xlu0 %v3150
  %v3162 = vpop.xlane.xlu0 %3161
  %3163 = vadd.xlane.f32.xlu0 %v3151
  %v3164 = vpop.xlane.xlu0 %3163
  %3165 = vadd.xlane.f32.xlu0 %v3152
  %v3166 = vpop.xlane.xlu0 %3165
  %3167 = vadd.xlane.f32.xlu0 %v3153
  %v3168 = vpop.xlane.xlu0 %3167
  %3169 = vadd.xlane.f32.xlu0 %v3154
  %v3170 = vpop.xlane.xlu0 %3169
  %v3171 = vrcp.pop %v3156
  %v3172 = vmul.f32 %v3156, %v3171
  %v3173 = vsub.f32 1.0, %v3172
  %v3174 = vmul.f32 %v3171, %v3173
  %v3175 = vadd.f32 %v3171, %v3174
  %vm3176 = vweird.f32 %v3156
  %vm3177 = vweird.f32 %v3171
  %vm3178 = vmor %vm3176, %vm3177
  %v3179 = vsel %vm3178, %v3171, %v3175
  %v3180 = vand.u32 2147483647, %v3156
  %vm3181 = vcmp.eq.f32.partialorder %v3180, 8.507059e+37
  %v3182 = vand.u32 %v3156, 2147483648
  %v3183 = vor.u32 1.1754944e-38, %v3182
  %v3184 = vsel %vm3181, %v3183, %v3179
  %v3185 = vmul.f32 %v3147, %v3184
  %v3186 = vrcp.pop %v3158
  %v3187 = vmul.f32 %v3158, %v3186
  %v3188 = vsub.f32 1.0, %v3187
  %v3189 = vmul.f32 %v3186, %v3188
  %v3190 = vadd.f32 %v3186, %v3189
  %vm3191 = vweird.f32 %v3158
  %vm3192 = vweird.f32 %v3186
  %vm3193 = vmor %vm3191, %vm3192
  %v3194 = vsel %vm3193, %v3186, %v3190
  %v3195 = vand.u32 2147483647, %v3158
  %vm3196 = vcmp.eq.f32.partialorder %v3195, 8.507059e+37
  %v3197 = vand.u32 %v3158, 2147483648
  %v3198 = vor.u32 1.1754944e-38, %v3197
  %v3199 = vsel %vm3196, %v3198, %v3194
  %v3200 = vmul.f32 %v3148, %v3199
  %v3201 = vrcp.pop %v3160
  %v3202 = vmul.f32 %v3160, %v3201
  %v3203 = vsub.f32 1.0, %v3202
  %v3204 = vmul.f32 %v3201, %v3203
  %v3205 = vadd.f32 %v3201, %v3204
  %vm3206 = vweird.f32 %v3160
  %vm3207 = vweird.f32 %v3201
  %vm3208 = vmor %vm3206, %vm3207
  %v3209 = vsel %vm3208, %v3201, %v3205
  %v3210 = vand.u32 2147483647, %v3160
  %vm3211 = vcmp.eq.f32.partialorder %v3210, 8.507059e+37
  %v3212 = vand.u32 %v3160, 2147483648
  %v3213 = vor.u32 1.1754944e-38, %v3212
  %v3214 = vsel %vm3211, %v3213, %v3209
  %v3215 = vmul.f32 %v3149, %v3214
  %v3216 = vrcp.pop %v3162
  %v3217 = vmul.f32 %v3162, %v3216
  %v3218 = vsub.f32 1.0, %v3217
  %v3219 = vmul.f32 %v3216, %v3218
  %v3220 = vadd.f32 %v3216, %v3219
  %vm3221 = vweird.f32 %v3162
  %vm3222 = vweird.f32 %v3216
  %vm3223 = vmor %vm3221, %vm3222
  %v3224 = vsel %vm3223, %v3216, %v3220
  %v3225 = vand.u32 2147483647, %v3162
  %vm3226 = vcmp.eq.f32.partialorder %v3225, 8.507059e+37
  %v3227 = vand.u32 %v3162, 2147483648
  %v3228 = vor.u32 1.1754944e-38, %v3227
  %v3229 = vsel %vm3226, %v3228, %v3224
  %v3230 = vmul.f32 %v3150, %v3229
  %v3231 = vrcp.pop %v3164
  %v3232 = vmul.f32 %v3164, %v3231
  %v3233 = vsub.f32 1.0, %v3232
  %v3234 = vmul.f32 %v3231, %v3233
  %v3235 = vadd.f32 %v3231, %v3234
  %vm3236 = vweird.f32 %v3164
  %vm3237 = vweird.f32 %v3231
  %vm3238 = vmor %vm3236, %vm3237
  %v3239 = vsel %vm3238, %v3231, %v3235
  %v3240 = vand.u32 2147483647, %v3164
  %vm3241 = vcmp.eq.f32.partialorder %v3240, 8.507059e+37
  %v3242 = vand.u32 %v3164, 2147483648
  %v3243 = vor.u32 1.1754944e-38, %v3242
  %v3244 = vsel %vm3241, %v3243, %v3239
  %v3245 = vmul.f32 %v3151, %v3244
  %v3246 = vrcp.pop %v3166
  %v3247 = vmul.f32 %v3166, %v3246
  %v3248 = vsub.f32 1.0, %v3247
  %v3249 = vmul.f32 %v3246, %v3248
  %v3250 = vadd.f32 %v3246, %v3249
  %vm3251 = vweird.f32 %v3166
  %vm3252 = vweird.f32 %v3246
  %vm3253 = vmor %vm3251, %vm3252
  %v3254 = vsel %vm3253, %v3246, %v3250
  %v3255 = vand.u32 2147483647, %v3166
  %vm3256 = vcmp.eq.f32.partialorder %v3255, 8.507059e+37
  %v3257 = vand.u32 %v3166, 2147483648
  %v3258 = vor.u32 1.1754944e-38, %v3257
  %v3259 = vsel %vm3256, %v3258, %v3254
  %v3260 = vmul.f32 %v3152, %v3259
  %v3261 = vrcp.pop %v3168
  %v3262 = vmul.f32 %v3168, %v3261
  %v3263 = vsub.f32 1.0, %v3262
  %v3264 = vmul.f32 %v3261, %v3263
  %v3265 = vadd.f32 %v3261, %v3264
  %vm3266 = vweird.f32 %v3168
  %vm3267 = vweird.f32 %v3261
  %vm3268 = vmor %vm3266, %vm3267
  %v3269 = vsel %vm3268, %v3261, %v3265
  %v3270 = vand.u32 2147483647, %v3168
  %vm3271 = vcmp.eq.f32.partialorder %v3270, 8.507059e+37
  %v3272 = vand.u32 %v3168, 2147483648
  %v3273 = vor.u32 1.1754944e-38, %v3272
  %v3274 = vsel %vm3271, %v3273, %v3269
  %v3275 = vmul.f32 %v3153, %v3274
  %v3276 = vrcp.pop %v3170
  %v3277 = vmul.f32 %v3170, %v3276
  %v3278 = vsub.f32 1.0, %v3277
  %v3279 = vmul.f32 %v3276, %v3278
  %v3280 = vadd.f32 %v3276, %v3279
  %vm3281 = vweird.f32 %v3170
  %vm3282 = vweird.f32 %v3276
  %vm3283 = vmor %vm3281, %vm3282
  %v3284 = vsel %vm3283, %v3276, %v3280
  %v3285 = vand.u32 2147483647, %v3170
  %vm3286 = vcmp.eq.f32.partialorder %v3285, 8.507059e+37
  %v3287 = vand.u32 %v3170, 2147483648
  %v3288 = vor.u32 1.1754944e-38, %v3287
  %v3289 = vsel %vm3286, %v3288, %v3284
  %v3290 = vmul.f32 %v3154, %v3289
  %v3291 = vsel %vm995, %v2994, -1e+30
  %v3292 = vsel %vm995, %v2997, -1e+30
  %v3293 = vsel %vm995, %v3000, -1e+30
  %v3294 = vsel %vm995, %v3003, -1e+30
  %v3295 = vsel %vm995, %v3006, -1e+30
  %v3296 = vsel %vm995, %v3009, -1e+30
  %v3297 = vsel %vm995, %v3012, -1e+30
  %v3298 = vsel %vm995, %v3015, -1e+30
  %3299 = vmax.xlane.f32.xlu0 %v3291
  %v3300 = vpop.xlane.xlu0 %3299
  %3301 = vmax.xlane.f32.xlu0 %v3292
  %v3302 = vpop.xlane.xlu0 %3301
  %3303 = vmax.xlane.f32.xlu0 %v3293
  %v3304 = vpop.xlane.xlu0 %3303
  %3305 = vmax.xlane.f32.xlu0 %v3294
  %v3306 = vpop.xlane.xlu0 %3305
  %3307 = vmax.xlane.f32.xlu0 %v3295
  %v3308 = vpop.xlane.xlu0 %3307
  %3309 = vmax.xlane.f32.xlu0 %v3296
  %v3310 = vpop.xlane.xlu0 %3309
  %3311 = vmax.xlane.f32.xlu0 %v3297
  %v3312 = vpop.xlane.xlu0 %3311
  %3313 = vmax.xlane.f32.xlu0 %v3298
  %v3314 = vpop.xlane.xlu0 %3313
  %v3315 = vsub.f32 %v2994, %v3300
  %v3316 = vsub.f32 %v2997, %v3302
  %v3317 = vsub.f32 %v3000, %v3304
  %v3318 = vsub.f32 %v3003, %v3306
  %v3319 = vsub.f32 %v3006, %v3308
  %v3320 = vsub.f32 %v3009, %v3310
  %v3321 = vsub.f32 %v3012, %v3312
  %v3322 = vsub.f32 %v3015, %v3314
  %v3323 = vmul.f32 %v3315, 1.442695
  %v3324 = vpow.pop %v3323
  %v3325 = vmul.f32 %v3316, 1.442695
  %v3326 = vpow.pop %v3325
  %v3327 = vmul.f32 %v3317, 1.442695
  %v3328 = vpow.pop %v3327
  %v3329 = vmul.f32 %v3318, 1.442695
  %v3330 = vpow.pop %v3329
  %v3331 = vmul.f32 %v3319, 1.442695
  %v3332 = vpow.pop %v3331
  %v3333 = vmul.f32 %v3320, 1.442695
  %v3334 = vpow.pop %v3333
  %v3335 = vmul.f32 %v3321, 1.442695
  %v3336 = vpow.pop %v3335
  %v3337 = vmul.f32 %v3322, 1.442695
  %v3338 = vpow.pop %v3337
  %v3339 = vmul.f32 %v3324, %v136
  %v3340 = vmul.f32 %v3326, %v136
  %v3341 = vmul.f32 %v3328, %v136
  %v3342 = vmul.f32 %v3330, %v136
  %v3343 = vmul.f32 %v3332, %v136
  %v3344 = vmul.f32 %v3334, %v136
  %v3345 = vmul.f32 %v3336, %v136
  %v3346 = vmul.f32 %v3338, %v136
  %3347 = vadd.xlane.f32.xlu0 %v3339
  %v3348 = vpop.xlane.xlu0 %3347
  %3349 = vadd.xlane.f32.xlu0 %v3340
  %v3350 = vpop.xlane.xlu0 %3349
  %3351 = vadd.xlane.f32.xlu0 %v3341
  %v3352 = vpop.xlane.xlu0 %3351
  %3353 = vadd.xlane.f32.xlu0 %v3342
  %v3354 = vpop.xlane.xlu0 %3353
  %3355 = vadd.xlane.f32.xlu0 %v3343
  %v3356 = vpop.xlane.xlu0 %3355
  %3357 = vadd.xlane.f32.xlu0 %v3344
  %v3358 = vpop.xlane.xlu0 %3357
  %3359 = vadd.xlane.f32.xlu0 %v3345
  %v3360 = vpop.xlane.xlu0 %3359
  %3361 = vadd.xlane.f32.xlu0 %v3346
  %v3362 = vpop.xlane.xlu0 %3361
  %v3363 = vrcp.pop %v3348
  %v3364 = vmul.f32 %v3348, %v3363
  %v3365 = vsub.f32 1.0, %v3364
  %v3366 = vmul.f32 %v3363, %v3365
  %v3367 = vadd.f32 %v3363, %v3366
  %vm3368 = vweird.f32 %v3348
  %vm3369 = vweird.f32 %v3363
  %vm3370 = vmor %vm3368, %vm3369
  %v3371 = vsel %vm3370, %v3363, %v3367
  %v3372 = vand.u32 2147483647, %v3348
  %vm3373 = vcmp.eq.f32.partialorder %v3372, 8.507059e+37
  %v3374 = vand.u32 %v3348, 2147483648
  %v3375 = vor.u32 1.1754944e-38, %v3374
  %v3376 = vsel %vm3373, %v3375, %v3371
  %v3377 = vmul.f32 %v3339, %v3376
  %v3378 = vrcp.pop %v3350
  %v3379 = vmul.f32 %v3350, %v3378
  %v3380 = vsub.f32 1.0, %v3379
  %v3381 = vmul.f32 %v3378, %v3380
  %v3382 = vadd.f32 %v3378, %v3381
  %vm3383 = vweird.f32 %v3350
  %vm3384 = vweird.f32 %v3378
  %vm3385 = vmor %vm3383, %vm3384
  %v3386 = vsel %vm3385, %v3378, %v3382
  %v3387 = vand.u32 2147483647, %v3350
  %vm3388 = vcmp.eq.f32.partialorder %v3387, 8.507059e+37
  %v3389 = vand.u32 %v3350, 2147483648
  %v3390 = vor.u32 1.1754944e-38, %v3389
  %v3391 = vsel %vm3388, %v3390, %v3386
  %v3392 = vmul.f32 %v3340, %v3391
  %v3393 = vrcp.pop %v3352
  %v3394 = vmul.f32 %v3352, %v3393
  %v3395 = vsub.f32 1.0, %v3394
  %v3396 = vmul.f32 %v3393, %v3395
  %v3397 = vadd.f32 %v3393, %v3396
  %vm3398 = vweird.f32 %v3352
  %vm3399 = vweird.f32 %v3393
  %vm3400 = vmor %vm3398, %vm3399
  %v3401 = vsel %vm3400, %v3393, %v3397
  %v3402 = vand.u32 2147483647, %v3352
  %vm3403 = vcmp.eq.f32.partialorder %v3402, 8.507059e+37
  %v3404 = vand.u32 %v3352, 2147483648
  %v3405 = vor.u32 1.1754944e-38, %v3404
  %v3406 = vsel %vm3403, %v3405, %v3401
  %v3407 = vmul.f32 %v3341, %v3406
  %v3408 = vrcp.pop %v3354
  %v3409 = vmul.f32 %v3354, %v3408
  %v3410 = vsub.f32 1.0, %v3409
  %v3411 = vmul.f32 %v3408, %v3410
  %v3412 = vadd.f32 %v3408, %v3411
  %vm3413 = vweird.f32 %v3354
  %vm3414 = vweird.f32 %v3408
  %vm3415 = vmor %vm3413, %vm3414
  %v3416 = vsel %vm3415, %v3408, %v3412
  %v3417 = vand.u32 2147483647, %v3354
  %vm3418 = vcmp.eq.f32.partialorder %v3417, 8.507059e+37
  %v3419 = vand.u32 %v3354, 2147483648
  %v3420 = vor.u32 1.1754944e-38, %v3419
  %v3421 = vsel %vm3418, %v3420, %v3416
  %v3422 = vmul.f32 %v3342, %v3421
  %v3423 = vrcp.pop %v3356
  %v3424 = vmul.f32 %v3356, %v3423
  %v3425 = vsub.f32 1.0, %v3424
  %v3426 = vmul.f32 %v3423, %v3425
  %v3427 = vadd.f32 %v3423, %v3426
  %vm3428 = vweird.f32 %v3356
  %vm3429 = vweird.f32 %v3423
  %vm3430 = vmor %vm3428, %vm3429
  %v3431 = vsel %vm3430, %v3423, %v3427
  %v3432 = vand.u32 2147483647, %v3356
  %vm3433 = vcmp.eq.f32.partialorder %v3432, 8.507059e+37
  %v3434 = vand.u32 %v3356, 2147483648
  %v3435 = vor.u32 1.1754944e-38, %v3434
  %v3436 = vsel %vm3433, %v3435, %v3431
  %v3437 = vmul.f32 %v3343, %v3436
  %v3438 = vrcp.pop %v3358
  %v3439 = vmul.f32 %v3358, %v3438
  %v3440 = vsub.f32 1.0, %v3439
  %v3441 = vmul.f32 %v3438, %v3440
  %v3442 = vadd.f32 %v3438, %v3441
  %vm3443 = vweird.f32 %v3358
  %vm3444 = vweird.f32 %v3438
  %vm3445 = vmor %vm3443, %vm3444
  %v3446 = vsel %vm3445, %v3438, %v3442
  %v3447 = vand.u32 2147483647, %v3358
  %vm3448 = vcmp.eq.f32.partialorder %v3447, 8.507059e+37
  %v3449 = vand.u32 %v3358, 2147483648
  %v3450 = vor.u32 1.1754944e-38, %v3449
  %v3451 = vsel %vm3448, %v3450, %v3446
  %v3452 = vmul.f32 %v3344, %v3451
  %v3453 = vrcp.pop %v3360
  %v3454 = vmul.f32 %v3360, %v3453
  %v3455 = vsub.f32 1.0, %v3454
  %v3456 = vmul.f32 %v3453, %v3455
  %v3457 = vadd.f32 %v3453, %v3456
  %vm3458 = vweird.f32 %v3360
  %vm3459 = vweird.f32 %v3453
  %vm3460 = vmor %vm3458, %vm3459
  %v3461 = vsel %vm3460, %v3453, %v3457
  %v3462 = vand.u32 2147483647, %v3360
  %vm3463 = vcmp.eq.f32.partialorder %v3462, 8.507059e+37
  %v3464 = vand.u32 %v3360, 2147483648
  %v3465 = vor.u32 1.1754944e-38, %v3464
  %v3466 = vsel %vm3463, %v3465, %v3461
  %v3467 = vmul.f32 %v3345, %v3466
  %v3468 = vrcp.pop %v3362
  %v3469 = vmul.f32 %v3362, %v3468
  %v3470 = vsub.f32 1.0, %v3469
  %v3471 = vmul.f32 %v3468, %v3470
  %v3472 = vadd.f32 %v3468, %v3471
  %vm3473 = vweird.f32 %v3362
  %vm3474 = vweird.f32 %v3468
  %vm3475 = vmor %vm3473, %vm3474
  %v3476 = vsel %vm3475, %v3468, %v3472
  %v3477 = vand.u32 2147483647, %v3362
  %vm3478 = vcmp.eq.f32.partialorder %v3477, 8.507059e+37
  %v3479 = vand.u32 %v3362, 2147483648
  %v3480 = vor.u32 1.1754944e-38, %v3479
  %v3481 = vsel %vm3478, %v3480, %v3476
  %v3482 = vmul.f32 %v3346, %v3481
  %v3483 = vadd.f32 %v3185, %v3377
  %v3484 = vadd.f32 %v3200, %v3392
  %v3485 = vadd.f32 %v3215, %v3407
  %v3486 = vadd.f32 %v3230, %v3422
  %v3487 = vadd.f32 %v3245, %v3437
  %v3488 = vadd.f32 %v3260, %v3452
  %v3489 = vadd.f32 %v3275, %v3467
  %v3490 = vadd.f32 %v3290, %v3482
  %v3491 = vsel %vm995, %v3035, -1e+30
  %v3492 = vsel %vm995, %v3038, -1e+30
  %v3493 = vsel %vm995, %v3041, -1e+30
  %v3494 = vsel %vm995, %v3044, -1e+30
  %v3495 = vsel %vm995, %v3047, -1e+30
  %v3496 = vsel %vm995, %v3050, -1e+30
  %v3497 = vsel %vm995, %v3053, -1e+30
  %v3498 = vsel %vm995, %v3056, -1e+30
  %3499 = vmax.xlane.f32.xlu0 %v3491
  %v3500 = vpop.xlane.xlu0 %3499
  %3501 = vmax.xlane.f32.xlu0 %v3492
  %v3502 = vpop.xlane.xlu0 %3501
  %3503 = vmax.xlane.f32.xlu0 %v3493
  %v3504 = vpop.xlane.xlu0 %3503
  %3505 = vmax.xlane.f32.xlu0 %v3494
  %v3506 = vpop.xlane.xlu0 %3505
  %3507 = vmax.xlane.f32.xlu0 %v3495
  %v3508 = vpop.xlane.xlu0 %3507
  %3509 = vmax.xlane.f32.xlu0 %v3496
  %v3510 = vpop.xlane.xlu0 %3509
  %3511 = vmax.xlane.f32.xlu0 %v3497
  %v3512 = vpop.xlane.xlu0 %3511
  %3513 = vmax.xlane.f32.xlu0 %v3498
  %v3514 = vpop.xlane.xlu0 %3513
  %v3515 = vsub.f32 %v3035, %v3500
  %v3516 = vsub.f32 %v3038, %v3502
  %v3517 = vsub.f32 %v3041, %v3504
  %v3518 = vsub.f32 %v3044, %v3506
  %v3519 = vsub.f32 %v3047, %v3508
  %v3520 = vsub.f32 %v3050, %v3510
  %v3521 = vsub.f32 %v3053, %v3512
  %v3522 = vsub.f32 %v3056, %v3514
  %v3523 = vmul.f32 %v3515, 1.442695
  %v3524 = vpow.pop %v3523
  %v3525 = vmul.f32 %v3516, 1.442695
  %v3526 = vpow.pop %v3525
  %v3527 = vmul.f32 %v3517, 1.442695
  %v3528 = vpow.pop %v3527
  %v3529 = vmul.f32 %v3518, 1.442695
  %v3530 = vpow.pop %v3529
  %v3531 = vmul.f32 %v3519, 1.442695
  %v3532 = vpow.pop %v3531
  %v3533 = vmul.f32 %v3520, 1.442695
  %v3534 = vpow.pop %v3533
  %v3535 = vmul.f32 %v3521, 1.442695
  %v3536 = vpow.pop %v3535
  %v3537 = vmul.f32 %v3522, 1.442695
  %v3538 = vpow.pop %v3537
  %v3539 = vmul.f32 %v3524, %v136
  %v3540 = vmul.f32 %v3526, %v136
  %v3541 = vmul.f32 %v3528, %v136
  %v3542 = vmul.f32 %v3530, %v136
  %v3543 = vmul.f32 %v3532, %v136
  %v3544 = vmul.f32 %v3534, %v136
  %v3545 = vmul.f32 %v3536, %v136
  %v3546 = vmul.f32 %v3538, %v136
  %3547 = vadd.xlane.f32.xlu0 %v3539
  %v3548 = vpop.xlane.xlu0 %3547
  %3549 = vadd.xlane.f32.xlu0 %v3540
  %v3550 = vpop.xlane.xlu0 %3549
  %3551 = vadd.xlane.f32.xlu0 %v3541
  %v3552 = vpop.xlane.xlu0 %3551
  %3553 = vadd.xlane.f32.xlu0 %v3542
  %v3554 = vpop.xlane.xlu0 %3553
  %3555 = vadd.xlane.f32.xlu0 %v3543
  %v3556 = vpop.xlane.xlu0 %3555
  %3557 = vadd.xlane.f32.xlu0 %v3544
  %v3558 = vpop.xlane.xlu0 %3557
  %3559 = vadd.xlane.f32.xlu0 %v3545
  %v3560 = vpop.xlane.xlu0 %3559
  %3561 = vadd.xlane.f32.xlu0 %v3546
  %v3562 = vpop.xlane.xlu0 %3561
  %v3563 = vrcp.pop %v3548
  %v3564 = vmul.f32 %v3548, %v3563
  %v3565 = vsub.f32 1.0, %v3564
  %v3566 = vmul.f32 %v3563, %v3565
  %v3567 = vadd.f32 %v3563, %v3566
  %vm3568 = vweird.f32 %v3548
  %vm3569 = vweird.f32 %v3563
  %vm3570 = vmor %vm3568, %vm3569
  %v3571 = vsel %vm3570, %v3563, %v3567
  %v3572 = vand.u32 2147483647, %v3548
  %vm3573 = vcmp.eq.f32.partialorder %v3572, 8.507059e+37
  %v3574 = vand.u32 %v3548, 2147483648
  %v3575 = vor.u32 1.1754944e-38, %v3574
  %v3576 = vsel %vm3573, %v3575, %v3571
  %v3577 = vmul.f32 %v3539, %v3576
  %v3578 = vrcp.pop %v3550
  %v3579 = vmul.f32 %v3550, %v3578
  %v3580 = vsub.f32 1.0, %v3579
  %v3581 = vmul.f32 %v3578, %v3580
  %v3582 = vadd.f32 %v3578, %v3581
  %vm3583 = vweird.f32 %v3550
  %vm3584 = vweird.f32 %v3578
  %vm3585 = vmor %vm3583, %vm3584
  %v3586 = vsel %vm3585, %v3578, %v3582
  %v3587 = vand.u32 2147483647, %v3550
  %vm3588 = vcmp.eq.f32.partialorder %v3587, 8.507059e+37
  %v3589 = vand.u32 %v3550, 2147483648
  %v3590 = vor.u32 1.1754944e-38, %v3589
  %v3591 = vsel %vm3588, %v3590, %v3586
  %v3592 = vmul.f32 %v3540, %v3591
  %v3593 = vrcp.pop %v3552
  %v3594 = vmul.f32 %v3552, %v3593
  %v3595 = vsub.f32 1.0, %v3594
  %v3596 = vmul.f32 %v3593, %v3595
  %v3597 = vadd.f32 %v3593, %v3596
  %vm3598 = vweird.f32 %v3552
  %vm3599 = vweird.f32 %v3593
  %vm3600 = vmor %vm3598, %vm3599
  %v3601 = vsel %vm3600, %v3593, %v3597
  %v3602 = vand.u32 2147483647, %v3552
  %vm3603 = vcmp.eq.f32.partialorder %v3602, 8.507059e+37
  %v3604 = vand.u32 %v3552, 2147483648
  %v3605 = vor.u32 1.1754944e-38, %v3604
  %v3606 = vsel %vm3603, %v3605, %v3601
  %v3607 = vmul.f32 %v3541, %v3606
  %v3608 = vrcp.pop %v3554
  %v3609 = vmul.f32 %v3554, %v3608
  %v3610 = vsub.f32 1.0, %v3609
  %v3611 = vmul.f32 %v3608, %v3610
  %v3612 = vadd.f32 %v3608, %v3611
  %vm3613 = vweird.f32 %v3554
  %vm3614 = vweird.f32 %v3608
  %vm3615 = vmor %vm3613, %vm3614
  %v3616 = vsel %vm3615, %v3608, %v3612
  %v3617 = vand.u32 2147483647, %v3554
  %vm3618 = vcmp.eq.f32.partialorder %v3617, 8.507059e+37
  %v3619 = vand.u32 %v3554, 2147483648
  %v3620 = vor.u32 1.1754944e-38, %v3619
  %v3621 = vsel %vm3618, %v3620, %v3616
  %v3622 = vmul.f32 %v3542, %v3621
  %v3623 = vrcp.pop %v3556
  %v3624 = vmul.f32 %v3556, %v3623
  %v3625 = vsub.f32 1.0, %v3624
  %v3626 = vmul.f32 %v3623, %v3625
  %v3627 = vadd.f32 %v3623, %v3626
  %vm3628 = vweird.f32 %v3556
  %vm3629 = vweird.f32 %v3623
  %vm3630 = vmor %vm3628, %vm3629
  %v3631 = vsel %vm3630, %v3623, %v3627
  %v3632 = vand.u32 2147483647, %v3556
  %vm3633 = vcmp.eq.f32.partialorder %v3632, 8.507059e+37
  %v3634 = vand.u32 %v3556, 2147483648
  %v3635 = vor.u32 1.1754944e-38, %v3634
  %v3636 = vsel %vm3633, %v3635, %v3631
  %v3637 = vmul.f32 %v3543, %v3636
  %v3638 = vrcp.pop %v3558
  %v3639 = vmul.f32 %v3558, %v3638
  %v3640 = vsub.f32 1.0, %v3639
  %v3641 = vmul.f32 %v3638, %v3640
  %v3642 = vadd.f32 %v3638, %v3641
  %vm3643 = vweird.f32 %v3558
  %vm3644 = vweird.f32 %v3638
  %vm3645 = vmor %vm3643, %vm3644
  %v3646 = vsel %vm3645, %v3638, %v3642
  %v3647 = vand.u32 2147483647, %v3558
  %vm3648 = vcmp.eq.f32.partialorder %v3647, 8.507059e+37
  %v3649 = vand.u32 %v3558, 2147483648
  %v3650 = vor.u32 1.1754944e-38, %v3649
  %v3651 = vsel %vm3648, %v3650, %v3646
  %v3652 = vmul.f32 %v3544, %v3651
  %v3653 = vrcp.pop %v3560
  %v3654 = vmul.f32 %v3560, %v3653
  %v3655 = vsub.f32 1.0, %v3654
  %v3656 = vmul.f32 %v3653, %v3655
  %v3657 = vadd.f32 %v3653, %v3656
  %vm3658 = vweird.f32 %v3560
  %vm3659 = vweird.f32 %v3653
  %vm3660 = vmor %vm3658, %vm3659
  %v3661 = vsel %vm3660, %v3653, %v3657
  %v3662 = vand.u32 2147483647, %v3560
  %vm3663 = vcmp.eq.f32.partialorder %v3662, 8.507059e+37
  %v3664 = vand.u32 %v3560, 2147483648
  %v3665 = vor.u32 1.1754944e-38, %v3664
  %v3666 = vsel %vm3663, %v3665, %v3661
  %v3667 = vmul.f32 %v3545, %v3666
  %v3668 = vrcp.pop %v3562
  %v3669 = vmul.f32 %v3562, %v3668
  %v3670 = vsub.f32 1.0, %v3669
  %v3671 = vmul.f32 %v3668, %v3670
  %v3672 = vadd.f32 %v3668, %v3671
  %vm3673 = vweird.f32 %v3562
  %vm3674 = vweird.f32 %v3668
  %vm3675 = vmor %vm3673, %vm3674
  %v3676 = vsel %vm3675, %v3668, %v3672
  %v3677 = vand.u32 2147483647, %v3562
  %vm3678 = vcmp.eq.f32.partialorder %v3677, 8.507059e+37
  %v3679 = vand.u32 %v3562, 2147483648
  %v3680 = vor.u32 1.1754944e-38, %v3679
  %v3681 = vsel %vm3678, %v3680, %v3676
  %v3682 = vmul.f32 %v3546, %v3681
  %v3683 = vadd.f32 %v3483, %v3577
  %v3684 = vadd.f32 %v3484, %v3592
  %v3685 = vadd.f32 %v3485, %v3607
  %v3686 = vadd.f32 %v3486, %v3622
  %v3687 = vadd.f32 %v3487, %v3637
  %v3688 = vadd.f32 %v3488, %v3652
  %v3689 = vadd.f32 %v3489, %v3667
  %v3690 = vadd.f32 %v3490, %v3682
  %v3691 = vsel %vm995, %v3076, -1e+30
  %v3692 = vsel %vm995, %v3079, -1e+30
  %v3693 = vsel %vm995, %v3082, -1e+30
  %v3694 = vsel %vm995, %v3085, -1e+30
  %v3695 = vsel %vm995, %v3088, -1e+30
  %v3696 = vsel %vm995, %v3091, -1e+30
  %v3697 = vsel %vm995, %v3094, -1e+30
  %v3698 = vsel %vm995, %v3097, -1e+30
  %3699 = vmax.xlane.f32.xlu0 %v3691
  %v3700 = vpop.xlane.xlu0 %3699
  %3701 = vmax.xlane.f32.xlu0 %v3692
  %v3702 = vpop.xlane.xlu0 %3701
  %3703 = vmax.xlane.f32.xlu0 %v3693
  %v3704 = vpop.xlane.xlu0 %3703
  %3705 = vmax.xlane.f32.xlu0 %v3694
  %v3706 = vpop.xlane.xlu0 %3705
  %3707 = vmax.xlane.f32.xlu0 %v3695
  %v3708 = vpop.xlane.xlu0 %3707
  %3709 = vmax.xlane.f32.xlu0 %v3696
  %v3710 = vpop.xlane.xlu0 %3709
  %3711 = vmax.xlane.f32.xlu0 %v3697
  %v3712 = vpop.xlane.xlu0 %3711
  %3713 = vmax.xlane.f32.xlu0 %v3698
  %v3714 = vpop.xlane.xlu0 %3713
  %v3715 = vsub.f32 %v3076, %v3700
  %v3716 = vsub.f32 %v3079, %v3702
  %v3717 = vsub.f32 %v3082, %v3704
  %v3718 = vsub.f32 %v3085, %v3706
  %v3719 = vsub.f32 %v3088, %v3708
  %v3720 = vsub.f32 %v3091, %v3710
  %v3721 = vsub.f32 %v3094, %v3712
  %v3722 = vsub.f32 %v3097, %v3714
  %v3723 = vmul.f32 %v3715, 1.442695
  %v3724 = vpow.pop %v3723
  %v3725 = vmul.f32 %v3716, 1.442695
  %v3726 = vpow.pop %v3725
  %v3727 = vmul.f32 %v3717, 1.442695
  %v3728 = vpow.pop %v3727
  %v3729 = vmul.f32 %v3718, 1.442695
  %v3730 = vpow.pop %v3729
  %v3731 = vmul.f32 %v3719, 1.442695
  %v3732 = vpow.pop %v3731
  %v3733 = vmul.f32 %v3720, 1.442695
  %v3734 = vpow.pop %v3733
  %v3735 = vmul.f32 %v3721, 1.442695
  %v3736 = vpow.pop %v3735
  %v3737 = vmul.f32 %v3722, 1.442695
  %v3738 = vpow.pop %v3737
  %v3739 = vmul.f32 %v3724, %v136
  %v3740 = vmul.f32 %v3726, %v136
  %v3741 = vmul.f32 %v3728, %v136
  %v3742 = vmul.f32 %v3730, %v136
  %v3743 = vmul.f32 %v3732, %v136
  %v3744 = vmul.f32 %v3734, %v136
  %v3745 = vmul.f32 %v3736, %v136
  %v3746 = vmul.f32 %v3738, %v136
  %3747 = vadd.xlane.f32.xlu0 %v3739
  %v3748 = vpop.xlane.xlu0 %3747
  %3749 = vadd.xlane.f32.xlu0 %v3740
  %v3750 = vpop.xlane.xlu0 %3749
  %3751 = vadd.xlane.f32.xlu0 %v3741
  %v3752 = vpop.xlane.xlu0 %3751
  %3753 = vadd.xlane.f32.xlu0 %v3742
  %v3754 = vpop.xlane.xlu0 %3753
  %3755 = vadd.xlane.f32.xlu0 %v3743
  %v3756 = vpop.xlane.xlu0 %3755
  %3757 = vadd.xlane.f32.xlu0 %v3744
  %v3758 = vpop.xlane.xlu0 %3757
  %3759 = vadd.xlane.f32.xlu0 %v3745
  %v3760 = vpop.xlane.xlu0 %3759
  %3761 = vadd.xlane.f32.xlu0 %v3746
  %v3762 = vpop.xlane.xlu0 %3761
  %v3763 = vrcp.pop %v3748
  %v3764 = vmul.f32 %v3748, %v3763
  %v3765 = vsub.f32 1.0, %v3764
  %v3766 = vmul.f32 %v3763, %v3765
  %v3767 = vadd.f32 %v3763, %v3766
  %vm3768 = vweird.f32 %v3748
  %vm3769 = vweird.f32 %v3763
  %vm3770 = vmor %vm3768, %vm3769
  %v3771 = vsel %vm3770, %v3763, %v3767
  %v3772 = vand.u32 2147483647, %v3748
  %vm3773 = vcmp.eq.f32.partialorder %v3772, 8.507059e+37
  %v3774 = vand.u32 %v3748, 2147483648
  %v3775 = vor.u32 1.1754944e-38, %v3774
  %v3776 = vsel %vm3773, %v3775, %v3771
  %v3777 = vmul.f32 %v3739, %v3776
  %v3778 = vrcp.pop %v3750
  %v3779 = vmul.f32 %v3750, %v3778
  %v3780 = vsub.f32 1.0, %v3779
  %v3781 = vmul.f32 %v3778, %v3780
  %v3782 = vadd.f32 %v3778, %v3781
  %vm3783 = vweird.f32 %v3750
  %vm3784 = vweird.f32 %v3778
  %vm3785 = vmor %vm3783, %vm3784
  %v3786 = vsel %vm3785, %v3778, %v3782
  %v3787 = vand.u32 2147483647, %v3750
  %vm3788 = vcmp.eq.f32.partialorder %v3787, 8.507059e+37
  %v3789 = vand.u32 %v3750, 2147483648
  %v3790 = vor.u32 1.1754944e-38, %v3789
  %v3791 = vsel %vm3788, %v3790, %v3786
  %v3792 = vmul.f32 %v3740, %v3791
  %v3793 = vrcp.pop %v3752
  %v3794 = vmul.f32 %v3752, %v3793
  %v3795 = vsub.f32 1.0, %v3794
  %v3796 = vmul.f32 %v3793, %v3795
  %v3797 = vadd.f32 %v3793, %v3796
  %vm3798 = vweird.f32 %v3752
  %vm3799 = vweird.f32 %v3793
  %vm3800 = vmor %vm3798, %vm3799
  %v3801 = vsel %vm3800, %v3793, %v3797
  %v3802 = vand.u32 2147483647, %v3752
  %vm3803 = vcmp.eq.f32.partialorder %v3802, 8.507059e+37
  %v3804 = vand.u32 %v3752, 2147483648
  %v3805 = vor.u32 1.1754944e-38, %v3804
  %v3806 = vsel %vm3803, %v3805, %v3801
  %v3807 = vmul.f32 %v3741, %v3806
  %v3808 = vrcp.pop %v3754
  %v3809 = vmul.f32 %v3754, %v3808
  %v3810 = vsub.f32 1.0, %v3809
  %v3811 = vmul.f32 %v3808, %v3810
  %v3812 = vadd.f32 %v3808, %v3811
  %vm3813 = vweird.f32 %v3754
  %vm3814 = vweird.f32 %v3808
  %vm3815 = vmor %vm3813, %vm3814
  %v3816 = vsel %vm3815, %v3808, %v3812
  %v3817 = vand.u32 2147483647, %v3754
  %vm3818 = vcmp.eq.f32.partialorder %v3817, 8.507059e+37
  %v3819 = vand.u32 %v3754, 2147483648
  %v3820 = vor.u32 1.1754944e-38, %v3819
  %v3821 = vsel %vm3818, %v3820, %v3816
  %v3822 = vmul.f32 %v3742, %v3821
  %v3823 = vrcp.pop %v3756
  %v3824 = vmul.f32 %v3756, %v3823
  %v3825 = vsub.f32 1.0, %v3824
  %v3826 = vmul.f32 %v3823, %v3825
  %v3827 = vadd.f32 %v3823, %v3826
  %vm3828 = vweird.f32 %v3756
  %vm3829 = vweird.f32 %v3823
  %vm3830 = vmor %vm3828, %vm3829
  %v3831 = vsel %vm3830, %v3823, %v3827
  %v3832 = vand.u32 2147483647, %v3756
  %vm3833 = vcmp.eq.f32.partialorder %v3832, 8.507059e+37
  %v3834 = vand.u32 %v3756, 2147483648
  %v3835 = vor.u32 1.1754944e-38, %v3834
  %v3836 = vsel %vm3833, %v3835, %v3831
  %v3837 = vmul.f32 %v3743, %v3836
  %v3838 = vrcp.pop %v3758
  %v3839 = vmul.f32 %v3758, %v3838
  %v3840 = vsub.f32 1.0, %v3839
  %v3841 = vmul.f32 %v3838, %v3840
  %v3842 = vadd.f32 %v3838, %v3841
  %vm3843 = vweird.f32 %v3758
  %vm3844 = vweird.f32 %v3838
  %vm3845 = vmor %vm3843, %vm3844
  %v3846 = vsel %vm3845, %v3838, %v3842
  %v3847 = vand.u32 2147483647, %v3758
  %vm3848 = vcmp.eq.f32.partialorder %v3847, 8.507059e+37
  %v3849 = vand.u32 %v3758, 2147483648
  %v3850 = vor.u32 1.1754944e-38, %v3849
  %v3851 = vsel %vm3848, %v3850, %v3846
  %v3852 = vmul.f32 %v3744, %v3851
  %v3853 = vrcp.pop %v3760
  %v3854 = vmul.f32 %v3760, %v3853
  %v3855 = vsub.f32 1.0, %v3854
  %v3856 = vmul.f32 %v3853, %v3855
  %v3857 = vadd.f32 %v3853, %v3856
  %vm3858 = vweird.f32 %v3760
  %vm3859 = vweird.f32 %v3853
  %vm3860 = vmor %vm3858, %vm3859
  %v3861 = vsel %vm3860, %v3853, %v3857
  %v3862 = vand.u32 2147483647, %v3760
  %vm3863 = vcmp.eq.f32.partialorder %v3862, 8.507059e+37
  %v3864 = vand.u32 %v3760, 2147483648
  %v3865 = vor.u32 1.1754944e-38, %v3864
  %v3866 = vsel %vm3863, %v3865, %v3861
  %v3867 = vmul.f32 %v3745, %v3866
  %v3868 = vrcp.pop %v3762
  %v3869 = vmul.f32 %v3762, %v3868
  %v3870 = vsub.f32 1.0, %v3869
  %v3871 = vmul.f32 %v3868, %v3870
  %v3872 = vadd.f32 %v3868, %v3871
  %vm3873 = vweird.f32 %v3762
  %vm3874 = vweird.f32 %v3868
  %vm3875 = vmor %vm3873, %vm3874
  %v3876 = vsel %vm3875, %v3868, %v3872
  %v3877 = vand.u32 2147483647, %v3762
  %vm3878 = vcmp.eq.f32.partialorder %v3877, 8.507059e+37
  %v3879 = vand.u32 %v3762, 2147483648
  %v3880 = vor.u32 1.1754944e-38, %v3879
  %v3881 = vsel %vm3878, %v3880, %v3876
  %v3882 = vmul.f32 %v3746, %v3881
  %v3883 = vadd.f32 %v3683, %v3777
  %v3884 = vadd.f32 %v3684, %v3792
  %v3885 = vadd.f32 %v3685, %v3807
  %v3886 = vadd.f32 %v3686, %v3822
  %v3887 = vadd.f32 %v3687, %v3837
  %v3888 = vadd.f32 %v3688, %v3852
  %v3889 = vadd.f32 %v3689, %v3867
  %v3890 = vadd.f32 %v3690, %v3882
  %v3891 = vmul.f32 %v3883, 0.25
  %v3892 = vmul.f32 %v3884, 0.25
  %v3893 = vmul.f32 %v3885, 0.25
  %v3894 = vmul.f32 %v3886, 0.25
  %v3895 = vmul.f32 %v3887, 0.25
  %v3896 = vmul.f32 %v3888, 0.25
  %v3897 = vmul.f32 %v3889, 0.25
  %v3898 = vmul.f32 %v3890, 0.25
  %s3899 = scalar_lea.vmem %s17, 64
  %3900 = vst.msk [vmem:[%s3899] sm:$0xff] %vm1796, %v3891
  %3901 = vst.msk [vmem:[%s3899 + $0x8] sm:$0xff] %vm1796, %v3892
  %3902 = vst.msk [vmem:[%s3899 + $0x10] sm:$0xff] %vm1796, %v3893
  %3903 = vst.msk [vmem:[%s3899 + $0x18] sm:$0xff] %vm1796, %v3894
  %3904 = vst.msk [vmem:[%s3899 + $0x20] sm:$0xff] %vm1796, %v3895
  %3905 = vst.msk [vmem:[%s3899 + $0x28] sm:$0xff] %vm1796, %v3896
  %3906 = vst.msk [vmem:[%s3899 + $0x30] sm:$0xff] %vm1796, %v3897
  %3907 = vst.msk [vmem:[%s3899 + $0x38] sm:$0xff] %vm1796, %v3898
  %v3908 = vld [vmem:[%s8] sm:$0xff]
  %v3909 = vld [vmem:[%s8 + $0x8] sm:$0xff]
  %v3910 = vld [vmem:[%s8 + $0x10] sm:$0xff]
  %v3911 = vld [vmem:[%s8 + $0x18] sm:$0xff]
  %3912 = vmatpush.msra.mxu0 0.0
  %3913 = vmatpush.msra.mxu0 0.0
  %3914 = vmatpush.msra.mxu0 0.0
  %3915 = vmatpush.msra.mxu0 0.0
  %3916 = vmatpush.msra.mxu0 0.0
  %3917 = vmatpush.msra.mxu0 0.0
  %3918 = vmatpush.msra.mxu0 0.0
  %3919 = vmatpush.msra.mxu0 0.0
  %3920 = vmatpush.msra.mxu0 0.0
  %3921 = vmatpush.msra.mxu0 0.0
  %3922 = vmatpush.msra.mxu0 0.0
  %3923 = vmatpush.msra.mxu0 0.0
  %3924 = vmatpush.msra.mxu0 %v3911
  %3925 = vmatpush.msra.mxu0 %v3910
  %3926 = vmatpush.msra.mxu0 %v3909
  %3927 = vmatpush.msra.mxu0 %v3908
  %3928 = vmatmul.f32.gmra.mxu0 %v2543
  %v3929 = vpop.f32.mrf.mxu0
  %v3930 = vadd.f32 0.0, %v3929
  %3931 = vmatmul.f32.gmra.mxu0 %v2546
  %v3932 = vpop.f32.mrf.mxu0
  %v3933 = vadd.f32 0.0, %v3932
  %3934 = vmatmul.f32.gmra.mxu0 %v2549
  %v3935 = vpop.f32.mrf.mxu0
  %v3936 = vadd.f32 0.0, %v3935
  %3937 = vmatmul.f32.gmra.mxu0 %v2552
  %v3938 = vpop.f32.mrf.mxu0
  %v3939 = vadd.f32 0.0, %v3938
  %3940 = vmatmul.f32.gmra.mxu0 %v2555
  %v3941 = vpop.f32.mrf.mxu0
  %v3942 = vadd.f32 0.0, %v3941
  %3943 = vmatmul.f32.gmra.mxu0 %v2558
  %v3944 = vpop.f32.mrf.mxu0
  %v3945 = vadd.f32 0.0, %v3944
  %3946 = vmatmul.f32.gmra.mxu0 %v2561
  %v3947 = vpop.f32.mrf.mxu0
  %v3948 = vadd.f32 0.0, %v3947
  %3949 = vmatmul.f32.gmra.mxu0 %v2564
  %v3950 = vpop.f32.mrf.mxu0
  %v3951 = vadd.f32 0.0, %v3950
  %3952 = vmatmul.f32.gmra.mxu0 %v2567
  %v3953 = vpop.f32.mrf.mxu0
  %v3954 = vadd.f32 0.0, %v3953
  %3955 = vmatmul.f32.gmra.mxu0 %v2570
  %v3956 = vpop.f32.mrf.mxu0
  %v3957 = vadd.f32 0.0, %v3956
  %3958 = vmatmul.f32.gmra.mxu0 %v2573
  %v3959 = vpop.f32.mrf.mxu0
  %v3960 = vadd.f32 0.0, %v3959
  %3961 = vmatmul.f32.gmra.mxu0 %v2576
  %v3962 = vpop.f32.mrf.mxu0
  %v3963 = vadd.f32 0.0, %v3962
  %3964 = vmatmul.f32.gmra.mxu0 %v2579
  %v3965 = vpop.f32.mrf.mxu0
  %v3966 = vadd.f32 0.0, %v3965
  %3967 = vmatmul.f32.gmra.mxu0 %v2582
  %v3968 = vpop.f32.mrf.mxu0
  %v3969 = vadd.f32 0.0, %v3968
  %3970 = vmatmul.f32.gmra.mxu0 %v2585
  %v3971 = vpop.f32.mrf.mxu0
  %v3972 = vadd.f32 0.0, %v3971
  %3973 = vmatmul.f32.gmra.mxu0 %v2588
  %v3974 = vpop.f32.mrf.mxu0
  %v3975 = vadd.f32 0.0, %v3974
  %3976 = vdwg.mxu0
  %v3977 = vld [vmem:[%s1874] sm:$0xff]
  %v3978 = vld [vmem:[%s1874 + $0x8] sm:$0xff]
  %v3979 = vld [vmem:[%s1874 + $0x10] sm:$0xff]
  %v3980 = vld [vmem:[%s1874 + $0x18] sm:$0xff]
  %3981 = vmatpush.msra.mxu0 0.0
  %3982 = vmatpush.msra.mxu0 0.0
  %3983 = vmatpush.msra.mxu0 0.0
  %3984 = vmatpush.msra.mxu0 0.0
  %3985 = vmatpush.msra.mxu0 0.0
  %3986 = vmatpush.msra.mxu0 0.0
  %3987 = vmatpush.msra.mxu0 0.0
  %3988 = vmatpush.msra.mxu0 0.0
  %3989 = vmatpush.msra.mxu0 0.0
  %3990 = vmatpush.msra.mxu0 0.0
  %3991 = vmatpush.msra.mxu0 0.0
  %3992 = vmatpush.msra.mxu0 0.0
  %3993 = vmatpush.msra.mxu0 %v3980
  %3994 = vmatpush.msra.mxu0 %v3979
  %3995 = vmatpush.msra.mxu0 %v3978
  %3996 = vmatpush.msra.mxu0 %v3977
  %3997 = vmatmul.f32.gmra.mxu0 %v2543
  %v3998 = vpop.f32.mrf.mxu0
  %v3999 = vadd.f32 0.0, %v3998
  %4000 = vmatmul.f32.gmra.mxu0 %v2546
  %v4001 = vpop.f32.mrf.mxu0
  %v4002 = vadd.f32 0.0, %v4001
  %4003 = vmatmul.f32.gmra.mxu0 %v2549
  %v4004 = vpop.f32.mrf.mxu0
  %v4005 = vadd.f32 0.0, %v4004
  %4006 = vmatmul.f32.gmra.mxu0 %v2552
  %v4007 = vpop.f32.mrf.mxu0
  %v4008 = vadd.f32 0.0, %v4007
  %4009 = vmatmul.f32.gmra.mxu0 %v2555
  %v4010 = vpop.f32.mrf.mxu0
  %v4011 = vadd.f32 0.0, %v4010
  %4012 = vmatmul.f32.gmra.mxu0 %v2558
  %v4013 = vpop.f32.mrf.mxu0
  %v4014 = vadd.f32 0.0, %v4013
  %4015 = vmatmul.f32.gmra.mxu0 %v2561
  %v4016 = vpop.f32.mrf.mxu0
  %v4017 = vadd.f32 0.0, %v4016
  %4018 = vmatmul.f32.gmra.mxu0 %v2564
  %v4019 = vpop.f32.mrf.mxu0
  %v4020 = vadd.f32 0.0, %v4019
  %4021 = vmatmul.f32.gmra.mxu0 %v2567
  %v4022 = vpop.f32.mrf.mxu0
  %v4023 = vadd.f32 0.0, %v4022
  %4024 = vmatmul.f32.gmra.mxu0 %v2570
  %v4025 = vpop.f32.mrf.mxu0
  %v4026 = vadd.f32 0.0, %v4025
  %4027 = vmatmul.f32.gmra.mxu0 %v2573
  %v4028 = vpop.f32.mrf.mxu0
  %v4029 = vadd.f32 0.0, %v4028
  %4030 = vmatmul.f32.gmra.mxu0 %v2576
  %v4031 = vpop.f32.mrf.mxu0
  %v4032 = vadd.f32 0.0, %v4031
  %4033 = vmatmul.f32.gmra.mxu0 %v2579
  %v4034 = vpop.f32.mrf.mxu0
  %v4035 = vadd.f32 0.0, %v4034
  %4036 = vmatmul.f32.gmra.mxu0 %v2582
  %v4037 = vpop.f32.mrf.mxu0
  %v4038 = vadd.f32 0.0, %v4037
  %4039 = vmatmul.f32.gmra.mxu0 %v2585
  %v4040 = vpop.f32.mrf.mxu0
  %v4041 = vadd.f32 0.0, %v4040
  %4042 = vmatmul.f32.gmra.mxu0 %v2588
  %v4043 = vpop.f32.mrf.mxu0
  %v4044 = vadd.f32 0.0, %v4043
  %4045 = vdwg.mxu0
  %v4046 = vld [vmem:[%s1944] sm:$0xff]
  %v4047 = vld [vmem:[%s1944 + $0x8] sm:$0xff]
  %v4048 = vld [vmem:[%s1944 + $0x10] sm:$0xff]
  %v4049 = vld [vmem:[%s1944 + $0x18] sm:$0xff]
  %4050 = vmatpush.msra.mxu0 0.0
  %4051 = vmatpush.msra.mxu0 0.0
  %4052 = vmatpush.msra.mxu0 0.0
  %4053 = vmatpush.msra.mxu0 0.0
  %4054 = vmatpush.msra.mxu0 0.0
  %4055 = vmatpush.msra.mxu0 0.0
  %4056 = vmatpush.msra.mxu0 0.0
  %4057 = vmatpush.msra.mxu0 0.0
  %4058 = vmatpush.msra.mxu0 0.0
  %4059 = vmatpush.msra.mxu0 0.0
  %4060 = vmatpush.msra.mxu0 0.0
  %4061 = vmatpush.msra.mxu0 0.0
  %4062 = vmatpush.msra.mxu0 %v4049
  %4063 = vmatpush.msra.mxu0 %v4048
  %4064 = vmatpush.msra.mxu0 %v4047
  %4065 = vmatpush.msra.mxu0 %v4046
  %4066 = vmatmul.f32.gmra.mxu0 %v2543
  %v4067 = vpop.f32.mrf.mxu0
  %v4068 = vadd.f32 0.0, %v4067
  %4069 = vmatmul.f32.gmra.mxu0 %v2546
  %v4070 = vpop.f32.mrf.mxu0
  %v4071 = vadd.f32 0.0, %v4070
  %4072 = vmatmul.f32.gmra.mxu0 %v2549
  %v4073 = vpop.f32.mrf.mxu0
  %v4074 = vadd.f32 0.0, %v4073
  %4075 = vmatmul.f32.gmra.mxu0 %v2552
  %v4076 = vpop.f32.mrf.mxu0
  %v4077 = vadd.f32 0.0, %v4076
  %4078 = vmatmul.f32.gmra.mxu0 %v2555
  %v4079 = vpop.f32.mrf.mxu0
  %v4080 = vadd.f32 0.0, %v4079
  %4081 = vmatmul.f32.gmra.mxu0 %v2558
  %v4082 = vpop.f32.mrf.mxu0
  %v4083 = vadd.f32 0.0, %v4082
  %4084 = vmatmul.f32.gmra.mxu0 %v2561
  %v4085 = vpop.f32.mrf.mxu0
  %v4086 = vadd.f32 0.0, %v4085
  %4087 = vmatmul.f32.gmra.mxu0 %v2564
  %v4088 = vpop.f32.mrf.mxu0
  %v4089 = vadd.f32 0.0, %v4088
  %4090 = vmatmul.f32.gmra.mxu0 %v2567
  %v4091 = vpop.f32.mrf.mxu0
  %v4092 = vadd.f32 0.0, %v4091
  %4093 = vmatmul.f32.gmra.mxu0 %v2570
  %v4094 = vpop.f32.mrf.mxu0
  %v4095 = vadd.f32 0.0, %v4094
  %4096 = vmatmul.f32.gmra.mxu0 %v2573
  %v4097 = vpop.f32.mrf.mxu0
  %v4098 = vadd.f32 0.0, %v4097
  %4099 = vmatmul.f32.gmra.mxu0 %v2576
  %v4100 = vpop.f32.mrf.mxu0
  %v4101 = vadd.f32 0.0, %v4100
  %4102 = vmatmul.f32.gmra.mxu0 %v2579
  %v4103 = vpop.f32.mrf.mxu0
  %v4104 = vadd.f32 0.0, %v4103
  %4105 = vmatmul.f32.gmra.mxu0 %v2582
  %v4106 = vpop.f32.mrf.mxu0
  %v4107 = vadd.f32 0.0, %v4106
  %4108 = vmatmul.f32.gmra.mxu0 %v2585
  %v4109 = vpop.f32.mrf.mxu0
  %v4110 = vadd.f32 0.0, %v4109
  %4111 = vmatmul.f32.gmra.mxu0 %v2588
  %v4112 = vpop.f32.mrf.mxu0
  %v4113 = vadd.f32 0.0, %v4112
  %4114 = vdwg.mxu0
  %v4115 = vld [vmem:[%s2014] sm:$0xff]
  %v4116 = vld [vmem:[%s2014 + $0x8] sm:$0xff]
  %v4117 = vld [vmem:[%s2014 + $0x10] sm:$0xff]
  %v4118 = vld [vmem:[%s2014 + $0x18] sm:$0xff]
  %4119 = vmatpush.msra.mxu0 0.0
  %4120 = vmatpush.msra.mxu0 0.0
  %4121 = vmatpush.msra.mxu0 0.0
  %4122 = vmatpush.msra.mxu0 0.0
  %4123 = vmatpush.msra.mxu0 0.0
  %4124 = vmatpush.msra.mxu0 0.0
  %4125 = vmatpush.msra.mxu0 0.0
  %4126 = vmatpush.msra.mxu0 0.0
  %4127 = vmatpush.msra.mxu0 0.0
  %4128 = vmatpush.msra.mxu0 0.0
  %4129 = vmatpush.msra.mxu0 0.0
  %4130 = vmatpush.msra.mxu0 0.0
  %4131 = vmatpush.msra.mxu0 %v4118
  %4132 = vmatpush.msra.mxu0 %v4117
  %4133 = vmatpush.msra.mxu0 %v4116
  %4134 = vmatpush.msra.mxu0 %v4115
  %4135 = vmatmul.f32.gmra.mxu0 %v2543
  %v4136 = vpop.f32.mrf.mxu0
  %v4137 = vadd.f32 0.0, %v4136
  %4138 = vmatmul.f32.gmra.mxu0 %v2546
  %v4139 = vpop.f32.mrf.mxu0
  %v4140 = vadd.f32 0.0, %v4139
  %4141 = vmatmul.f32.gmra.mxu0 %v2549
  %v4142 = vpop.f32.mrf.mxu0
  %v4143 = vadd.f32 0.0, %v4142
  %4144 = vmatmul.f32.gmra.mxu0 %v2552
  %v4145 = vpop.f32.mrf.mxu0
  %v4146 = vadd.f32 0.0, %v4145
  %4147 = vmatmul.f32.gmra.mxu0 %v2555
  %v4148 = vpop.f32.mrf.mxu0
  %v4149 = vadd.f32 0.0, %v4148
  %4150 = vmatmul.f32.gmra.mxu0 %v2558
  %v4151 = vpop.f32.mrf.mxu0
  %v4152 = vadd.f32 0.0, %v4151
  %4153 = vmatmul.f32.gmra.mxu0 %v2561
  %v4154 = vpop.f32.mrf.mxu0
  %v4155 = vadd.f32 0.0, %v4154
  %4156 = vmatmul.f32.gmra.mxu0 %v2564
  %v4157 = vpop.f32.mrf.mxu0
  %v4158 = vadd.f32 0.0, %v4157
  %4159 = vmatmul.f32.gmra.mxu0 %v2567
  %v4160 = vpop.f32.mrf.mxu0
  %v4161 = vadd.f32 0.0, %v4160
  %4162 = vmatmul.f32.gmra.mxu0 %v2570
  %v4163 = vpop.f32.mrf.mxu0
  %v4164 = vadd.f32 0.0, %v4163
  %4165 = vmatmul.f32.gmra.mxu0 %v2573
  %v4166 = vpop.f32.mrf.mxu0
  %v4167 = vadd.f32 0.0, %v4166
  %4168 = vmatmul.f32.gmra.mxu0 %v2576
  %v4169 = vpop.f32.mrf.mxu0
  %v4170 = vadd.f32 0.0, %v4169
  %4171 = vmatmul.f32.gmra.mxu0 %v2579
  %v4172 = vpop.f32.mrf.mxu0
  %v4173 = vadd.f32 0.0, %v4172
  %4174 = vmatmul.f32.gmra.mxu0 %v2582
  %v4175 = vpop.f32.mrf.mxu0
  %v4176 = vadd.f32 0.0, %v4175
  %4177 = vmatmul.f32.gmra.mxu0 %v2585
  %v4178 = vpop.f32.mrf.mxu0
  %v4179 = vadd.f32 0.0, %v4178
  %4180 = vmatmul.f32.gmra.mxu0 %v2588
  %v4181 = vpop.f32.mrf.mxu0
  %v4182 = vadd.f32 0.0, %v4181
  %4183 = vdwg.mxu0
  %4184 = vmatpush.msra.mxu0 %v3975
  %4185 = vmatpush.msra.mxu0 %v3972
  %4186 = vmatpush.msra.mxu0 %v3969
  %4187 = vmatpush.msra.mxu0 %v3966
  %4188 = vmatpush.msra.mxu0 %v3963
  %4189 = vmatpush.msra.mxu0 %v3960
  %4190 = vmatpush.msra.mxu0 %v3957
  %4191 = vmatpush.msra.mxu0 %v3954
  %4192 = vmatpush.msra.mxu0 %v3951
  %4193 = vmatpush.msra.mxu0 %v3948
  %4194 = vmatpush.msra.mxu0 %v3945
  %4195 = vmatpush.msra.mxu0 %v3942
  %4196 = vmatpush.msra.mxu0 %v3939
  %4197 = vmatpush.msra.mxu0 %v3936
  %4198 = vmatpush.msra.mxu0 %v3933
  %4199 = vmatpush.msra.mxu0 %v3930
  %4200 = vmatmul.f32.gmra.mxu0 %v3185
  %v4201 = vpop.f32.mrf.mxu0
  %v4202 = vadd.f32 %v2085, %v4201
  %4203 = vmatmul.f32.gmra.mxu0 %v3200
  %v4204 = vpop.f32.mrf.mxu0
  %v4205 = vadd.f32 %v2085, %v4204
  %4206 = vmatmul.f32.gmra.mxu0 %v3215
  %v4207 = vpop.f32.mrf.mxu0
  %v4208 = vadd.f32 %v2085, %v4207
  %4209 = vmatmul.f32.gmra.mxu0 %v3230
  %v4210 = vpop.f32.mrf.mxu0
  %v4211 = vadd.f32 %v2085, %v4210
  %4212 = vmatmul.f32.gmra.mxu0 %v3245
  %v4213 = vpop.f32.mrf.mxu0
  %v4214 = vadd.f32 %v2085, %v4213
  %4215 = vmatmul.f32.gmra.mxu0 %v3260
  %v4216 = vpop.f32.mrf.mxu0
  %v4217 = vadd.f32 %v2085, %v4216
  %4218 = vmatmul.f32.gmra.mxu0 %v3275
  %v4219 = vpop.f32.mrf.mxu0
  %v4220 = vadd.f32 %v2085, %v4219
  %4221 = vmatmul.f32.gmra.mxu0 %v3290
  %v4222 = vpop.f32.mrf.mxu0
  %v4223 = vadd.f32 %v2085, %v4222
  %4224 = vdwg.mxu0
  %4225 = vmatpush.msra.mxu0 %v4044
  %4226 = vmatpush.msra.mxu0 %v4041
  %4227 = vmatpush.msra.mxu0 %v4038
  %4228 = vmatpush.msra.mxu0 %v4035
  %4229 = vmatpush.msra.mxu0 %v4032
  %4230 = vmatpush.msra.mxu0 %v4029
  %4231 = vmatpush.msra.mxu0 %v4026
  %4232 = vmatpush.msra.mxu0 %v4023
  %4233 = vmatpush.msra.mxu0 %v4020
  %4234 = vmatpush.msra.mxu0 %v4017
  %4235 = vmatpush.msra.mxu0 %v4014
  %4236 = vmatpush.msra.mxu0 %v4011
  %4237 = vmatpush.msra.mxu0 %v4008
  %4238 = vmatpush.msra.mxu0 %v4005
  %4239 = vmatpush.msra.mxu0 %v4002
  %4240 = vmatpush.msra.mxu0 %v3999
  %4241 = vmatmul.f32.gmra.mxu0 %v3377
  %v4242 = vpop.f32.mrf.mxu0
  %v4243 = vadd.f32 %v4202, %v4242
  %4244 = vmatmul.f32.gmra.mxu0 %v3392
  %v4245 = vpop.f32.mrf.mxu0
  %v4246 = vadd.f32 %v4205, %v4245
  %4247 = vmatmul.f32.gmra.mxu0 %v3407
  %v4248 = vpop.f32.mrf.mxu0
  %v4249 = vadd.f32 %v4208, %v4248
  %4250 = vmatmul.f32.gmra.mxu0 %v3422
  %v4251 = vpop.f32.mrf.mxu0
  %v4252 = vadd.f32 %v4211, %v4251
  %4253 = vmatmul.f32.gmra.mxu0 %v3437
  %v4254 = vpop.f32.mrf.mxu0
  %v4255 = vadd.f32 %v4214, %v4254
  %4256 = vmatmul.f32.gmra.mxu0 %v3452
  %v4257 = vpop.f32.mrf.mxu0
  %v4258 = vadd.f32 %v4217, %v4257
  %4259 = vmatmul.f32.gmra.mxu0 %v3467
  %v4260 = vpop.f32.mrf.mxu0
  %v4261 = vadd.f32 %v4220, %v4260
  %4262 = vmatmul.f32.gmra.mxu0 %v3482
  %v4263 = vpop.f32.mrf.mxu0
  %v4264 = vadd.f32 %v4223, %v4263
  %4265 = vdwg.mxu0
  %4266 = vmatpush.msra.mxu0 %v4113
  %4267 = vmatpush.msra.mxu0 %v4110
  %4268 = vmatpush.msra.mxu0 %v4107
  %4269 = vmatpush.msra.mxu0 %v4104
  %4270 = vmatpush.msra.mxu0 %v4101
  %4271 = vmatpush.msra.mxu0 %v4098
  %4272 = vmatpush.msra.mxu0 %v4095
  %4273 = vmatpush.msra.mxu0 %v4092
  %4274 = vmatpush.msra.mxu0 %v4089
  %4275 = vmatpush.msra.mxu0 %v4086
  %4276 = vmatpush.msra.mxu0 %v4083
  %4277 = vmatpush.msra.mxu0 %v4080
  %4278 = vmatpush.msra.mxu0 %v4077
  %4279 = vmatpush.msra.mxu0 %v4074
  %4280 = vmatpush.msra.mxu0 %v4071
  %4281 = vmatpush.msra.mxu0 %v4068
  %4282 = vmatmul.f32.gmra.mxu0 %v3577
  %v4283 = vpop.f32.mrf.mxu0
  %v4284 = vadd.f32 %v4243, %v4283
  %4285 = vmatmul.f32.gmra.mxu0 %v3592
  %v4286 = vpop.f32.mrf.mxu0
  %v4287 = vadd.f32 %v4246, %v4286
  %4288 = vmatmul.f32.gmra.mxu0 %v3607
  %v4289 = vpop.f32.mrf.mxu0
  %v4290 = vadd.f32 %v4249, %v4289
  %4291 = vmatmul.f32.gmra.mxu0 %v3622
  %v4292 = vpop.f32.mrf.mxu0
  %v4293 = vadd.f32 %v4252, %v4292
  %4294 = vmatmul.f32.gmra.mxu0 %v3637
  %v4295 = vpop.f32.mrf.mxu0
  %v4296 = vadd.f32 %v4255, %v4295
  %4297 = vmatmul.f32.gmra.mxu0 %v3652
  %v4298 = vpop.f32.mrf.mxu0
  %v4299 = vadd.f32 %v4258, %v4298
  %4300 = vmatmul.f32.gmra.mxu0 %v3667
  %v4301 = vpop.f32.mrf.mxu0
  %v4302 = vadd.f32 %v4261, %v4301
  %4303 = vmatmul.f32.gmra.mxu0 %v3682
  %v4304 = vpop.f32.mrf.mxu0
  %v4305 = vadd.f32 %v4264, %v4304
  %4306 = vdwg.mxu0
  %4307 = vmatpush.msra.mxu0 %v4182
  %4308 = vmatpush.msra.mxu0 %v4179
  %4309 = vmatpush.msra.mxu0 %v4176
  %4310 = vmatpush.msra.mxu0 %v4173
  %4311 = vmatpush.msra.mxu0 %v4170
  %4312 = vmatpush.msra.mxu0 %v4167
  %4313 = vmatpush.msra.mxu0 %v4164
  %4314 = vmatpush.msra.mxu0 %v4161
  %4315 = vmatpush.msra.mxu0 %v4158
  %4316 = vmatpush.msra.mxu0 %v4155
  %4317 = vmatpush.msra.mxu0 %v4152
  %4318 = vmatpush.msra.mxu0 %v4149
  %4319 = vmatpush.msra.mxu0 %v4146
  %4320 = vmatpush.msra.mxu0 %v4143
  %4321 = vmatpush.msra.mxu0 %v4140
  %4322 = vmatpush.msra.mxu0 %v4137
  %4323 = vmatmul.f32.gmra.mxu0 %v3777
  %v4324 = vpop.f32.mrf.mxu0
  %v4325 = vadd.f32 %v4284, %v4324
  %4326 = vmatmul.f32.gmra.mxu0 %v3792
  %v4327 = vpop.f32.mrf.mxu0
  %v4328 = vadd.f32 %v4287, %v4327
  %4329 = vmatmul.f32.gmra.mxu0 %v3807
  %v4330 = vpop.f32.mrf.mxu0
  %v4331 = vadd.f32 %v4290, %v4330
  %4332 = vmatmul.f32.gmra.mxu0 %v3822
  %v4333 = vpop.f32.mrf.mxu0
  %v4334 = vadd.f32 %v4293, %v4333
  %4335 = vmatmul.f32.gmra.mxu0 %v3837
  %v4336 = vpop.f32.mrf.mxu0
  %v4337 = vadd.f32 %v4296, %v4336
  %4338 = vmatmul.f32.gmra.mxu0 %v3852
  %v4339 = vpop.f32.mrf.mxu0
  %v4340 = vadd.f32 %v4299, %v4339
  %4341 = vmatmul.f32.gmra.mxu0 %v3867
  %v4342 = vpop.f32.mrf.mxu0
  %v4343 = vadd.f32 %v4302, %v4342
  %4344 = vmatmul.f32.gmra.mxu0 %v3882
  %v4345 = vpop.f32.mrf.mxu0
  %v4346 = vadd.f32 %v4305, %v4345
  %4347 = vdwg.mxu0
  %v4348 = vadd.f32 %v2260, %v4325
  %v4349 = vadd.f32 %v2261, %v4328
  %v4350 = vadd.f32 %v2262, %v4331
  %v4351 = vadd.f32 %v2263, %v4334
  %v4352 = vadd.f32 %v2264, %v4337
  %v4353 = vadd.f32 %v2265, %v4340
  %v4354 = vadd.f32 %v2266, %v4343
  %v4355 = vadd.f32 %v2267, %v4346
  %v4356 = vld [vmem:[%s11] sm:$0xff]
  %v4357 = vld [vmem:[%s11 + $0x8] sm:$0xff]
  %v4358 = vld [vmem:[%s11 + $0x10] sm:$0xff]
  %v4359 = vld [vmem:[%s11 + $0x18] sm:$0xff]
  %v4360 = vld [vmem:[%s11 + $0x20] sm:$0xff]
  %v4361 = vld [vmem:[%s11 + $0x28] sm:$0xff]
  %v4362 = vld [vmem:[%s11 + $0x30] sm:$0xff]
  %v4363 = vld [vmem:[%s11 + $0x38] sm:$0xff]
  %v4365 = vsel %vm161, %v2251, 0
  %v4368 = vsel %vm161, %v2252, 0
  %v4371 = vsel %vm161, %v2253, 0
  %v4374 = vsel %vm161, %v2254, 0
  %v4377 = vsel %vm161, %v2255, 0
  %v4380 = vsel %vm161, %v2256, 0
  %v4383 = vsel %vm161, %v2257, 0
  %v4386 = vsel %vm161, %v2258, 0
  %v4389 = vsel %vm161, %v4348, 0
  %v4392 = vsel %vm161, %v4349, 0
  %v4395 = vsel %vm161, %v4350, 0
  %v4398 = vsel %vm161, %v4351, 0
  %v4401 = vsel %vm161, %v4352, 0
  %v4404 = vsel %vm161, %v4353, 0
  %v4407 = vsel %vm161, %v4354, 0
  %v4410 = vsel %vm161, %v4355, 0
  %4412 = vmatpush.msra.mxu0 0.0
  %4413 = vmatpush.msra.mxu0 0.0
  %4414 = vmatpush.msra.mxu0 0.0
  %4415 = vmatpush.msra.mxu0 0.0
  %4416 = vmatpush.msra.mxu0 0.0
  %4417 = vmatpush.msra.mxu0 0.0
  %4418 = vmatpush.msra.mxu0 0.0
  %4419 = vmatpush.msra.mxu0 0.0
  %4420 = vmatpush.msra.mxu0 0.0
  %4421 = vmatpush.msra.mxu0 0.0
  %4422 = vmatpush.msra.mxu0 0.0
  %4423 = vmatpush.msra.mxu0 0.0
  %4424 = vmatpush.msra.mxu0 %v4362
  %4425 = vmatpush.msra.mxu0 %v4360
  %4426 = vmatpush.msra.mxu0 %v4358
  %4427 = vmatpush.msra.mxu0 %v4356
  %4428 = vmatmul.f32.gmra.mxu0 %v4365
  %v4429 = vpop.f32.mrf.mxu0
  %v4430 = vadd.f32 0.0, %v4429
  %4431 = vmatmul.f32.gmra.mxu0 %v4368
  %v4432 = vpop.f32.mrf.mxu0
  %v4433 = vadd.f32 0.0, %v4432
  %4434 = vmatmul.f32.gmra.mxu0 %v4371
  %v4435 = vpop.f32.mrf.mxu0
  %v4436 = vadd.f32 0.0, %v4435
  %4437 = vmatmul.f32.gmra.mxu0 %v4374
  %v4438 = vpop.f32.mrf.mxu0
  %v4439 = vadd.f32 0.0, %v4438
  %4440 = vmatmul.f32.gmra.mxu0 %v4377
  %v4441 = vpop.f32.mrf.mxu0
  %v4442 = vadd.f32 0.0, %v4441
  %4443 = vmatmul.f32.gmra.mxu0 %v4380
  %v4444 = vpop.f32.mrf.mxu0
  %v4445 = vadd.f32 0.0, %v4444
  %4446 = vmatmul.f32.gmra.mxu0 %v4383
  %v4447 = vpop.f32.mrf.mxu0
  %v4448 = vadd.f32 0.0, %v4447
  %4449 = vmatmul.f32.gmra.mxu0 %v4386
  %v4450 = vpop.f32.mrf.mxu0
  %v4451 = vadd.f32 0.0, %v4450
  %4452 = vmatmul.f32.gmra.mxu0 %v4389
  %v4453 = vpop.f32.mrf.mxu0
  %v4454 = vadd.f32 0.0, %v4453
  %4455 = vmatmul.f32.gmra.mxu0 %v4392
  %v4456 = vpop.f32.mrf.mxu0
  %v4457 = vadd.f32 0.0, %v4456
  %4458 = vmatmul.f32.gmra.mxu0 %v4395
  %v4459 = vpop.f32.mrf.mxu0
  %v4460 = vadd.f32 0.0, %v4459
  %4461 = vmatmul.f32.gmra.mxu0 %v4398
  %v4462 = vpop.f32.mrf.mxu0
  %v4463 = vadd.f32 0.0, %v4462
  %4464 = vmatmul.f32.gmra.mxu0 %v4401
  %v4465 = vpop.f32.mrf.mxu0
  %v4466 = vadd.f32 0.0, %v4465
  %4467 = vmatmul.f32.gmra.mxu0 %v4404
  %v4468 = vpop.f32.mrf.mxu0
  %v4469 = vadd.f32 0.0, %v4468
  %4470 = vmatmul.f32.gmra.mxu0 %v4407
  %v4471 = vpop.f32.mrf.mxu0
  %v4472 = vadd.f32 0.0, %v4471
  %4473 = vmatmul.f32.gmra.mxu0 %v4410
  %v4474 = vpop.f32.mrf.mxu0
  %v4475 = vadd.f32 0.0, %v4474
  %4476 = vdwg.mxu0
  %4477 = vmatpush.msra.mxu0 0.0
  %4478 = vmatpush.msra.mxu0 0.0
  %4479 = vmatpush.msra.mxu0 0.0
  %4480 = vmatpush.msra.mxu0 0.0
  %4481 = vmatpush.msra.mxu0 0.0
  %4482 = vmatpush.msra.mxu0 0.0
  %4483 = vmatpush.msra.mxu0 0.0
  %4484 = vmatpush.msra.mxu0 0.0
  %4485 = vmatpush.msra.mxu0 0.0
  %4486 = vmatpush.msra.mxu0 0.0
  %4487 = vmatpush.msra.mxu0 0.0
  %4488 = vmatpush.msra.mxu0 0.0
  %4489 = vmatpush.msra.mxu0 %v4363
  %4490 = vmatpush.msra.mxu0 %v4361
  %4491 = vmatpush.msra.mxu0 %v4359
  %4492 = vmatpush.msra.mxu0 %v4357
  %4493 = vmatmul.f32.gmra.mxu0 %v4365
  %v4494 = vpop.f32.mrf.mxu0
  %v4495 = vadd.f32 0.0, %v4494
  %4496 = vmatmul.f32.gmra.mxu0 %v4368
  %v4497 = vpop.f32.mrf.mxu0
  %v4498 = vadd.f32 0.0, %v4497
  %4499 = vmatmul.f32.gmra.mxu0 %v4371
  %v4500 = vpop.f32.mrf.mxu0
  %v4501 = vadd.f32 0.0, %v4500
  %4502 = vmatmul.f32.gmra.mxu0 %v4374
  %v4503 = vpop.f32.mrf.mxu0
  %v4504 = vadd.f32 0.0, %v4503
  %4505 = vmatmul.f32.gmra.mxu0 %v4377
  %v4506 = vpop.f32.mrf.mxu0
  %v4507 = vadd.f32 0.0, %v4506
  %4508 = vmatmul.f32.gmra.mxu0 %v4380
  %v4509 = vpop.f32.mrf.mxu0
  %v4510 = vadd.f32 0.0, %v4509
  %4511 = vmatmul.f32.gmra.mxu0 %v4383
  %v4512 = vpop.f32.mrf.mxu0
  %v4513 = vadd.f32 0.0, %v4512
  %4514 = vmatmul.f32.gmra.mxu0 %v4386
  %v4515 = vpop.f32.mrf.mxu0
  %v4516 = vadd.f32 0.0, %v4515
  %4517 = vmatmul.f32.gmra.mxu0 %v4389
  %v4518 = vpop.f32.mrf.mxu0
  %v4519 = vadd.f32 0.0, %v4518
  %4520 = vmatmul.f32.gmra.mxu0 %v4392
  %v4521 = vpop.f32.mrf.mxu0
  %v4522 = vadd.f32 0.0, %v4521
  %4523 = vmatmul.f32.gmra.mxu0 %v4395
  %v4524 = vpop.f32.mrf.mxu0
  %v4525 = vadd.f32 0.0, %v4524
  %4526 = vmatmul.f32.gmra.mxu0 %v4398
  %v4527 = vpop.f32.mrf.mxu0
  %v4528 = vadd.f32 0.0, %v4527
  %4529 = vmatmul.f32.gmra.mxu0 %v4401
  %v4530 = vpop.f32.mrf.mxu0
  %v4531 = vadd.f32 0.0, %v4530
  %4532 = vmatmul.f32.gmra.mxu0 %v4404
  %v4533 = vpop.f32.mrf.mxu0
  %v4534 = vadd.f32 0.0, %v4533
  %4535 = vmatmul.f32.gmra.mxu0 %v4407
  %v4536 = vpop.f32.mrf.mxu0
  %v4537 = vadd.f32 0.0, %v4536
  %4538 = vmatmul.f32.gmra.mxu0 %v4410
  %v4539 = vpop.f32.mrf.mxu0
  %v4540 = vadd.f32 0.0, %v4539
  %4541 = vdwg.mxu0
  %v4542 = vld [vmem:[%s13] sm:$0xff]
  %v4543 = vld [vmem:[%s13 + $0x8] sm:$0xff]
  %v4544 = vld [vmem:[%s13 + $0x10] sm:$0xff]
  %v4545 = vld [vmem:[%s13 + $0x18] sm:$0xff]
  %v4546 = vld [vmem:[%s13 + $0x20] sm:$0xff]
  %v4547 = vld [vmem:[%s13 + $0x28] sm:$0xff]
  %v4548 = vld [vmem:[%s13 + $0x30] sm:$0xff]
  %v4549 = vld [vmem:[%s13 + $0x38] sm:$0xff]
  %v4550 = vld [vmem:[%s13 + $0x40] sm:$0xff]
  %v4551 = vld [vmem:[%s13 + $0x48] sm:$0xff]
  %v4552 = vld [vmem:[%s13 + $0x50] sm:$0xff]
  %v4553 = vld [vmem:[%s13 + $0x58] sm:$0xff]
  %v4554 = vld [vmem:[%s13 + $0x60] sm:$0xff]
  %v4555 = vld [vmem:[%s13 + $0x68] sm:$0xff]
  %v4556 = vld [vmem:[%s13 + $0x70] sm:$0xff]
  %v4557 = vld [vmem:[%s13 + $0x78] sm:$0xff]
  %v4558 = vld [vmem:[%s13 + $0x80] sm:$0xff]
  %v4559 = vld [vmem:[%s13 + $0x88] sm:$0xff]
  %v4560 = vld [vmem:[%s13 + $0x90] sm:$0xff]
  %v4561 = vld [vmem:[%s13 + $0x98] sm:$0xff]
  %v4562 = vld [vmem:[%s13 + $0xa0] sm:$0xff]
  %v4563 = vld [vmem:[%s13 + $0xa8] sm:$0xff]
  %v4564 = vld [vmem:[%s13 + $0xb0] sm:$0xff]
  %v4565 = vld [vmem:[%s13 + $0xb8] sm:$0xff]
  %v4566 = vld [vmem:[%s13 + $0xc0] sm:$0xff]
  %v4567 = vld [vmem:[%s13 + $0xc8] sm:$0xff]
  %v4568 = vld [vmem:[%s13 + $0xd0] sm:$0xff]
  %v4569 = vld [vmem:[%s13 + $0xd8] sm:$0xff]
  %v4570 = vld [vmem:[%s13 + $0xe0] sm:$0xff]
  %v4571 = vld [vmem:[%s13 + $0xe8] sm:$0xff]
  %v4572 = vld [vmem:[%s13 + $0xf0] sm:$0xff]
  %v4573 = vld [vmem:[%s13 + $0xf8] sm:$0xff]
  %v4574 = vld [vmem:[%s13 + $0x140] sm:$0xff]
  %v4575 = vld [vmem:[%s13 + $0x148] sm:$0xff]
  %v4576 = vld [vmem:[%s13 + $0x150] sm:$0xff]
  %v4577 = vld [vmem:[%s13 + $0x158] sm:$0xff]
  %v4578 = vld [vmem:[%s13 + $0x160] sm:$0xff]
  %v4579 = vld [vmem:[%s13 + $0x168] sm:$0xff]
  %v4580 = vld [vmem:[%s13 + $0x170] sm:$0xff]
  %v4581 = vld [vmem:[%s13 + $0x178] sm:$0xff]
  %v4582 = vld [vmem:[%s13 + $0x180] sm:$0xff]
  %v4583 = vld [vmem:[%s13 + $0x188] sm:$0xff]
  %v4584 = vld [vmem:[%s13 + $0x190] sm:$0xff]
  %v4585 = vld [vmem:[%s13 + $0x198] sm:$0xff]
  %v4586 = vld [vmem:[%s13 + $0x1a0] sm:$0xff]
  %v4587 = vld [vmem:[%s13 + $0x1a8] sm:$0xff]
  %v4588 = vld [vmem:[%s13 + $0x1b0] sm:$0xff]
  %v4589 = vld [vmem:[%s13 + $0x1b8] sm:$0xff]
  %v4590 = vld [vmem:[%s13 + $0x1c0] sm:$0xff]
  %v4591 = vld [vmem:[%s13 + $0x1c8] sm:$0xff]
  %v4592 = vld [vmem:[%s13 + $0x1d0] sm:$0xff]
  %v4593 = vld [vmem:[%s13 + $0x1d8] sm:$0xff]
  %v4594 = vld [vmem:[%s13 + $0x1e0] sm:$0xff]
  %v4595 = vld [vmem:[%s13 + $0x1e8] sm:$0xff]
  %v4596 = vld [vmem:[%s13 + $0x1f0] sm:$0xff]
  %v4597 = vld [vmem:[%s13 + $0x1f8] sm:$0xff]
  %v4598 = vld [vmem:[%s13 + $0x200] sm:$0xff]
  %v4599 = vld [vmem:[%s13 + $0x208] sm:$0xff]
  %v4600 = vld [vmem:[%s13 + $0x210] sm:$0xff]
  %v4601 = vld [vmem:[%s13 + $0x218] sm:$0xff]
  %v4602 = vld [vmem:[%s13 + $0x220] sm:$0xff]
  %v4603 = vld [vmem:[%s13 + $0x228] sm:$0xff]
  %v4604 = vld [vmem:[%s13 + $0x230] sm:$0xff]
  %v4605 = vld [vmem:[%s13 + $0x238] sm:$0xff]
  %vm4622 = vcmask 1040384
  %v4623 = vrot.slane %v4430, 7
  %v4624 = vrot.slane %v4433, 7
  %v4625 = vsel %vm4622, %v4623, %v4624
  %v4626 = vrot.slane %v4436, 7
  %v4627 = vsel %vm4622, %v4624, %v4626
  %v4628 = vrot.slane %v4439, 7
  %v4629 = vsel %vm4622, %v4626, %v4628
  %v4630 = vrot.slane %v4442, 7
  %v4631 = vsel %vm4622, %v4628, %v4630
  %v4632 = vrot.slane %v4445, 7
  %v4633 = vsel %vm4622, %v4630, %v4632
  %v4634 = vrot.slane %v4448, 7
  %v4635 = vsel %vm4622, %v4632, %v4634
  %v4636 = vrot.slane %v4451, 7
  %v4637 = vsel %vm4622, %v4634, %v4636
  %v4638 = vrot.slane %v4454, 7
  %v4639 = vsel %vm4622, %v4636, %v4638
  %v4640 = vrot.slane %v4457, 7
  %v4641 = vsel %vm4622, %v4638, %v4640
  %v4642 = vrot.slane %v4460, 7
  %v4643 = vsel %vm4622, %v4640, %v4642
  %v4644 = vrot.slane %v4463, 7
  %v4645 = vsel %vm4622, %v4642, %v4644
  %v4646 = vrot.slane %v4466, 7
  %v4647 = vsel %vm4622, %v4644, %v4646
  %v4648 = vrot.slane %v4469, 7
  %v4649 = vsel %vm4622, %v4646, %v4648
  %v4650 = vrot.slane %v4472, 7
  %v4651 = vsel %vm4622, %v4648, %v4650
  %v4652 = vrot.slane %v4475, 7
  %v4653 = vsel %vm4622, %v4650, %v4652
  %4654 = vrot.lane.b32.xlu0 %v4623, 16
  %v4655 = vpop.permute.xlu0 %4654
  %4656 = vrot.lane.b32.xlu0 %v4625, 16
  %v4657 = vpop.permute.xlu0 %4656
  %4658 = vrot.lane.b32.xlu0 %v4627, 16
  %v4659 = vpop.permute.xlu0 %4658
  %4660 = vrot.lane.b32.xlu0 %v4629, 16
  %v4661 = vpop.permute.xlu0 %4660
  %4662 = vrot.lane.b32.xlu0 %v4631, 16
  %v4663 = vpop.permute.xlu0 %4662
  %4664 = vrot.lane.b32.xlu0 %v4633, 16
  %v4665 = vpop.permute.xlu0 %4664
  %4666 = vrot.lane.b32.xlu0 %v4635, 16
  %v4667 = vpop.permute.xlu0 %4666
  %4668 = vrot.lane.b32.xlu0 %v4637, 16
  %v4669 = vpop.permute.xlu0 %4668
  %4670 = vrot.lane.b32.xlu0 %v4639, 16
  %v4671 = vpop.permute.xlu0 %4670
  %4672 = vrot.lane.b32.xlu0 %v4641, 16
  %v4673 = vpop.permute.xlu0 %4672
  %4674 = vrot.lane.b32.xlu0 %v4643, 16
  %v4675 = vpop.permute.xlu0 %4674
  %4676 = vrot.lane.b32.xlu0 %v4645, 16
  %v4677 = vpop.permute.xlu0 %4676
  %4678 = vrot.lane.b32.xlu0 %v4647, 16
  %v4679 = vpop.permute.xlu0 %4678
  %4680 = vrot.lane.b32.xlu0 %v4649, 16
  %v4681 = vpop.permute.xlu0 %4680
  %4682 = vrot.lane.b32.xlu0 %v4651, 16
  %v4683 = vpop.permute.xlu0 %4682
  %4684 = vrot.lane.b32.xlu0 %v4653, 16
  %v4685 = vpop.permute.xlu0 %4684
  %v4702 = vsel %vm4622, 0.0, %v4655
  %4704 = vset.pattern.permute.xlu0 0
  %4705 = vperm.xlu0 %4704, %v4566
  %v4706 = vpop.permute.xlu0 %4705
  %4709 = vset.pattern.permute.xlu0 0
  %4710 = vperm.xlu0 %4709, %v4567
  %v4711 = vpop.permute.xlu0 %4710
  %4714 = vset.pattern.permute.xlu0 0
  %4715 = vperm.xlu0 %4714, %v4568
  %v4716 = vpop.permute.xlu0 %4715
  %4719 = vset.pattern.permute.xlu0 0
  %4720 = vperm.xlu0 %4719, %v4569
  %v4721 = vpop.permute.xlu0 %4720
  %4724 = vset.pattern.permute.xlu0 0
  %4725 = vperm.xlu0 %4724, %v4570
  %v4726 = vpop.permute.xlu0 %4725
  %4729 = vset.pattern.permute.xlu0 0
  %4730 = vperm.xlu0 %4729, %v4571
  %v4731 = vpop.permute.xlu0 %4730
  %4734 = vset.pattern.permute.xlu0 0
  %4735 = vperm.xlu0 %4734, %v4572
  %v4736 = vpop.permute.xlu0 %4735
  %4739 = vset.pattern.permute.xlu0 0
  %4740 = vperm.xlu0 %4739, %v4573
  %v4741 = vpop.permute.xlu0 %4740
  %v4743 = vmul.f32 %v4702, %v4706
  %v4744 = vmul.f32 %v4657, %v4711
  %v4745 = vmul.f32 %v4659, %v4716
  %v4746 = vmul.f32 %v4661, %v4721
  %v4747 = vmul.f32 %v4663, %v4726
  %v4748 = vmul.f32 %v4665, %v4731
  %v4749 = vmul.f32 %v4667, %v4736
  %v4750 = vmul.f32 %v4669, %v4741
  %v4751 = vmul.f32 %v4671, %v4706
  %v4752 = vmul.f32 %v4673, %v4711
  %v4753 = vmul.f32 %v4675, %v4716
  %v4754 = vmul.f32 %v4677, %v4721
  %v4755 = vmul.f32 %v4679, %v4726
  %v4756 = vmul.f32 %v4681, %v4731
  %v4757 = vmul.f32 %v4683, %v4736
  %v4758 = vmul.f32 %v4685, %v4741
  %4775 = vrot.lane.b32.xlu0 %v4743, 80
  %v4776 = vpop.permute.xlu0 %4775
  %4777 = vrot.lane.b32.xlu0 %v4744, 80
  %v4778 = vpop.permute.xlu0 %4777
  %4779 = vrot.lane.b32.xlu0 %v4745, 80
  %v4780 = vpop.permute.xlu0 %4779
  %4781 = vrot.lane.b32.xlu0 %v4746, 80
  %v4782 = vpop.permute.xlu0 %4781
  %4783 = vrot.lane.b32.xlu0 %v4747, 80
  %v4784 = vpop.permute.xlu0 %4783
  %4785 = vrot.lane.b32.xlu0 %v4748, 80
  %v4786 = vpop.permute.xlu0 %4785
  %4787 = vrot.lane.b32.xlu0 %v4749, 80
  %v4788 = vpop.permute.xlu0 %4787
  %4789 = vrot.lane.b32.xlu0 %v4750, 80
  %v4790 = vpop.permute.xlu0 %4789
  %4791 = vrot.lane.b32.xlu0 %v4751, 80
  %v4792 = vpop.permute.xlu0 %4791
  %4793 = vrot.lane.b32.xlu0 %v4752, 80
  %v4794 = vpop.permute.xlu0 %4793
  %4795 = vrot.lane.b32.xlu0 %v4753, 80
  %v4796 = vpop.permute.xlu0 %4795
  %4797 = vrot.lane.b32.xlu0 %v4754, 80
  %v4798 = vpop.permute.xlu0 %4797
  %4799 = vrot.lane.b32.xlu0 %v4755, 80
  %v4800 = vpop.permute.xlu0 %4799
  %4801 = vrot.lane.b32.xlu0 %v4756, 80
  %v4802 = vpop.permute.xlu0 %4801
  %4803 = vrot.lane.b32.xlu0 %v4757, 80
  %v4804 = vpop.permute.xlu0 %4803
  %4805 = vrot.lane.b32.xlu0 %v4758, 80
  %v4806 = vpop.permute.xlu0 %4805
  %v4823 = vadd.f32 %v4430, %v4776
  %v4824 = vadd.f32 %v4433, %v4778
  %v4825 = vadd.f32 %v4436, %v4780
  %v4826 = vadd.f32 %v4439, %v4782
  %v4827 = vadd.f32 %v4442, %v4784
  %v4828 = vadd.f32 %v4445, %v4786
  %v4829 = vadd.f32 %v4448, %v4788
  %v4830 = vadd.f32 %v4451, %v4790
  %v4831 = vadd.f32 %v4454, %v4792
  %v4832 = vadd.f32 %v4457, %v4794
  %v4833 = vadd.f32 %v4460, %v4796
  %v4834 = vadd.f32 %v4463, %v4798
  %v4835 = vadd.f32 %v4466, %v4800
  %v4836 = vadd.f32 %v4469, %v4802
  %v4837 = vadd.f32 %v4472, %v4804
  %v4838 = vadd.f32 %v4475, %v4806
  %4854 = vrot.lane.b32.xlu0 %v4495, 48
  %v4855 = vpop.permute.xlu0 %4854
  %4856 = vrot.lane.b32.xlu0 %v4498, 48
  %v4857 = vpop.permute.xlu0 %4856
  %4858 = vrot.lane.b32.xlu0 %v4501, 48
  %v4859 = vpop.permute.xlu0 %4858
  %4860 = vrot.lane.b32.xlu0 %v4504, 48
  %v4861 = vpop.permute.xlu0 %4860
  %4862 = vrot.lane.b32.xlu0 %v4507, 48
  %v4863 = vpop.permute.xlu0 %4862
  %4864 = vrot.lane.b32.xlu0 %v4510, 48
  %v4865 = vpop.permute.xlu0 %4864
  %4866 = vrot.lane.b32.xlu0 %v4513, 48
  %v4867 = vpop.permute.xlu0 %4866
  %4868 = vrot.lane.b32.xlu0 %v4516, 48
  %v4869 = vpop.permute.xlu0 %4868
  %4870 = vrot.lane.b32.xlu0 %v4519, 48
  %v4871 = vpop.permute.xlu0 %4870
  %4872 = vrot.lane.b32.xlu0 %v4522, 48
  %v4873 = vpop.permute.xlu0 %4872
  %4874 = vrot.lane.b32.xlu0 %v4525, 48
  %v4875 = vpop.permute.xlu0 %4874
  %4876 = vrot.lane.b32.xlu0 %v4528, 48
  %v4877 = vpop.permute.xlu0 %4876
  %4878 = vrot.lane.b32.xlu0 %v4531, 48
  %v4879 = vpop.permute.xlu0 %4878
  %4880 = vrot.lane.b32.xlu0 %v4534, 48
  %v4881 = vpop.permute.xlu0 %4880
  %4882 = vrot.lane.b32.xlu0 %v4537, 48
  %v4883 = vpop.permute.xlu0 %4882
  %4900 = vset.pattern.permute.xlu0 0
  %4901 = vperm.xlu0 %4900, %v4550
  %v4902 = vpop.permute.xlu0 %4901
  %4905 = vset.pattern.permute.xlu0 0
  %4906 = vperm.xlu0 %4905, %v4551
  %v4907 = vpop.permute.xlu0 %4906
  %4910 = vset.pattern.permute.xlu0 0
  %4911 = vperm.xlu0 %4910, %v4552
  %v4912 = vpop.permute.xlu0 %4911
  %4915 = vset.pattern.permute.xlu0 0
  %4916 = vperm.xlu0 %4915, %v4553
  %v4917 = vpop.permute.xlu0 %4916
  %4920 = vset.pattern.permute.xlu0 0
  %4921 = vperm.xlu0 %4920, %v4554
  %v4922 = vpop.permute.xlu0 %4921
  %4925 = vset.pattern.permute.xlu0 0
  %4926 = vperm.xlu0 %4925, %v4555
  %v4927 = vpop.permute.xlu0 %4926
  %4930 = vset.pattern.permute.xlu0 0
  %4931 = vperm.xlu0 %4930, %v4556
  %v4932 = vpop.permute.xlu0 %4931
  %4935 = vset.pattern.permute.xlu0 0
  %4936 = vperm.xlu0 %4935, %v4557
  %v4937 = vpop.permute.xlu0 %4936
  %v4939 = vmul.f32 %v4902, 0.0
  %v4940 = vmul.f32 %v4855, %v4907
  %v4941 = vmul.f32 %v4857, %v4912
  %v4942 = vmul.f32 %v4859, %v4917
  %v4943 = vmul.f32 %v4861, %v4922
  %v4944 = vmul.f32 %v4863, %v4927
  %v4945 = vmul.f32 %v4865, %v4932
  %v4946 = vmul.f32 %v4867, %v4937
  %v4947 = vmul.f32 %v4869, %v4902
  %v4948 = vmul.f32 %v4871, %v4907
  %v4949 = vmul.f32 %v4873, %v4912
  %v4950 = vmul.f32 %v4875, %v4917
  %v4951 = vmul.f32 %v4877, %v4922
  %v4952 = vmul.f32 %v4879, %v4927
  %v4953 = vmul.f32 %v4881, %v4932
  %v4954 = vmul.f32 %v4883, %v4937
  %4971 = vrot.lane.b32.xlu0 %v4939, 80
  %v4972 = vpop.permute.xlu0 %4971
  %4973 = vrot.lane.b32.xlu0 %v4940, 80
  %v4974 = vpop.permute.xlu0 %4973
  %4975 = vrot.lane.b32.xlu0 %v4941, 80
  %v4976 = vpop.permute.xlu0 %4975
  %4977 = vrot.lane.b32.xlu0 %v4942, 80
  %v4978 = vpop.permute.xlu0 %4977
  %4979 = vrot.lane.b32.xlu0 %v4943, 80
  %v4980 = vpop.permute.xlu0 %4979
  %4981 = vrot.lane.b32.xlu0 %v4944, 80
  %v4982 = vpop.permute.xlu0 %4981
  %4983 = vrot.lane.b32.xlu0 %v4945, 80
  %v4984 = vpop.permute.xlu0 %4983
  %4985 = vrot.lane.b32.xlu0 %v4946, 80
  %v4986 = vpop.permute.xlu0 %4985
  %4987 = vrot.lane.b32.xlu0 %v4947, 80
  %v4988 = vpop.permute.xlu0 %4987
  %4989 = vrot.lane.b32.xlu0 %v4948, 80
  %v4990 = vpop.permute.xlu0 %4989
  %4991 = vrot.lane.b32.xlu0 %v4949, 80
  %v4992 = vpop.permute.xlu0 %4991
  %4993 = vrot.lane.b32.xlu0 %v4950, 80
  %v4994 = vpop.permute.xlu0 %4993
  %4995 = vrot.lane.b32.xlu0 %v4951, 80
  %v4996 = vpop.permute.xlu0 %4995
  %4997 = vrot.lane.b32.xlu0 %v4952, 80
  %v4998 = vpop.permute.xlu0 %4997
  %4999 = vrot.lane.b32.xlu0 %v4953, 80
  %v5000 = vpop.permute.xlu0 %4999
  %5001 = vrot.lane.b32.xlu0 %v4954, 80
  %v5002 = vpop.permute.xlu0 %5001
  %v5019 = vadd.f32 %v4823, %v4972
  %v5020 = vadd.f32 %v4824, %v4974
  %v5021 = vadd.f32 %v4825, %v4976
  %v5022 = vadd.f32 %v4826, %v4978
  %v5023 = vadd.f32 %v4827, %v4980
  %v5024 = vadd.f32 %v4828, %v4982
  %v5025 = vadd.f32 %v4829, %v4984
  %v5026 = vadd.f32 %v4830, %v4986
  %v5027 = vadd.f32 %v4831, %v4988
  %v5028 = vadd.f32 %v4832, %v4990
  %v5029 = vadd.f32 %v4833, %v4992
  %v5030 = vadd.f32 %v4834, %v4994
  %v5031 = vadd.f32 %v4835, %v4996
  %v5032 = vadd.f32 %v4836, %v4998
  %v5033 = vadd.f32 %v4837, %v5000
  %v5034 = vadd.f32 %v4838, %v5002
  %v5035 = vrot.slane %v4495, 7
  %v5036 = vrot.slane %v4498, 7
  %v5037 = vsel %vm4622, %v5035, %v5036
  %v5038 = vrot.slane %v4501, 7
  %v5039 = vsel %vm4622, %v5036, %v5038
  %v5040 = vrot.slane %v4504, 7
  %v5041 = vsel %vm4622, %v5038, %v5040
  %v5042 = vrot.slane %v4507, 7
  %v5043 = vsel %vm4622, %v5040, %v5042
  %v5044 = vrot.slane %v4510, 7
  %v5045 = vsel %vm4622, %v5042, %v5044
  %v5046 = vrot.slane %v4513, 7
  %v5047 = vsel %vm4622, %v5044, %v5046
  %v5048 = vrot.slane %v4516, 7
  %v5049 = vsel %vm4622, %v5046, %v5048
  %v5050 = vrot.slane %v4519, 7
  %v5051 = vsel %vm4622, %v5048, %v5050
  %v5052 = vrot.slane %v4522, 7
  %v5053 = vsel %vm4622, %v5050, %v5052
  %v5054 = vrot.slane %v4525, 7
  %v5055 = vsel %vm4622, %v5052, %v5054
  %v5056 = vrot.slane %v4528, 7
  %v5057 = vsel %vm4622, %v5054, %v5056
  %v5058 = vrot.slane %v4531, 7
  %v5059 = vsel %vm4622, %v5056, %v5058
  %v5060 = vrot.slane %v4534, 7
  %v5061 = vsel %vm4622, %v5058, %v5060
  %v5062 = vrot.slane %v4537, 7
  %v5063 = vsel %vm4622, %v5060, %v5062
  %5064 = vrot.lane.b32.xlu0 %v5035, 16
  %v5065 = vpop.permute.xlu0 %5064
  %5066 = vrot.lane.b32.xlu0 %v5037, 16
  %v5067 = vpop.permute.xlu0 %5066
  %5068 = vrot.lane.b32.xlu0 %v5039, 16
  %v5069 = vpop.permute.xlu0 %5068
  %5070 = vrot.lane.b32.xlu0 %v5041, 16
  %v5071 = vpop.permute.xlu0 %5070
  %5072 = vrot.lane.b32.xlu0 %v5043, 16
  %v5073 = vpop.permute.xlu0 %5072
  %5074 = vrot.lane.b32.xlu0 %v5045, 16
  %v5075 = vpop.permute.xlu0 %5074
  %5076 = vrot.lane.b32.xlu0 %v5047, 16
  %v5077 = vpop.permute.xlu0 %5076
  %5078 = vrot.lane.b32.xlu0 %v5049, 16
  %v5079 = vpop.permute.xlu0 %5078
  %5080 = vrot.lane.b32.xlu0 %v5051, 16
  %v5081 = vpop.permute.xlu0 %5080
  %5082 = vrot.lane.b32.xlu0 %v5053, 16
  %v5083 = vpop.permute.xlu0 %5082
  %5084 = vrot.lane.b32.xlu0 %v5055, 16
  %v5085 = vpop.permute.xlu0 %5084
  %5086 = vrot.lane.b32.xlu0 %v5057, 16
  %v5087 = vpop.permute.xlu0 %5086
  %5088 = vrot.lane.b32.xlu0 %v5059, 16
  %v5089 = vpop.permute.xlu0 %5088
  %5090 = vrot.lane.b32.xlu0 %v5061, 16
  %v5091 = vpop.permute.xlu0 %5090
  %5092 = vrot.lane.b32.xlu0 %v5063, 16
  %v5093 = vpop.permute.xlu0 %5092
  %v5109 = vsel %vm4622, 0.0, %v5065
  %5111 = vset.pattern.permute.xlu0 0
  %5112 = vperm.xlu0 %5111, %v4542
  %v5113 = vpop.permute.xlu0 %5112
  %5116 = vset.pattern.permute.xlu0 0
  %5117 = vperm.xlu0 %5116, %v4543
  %v5118 = vpop.permute.xlu0 %5117
  %5121 = vset.pattern.permute.xlu0 0
  %5122 = vperm.xlu0 %5121, %v4544
  %v5123 = vpop.permute.xlu0 %5122
  %5126 = vset.pattern.permute.xlu0 0
  %5127 = vperm.xlu0 %5126, %v4545
  %v5128 = vpop.permute.xlu0 %5127
  %5131 = vset.pattern.permute.xlu0 0
  %5132 = vperm.xlu0 %5131, %v4546
  %v5133 = vpop.permute.xlu0 %5132
  %5136 = vset.pattern.permute.xlu0 0
  %5137 = vperm.xlu0 %5136, %v4547
  %v5138 = vpop.permute.xlu0 %5137
  %5141 = vset.pattern.permute.xlu0 0
  %5142 = vperm.xlu0 %5141, %v4548
  %v5143 = vpop.permute.xlu0 %5142
  %5146 = vset.pattern.permute.xlu0 0
  %5147 = vperm.xlu0 %5146, %v4549
  %v5148 = vpop.permute.xlu0 %5147
  %v5150 = vmul.f32 %v5113, 0.0
  %v5151 = vmul.f32 %v5109, %v5118
  %v5152 = vmul.f32 %v5067, %v5123
  %v5153 = vmul.f32 %v5069, %v5128
  %v5154 = vmul.f32 %v5071, %v5133
  %v5155 = vmul.f32 %v5073, %v5138
  %v5156 = vmul.f32 %v5075, %v5143
  %v5157 = vmul.f32 %v5077, %v5148
  %v5158 = vmul.f32 %v5079, %v5113
  %v5159 = vmul.f32 %v5081, %v5118
  %v5160 = vmul.f32 %v5083, %v5123
  %v5161 = vmul.f32 %v5085, %v5128
  %v5162 = vmul.f32 %v5087, %v5133
  %v5163 = vmul.f32 %v5089, %v5138
  %v5164 = vmul.f32 %v5091, %v5143
  %v5165 = vmul.f32 %v5093, %v5148
  %5182 = vrot.lane.b32.xlu0 %v5150, 80
  %v5183 = vpop.permute.xlu0 %5182
  %5184 = vrot.lane.b32.xlu0 %v5151, 80
  %v5185 = vpop.permute.xlu0 %5184
  %5186 = vrot.lane.b32.xlu0 %v5152, 80
  %v5187 = vpop.permute.xlu0 %5186
  %5188 = vrot.lane.b32.xlu0 %v5153, 80
  %v5189 = vpop.permute.xlu0 %5188
  %5190 = vrot.lane.b32.xlu0 %v5154, 80
  %v5191 = vpop.permute.xlu0 %5190
  %5192 = vrot.lane.b32.xlu0 %v5155, 80
  %v5193 = vpop.permute.xlu0 %5192
  %5194 = vrot.lane.b32.xlu0 %v5156, 80
  %v5195 = vpop.permute.xlu0 %5194
  %5196 = vrot.lane.b32.xlu0 %v5157, 80
  %v5197 = vpop.permute.xlu0 %5196
  %5198 = vrot.lane.b32.xlu0 %v5158, 80
  %v5199 = vpop.permute.xlu0 %5198
  %5200 = vrot.lane.b32.xlu0 %v5159, 80
  %v5201 = vpop.permute.xlu0 %5200
  %5202 = vrot.lane.b32.xlu0 %v5160, 80
  %v5203 = vpop.permute.xlu0 %5202
  %5204 = vrot.lane.b32.xlu0 %v5161, 80
  %v5205 = vpop.permute.xlu0 %5204
  %5206 = vrot.lane.b32.xlu0 %v5162, 80
  %v5207 = vpop.permute.xlu0 %5206
  %5208 = vrot.lane.b32.xlu0 %v5163, 80
  %v5209 = vpop.permute.xlu0 %5208
  %5210 = vrot.lane.b32.xlu0 %v5164, 80
  %v5211 = vpop.permute.xlu0 %5210
  %5212 = vrot.lane.b32.xlu0 %v5165, 80
  %v5213 = vpop.permute.xlu0 %5212
  %v5230 = vadd.f32 %v5019, %v5183
  %v5231 = vadd.f32 %v5020, %v5185
  %v5232 = vadd.f32 %v5021, %v5187
  %v5233 = vadd.f32 %v5022, %v5189
  %v5234 = vadd.f32 %v5023, %v5191
  %v5235 = vadd.f32 %v5024, %v5193
  %v5236 = vadd.f32 %v5025, %v5195
  %v5237 = vadd.f32 %v5026, %v5197
  %v5238 = vadd.f32 %v5027, %v5199
  %v5239 = vadd.f32 %v5028, %v5201
  %v5240 = vadd.f32 %v5029, %v5203
  %v5241 = vadd.f32 %v5030, %v5205
  %v5242 = vadd.f32 %v5031, %v5207
  %v5243 = vadd.f32 %v5032, %v5209
  %v5244 = vadd.f32 %v5033, %v5211
  %v5245 = vadd.f32 %v5034, %v5213
  %vm5246 = vcmask 1046528
  %v5247 = vrot.slane %v4430, 1
  %v5248 = vrot.slane %v4433, 1
  %v5249 = vsel %vm5246, %v5247, %v5248
  %v5250 = vrot.slane %v4436, 1
  %v5251 = vsel %vm5246, %v5248, %v5250
  %v5252 = vrot.slane %v4439, 1
  %v5253 = vsel %vm5246, %v5250, %v5252
  %v5254 = vrot.slane %v4442, 1
  %v5255 = vsel %vm5246, %v5252, %v5254
  %v5256 = vrot.slane %v4445, 1
  %v5257 = vsel %vm5246, %v5254, %v5256
  %v5258 = vrot.slane %v4448, 1
  %v5259 = vsel %vm5246, %v5256, %v5258
  %v5260 = vrot.slane %v4451, 1
  %v5261 = vsel %vm5246, %v5258, %v5260
  %v5262 = vrot.slane %v4454, 1
  %v5263 = vsel %vm5246, %v5260, %v5262
  %v5264 = vrot.slane %v4457, 1
  %v5265 = vsel %vm5246, %v5262, %v5264
  %v5266 = vrot.slane %v4460, 1
  %v5267 = vsel %vm5246, %v5264, %v5266
  %v5268 = vrot.slane %v4463, 1
  %v5269 = vsel %vm5246, %v5266, %v5268
  %v5270 = vrot.slane %v4466, 1
  %v5271 = vsel %vm5246, %v5268, %v5270
  %v5272 = vrot.slane %v4469, 1
  %v5273 = vsel %vm5246, %v5270, %v5272
  %v5274 = vrot.slane %v4472, 1
  %v5275 = vsel %vm5246, %v5272, %v5274
  %v5276 = vrot.slane %v4475, 1
  %v5277 = vsel %vm5246, %v5274, %v5276
  %v5294 = vsel %vm5246, %v5276, 0.0
  %5296 = vset.pattern.permute.xlu0 0
  %5297 = vperm.xlu0 %5296, %v4574
  %v5298 = vpop.permute.xlu0 %5297
  %5301 = vset.pattern.permute.xlu0 0
  %5302 = vperm.xlu0 %5301, %v4575
  %v5303 = vpop.permute.xlu0 %5302
  %5306 = vset.pattern.permute.xlu0 0
  %5307 = vperm.xlu0 %5306, %v4576
  %v5308 = vpop.permute.xlu0 %5307
  %5311 = vset.pattern.permute.xlu0 0
  %5312 = vperm.xlu0 %5311, %v4577
  %v5313 = vpop.permute.xlu0 %5312
  %5316 = vset.pattern.permute.xlu0 0
  %5317 = vperm.xlu0 %5316, %v4578
  %v5318 = vpop.permute.xlu0 %5317
  %5321 = vset.pattern.permute.xlu0 0
  %5322 = vperm.xlu0 %5321, %v4579
  %v5323 = vpop.permute.xlu0 %5322
  %5326 = vset.pattern.permute.xlu0 0
  %5327 = vperm.xlu0 %5326, %v4580
  %v5328 = vpop.permute.xlu0 %5327
  %5331 = vset.pattern.permute.xlu0 0
  %5332 = vperm.xlu0 %5331, %v4581
  %v5333 = vpop.permute.xlu0 %5332
  %v5335 = vmul.f32 %v5249, %v5298
  %v5336 = vmul.f32 %v5251, %v5303
  %v5337 = vmul.f32 %v5253, %v5308
  %v5338 = vmul.f32 %v5255, %v5313
  %v5339 = vmul.f32 %v5257, %v5318
  %v5340 = vmul.f32 %v5259, %v5323
  %v5341 = vmul.f32 %v5261, %v5328
  %v5342 = vmul.f32 %v5263, %v5333
  %v5343 = vmul.f32 %v5265, %v5298
  %v5344 = vmul.f32 %v5267, %v5303
  %v5345 = vmul.f32 %v5269, %v5308
  %v5346 = vmul.f32 %v5271, %v5313
  %v5347 = vmul.f32 %v5273, %v5318
  %v5348 = vmul.f32 %v5275, %v5323
  %v5349 = vmul.f32 %v5277, %v5328
  %v5350 = vmul.f32 %v5294, %v5333
  %5351 = vrot.lane.b32.xlu0 %v4430, 96
  %v5352 = vpop.permute.xlu0 %5351
  %5353 = vrot.lane.b32.xlu0 %v4433, 96
  %v5354 = vpop.permute.xlu0 %5353
  %5355 = vrot.lane.b32.xlu0 %v4436, 96
  %v5356 = vpop.permute.xlu0 %5355
  %5357 = vrot.lane.b32.xlu0 %v4439, 96
  %v5358 = vpop.permute.xlu0 %5357
  %5359 = vrot.lane.b32.xlu0 %v4442, 96
  %v5360 = vpop.permute.xlu0 %5359
  %5361 = vrot.lane.b32.xlu0 %v4445, 96
  %v5362 = vpop.permute.xlu0 %5361
  %5363 = vrot.lane.b32.xlu0 %v4448, 96
  %v5364 = vpop.permute.xlu0 %5363
  %5365 = vrot.lane.b32.xlu0 %v4451, 96
  %v5366 = vpop.permute.xlu0 %5365
  %5367 = vrot.lane.b32.xlu0 %v4454, 96
  %v5368 = vpop.permute.xlu0 %5367
  %5369 = vrot.lane.b32.xlu0 %v4457, 96
  %v5370 = vpop.permute.xlu0 %5369
  %5371 = vrot.lane.b32.xlu0 %v4460, 96
  %v5372 = vpop.permute.xlu0 %5371
  %5373 = vrot.lane.b32.xlu0 %v4463, 96
  %v5374 = vpop.permute.xlu0 %5373
  %5375 = vrot.lane.b32.xlu0 %v4466, 96
  %v5376 = vpop.permute.xlu0 %5375
  %5377 = vrot.lane.b32.xlu0 %v4469, 96
  %v5378 = vpop.permute.xlu0 %5377
  %5379 = vrot.lane.b32.xlu0 %v4472, 96
  %v5380 = vpop.permute.xlu0 %5379
  %5381 = vrot.lane.b32.xlu0 %v4475, 96
  %v5382 = vpop.permute.xlu0 %5381
  %v5399 = vadd.f32 %v5335, %v5352
  %v5400 = vadd.f32 %v5336, %v5354
  %v5401 = vadd.f32 %v5337, %v5356
  %v5402 = vadd.f32 %v5338, %v5358
  %v5403 = vadd.f32 %v5339, %v5360
  %v5404 = vadd.f32 %v5340, %v5362
  %v5405 = vadd.f32 %v5341, %v5364
  %v5406 = vadd.f32 %v5342, %v5366
  %v5407 = vadd.f32 %v5343, %v5368
  %v5408 = vadd.f32 %v5344, %v5370
  %v5409 = vadd.f32 %v5345, %v5372
  %v5410 = vadd.f32 %v5346, %v5374
  %v5411 = vadd.f32 %v5347, %v5376
  %v5412 = vadd.f32 %v5348, %v5378
  %v5413 = vadd.f32 %v5349, %v5380
  %v5414 = vadd.f32 %v5350, %v5382
  %v5416 = vrot.slane %v4495, 1
  %v5417 = vrot.slane %v4498, 1
  %v5418 = vsel %vm5246, %v5416, %v5417
  %v5419 = vrot.slane %v4501, 1
  %v5420 = vsel %vm5246, %v5417, %v5419
  %v5421 = vrot.slane %v4504, 1
  %v5422 = vsel %vm5246, %v5419, %v5421
  %v5423 = vrot.slane %v4507, 1
  %v5424 = vsel %vm5246, %v5421, %v5423
  %v5425 = vrot.slane %v4510, 1
  %v5426 = vsel %vm5246, %v5423, %v5425
  %v5427 = vrot.slane %v4513, 1
  %v5428 = vsel %vm5246, %v5425, %v5427
  %v5429 = vrot.slane %v4516, 1
  %v5430 = vsel %vm5246, %v5427, %v5429
  %v5431 = vrot.slane %v4519, 1
  %v5432 = vsel %vm5246, %v5429, %v5431
  %v5433 = vrot.slane %v4522, 1
  %v5434 = vsel %vm5246, %v5431, %v5433
  %v5435 = vrot.slane %v4525, 1
  %v5436 = vsel %vm5246, %v5433, %v5435
  %v5437 = vrot.slane %v4528, 1
  %v5438 = vsel %vm5246, %v5435, %v5437
  %v5439 = vrot.slane %v4531, 1
  %v5440 = vsel %vm5246, %v5437, %v5439
  %v5441 = vrot.slane %v4534, 1
  %v5442 = vsel %vm5246, %v5439, %v5441
  %v5443 = vrot.slane %v4537, 1
  %v5444 = vsel %vm5246, %v5441, %v5443
  %v5445 = vrot.slane %v4540, 1
  %v5446 = vsel %vm5246, %v5443, %v5445
  %5447 = vrot.lane.b32.xlu0 %v5416, 64
  %v5448 = vpop.permute.xlu0 %5447
  %5449 = vrot.lane.b32.xlu0 %v5418, 64
  %v5450 = vpop.permute.xlu0 %5449
  %5451 = vrot.lane.b32.xlu0 %v5420, 64
  %v5452 = vpop.permute.xlu0 %5451
  %5453 = vrot.lane.b32.xlu0 %v5422, 64
  %v5454 = vpop.permute.xlu0 %5453
  %5455 = vrot.lane.b32.xlu0 %v5424, 64
  %v5456 = vpop.permute.xlu0 %5455
  %5457 = vrot.lane.b32.xlu0 %v5426, 64
  %v5458 = vpop.permute.xlu0 %5457
  %5459 = vrot.lane.b32.xlu0 %v5428, 64
  %v5460 = vpop.permute.xlu0 %5459
  %5461 = vrot.lane.b32.xlu0 %v5430, 64
  %v5462 = vpop.permute.xlu0 %5461
  %5463 = vrot.lane.b32.xlu0 %v5432, 64
  %v5464 = vpop.permute.xlu0 %5463
  %5465 = vrot.lane.b32.xlu0 %v5434, 64
  %v5466 = vpop.permute.xlu0 %5465
  %5467 = vrot.lane.b32.xlu0 %v5436, 64
  %v5468 = vpop.permute.xlu0 %5467
  %5469 = vrot.lane.b32.xlu0 %v5438, 64
  %v5470 = vpop.permute.xlu0 %5469
  %5471 = vrot.lane.b32.xlu0 %v5440, 64
  %v5472 = vpop.permute.xlu0 %5471
  %5473 = vrot.lane.b32.xlu0 %v5442, 64
  %v5474 = vpop.permute.xlu0 %5473
  %5475 = vrot.lane.b32.xlu0 %v5444, 64
  %v5476 = vpop.permute.xlu0 %5475
  %5477 = vrot.lane.b32.xlu0 %v5446, 64
  %v5478 = vpop.permute.xlu0 %5477
  %v5495 = vsel %vm5246, 0.0, %v5448
  %5497 = vset.pattern.permute.xlu0 0
  %5498 = vperm.xlu0 %5497, %v4558
  %v5499 = vpop.permute.xlu0 %5498
  %5502 = vset.pattern.permute.xlu0 0
  %5503 = vperm.xlu0 %5502, %v4559
  %v5504 = vpop.permute.xlu0 %5503
  %5507 = vset.pattern.permute.xlu0 0
  %5508 = vperm.xlu0 %5507, %v4560
  %v5509 = vpop.permute.xlu0 %5508
  %5512 = vset.pattern.permute.xlu0 0
  %5513 = vperm.xlu0 %5512, %v4561
  %v5514 = vpop.permute.xlu0 %5513
  %5517 = vset.pattern.permute.xlu0 0
  %5518 = vperm.xlu0 %5517, %v4562
  %v5519 = vpop.permute.xlu0 %5518
  %5522 = vset.pattern.permute.xlu0 0
  %5523 = vperm.xlu0 %5522, %v4563
  %v5524 = vpop.permute.xlu0 %5523
  %5527 = vset.pattern.permute.xlu0 0
  %5528 = vperm.xlu0 %5527, %v4564
  %v5529 = vpop.permute.xlu0 %5528
  %5532 = vset.pattern.permute.xlu0 0
  %5533 = vperm.xlu0 %5532, %v4565
  %v5534 = vpop.permute.xlu0 %5533
  %v5536 = vmul.f32 %v5495, %v5499
  %v5537 = vmul.f32 %v5450, %v5504
  %v5538 = vmul.f32 %v5452, %v5509
  %v5539 = vmul.f32 %v5454, %v5514
  %v5540 = vmul.f32 %v5456, %v5519
  %v5541 = vmul.f32 %v5458, %v5524
  %v5542 = vmul.f32 %v5460, %v5529
  %v5543 = vmul.f32 %v5462, %v5534
  %v5544 = vmul.f32 %v5464, %v5499
  %v5545 = vmul.f32 %v5466, %v5504
  %v5546 = vmul.f32 %v5468, %v5509
  %v5547 = vmul.f32 %v5470, %v5514
  %v5548 = vmul.f32 %v5472, %v5519
  %v5549 = vmul.f32 %v5474, %v5524
  %v5550 = vmul.f32 %v5476, %v5529
  %v5551 = vmul.f32 %v5478, %v5534
  %5568 = vrot.lane.b32.xlu0 %v5536, 64
  %v5569 = vpop.permute.xlu0 %5568
  %5570 = vrot.lane.b32.xlu0 %v5537, 64
  %v5571 = vpop.permute.xlu0 %5570
  %5572 = vrot.lane.b32.xlu0 %v5538, 64
  %v5573 = vpop.permute.xlu0 %5572
  %5574 = vrot.lane.b32.xlu0 %v5539, 64
  %v5575 = vpop.permute.xlu0 %5574
  %5576 = vrot.lane.b32.xlu0 %v5540, 64
  %v5577 = vpop.permute.xlu0 %5576
  %5578 = vrot.lane.b32.xlu0 %v5541, 64
  %v5579 = vpop.permute.xlu0 %5578
  %5580 = vrot.lane.b32.xlu0 %v5542, 64
  %v5581 = vpop.permute.xlu0 %5580
  %5582 = vrot.lane.b32.xlu0 %v5543, 64
  %v5583 = vpop.permute.xlu0 %5582
  %5584 = vrot.lane.b32.xlu0 %v5544, 64
  %v5585 = vpop.permute.xlu0 %5584
  %5586 = vrot.lane.b32.xlu0 %v5545, 64
  %v5587 = vpop.permute.xlu0 %5586
  %5588 = vrot.lane.b32.xlu0 %v5546, 64
  %v5589 = vpop.permute.xlu0 %5588
  %5590 = vrot.lane.b32.xlu0 %v5547, 64
  %v5591 = vpop.permute.xlu0 %5590
  %5592 = vrot.lane.b32.xlu0 %v5548, 64
  %v5593 = vpop.permute.xlu0 %5592
  %5594 = vrot.lane.b32.xlu0 %v5549, 64
  %v5595 = vpop.permute.xlu0 %5594
  %5596 = vrot.lane.b32.xlu0 %v5550, 64
  %v5597 = vpop.permute.xlu0 %5596
  %5598 = vrot.lane.b32.xlu0 %v5551, 64
  %v5599 = vpop.permute.xlu0 %5598
  %v5616 = vadd.f32 %v5399, %v5569
  %v5617 = vadd.f32 %v5400, %v5571
  %v5618 = vadd.f32 %v5401, %v5573
  %v5619 = vadd.f32 %v5402, %v5575
  %v5620 = vadd.f32 %v5403, %v5577
  %v5621 = vadd.f32 %v5404, %v5579
  %v5622 = vadd.f32 %v5405, %v5581
  %v5623 = vadd.f32 %v5406, %v5583
  %v5624 = vadd.f32 %v5407, %v5585
  %v5625 = vadd.f32 %v5408, %v5587
  %v5626 = vadd.f32 %v5409, %v5589
  %v5627 = vadd.f32 %v5410, %v5591
  %v5628 = vadd.f32 %v5411, %v5593
  %v5629 = vadd.f32 %v5412, %v5595
  %v5630 = vadd.f32 %v5413, %v5597
  %v5631 = vadd.f32 %v5414, %v5599
  %5632 = vrot.lane.b32.xlu0 %v4495, 32
  %v5633 = vpop.permute.xlu0 %5632
  %5634 = vrot.lane.b32.xlu0 %v4498, 32
  %v5635 = vpop.permute.xlu0 %5634
  %5636 = vrot.lane.b32.xlu0 %v4501, 32
  %v5637 = vpop.permute.xlu0 %5636
  %5638 = vrot.lane.b32.xlu0 %v4504, 32
  %v5639 = vpop.permute.xlu0 %5638
  %5640 = vrot.lane.b32.xlu0 %v4507, 32
  %v5641 = vpop.permute.xlu0 %5640
  %5642 = vrot.lane.b32.xlu0 %v4510, 32
  %v5643 = vpop.permute.xlu0 %5642
  %5644 = vrot.lane.b32.xlu0 %v4513, 32
  %v5645 = vpop.permute.xlu0 %5644
  %5646 = vrot.lane.b32.xlu0 %v4516, 32
  %v5647 = vpop.permute.xlu0 %5646
  %5648 = vrot.lane.b32.xlu0 %v4519, 32
  %v5649 = vpop.permute.xlu0 %5648
  %5650 = vrot.lane.b32.xlu0 %v4522, 32
  %v5651 = vpop.permute.xlu0 %5650
  %5652 = vrot.lane.b32.xlu0 %v4525, 32
  %v5653 = vpop.permute.xlu0 %5652
  %5654 = vrot.lane.b32.xlu0 %v4528, 32
  %v5655 = vpop.permute.xlu0 %5654
  %5656 = vrot.lane.b32.xlu0 %v4531, 32
  %v5657 = vpop.permute.xlu0 %5656
  %5658 = vrot.lane.b32.xlu0 %v4534, 32
  %v5659 = vpop.permute.xlu0 %5658
  %5660 = vrot.lane.b32.xlu0 %v4537, 32
  %v5661 = vpop.permute.xlu0 %5660
  %v5677 = vmul.f32 %v5633, %v4907
  %v5678 = vmul.f32 %v5635, %v4912
  %v5679 = vmul.f32 %v5637, %v4917
  %v5680 = vmul.f32 %v5639, %v4922
  %v5681 = vmul.f32 %v5641, %v4927
  %v5682 = vmul.f32 %v5643, %v4932
  %v5683 = vmul.f32 %v5645, %v4937
  %v5684 = vmul.f32 %v5647, %v4902
  %v5685 = vmul.f32 %v5649, %v4907
  %v5686 = vmul.f32 %v5651, %v4912
  %v5687 = vmul.f32 %v5653, %v4917
  %v5688 = vmul.f32 %v5655, %v4922
  %v5689 = vmul.f32 %v5657, %v4927
  %v5690 = vmul.f32 %v5659, %v4932
  %v5691 = vmul.f32 %v5661, %v4937
  %5707 = vrot.lane.b32.xlu0 %v4939, 64
  %v5708 = vpop.permute.xlu0 %5707
  %5709 = vrot.lane.b32.xlu0 %v5677, 64
  %v5710 = vpop.permute.xlu0 %5709
  %5711 = vrot.lane.b32.xlu0 %v5678, 64
  %v5712 = vpop.permute.xlu0 %5711
  %5713 = vrot.lane.b32.xlu0 %v5679, 64
  %v5714 = vpop.permute.xlu0 %5713
  %5715 = vrot.lane.b32.xlu0 %v5680, 64
  %v5716 = vpop.permute.xlu0 %5715
  %5717 = vrot.lane.b32.xlu0 %v5681, 64
  %v5718 = vpop.permute.xlu0 %5717
  %5719 = vrot.lane.b32.xlu0 %v5682, 64
  %v5720 = vpop.permute.xlu0 %5719
  %5721 = vrot.lane.b32.xlu0 %v5683, 64
  %v5722 = vpop.permute.xlu0 %5721
  %5723 = vrot.lane.b32.xlu0 %v5684, 64
  %v5724 = vpop.permute.xlu0 %5723
  %5725 = vrot.lane.b32.xlu0 %v5685, 64
  %v5726 = vpop.permute.xlu0 %5725
  %5727 = vrot.lane.b32.xlu0 %v5686, 64
  %v5728 = vpop.permute.xlu0 %5727
  %5729 = vrot.lane.b32.xlu0 %v5687, 64
  %v5730 = vpop.permute.xlu0 %5729
  %5731 = vrot.lane.b32.xlu0 %v5688, 64
  %v5732 = vpop.permute.xlu0 %5731
  %5733 = vrot.lane.b32.xlu0 %v5689, 64
  %v5734 = vpop.permute.xlu0 %5733
  %5735 = vrot.lane.b32.xlu0 %v5690, 64
  %v5736 = vpop.permute.xlu0 %5735
  %5737 = vrot.lane.b32.xlu0 %v5691, 64
  %v5738 = vpop.permute.xlu0 %5737
  %v5755 = vadd.f32 %v5616, %v5708
  %v5756 = vadd.f32 %v5617, %v5710
  %v5757 = vadd.f32 %v5618, %v5712
  %v5758 = vadd.f32 %v5619, %v5714
  %v5759 = vadd.f32 %v5620, %v5716
  %v5760 = vadd.f32 %v5621, %v5718
  %v5761 = vadd.f32 %v5622, %v5720
  %v5762 = vadd.f32 %v5623, %v5722
  %v5763 = vadd.f32 %v5624, %v5724
  %v5764 = vadd.f32 %v5625, %v5726
  %v5765 = vadd.f32 %v5626, %v5728
  %v5766 = vadd.f32 %v5627, %v5730
  %v5767 = vadd.f32 %v5628, %v5732
  %v5768 = vadd.f32 %v5629, %v5734
  %v5769 = vadd.f32 %v5630, %v5736
  %v5770 = vadd.f32 %v5631, %v5738
  %5772 = vset.pattern.permute.xlu0 0
  %5773 = vperm.xlu0 %5772, %v4590
  %v5774 = vpop.permute.xlu0 %5773
  %5777 = vset.pattern.permute.xlu0 0
  %5778 = vperm.xlu0 %5777, %v4591
  %v5779 = vpop.permute.xlu0 %5778
  %5782 = vset.pattern.permute.xlu0 0
  %5783 = vperm.xlu0 %5782, %v4592
  %v5784 = vpop.permute.xlu0 %5783
  %5787 = vset.pattern.permute.xlu0 0
  %5788 = vperm.xlu0 %5787, %v4593
  %v5789 = vpop.permute.xlu0 %5788
  %5792 = vset.pattern.permute.xlu0 0
  %5793 = vperm.xlu0 %5792, %v4594
  %v5794 = vpop.permute.xlu0 %5793
  %5797 = vset.pattern.permute.xlu0 0
  %5798 = vperm.xlu0 %5797, %v4595
  %v5799 = vpop.permute.xlu0 %5798
  %5802 = vset.pattern.permute.xlu0 0
  %5803 = vperm.xlu0 %5802, %v4596
  %v5804 = vpop.permute.xlu0 %5803
  %5807 = vset.pattern.permute.xlu0 0
  %5808 = vperm.xlu0 %5807, %v4597
  %v5809 = vpop.permute.xlu0 %5808
  %v5811 = vmul.f32 %v4433, %v5774
  %v5812 = vmul.f32 %v4436, %v5779
  %v5813 = vmul.f32 %v4439, %v5784
  %v5814 = vmul.f32 %v4442, %v5789
  %v5815 = vmul.f32 %v4445, %v5794
  %v5816 = vmul.f32 %v4448, %v5799
  %v5817 = vmul.f32 %v4451, %v5804
  %v5818 = vmul.f32 %v4454, %v5809
  %v5819 = vmul.f32 %v4457, %v5774
  %v5820 = vmul.f32 %v4460, %v5779
  %v5821 = vmul.f32 %v4463, %v5784
  %v5822 = vmul.f32 %v4466, %v5789
  %v5823 = vmul.f32 %v4469, %v5794
  %v5824 = vmul.f32 %v4472, %v5799
  %v5825 = vmul.f32 %v4475, %v5804
  %v5826 = vmul.f32 %v5809, 0.0
  %v5843 = vsel %vm4622, %v4652, 0.0
  %5845 = vset.pattern.permute.xlu0 0
  %5846 = vperm.xlu0 %5845, %v4582
  %v5847 = vpop.permute.xlu0 %5846
  %5850 = vset.pattern.permute.xlu0 0
  %5851 = vperm.xlu0 %5850, %v4583
  %v5852 = vpop.permute.xlu0 %5851
  %5855 = vset.pattern.permute.xlu0 0
  %5856 = vperm.xlu0 %5855, %v4584
  %v5857 = vpop.permute.xlu0 %5856
  %5860 = vset.pattern.permute.xlu0 0
  %5861 = vperm.xlu0 %5860, %v4585
  %v5862 = vpop.permute.xlu0 %5861
  %5865 = vset.pattern.permute.xlu0 0
  %5866 = vperm.xlu0 %5865, %v4586
  %v5867 = vpop.permute.xlu0 %5866
  %5870 = vset.pattern.permute.xlu0 0
  %5871 = vperm.xlu0 %5870, %v4587
  %v5872 = vpop.permute.xlu0 %5871
  %5875 = vset.pattern.permute.xlu0 0
  %5876 = vperm.xlu0 %5875, %v4588
  %v5877 = vpop.permute.xlu0 %5876
  %5880 = vset.pattern.permute.xlu0 0
  %5881 = vperm.xlu0 %5880, %v4589
  %v5882 = vpop.permute.xlu0 %5881
  %v5884 = vmul.f32 %v4625, %v5847
  %v5885 = vmul.f32 %v4627, %v5852
  %v5886 = vmul.f32 %v4629, %v5857
  %v5887 = vmul.f32 %v4631, %v5862
  %v5888 = vmul.f32 %v4633, %v5867
  %v5889 = vmul.f32 %v4635, %v5872
  %v5890 = vmul.f32 %v4637, %v5877
  %v5891 = vmul.f32 %v4639, %v5882
  %v5892 = vmul.f32 %v4641, %v5847
  %v5893 = vmul.f32 %v4643, %v5852
  %v5894 = vmul.f32 %v4645, %v5857
  %v5895 = vmul.f32 %v4647, %v5862
  %v5896 = vmul.f32 %v4649, %v5867
  %v5897 = vmul.f32 %v4651, %v5872
  %v5898 = vmul.f32 %v4653, %v5877
  %v5899 = vmul.f32 %v5843, %v5882
  %5916 = vrot.lane.b32.xlu0 %v5884, 96
  %v5917 = vpop.permute.xlu0 %5916
  %5918 = vrot.lane.b32.xlu0 %v5885, 96
  %v5919 = vpop.permute.xlu0 %5918
  %5920 = vrot.lane.b32.xlu0 %v5886, 96
  %v5921 = vpop.permute.xlu0 %5920
  %5922 = vrot.lane.b32.xlu0 %v5887, 96
  %v5923 = vpop.permute.xlu0 %5922
  %5924 = vrot.lane.b32.xlu0 %v5888, 96
  %v5925 = vpop.permute.xlu0 %5924
  %5926 = vrot.lane.b32.xlu0 %v5889, 96
  %v5927 = vpop.permute.xlu0 %5926
  %5928 = vrot.lane.b32.xlu0 %v5890, 96
  %v5929 = vpop.permute.xlu0 %5928
  %5930 = vrot.lane.b32.xlu0 %v5891, 96
  %v5931 = vpop.permute.xlu0 %5930
  %5932 = vrot.lane.b32.xlu0 %v5892, 96
  %v5933 = vpop.permute.xlu0 %5932
  %5934 = vrot.lane.b32.xlu0 %v5893, 96
  %v5935 = vpop.permute.xlu0 %5934
  %5936 = vrot.lane.b32.xlu0 %v5894, 96
  %v5937 = vpop.permute.xlu0 %5936
  %5938 = vrot.lane.b32.xlu0 %v5895, 96
  %v5939 = vpop.permute.xlu0 %5938
  %5940 = vrot.lane.b32.xlu0 %v5896, 96
  %v5941 = vpop.permute.xlu0 %5940
  %5942 = vrot.lane.b32.xlu0 %v5897, 96
  %v5943 = vpop.permute.xlu0 %5942
  %5944 = vrot.lane.b32.xlu0 %v5898, 96
  %v5945 = vpop.permute.xlu0 %5944
  %5946 = vrot.lane.b32.xlu0 %v5899, 96
  %v5947 = vpop.permute.xlu0 %5946
  %v5964 = vadd.f32 %v5811, %v5917
  %v5965 = vadd.f32 %v5812, %v5919
  %v5966 = vadd.f32 %v5813, %v5921
  %v5967 = vadd.f32 %v5814, %v5923
  %v5968 = vadd.f32 %v5815, %v5925
  %v5969 = vadd.f32 %v5816, %v5927
  %v5970 = vadd.f32 %v5817, %v5929
  %v5971 = vadd.f32 %v5818, %v5931
  %v5972 = vadd.f32 %v5819, %v5933
  %v5973 = vadd.f32 %v5820, %v5935
  %v5974 = vadd.f32 %v5821, %v5937
  %v5975 = vadd.f32 %v5822, %v5939
  %v5976 = vadd.f32 %v5823, %v5941
  %v5977 = vadd.f32 %v5824, %v5943
  %v5978 = vadd.f32 %v5825, %v5945
  %v5979 = vadd.f32 %v5826, %v5947
  %v5980 = vadd.f32 %v5964, %v4495
  %v5981 = vadd.f32 %v5965, %v4498
  %v5982 = vadd.f32 %v5966, %v4501
  %v5983 = vadd.f32 %v5967, %v4504
  %v5984 = vadd.f32 %v5968, %v4507
  %v5985 = vadd.f32 %v5969, %v4510
  %v5986 = vadd.f32 %v5970, %v4513
  %v5987 = vadd.f32 %v5971, %v4516
  %v5988 = vadd.f32 %v5972, %v4519
  %v5989 = vadd.f32 %v5973, %v4522
  %v5990 = vadd.f32 %v5974, %v4525
  %v5991 = vadd.f32 %v5975, %v4528
  %v5992 = vadd.f32 %v5976, %v4531
  %v5993 = vadd.f32 %v5977, %v4534
  %v5994 = vadd.f32 %v5978, %v4537
  %v5995 = vadd.f32 %v5979, %v4540
  %v5996 = vrot.slane %v4540, 7
  %v5997 = vsel %vm4622, %v5062, %v5996
  %5998 = vrot.lane.b32.xlu0 %v5035, 80
  %v5999 = vpop.permute.xlu0 %5998
  %6000 = vrot.lane.b32.xlu0 %v5037, 80
  %v6001 = vpop.permute.xlu0 %6000
  %6002 = vrot.lane.b32.xlu0 %v5039, 80
  %v6003 = vpop.permute.xlu0 %6002
  %6004 = vrot.lane.b32.xlu0 %v5041, 80
  %v6005 = vpop.permute.xlu0 %6004
  %6006 = vrot.lane.b32.xlu0 %v5043, 80
  %v6007 = vpop.permute.xlu0 %6006
  %6008 = vrot.lane.b32.xlu0 %v5045, 80
  %v6009 = vpop.permute.xlu0 %6008
  %6010 = vrot.lane.b32.xlu0 %v5047, 80
  %v6011 = vpop.permute.xlu0 %6010
  %6012 = vrot.lane.b32.xlu0 %v5049, 80
  %v6013 = vpop.permute.xlu0 %6012
  %6014 = vrot.lane.b32.xlu0 %v5051, 80
  %v6015 = vpop.permute.xlu0 %6014
  %6016 = vrot.lane.b32.xlu0 %v5053, 80
  %v6017 = vpop.permute.xlu0 %6016
  %6018 = vrot.lane.b32.xlu0 %v5055, 80
  %v6019 = vpop.permute.xlu0 %6018
  %6020 = vrot.lane.b32.xlu0 %v5057, 80
  %v6021 = vpop.permute.xlu0 %6020
  %6022 = vrot.lane.b32.xlu0 %v5059, 80
  %v6023 = vpop.permute.xlu0 %6022
  %6024 = vrot.lane.b32.xlu0 %v5061, 80
  %v6025 = vpop.permute.xlu0 %6024
  %6026 = vrot.lane.b32.xlu0 %v5063, 80
  %v6027 = vpop.permute.xlu0 %6026
  %6028 = vrot.lane.b32.xlu0 %v5997, 80
  %v6029 = vpop.permute.xlu0 %6028
  %v6046 = vsel %vm4622, 0.0, %v5999
  %v6047 = vmul.f32 %v6046, %v4706
  %v6048 = vmul.f32 %v6001, %v4711
  %v6049 = vmul.f32 %v6003, %v4716
  %v6050 = vmul.f32 %v6005, %v4721
  %v6051 = vmul.f32 %v6007, %v4726
  %v6052 = vmul.f32 %v6009, %v4731
  %v6053 = vmul.f32 %v6011, %v4736
  %v6054 = vmul.f32 %v6013, %v4741
  %v6055 = vmul.f32 %v6015, %v4706
  %v6056 = vmul.f32 %v6017, %v4711
  %v6057 = vmul.f32 %v6019, %v4716
  %v6058 = vmul.f32 %v6021, %v4721
  %v6059 = vmul.f32 %v6023, %v4726
  %v6060 = vmul.f32 %v6025, %v4731
  %v6061 = vmul.f32 %v6027, %v4736
  %v6062 = vmul.f32 %v6029, %v4741
  %6079 = vrot.lane.b32.xlu0 %v6047, 16
  %v6080 = vpop.permute.xlu0 %6079
  %6081 = vrot.lane.b32.xlu0 %v6048, 16
  %v6082 = vpop.permute.xlu0 %6081
  %6083 = vrot.lane.b32.xlu0 %v6049, 16
  %v6084 = vpop.permute.xlu0 %6083
  %6085 = vrot.lane.b32.xlu0 %v6050, 16
  %v6086 = vpop.permute.xlu0 %6085
  %6087 = vrot.lane.b32.xlu0 %v6051, 16
  %v6088 = vpop.permute.xlu0 %6087
  %6089 = vrot.lane.b32.xlu0 %v6052, 16
  %v6090 = vpop.permute.xlu0 %6089
  %6091 = vrot.lane.b32.xlu0 %v6053, 16
  %v6092 = vpop.permute.xlu0 %6091
  %6093 = vrot.lane.b32.xlu0 %v6054, 16
  %v6094 = vpop.permute.xlu0 %6093
  %6095 = vrot.lane.b32.xlu0 %v6055, 16
  %v6096 = vpop.permute.xlu0 %6095
  %6097 = vrot.lane.b32.xlu0 %v6056, 16
  %v6098 = vpop.permute.xlu0 %6097
  %6099 = vrot.lane.b32.xlu0 %v6057, 16
  %v6100 = vpop.permute.xlu0 %6099
  %6101 = vrot.lane.b32.xlu0 %v6058, 16
  %v6102 = vpop.permute.xlu0 %6101
  %6103 = vrot.lane.b32.xlu0 %v6059, 16
  %v6104 = vpop.permute.xlu0 %6103
  %6105 = vrot.lane.b32.xlu0 %v6060, 16
  %v6106 = vpop.permute.xlu0 %6105
  %6107 = vrot.lane.b32.xlu0 %v6061, 16
  %v6108 = vpop.permute.xlu0 %6107
  %6109 = vrot.lane.b32.xlu0 %v6062, 16
  %v6110 = vpop.permute.xlu0 %6109
  %v6127 = vadd.f32 %v5980, %v6080
  %v6128 = vadd.f32 %v5981, %v6082
  %v6129 = vadd.f32 %v5982, %v6084
  %v6130 = vadd.f32 %v5983, %v6086
  %v6131 = vadd.f32 %v5984, %v6088
  %v6132 = vadd.f32 %v5985, %v6090
  %v6133 = vadd.f32 %v5986, %v6092
  %v6134 = vadd.f32 %v5987, %v6094
  %v6135 = vadd.f32 %v5988, %v6096
  %v6136 = vadd.f32 %v5989, %v6098
  %v6137 = vadd.f32 %v5990, %v6100
  %v6138 = vadd.f32 %v5991, %v6102
  %v6139 = vadd.f32 %v5992, %v6104
  %v6140 = vadd.f32 %v5993, %v6106
  %v6141 = vadd.f32 %v5994, %v6108
  %v6142 = vadd.f32 %v5995, %v6110
  %6144 = vset.pattern.permute.xlu0 0
  %6145 = vperm.xlu0 %6144, %v4598
  %v6146 = vpop.permute.xlu0 %6145
  %6149 = vset.pattern.permute.xlu0 0
  %6150 = vperm.xlu0 %6149, %v4599
  %v6151 = vpop.permute.xlu0 %6150
  %6154 = vset.pattern.permute.xlu0 0
  %6155 = vperm.xlu0 %6154, %v4600
  %v6156 = vpop.permute.xlu0 %6155
  %6159 = vset.pattern.permute.xlu0 0
  %6160 = vperm.xlu0 %6159, %v4601
  %v6161 = vpop.permute.xlu0 %6160
  %6164 = vset.pattern.permute.xlu0 0
  %6165 = vperm.xlu0 %6164, %v4602
  %v6166 = vpop.permute.xlu0 %6165
  %6169 = vset.pattern.permute.xlu0 0
  %6170 = vperm.xlu0 %6169, %v4603
  %v6171 = vpop.permute.xlu0 %6170
  %6174 = vset.pattern.permute.xlu0 0
  %6175 = vperm.xlu0 %6174, %v4604
  %v6176 = vpop.permute.xlu0 %6175
  %6179 = vset.pattern.permute.xlu0 0
  %6180 = vperm.xlu0 %6179, %v4605
  %v6181 = vpop.permute.xlu0 %6180
  %v6183 = vmul.f32 %v5251, %v6146
  %v6184 = vmul.f32 %v5253, %v6151
  %v6185 = vmul.f32 %v5255, %v6156
  %v6186 = vmul.f32 %v5257, %v6161
  %v6187 = vmul.f32 %v5259, %v6166
  %v6188 = vmul.f32 %v5261, %v6171
  %v6189 = vmul.f32 %v5263, %v6176
  %v6190 = vmul.f32 %v5265, %v6181
  %v6191 = vmul.f32 %v5267, %v6146
  %v6192 = vmul.f32 %v5269, %v6151
  %v6193 = vmul.f32 %v5271, %v6156
  %v6194 = vmul.f32 %v5273, %v6161
  %v6195 = vmul.f32 %v5275, %v6166
  %v6196 = vmul.f32 %v5277, %v6171
  %v6197 = vmul.f32 %v5294, %v6176
  %v6198 = vmul.f32 %v6181, 0.0
  %6215 = vrot.lane.b32.xlu0 %v5811, 96
  %v6216 = vpop.permute.xlu0 %6215
  %6217 = vrot.lane.b32.xlu0 %v5812, 96
  %v6218 = vpop.permute.xlu0 %6217
  %6219 = vrot.lane.b32.xlu0 %v5813, 96
  %v6220 = vpop.permute.xlu0 %6219
  %6221 = vrot.lane.b32.xlu0 %v5814, 96
  %v6222 = vpop.permute.xlu0 %6221
  %6223 = vrot.lane.b32.xlu0 %v5815, 96
  %v6224 = vpop.permute.xlu0 %6223
  %6225 = vrot.lane.b32.xlu0 %v5816, 96
  %v6226 = vpop.permute.xlu0 %6225
  %6227 = vrot.lane.b32.xlu0 %v5817, 96
  %v6228 = vpop.permute.xlu0 %6227
  %6229 = vrot.lane.b32.xlu0 %v5818, 96
  %v6230 = vpop.permute.xlu0 %6229
  %6231 = vrot.lane.b32.xlu0 %v5819, 96
  %v6232 = vpop.permute.xlu0 %6231
  %6233 = vrot.lane.b32.xlu0 %v5820, 96
  %v6234 = vpop.permute.xlu0 %6233
  %6235 = vrot.lane.b32.xlu0 %v5821, 96
  %v6236 = vpop.permute.xlu0 %6235
  %6237 = vrot.lane.b32.xlu0 %v5822, 96
  %v6238 = vpop.permute.xlu0 %6237
  %6239 = vrot.lane.b32.xlu0 %v5823, 96
  %v6240 = vpop.permute.xlu0 %6239
  %6241 = vrot.lane.b32.xlu0 %v5824, 96
  %v6242 = vpop.permute.xlu0 %6241
  %6243 = vrot.lane.b32.xlu0 %v5825, 96
  %v6244 = vpop.permute.xlu0 %6243
  %6245 = vrot.lane.b32.xlu0 %v5826, 96
  %v6246 = vpop.permute.xlu0 %6245
  %v6263 = vadd.f32 %v6183, %v6216
  %v6264 = vadd.f32 %v6184, %v6218
  %v6265 = vadd.f32 %v6185, %v6220
  %v6266 = vadd.f32 %v6186, %v6222
  %v6267 = vadd.f32 %v6187, %v6224
  %v6268 = vadd.f32 %v6188, %v6226
  %v6269 = vadd.f32 %v6189, %v6228
  %v6270 = vadd.f32 %v6190, %v6230
  %v6271 = vadd.f32 %v6191, %v6232
  %v6272 = vadd.f32 %v6192, %v6234
  %v6273 = vadd.f32 %v6193, %v6236
  %v6274 = vadd.f32 %v6194, %v6238
  %v6275 = vadd.f32 %v6195, %v6240
  %v6276 = vadd.f32 %v6196, %v6242
  %v6277 = vadd.f32 %v6197, %v6244
  %v6278 = vadd.f32 %v6198, %v6246
  %v6295 = vsel %vm5246, %v5445, 0.0
  %v6296 = vmul.f32 %v5418, %v5298
  %v6297 = vmul.f32 %v5420, %v5303
  %v6298 = vmul.f32 %v5422, %v5308
  %v6299 = vmul.f32 %v5424, %v5313
  %v6300 = vmul.f32 %v5426, %v5318
  %v6301 = vmul.f32 %v5428, %v5323
  %v6302 = vmul.f32 %v5430, %v5328
  %v6303 = vmul.f32 %v5432, %v5333
  %v6304 = vmul.f32 %v5434, %v5298
  %v6305 = vmul.f32 %v5436, %v5303
  %v6306 = vmul.f32 %v5438, %v5308
  %v6307 = vmul.f32 %v5440, %v5313
  %v6308 = vmul.f32 %v5442, %v5318
  %v6309 = vmul.f32 %v5444, %v5323
  %v6310 = vmul.f32 %v5446, %v5328
  %v6311 = vmul.f32 %v6295, %v5333
  %v6312 = vadd.f32 %v6263, %v6296
  %v6313 = vadd.f32 %v6264, %v6297
  %v6314 = vadd.f32 %v6265, %v6298
  %v6315 = vadd.f32 %v6266, %v6299
  %v6316 = vadd.f32 %v6267, %v6300
  %v6317 = vadd.f32 %v6268, %v6301
  %v6318 = vadd.f32 %v6269, %v6302
  %v6319 = vadd.f32 %v6270, %v6303
  %v6320 = vadd.f32 %v6271, %v6304
  %v6321 = vadd.f32 %v6272, %v6305
  %v6322 = vadd.f32 %v6273, %v6306
  %v6323 = vadd.f32 %v6274, %v6307
  %v6324 = vadd.f32 %v6275, %v6308
  %v6325 = vadd.f32 %v6276, %v6309
  %v6326 = vadd.f32 %v6277, %v6310
  %v6327 = vadd.f32 %v6278, %v6311
  %6328 = vrot.lane.b32.xlu0 %v4495, 96
  %v6329 = vpop.permute.xlu0 %6328
  %6330 = vrot.lane.b32.xlu0 %v4498, 96
  %v6331 = vpop.permute.xlu0 %6330
  %6332 = vrot.lane.b32.xlu0 %v4501, 96
  %v6333 = vpop.permute.xlu0 %6332
  %6334 = vrot.lane.b32.xlu0 %v4504, 96
  %v6335 = vpop.permute.xlu0 %6334
  %6336 = vrot.lane.b32.xlu0 %v4507, 96
  %v6337 = vpop.permute.xlu0 %6336
  %6338 = vrot.lane.b32.xlu0 %v4510, 96
  %v6339 = vpop.permute.xlu0 %6338
  %6340 = vrot.lane.b32.xlu0 %v4513, 96
  %v6341 = vpop.permute.xlu0 %6340
  %6342 = vrot.lane.b32.xlu0 %v4516, 96
  %v6343 = vpop.permute.xlu0 %6342
  %6344 = vrot.lane.b32.xlu0 %v4519, 96
  %v6345 = vpop.permute.xlu0 %6344
  %6346 = vrot.lane.b32.xlu0 %v4522, 96
  %v6347 = vpop.permute.xlu0 %6346
  %6348 = vrot.lane.b32.xlu0 %v4525, 96
  %v6349 = vpop.permute.xlu0 %6348
  %6350 = vrot.lane.b32.xlu0 %v4528, 96
  %v6351 = vpop.permute.xlu0 %6350
  %6352 = vrot.lane.b32.xlu0 %v4531, 96
  %v6353 = vpop.permute.xlu0 %6352
  %6354 = vrot.lane.b32.xlu0 %v4534, 96
  %v6355 = vpop.permute.xlu0 %6354
  %6356 = vrot.lane.b32.xlu0 %v4537, 96
  %v6357 = vpop.permute.xlu0 %6356
  %6358 = vrot.lane.b32.xlu0 %v4540, 96
  %v6359 = vpop.permute.xlu0 %6358
  %v6376 = vadd.f32 %v6312, %v6329
  %v6377 = vadd.f32 %v6313, %v6331
  %v6378 = vadd.f32 %v6314, %v6333
  %v6379 = vadd.f32 %v6315, %v6335
  %v6380 = vadd.f32 %v6316, %v6337
  %v6381 = vadd.f32 %v6317, %v6339
  %v6382 = vadd.f32 %v6318, %v6341
  %v6383 = vadd.f32 %v6319, %v6343
  %v6384 = vadd.f32 %v6320, %v6345
  %v6385 = vadd.f32 %v6321, %v6347
  %v6386 = vadd.f32 %v6322, %v6349
  %v6387 = vadd.f32 %v6323, %v6351
  %v6388 = vadd.f32 %v6324, %v6353
  %v6389 = vadd.f32 %v6325, %v6355
  %v6390 = vadd.f32 %v6326, %v6357
  %v6391 = vadd.f32 %v6327, %v6359
  %6408 = vrot.lane.b32.xlu0 %v5755, 16
  %v6409 = vpop.permute.xlu0 %6408
  %6410 = vrot.lane.b32.xlu0 %v5756, 16
  %v6411 = vpop.permute.xlu0 %6410
  %6412 = vrot.lane.b32.xlu0 %v5757, 16
  %v6413 = vpop.permute.xlu0 %6412
  %6414 = vrot.lane.b32.xlu0 %v5758, 16
  %v6415 = vpop.permute.xlu0 %6414
  %6416 = vrot.lane.b32.xlu0 %v5759, 16
  %v6417 = vpop.permute.xlu0 %6416
  %6418 = vrot.lane.b32.xlu0 %v5760, 16
  %v6419 = vpop.permute.xlu0 %6418
  %6420 = vrot.lane.b32.xlu0 %v5761, 16
  %v6421 = vpop.permute.xlu0 %6420
  %6422 = vrot.lane.b32.xlu0 %v5762, 16
  %v6423 = vpop.permute.xlu0 %6422
  %6424 = vrot.lane.b32.xlu0 %v5763, 16
  %v6425 = vpop.permute.xlu0 %6424
  %6426 = vrot.lane.b32.xlu0 %v5764, 16
  %v6427 = vpop.permute.xlu0 %6426
  %6428 = vrot.lane.b32.xlu0 %v5765, 16
  %v6429 = vpop.permute.xlu0 %6428
  %6430 = vrot.lane.b32.xlu0 %v5766, 16
  %v6431 = vpop.permute.xlu0 %6430
  %6432 = vrot.lane.b32.xlu0 %v5767, 16
  %v6433 = vpop.permute.xlu0 %6432
  %6434 = vrot.lane.b32.xlu0 %v5768, 16
  %v6435 = vpop.permute.xlu0 %6434
  %6436 = vrot.lane.b32.xlu0 %v5769, 16
  %v6437 = vpop.permute.xlu0 %6436
  %6438 = vrot.lane.b32.xlu0 %v5770, 16
  %v6439 = vpop.permute.xlu0 %6438
  %6472 = vrot.lane.b32.xlu0 %v6127, 64
  %v6473 = vpop.permute.xlu0 %6472
  %6474 = vrot.lane.b32.xlu0 %v6128, 64
  %v6475 = vpop.permute.xlu0 %6474
  %6476 = vrot.lane.b32.xlu0 %v6129, 64
  %v6477 = vpop.permute.xlu0 %6476
  %6478 = vrot.lane.b32.xlu0 %v6130, 64
  %v6479 = vpop.permute.xlu0 %6478
  %6480 = vrot.lane.b32.xlu0 %v6131, 64
  %v6481 = vpop.permute.xlu0 %6480
  %6482 = vrot.lane.b32.xlu0 %v6132, 64
  %v6483 = vpop.permute.xlu0 %6482
  %6484 = vrot.lane.b32.xlu0 %v6133, 64
  %v6485 = vpop.permute.xlu0 %6484
  %6486 = vrot.lane.b32.xlu0 %v6134, 64
  %v6487 = vpop.permute.xlu0 %6486
  %6488 = vrot.lane.b32.xlu0 %v6135, 64
  %v6489 = vpop.permute.xlu0 %6488
  %6490 = vrot.lane.b32.xlu0 %v6136, 64
  %v6491 = vpop.permute.xlu0 %6490
  %6492 = vrot.lane.b32.xlu0 %v6137, 64
  %v6493 = vpop.permute.xlu0 %6492
  %6494 = vrot.lane.b32.xlu0 %v6138, 64
  %v6495 = vpop.permute.xlu0 %6494
  %6496 = vrot.lane.b32.xlu0 %v6139, 64
  %v6497 = vpop.permute.xlu0 %6496
  %6498 = vrot.lane.b32.xlu0 %v6140, 64
  %v6499 = vpop.permute.xlu0 %6498
  %6500 = vrot.lane.b32.xlu0 %v6141, 64
  %v6501 = vpop.permute.xlu0 %6500
  %6502 = vrot.lane.b32.xlu0 %v6142, 64
  %v6503 = vpop.permute.xlu0 %6502
  %6536 = vrot.lane.b32.xlu0 %v6376, 80
  %v6537 = vpop.permute.xlu0 %6536
  %6538 = vrot.lane.b32.xlu0 %v6377, 80
  %v6539 = vpop.permute.xlu0 %6538
  %6540 = vrot.lane.b32.xlu0 %v6378, 80
  %v6541 = vpop.permute.xlu0 %6540
  %6542 = vrot.lane.b32.xlu0 %v6379, 80
  %v6543 = vpop.permute.xlu0 %6542
  %6544 = vrot.lane.b32.xlu0 %v6380, 80
  %v6545 = vpop.permute.xlu0 %6544
  %6546 = vrot.lane.b32.xlu0 %v6381, 80
  %v6547 = vpop.permute.xlu0 %6546
  %6548 = vrot.lane.b32.xlu0 %v6382, 80
  %v6549 = vpop.permute.xlu0 %6548
  %6550 = vrot.lane.b32.xlu0 %v6383, 80
  %v6551 = vpop.permute.xlu0 %6550
  %6552 = vrot.lane.b32.xlu0 %v6384, 80
  %v6553 = vpop.permute.xlu0 %6552
  %6554 = vrot.lane.b32.xlu0 %v6385, 80
  %v6555 = vpop.permute.xlu0 %6554
  %6556 = vrot.lane.b32.xlu0 %v6386, 80
  %v6557 = vpop.permute.xlu0 %6556
  %6558 = vrot.lane.b32.xlu0 %v6387, 80
  %v6559 = vpop.permute.xlu0 %6558
  %6560 = vrot.lane.b32.xlu0 %v6388, 80
  %v6561 = vpop.permute.xlu0 %6560
  %6562 = vrot.lane.b32.xlu0 %v6389, 80
  %v6563 = vpop.permute.xlu0 %6562
  %6564 = vrot.lane.b32.xlu0 %v6390, 80
  %v6565 = vpop.permute.xlu0 %6564
  %6566 = vrot.lane.b32.xlu0 %v6391, 80
  %v6567 = vpop.permute.xlu0 %6566
  %v6584 = vld [vmem:[%s12] sm:$0x1]
  %v6586 = vperm.slane %v6584, 0
  %6587 = vrot.lane.b32.xlu0 %v6586, 80
  %v6588 = vpop.permute.xlu0 %6587
  %v6590 = vadd.f32 %v5230, %v6588
  %v6591 = vadd.f32 %v5231, %v6588
  %v6592 = vadd.f32 %v5232, %v6588
  %v6593 = vadd.f32 %v5233, %v6588
  %v6594 = vadd.f32 %v5234, %v6588
  %v6595 = vadd.f32 %v5235, %v6588
  %v6596 = vadd.f32 %v5236, %v6588
  %v6597 = vadd.f32 %v5237, %v6588
  %v6598 = vadd.f32 %v5238, %v6588
  %v6599 = vadd.f32 %v5239, %v6588
  %v6600 = vadd.f32 %v5240, %v6588
  %v6601 = vadd.f32 %v5241, %v6588
  %v6602 = vadd.f32 %v5242, %v6588
  %v6603 = vadd.f32 %v5243, %v6588
  %v6604 = vadd.f32 %v5244, %v6588
  %v6605 = vadd.f32 %v5245, %v6588
  %v6606 = vadd.f32 %v6409, %v6588
  %v6607 = vadd.f32 %v6411, %v6588
  %v6608 = vadd.f32 %v6413, %v6588
  %v6609 = vadd.f32 %v6415, %v6588
  %v6610 = vadd.f32 %v6417, %v6588
  %v6611 = vadd.f32 %v6419, %v6588
  %v6612 = vadd.f32 %v6421, %v6588
  %v6613 = vadd.f32 %v6423, %v6588
  %v6614 = vadd.f32 %v6425, %v6588
  %v6615 = vadd.f32 %v6427, %v6588
  %v6616 = vadd.f32 %v6429, %v6588
  %v6617 = vadd.f32 %v6431, %v6588
  %v6618 = vadd.f32 %v6433, %v6588
  %v6619 = vadd.f32 %v6435, %v6588
  %v6620 = vadd.f32 %v6437, %v6588
  %v6621 = vadd.f32 %v6439, %v6588
  %v6622 = vadd.f32 %v6473, %v6588
  %v6623 = vadd.f32 %v6475, %v6588
  %v6624 = vadd.f32 %v6477, %v6588
  %v6625 = vadd.f32 %v6479, %v6588
  %v6626 = vadd.f32 %v6481, %v6588
  %v6627 = vadd.f32 %v6483, %v6588
  %v6628 = vadd.f32 %v6485, %v6588
  %v6629 = vadd.f32 %v6487, %v6588
  %v6630 = vadd.f32 %v6489, %v6588
  %v6631 = vadd.f32 %v6491, %v6588
  %v6632 = vadd.f32 %v6493, %v6588
  %v6633 = vadd.f32 %v6495, %v6588
  %v6634 = vadd.f32 %v6497, %v6588
  %v6635 = vadd.f32 %v6499, %v6588
  %v6636 = vadd.f32 %v6501, %v6588
  %v6637 = vadd.f32 %v6503, %v6588
  %v6638 = vadd.f32 %v6537, %v6588
  %v6639 = vadd.f32 %v6539, %v6588
  %v6640 = vadd.f32 %v6541, %v6588
  %v6641 = vadd.f32 %v6543, %v6588
  %v6642 = vadd.f32 %v6545, %v6588
  %v6643 = vadd.f32 %v6547, %v6588
  %v6644 = vadd.f32 %v6549, %v6588
  %v6645 = vadd.f32 %v6551, %v6588
  %v6646 = vadd.f32 %v6553, %v6588
  %v6647 = vadd.f32 %v6555, %v6588
  %v6648 = vadd.f32 %v6557, %v6588
  %v6649 = vadd.f32 %v6559, %v6588
  %v6650 = vadd.f32 %v6561, %v6588
  %v6651 = vadd.f32 %v6563, %v6588
  %v6652 = vadd.f32 %v6565, %v6588
  %v6653 = vadd.f32 %v6567, %v6588
  %vm6654 = vcmask 786048
  %v6655 = vsel %vm6654, %v6590, 0.0
  %v6656 = vsel %vm6654, %v6591, 0.0
  %v6657 = vadd.f32 %v6655, %v6656
  %v6658 = vsel %vm6654, %v6592, 0.0
  %v6659 = vadd.f32 %v6657, %v6658
  %v6660 = vsel %vm6654, %v6593, 0.0
  %v6661 = vadd.f32 %v6659, %v6660
  %v6662 = vsel %vm6654, %v6594, 0.0
  %v6663 = vadd.f32 %v6661, %v6662
  %v6664 = vsel %vm6654, %v6595, 0.0
  %v6665 = vadd.f32 %v6663, %v6664
  %v6666 = vsel %vm6654, %v6596, 0.0
  %v6667 = vadd.f32 %v6665, %v6666
  %v6668 = vsel %vm6654, %v6597, 0.0
  %v6669 = vadd.f32 %v6667, %v6668
  %v6670 = vsel %vm6654, %v6598, 0.0
  %v6671 = vadd.f32 %v6669, %v6670
  %v6672 = vsel %vm6654, %v6599, 0.0
  %v6673 = vadd.f32 %v6671, %v6672
  %v6674 = vsel %vm6654, %v6600, 0.0
  %v6675 = vadd.f32 %v6673, %v6674
  %v6676 = vsel %vm6654, %v6601, 0.0
  %v6677 = vadd.f32 %v6675, %v6676
  %v6678 = vsel %vm6654, %v6602, 0.0
  %v6679 = vadd.f32 %v6677, %v6678
  %v6680 = vsel %vm6654, %v6603, 0.0
  %v6681 = vadd.f32 %v6679, %v6680
  %v6682 = vsel %vm6654, %v6604, 0.0
  %v6683 = vadd.f32 %v6681, %v6682
  %v6684 = vsel %vm6654, %v6605, 0.0
  %v6685 = vadd.f32 %v6683, %v6684
  %v6686 = vsel %vm6654, %v6606, 0.0
  %v6687 = vadd.f32 %v6685, %v6686
  %v6688 = vsel %vm6654, %v6607, 0.0
  %v6689 = vadd.f32 %v6687, %v6688
  %v6690 = vsel %vm6654, %v6608, 0.0
  %v6691 = vadd.f32 %v6689, %v6690
  %v6692 = vsel %vm6654, %v6609, 0.0
  %v6693 = vadd.f32 %v6691, %v6692
  %v6694 = vsel %vm6654, %v6610, 0.0
  %v6695 = vadd.f32 %v6693, %v6694
  %v6696 = vsel %vm6654, %v6611, 0.0
  %v6697 = vadd.f32 %v6695, %v6696
  %v6698 = vsel %vm6654, %v6612, 0.0
  %v6699 = vadd.f32 %v6697, %v6698
  %v6700 = vsel %vm6654, %v6613, 0.0
  %v6701 = vadd.f32 %v6699, %v6700
  %v6702 = vsel %vm6654, %v6614, 0.0
  %v6703 = vadd.f32 %v6701, %v6702
  %v6704 = vsel %vm6654, %v6615, 0.0
  %v6705 = vadd.f32 %v6703, %v6704
  %v6706 = vsel %vm6654, %v6616, 0.0
  %v6707 = vadd.f32 %v6705, %v6706
  %v6708 = vsel %vm6654, %v6617, 0.0
  %v6709 = vadd.f32 %v6707, %v6708
  %v6710 = vsel %vm6654, %v6618, 0.0
  %v6711 = vadd.f32 %v6709, %v6710
  %v6712 = vsel %vm6654, %v6619, 0.0
  %v6713 = vadd.f32 %v6711, %v6712
  %v6714 = vsel %vm6654, %v6620, 0.0
  %v6715 = vadd.f32 %v6713, %v6714
  %v6716 = vsel %vm6654, %v6621, 0.0
  %v6717 = vadd.f32 %v6715, %v6716
  %v6718 = vsel %vm6654, %v6622, 0.0
  %v6719 = vadd.f32 %v6717, %v6718
  %v6720 = vsel %vm6654, %v6623, 0.0
  %v6721 = vadd.f32 %v6719, %v6720
  %v6722 = vsel %vm6654, %v6624, 0.0
  %v6723 = vadd.f32 %v6721, %v6722
  %v6724 = vsel %vm6654, %v6625, 0.0
  %v6725 = vadd.f32 %v6723, %v6724
  %v6726 = vsel %vm6654, %v6626, 0.0
  %v6727 = vadd.f32 %v6725, %v6726
  %v6728 = vsel %vm6654, %v6627, 0.0
  %v6729 = vadd.f32 %v6727, %v6728
  %v6730 = vsel %vm6654, %v6628, 0.0
  %v6731 = vadd.f32 %v6729, %v6730
  %v6732 = vsel %vm6654, %v6629, 0.0
  %v6733 = vadd.f32 %v6731, %v6732
  %v6734 = vsel %vm6654, %v6630, 0.0
  %v6735 = vadd.f32 %v6733, %v6734
  %v6736 = vsel %vm6654, %v6631, 0.0
  %v6737 = vadd.f32 %v6735, %v6736
  %v6738 = vsel %vm6654, %v6632, 0.0
  %v6739 = vadd.f32 %v6737, %v6738
  %v6740 = vsel %vm6654, %v6633, 0.0
  %v6741 = vadd.f32 %v6739, %v6740
  %v6742 = vsel %vm6654, %v6634, 0.0
  %v6743 = vadd.f32 %v6741, %v6742
  %v6744 = vsel %vm6654, %v6635, 0.0
  %v6745 = vadd.f32 %v6743, %v6744
  %v6746 = vsel %vm6654, %v6636, 0.0
  %v6747 = vadd.f32 %v6745, %v6746
  %v6748 = vsel %vm6654, %v6637, 0.0
  %v6749 = vadd.f32 %v6747, %v6748
  %v6750 = vsel %vm6654, %v6638, 0.0
  %v6751 = vadd.f32 %v6749, %v6750
  %v6752 = vsel %vm6654, %v6639, 0.0
  %v6753 = vadd.f32 %v6751, %v6752
  %v6754 = vsel %vm6654, %v6640, 0.0
  %v6755 = vadd.f32 %v6753, %v6754
  %v6756 = vsel %vm6654, %v6641, 0.0
  %v6757 = vadd.f32 %v6755, %v6756
  %v6758 = vsel %vm6654, %v6642, 0.0
  %v6759 = vadd.f32 %v6757, %v6758
  %v6760 = vsel %vm6654, %v6643, 0.0
  %v6761 = vadd.f32 %v6759, %v6760
  %v6762 = vsel %vm6654, %v6644, 0.0
  %v6763 = vadd.f32 %v6761, %v6762
  %v6764 = vsel %vm6654, %v6645, 0.0
  %v6765 = vadd.f32 %v6763, %v6764
  %v6766 = vsel %vm6654, %v6646, 0.0
  %v6767 = vadd.f32 %v6765, %v6766
  %v6768 = vsel %vm6654, %v6647, 0.0
  %v6769 = vadd.f32 %v6767, %v6768
  %v6770 = vsel %vm6654, %v6648, 0.0
  %v6771 = vadd.f32 %v6769, %v6770
  %v6772 = vsel %vm6654, %v6649, 0.0
  %v6773 = vadd.f32 %v6771, %v6772
  %v6774 = vsel %vm6654, %v6650, 0.0
  %v6775 = vadd.f32 %v6773, %v6774
  %v6776 = vsel %vm6654, %v6651, 0.0
  %v6777 = vadd.f32 %v6775, %v6776
  %v6778 = vsel %vm6654, %v6652, 0.0
  %v6779 = vadd.f32 %v6777, %v6778
  %v6780 = vsel %vm6654, %v6653, 0.0
  %v6781 = vadd.f32 %v6779, %v6780
  %v6782 = vrot.slane %v6781, 4
  %v6783 = vadd.f32 %v6781, %v6782
  %v6784 = vrot.slane %v6783, 2
  %v6785 = vadd.f32 %v6783, %v6784
  %v6786 = vrot.slane %v6785, 1
  %v6787 = vadd.f32 %v6785, %v6786
  %v6788 = vrcp.pop 512.0
  %v6789 = vmul.f32 512.0, %v6788
  %v6790 = vsub.f32 1.0, %v6789
  %v6791 = vmul.f32 %v6788, %v6790
  %v6792 = vadd.f32 %v6788, %v6791
  %vm6793 = vweird.f32 %v6788
  %v6794 = vsel %vm6793, %v6788, %v6792
  %v6795 = vmul.f32 %v6787, %v6794
  %v6796 = vsub.f32 %v6590, %v6795
  %v6797 = vsub.f32 %v6591, %v6795
  %v6798 = vsub.f32 %v6592, %v6795
  %v6799 = vsub.f32 %v6593, %v6795
  %v6800 = vsub.f32 %v6594, %v6795
  %v6801 = vsub.f32 %v6595, %v6795
  %v6802 = vsub.f32 %v6596, %v6795
  %v6803 = vsub.f32 %v6597, %v6795
  %v6804 = vsub.f32 %v6598, %v6795
  %v6805 = vsub.f32 %v6599, %v6795
  %v6806 = vsub.f32 %v6600, %v6795
  %v6807 = vsub.f32 %v6601, %v6795
  %v6808 = vsub.f32 %v6602, %v6795
  %v6809 = vsub.f32 %v6603, %v6795
  %v6810 = vsub.f32 %v6604, %v6795
  %v6811 = vsub.f32 %v6605, %v6795
  %v6812 = vsub.f32 %v6606, %v6795
  %v6813 = vsub.f32 %v6607, %v6795
  %v6814 = vsub.f32 %v6608, %v6795
  %v6815 = vsub.f32 %v6609, %v6795
  %v6816 = vsub.f32 %v6610, %v6795
  %v6817 = vsub.f32 %v6611, %v6795
  %v6818 = vsub.f32 %v6612, %v6795
  %v6819 = vsub.f32 %v6613, %v6795
  %v6820 = vsub.f32 %v6614, %v6795
  %v6821 = vsub.f32 %v6615, %v6795
  %v6822 = vsub.f32 %v6616, %v6795
  %v6823 = vsub.f32 %v6617, %v6795
  %v6824 = vsub.f32 %v6618, %v6795
  %v6825 = vsub.f32 %v6619, %v6795
  %v6826 = vsub.f32 %v6620, %v6795
  %v6827 = vsub.f32 %v6621, %v6795
  %v6828 = vsub.f32 %v6622, %v6795
  %v6829 = vsub.f32 %v6623, %v6795
  %v6830 = vsub.f32 %v6624, %v6795
  %v6831 = vsub.f32 %v6625, %v6795
  %v6832 = vsub.f32 %v6626, %v6795
  %v6833 = vsub.f32 %v6627, %v6795
  %v6834 = vsub.f32 %v6628, %v6795
  %v6835 = vsub.f32 %v6629, %v6795
  %v6836 = vsub.f32 %v6630, %v6795
  %v6837 = vsub.f32 %v6631, %v6795
  %v6838 = vsub.f32 %v6632, %v6795
  %v6839 = vsub.f32 %v6633, %v6795
  %v6840 = vsub.f32 %v6634, %v6795
  %v6841 = vsub.f32 %v6635, %v6795
  %v6842 = vsub.f32 %v6636, %v6795
  %v6843 = vsub.f32 %v6637, %v6795
  %v6844 = vsub.f32 %v6638, %v6795
  %v6845 = vsub.f32 %v6639, %v6795
  %v6846 = vsub.f32 %v6640, %v6795
  %v6847 = vsub.f32 %v6641, %v6795
  %v6848 = vsub.f32 %v6642, %v6795
  %v6849 = vsub.f32 %v6643, %v6795
  %v6850 = vsub.f32 %v6644, %v6795
  %v6851 = vsub.f32 %v6645, %v6795
  %v6852 = vsub.f32 %v6646, %v6795
  %v6853 = vsub.f32 %v6647, %v6795
  %v6854 = vsub.f32 %v6648, %v6795
  %v6855 = vsub.f32 %v6649, %v6795
  %v6856 = vsub.f32 %v6650, %v6795
  %v6857 = vsub.f32 %v6651, %v6795
  %v6858 = vsub.f32 %v6652, %v6795
  %v6859 = vsub.f32 %v6653, %v6795
  %v6860 = vmul.f32 %v6796, %v6796
  %v6861 = vmul.f32 %v6797, %v6797
  %v6862 = vmul.f32 %v6798, %v6798
  %v6863 = vmul.f32 %v6799, %v6799
  %v6864 = vmul.f32 %v6800, %v6800
  %v6865 = vmul.f32 %v6801, %v6801
  %v6866 = vmul.f32 %v6802, %v6802
  %v6867 = vmul.f32 %v6803, %v6803
  %v6868 = vmul.f32 %v6804, %v6804
  %v6869 = vmul.f32 %v6805, %v6805
  %v6870 = vmul.f32 %v6806, %v6806
  %v6871 = vmul.f32 %v6807, %v6807
  %v6872 = vmul.f32 %v6808, %v6808
  %v6873 = vmul.f32 %v6809, %v6809
  %v6874 = vmul.f32 %v6810, %v6810
  %v6875 = vmul.f32 %v6811, %v6811
  %v6876 = vmul.f32 %v6812, %v6812
  %v6877 = vmul.f32 %v6813, %v6813
  %v6878 = vmul.f32 %v6814, %v6814
  %v6879 = vmul.f32 %v6815, %v6815
  %v6880 = vmul.f32 %v6816, %v6816
  %v6881 = vmul.f32 %v6817, %v6817
  %v6882 = vmul.f32 %v6818, %v6818
  %v6883 = vmul.f32 %v6819, %v6819
  %v6884 = vmul.f32 %v6820, %v6820
  %v6885 = vmul.f32 %v6821, %v6821
  %v6886 = vmul.f32 %v6822, %v6822
  %v6887 = vmul.f32 %v6823, %v6823
  %v6888 = vmul.f32 %v6824, %v6824
  %v6889 = vmul.f32 %v6825, %v6825
  %v6890 = vmul.f32 %v6826, %v6826
  %v6891 = vmul.f32 %v6827, %v6827
  %v6892 = vmul.f32 %v6828, %v6828
  %v6893 = vmul.f32 %v6829, %v6829
  %v6894 = vmul.f32 %v6830, %v6830
  %v6895 = vmul.f32 %v6831, %v6831
  %v6896 = vmul.f32 %v6832, %v6832
  %v6897 = vmul.f32 %v6833, %v6833
  %v6898 = vmul.f32 %v6834, %v6834
  %v6899 = vmul.f32 %v6835, %v6835
  %v6900 = vmul.f32 %v6836, %v6836
  %v6901 = vmul.f32 %v6837, %v6837
  %v6902 = vmul.f32 %v6838, %v6838
  %v6903 = vmul.f32 %v6839, %v6839
  %v6904 = vmul.f32 %v6840, %v6840
  %v6905 = vmul.f32 %v6841, %v6841
  %v6906 = vmul.f32 %v6842, %v6842
  %v6907 = vmul.f32 %v6843, %v6843
  %v6908 = vmul.f32 %v6844, %v6844
  %v6909 = vmul.f32 %v6845, %v6845
  %v6910 = vmul.f32 %v6846, %v6846
  %v6911 = vmul.f32 %v6847, %v6847
  %v6912 = vmul.f32 %v6848, %v6848
  %v6913 = vmul.f32 %v6849, %v6849
  %v6914 = vmul.f32 %v6850, %v6850
  %v6915 = vmul.f32 %v6851, %v6851
  %v6916 = vmul.f32 %v6852, %v6852
  %v6917 = vmul.f32 %v6853, %v6853
  %v6918 = vmul.f32 %v6854, %v6854
  %v6919 = vmul.f32 %v6855, %v6855
  %v6920 = vmul.f32 %v6856, %v6856
  %v6921 = vmul.f32 %v6857, %v6857
  %v6922 = vmul.f32 %v6858, %v6858
  %v6923 = vmul.f32 %v6859, %v6859
  %v6924 = vsel %vm6654, %v6860, 0.0
  %v6925 = vsel %vm6654, %v6861, 0.0
  %v6926 = vadd.f32 %v6924, %v6925
  %v6927 = vsel %vm6654, %v6862, 0.0
  %v6928 = vadd.f32 %v6926, %v6927
  %v6929 = vsel %vm6654, %v6863, 0.0
  %v6930 = vadd.f32 %v6928, %v6929
  %v6931 = vsel %vm6654, %v6864, 0.0
  %v6932 = vadd.f32 %v6930, %v6931
  %v6933 = vsel %vm6654, %v6865, 0.0
  %v6934 = vadd.f32 %v6932, %v6933
  %v6935 = vsel %vm6654, %v6866, 0.0
  %v6936 = vadd.f32 %v6934, %v6935
  %v6937 = vsel %vm6654, %v6867, 0.0
  %v6938 = vadd.f32 %v6936, %v6937
  %v6939 = vsel %vm6654, %v6868, 0.0
  %v6940 = vadd.f32 %v6938, %v6939
  %v6941 = vsel %vm6654, %v6869, 0.0
  %v6942 = vadd.f32 %v6940, %v6941
  %v6943 = vsel %vm6654, %v6870, 0.0
  %v6944 = vadd.f32 %v6942, %v6943
  %v6945 = vsel %vm6654, %v6871, 0.0
  %v6946 = vadd.f32 %v6944, %v6945
  %v6947 = vsel %vm6654, %v6872, 0.0
  %v6948 = vadd.f32 %v6946, %v6947
  %v6949 = vsel %vm6654, %v6873, 0.0
  %v6950 = vadd.f32 %v6948, %v6949
  %v6951 = vsel %vm6654, %v6874, 0.0
  %v6952 = vadd.f32 %v6950, %v6951
  %v6953 = vsel %vm6654, %v6875, 0.0
  %v6954 = vadd.f32 %v6952, %v6953
  %v6955 = vsel %vm6654, %v6876, 0.0
  %v6956 = vadd.f32 %v6954, %v6955
  %v6957 = vsel %vm6654, %v6877, 0.0
  %v6958 = vadd.f32 %v6956, %v6957
  %v6959 = vsel %vm6654, %v6878, 0.0
  %v6960 = vadd.f32 %v6958, %v6959
  %v6961 = vsel %vm6654, %v6879, 0.0
  %v6962 = vadd.f32 %v6960, %v6961
  %v6963 = vsel %vm6654, %v6880, 0.0
  %v6964 = vadd.f32 %v6962, %v6963
  %v6965 = vsel %vm6654, %v6881, 0.0
  %v6966 = vadd.f32 %v6964, %v6965
  %v6967 = vsel %vm6654, %v6882, 0.0
  %v6968 = vadd.f32 %v6966, %v6967
  %v6969 = vsel %vm6654, %v6883, 0.0
  %v6970 = vadd.f32 %v6968, %v6969
  %v6971 = vsel %vm6654, %v6884, 0.0
  %v6972 = vadd.f32 %v6970, %v6971
  %v6973 = vsel %vm6654, %v6885, 0.0
  %v6974 = vadd.f32 %v6972, %v6973
  %v6975 = vsel %vm6654, %v6886, 0.0
  %v6976 = vadd.f32 %v6974, %v6975
  %v6977 = vsel %vm6654, %v6887, 0.0
  %v6978 = vadd.f32 %v6976, %v6977
  %v6979 = vsel %vm6654, %v6888, 0.0
  %v6980 = vadd.f32 %v6978, %v6979
  %v6981 = vsel %vm6654, %v6889, 0.0
  %v6982 = vadd.f32 %v6980, %v6981
  %v6983 = vsel %vm6654, %v6890, 0.0
  %v6984 = vadd.f32 %v6982, %v6983
  %v6985 = vsel %vm6654, %v6891, 0.0
  %v6986 = vadd.f32 %v6984, %v6985
  %v6987 = vsel %vm6654, %v6892, 0.0
  %v6988 = vadd.f32 %v6986, %v6987
  %v6989 = vsel %vm6654, %v6893, 0.0
  %v6990 = vadd.f32 %v6988, %v6989
  %v6991 = vsel %vm6654, %v6894, 0.0
  %v6992 = vadd.f32 %v6990, %v6991
  %v6993 = vsel %vm6654, %v6895, 0.0
  %v6994 = vadd.f32 %v6992, %v6993
  %v6995 = vsel %vm6654, %v6896, 0.0
  %v6996 = vadd.f32 %v6994, %v6995
  %v6997 = vsel %vm6654, %v6897, 0.0
  %v6998 = vadd.f32 %v6996, %v6997
  %v6999 = vsel %vm6654, %v6898, 0.0
  %v7000 = vadd.f32 %v6998, %v6999
  %v7001 = vsel %vm6654, %v6899, 0.0
  %v7002 = vadd.f32 %v7000, %v7001
  %v7003 = vsel %vm6654, %v6900, 0.0
  %v7004 = vadd.f32 %v7002, %v7003
  %v7005 = vsel %vm6654, %v6901, 0.0
  %v7006 = vadd.f32 %v7004, %v7005
  %v7007 = vsel %vm6654, %v6902, 0.0
  %v7008 = vadd.f32 %v7006, %v7007
  %v7009 = vsel %vm6654, %v6903, 0.0
  %v7010 = vadd.f32 %v7008, %v7009
  %v7011 = vsel %vm6654, %v6904, 0.0
  %v7012 = vadd.f32 %v7010, %v7011
  %v7013 = vsel %vm6654, %v6905, 0.0
  %v7014 = vadd.f32 %v7012, %v7013
  %v7015 = vsel %vm6654, %v6906, 0.0
  %v7016 = vadd.f32 %v7014, %v7015
  %v7017 = vsel %vm6654, %v6907, 0.0
  %v7018 = vadd.f32 %v7016, %v7017
  %v7019 = vsel %vm6654, %v6908, 0.0
  %v7020 = vadd.f32 %v7018, %v7019
  %v7021 = vsel %vm6654, %v6909, 0.0
  %v7022 = vadd.f32 %v7020, %v7021
  %v7023 = vsel %vm6654, %v6910, 0.0
  %v7024 = vadd.f32 %v7022, %v7023
  %v7025 = vsel %vm6654, %v6911, 0.0
  %v7026 = vadd.f32 %v7024, %v7025
  %v7027 = vsel %vm6654, %v6912, 0.0
  %v7028 = vadd.f32 %v7026, %v7027
  %v7029 = vsel %vm6654, %v6913, 0.0
  %v7030 = vadd.f32 %v7028, %v7029
  %v7031 = vsel %vm6654, %v6914, 0.0
  %v7032 = vadd.f32 %v7030, %v7031
  %v7033 = vsel %vm6654, %v6915, 0.0
  %v7034 = vadd.f32 %v7032, %v7033
  %v7035 = vsel %vm6654, %v6916, 0.0
  %v7036 = vadd.f32 %v7034, %v7035
  %v7037 = vsel %vm6654, %v6917, 0.0
  %v7038 = vadd.f32 %v7036, %v7037
  %v7039 = vsel %vm6654, %v6918, 0.0
  %v7040 = vadd.f32 %v7038, %v7039
  %v7041 = vsel %vm6654, %v6919, 0.0
  %v7042 = vadd.f32 %v7040, %v7041
  %v7043 = vsel %vm6654, %v6920, 0.0
  %v7044 = vadd.f32 %v7042, %v7043
  %v7045 = vsel %vm6654, %v6921, 0.0
  %v7046 = vadd.f32 %v7044, %v7045
  %v7047 = vsel %vm6654, %v6922, 0.0
  %v7048 = vadd.f32 %v7046, %v7047
  %v7049 = vsel %vm6654, %v6923, 0.0
  %v7050 = vadd.f32 %v7048, %v7049
  %v7051 = vrot.slane %v7050, 4
  %v7052 = vadd.f32 %v7050, %v7051
  %v7053 = vrot.slane %v7052, 2
  %v7054 = vadd.f32 %v7052, %v7053
  %v7055 = vrot.slane %v7054, 1
  %v7056 = vadd.f32 %v7054, %v7055
  %v7057 = vmul.f32 %v7056, %v6794
  %v7058 = vadd.f32 %v7057, 1e-05
  %v7059 = vrsqrt.pop %v7058
  %v7060 = vmul.f32 %v7059, %v7058
  %v7061 = vmul.f32 %v7060, %v7059
  %v7062 = vmul.f32 0.5, %v7061
  %v7063 = vsub.f32 1.5, %v7062
  %v7064 = vmul.f32 %v7059, %v7063
  %vm7065 = vweird.f32 %v7058
  %vm7066 = vweird.f32 %v7059
  %vm7067 = vmor %vm7065, %vm7066
  %v7068 = vsel %vm7067, %v7059, %v7064
  %v7069 = vmul.f32 %v6796, %v7068
  %v7070 = vmul.f32 %v6797, %v7068
  %v7071 = vmul.f32 %v6798, %v7068
  %v7072 = vmul.f32 %v6799, %v7068
  %v7073 = vmul.f32 %v6800, %v7068
  %v7074 = vmul.f32 %v6801, %v7068
  %v7075 = vmul.f32 %v6802, %v7068
  %v7076 = vmul.f32 %v6803, %v7068
  %v7077 = vmul.f32 %v6804, %v7068
  %v7078 = vmul.f32 %v6805, %v7068
  %v7079 = vmul.f32 %v6806, %v7068
  %v7080 = vmul.f32 %v6807, %v7068
  %v7081 = vmul.f32 %v6808, %v7068
  %v7082 = vmul.f32 %v6809, %v7068
  %v7083 = vmul.f32 %v6810, %v7068
  %v7084 = vmul.f32 %v6811, %v7068
  %v7085 = vmul.f32 %v6812, %v7068
  %v7086 = vmul.f32 %v6813, %v7068
  %v7087 = vmul.f32 %v6814, %v7068
  %v7088 = vmul.f32 %v6815, %v7068
  %v7089 = vmul.f32 %v6816, %v7068
  %v7090 = vmul.f32 %v6817, %v7068
  %v7091 = vmul.f32 %v6818, %v7068
  %v7092 = vmul.f32 %v6819, %v7068
  %v7093 = vmul.f32 %v6820, %v7068
  %v7094 = vmul.f32 %v6821, %v7068
  %v7095 = vmul.f32 %v6822, %v7068
  %v7096 = vmul.f32 %v6823, %v7068
  %v7097 = vmul.f32 %v6824, %v7068
  %v7098 = vmul.f32 %v6825, %v7068
  %v7099 = vmul.f32 %v6826, %v7068
  %v7100 = vmul.f32 %v6827, %v7068
  %v7101 = vmul.f32 %v6828, %v7068
  %v7102 = vmul.f32 %v6829, %v7068
  %v7103 = vmul.f32 %v6830, %v7068
  %v7104 = vmul.f32 %v6831, %v7068
  %v7105 = vmul.f32 %v6832, %v7068
  %v7106 = vmul.f32 %v6833, %v7068
  %v7107 = vmul.f32 %v6834, %v7068
  %v7108 = vmul.f32 %v6835, %v7068
  %v7109 = vmul.f32 %v6836, %v7068
  %v7110 = vmul.f32 %v6837, %v7068
  %v7111 = vmul.f32 %v6838, %v7068
  %v7112 = vmul.f32 %v6839, %v7068
  %v7113 = vmul.f32 %v6840, %v7068
  %v7114 = vmul.f32 %v6841, %v7068
  %v7115 = vmul.f32 %v6842, %v7068
  %v7116 = vmul.f32 %v6843, %v7068
  %v7117 = vmul.f32 %v6844, %v7068
  %v7118 = vmul.f32 %v6845, %v7068
  %v7119 = vmul.f32 %v6846, %v7068
  %v7120 = vmul.f32 %v6847, %v7068
  %v7121 = vmul.f32 %v6848, %v7068
  %v7122 = vmul.f32 %v6849, %v7068
  %v7123 = vmul.f32 %v6850, %v7068
  %v7124 = vmul.f32 %v6851, %v7068
  %v7125 = vmul.f32 %v6852, %v7068
  %v7126 = vmul.f32 %v6853, %v7068
  %v7127 = vmul.f32 %v6854, %v7068
  %v7128 = vmul.f32 %v6855, %v7068
  %v7129 = vmul.f32 %v6856, %v7068
  %v7130 = vmul.f32 %v6857, %v7068
  %v7131 = vmul.f32 %v6858, %v7068
  %v7132 = vmul.f32 %v6859, %v7068
  %v7133 = vld [vmem:[%s14] sm:$0x1]
  %v7135 = vperm.slane %v7133, 0
  %7136 = vrot.lane.b32.xlu0 %v7135, 80
  %v7137 = vpop.permute.xlu0 %7136
  %v7139 = vmul.f32 %v7069, %v7137
  %v7140 = vmul.f32 %v7070, %v7137
  %v7141 = vmul.f32 %v7071, %v7137
  %v7142 = vmul.f32 %v7072, %v7137
  %v7143 = vmul.f32 %v7073, %v7137
  %v7144 = vmul.f32 %v7074, %v7137
  %v7145 = vmul.f32 %v7075, %v7137
  %v7146 = vmul.f32 %v7076, %v7137
  %v7147 = vmul.f32 %v7077, %v7137
  %v7148 = vmul.f32 %v7078, %v7137
  %v7149 = vmul.f32 %v7079, %v7137
  %v7150 = vmul.f32 %v7080, %v7137
  %v7151 = vmul.f32 %v7081, %v7137
  %v7152 = vmul.f32 %v7082, %v7137
  %v7153 = vmul.f32 %v7083, %v7137
  %v7154 = vmul.f32 %v7084, %v7137
  %v7155 = vmul.f32 %v7085, %v7137
  %v7156 = vmul.f32 %v7086, %v7137
  %v7157 = vmul.f32 %v7087, %v7137
  %v7158 = vmul.f32 %v7088, %v7137
  %v7159 = vmul.f32 %v7089, %v7137
  %v7160 = vmul.f32 %v7090, %v7137
  %v7161 = vmul.f32 %v7091, %v7137
  %v7162 = vmul.f32 %v7092, %v7137
  %v7163 = vmul.f32 %v7093, %v7137
  %v7164 = vmul.f32 %v7094, %v7137
  %v7165 = vmul.f32 %v7095, %v7137
  %v7166 = vmul.f32 %v7096, %v7137
  %v7167 = vmul.f32 %v7097, %v7137
  %v7168 = vmul.f32 %v7098, %v7137
  %v7169 = vmul.f32 %v7099, %v7137
  %v7170 = vmul.f32 %v7100, %v7137
  %v7171 = vmul.f32 %v7101, %v7137
  %v7172 = vmul.f32 %v7102, %v7137
  %v7173 = vmul.f32 %v7103, %v7137
  %v7174 = vmul.f32 %v7104, %v7137
  %v7175 = vmul.f32 %v7105, %v7137
  %v7176 = vmul.f32 %v7106, %v7137
  %v7177 = vmul.f32 %v7107, %v7137
  %v7178 = vmul.f32 %v7108, %v7137
  %v7179 = vmul.f32 %v7109, %v7137
  %v7180 = vmul.f32 %v7110, %v7137
  %v7181 = vmul.f32 %v7111, %v7137
  %v7182 = vmul.f32 %v7112, %v7137
  %v7183 = vmul.f32 %v7113, %v7137
  %v7184 = vmul.f32 %v7114, %v7137
  %v7185 = vmul.f32 %v7115, %v7137
  %v7186 = vmul.f32 %v7116, %v7137
  %v7187 = vmul.f32 %v7117, %v7137
  %v7188 = vmul.f32 %v7118, %v7137
  %v7189 = vmul.f32 %v7119, %v7137
  %v7190 = vmul.f32 %v7120, %v7137
  %v7191 = vmul.f32 %v7121, %v7137
  %v7192 = vmul.f32 %v7122, %v7137
  %v7193 = vmul.f32 %v7123, %v7137
  %v7194 = vmul.f32 %v7124, %v7137
  %v7195 = vmul.f32 %v7125, %v7137
  %v7196 = vmul.f32 %v7126, %v7137
  %v7197 = vmul.f32 %v7127, %v7137
  %v7198 = vmul.f32 %v7128, %v7137
  %v7199 = vmul.f32 %v7129, %v7137
  %v7200 = vmul.f32 %v7130, %v7137
  %v7201 = vmul.f32 %v7131, %v7137
  %v7202 = vmul.f32 %v7132, %v7137
  %v7203 = vld [vmem:[%s15] sm:$0x1]
  %v7205 = vperm.slane %v7203, 0
  %7206 = vrot.lane.b32.xlu0 %v7205, 80
  %v7207 = vpop.permute.xlu0 %7206
  %v7209 = vadd.f32 %v7139, %v7207
  %v7210 = vadd.f32 %v7140, %v7207
  %v7211 = vadd.f32 %v7141, %v7207
  %v7212 = vadd.f32 %v7142, %v7207
  %v7213 = vadd.f32 %v7143, %v7207
  %v7214 = vadd.f32 %v7144, %v7207
  %v7215 = vadd.f32 %v7145, %v7207
  %v7216 = vadd.f32 %v7146, %v7207
  %v7217 = vadd.f32 %v7147, %v7207
  %v7218 = vadd.f32 %v7148, %v7207
  %v7219 = vadd.f32 %v7149, %v7207
  %v7220 = vadd.f32 %v7150, %v7207
  %v7221 = vadd.f32 %v7151, %v7207
  %v7222 = vadd.f32 %v7152, %v7207
  %v7223 = vadd.f32 %v7153, %v7207
  %v7224 = vadd.f32 %v7154, %v7207
  %v7225 = vadd.f32 %v7155, %v7207
  %v7226 = vadd.f32 %v7156, %v7207
  %v7227 = vadd.f32 %v7157, %v7207
  %v7228 = vadd.f32 %v7158, %v7207
  %v7229 = vadd.f32 %v7159, %v7207
  %v7230 = vadd.f32 %v7160, %v7207
  %v7231 = vadd.f32 %v7161, %v7207
  %v7232 = vadd.f32 %v7162, %v7207
  %v7233 = vadd.f32 %v7163, %v7207
  %v7234 = vadd.f32 %v7164, %v7207
  %v7235 = vadd.f32 %v7165, %v7207
  %v7236 = vadd.f32 %v7166, %v7207
  %v7237 = vadd.f32 %v7167, %v7207
  %v7238 = vadd.f32 %v7168, %v7207
  %v7239 = vadd.f32 %v7169, %v7207
  %v7240 = vadd.f32 %v7170, %v7207
  %v7241 = vadd.f32 %v7171, %v7207
  %v7242 = vadd.f32 %v7172, %v7207
  %v7243 = vadd.f32 %v7173, %v7207
  %v7244 = vadd.f32 %v7174, %v7207
  %v7245 = vadd.f32 %v7175, %v7207
  %v7246 = vadd.f32 %v7176, %v7207
  %v7247 = vadd.f32 %v7177, %v7207
  %v7248 = vadd.f32 %v7178, %v7207
  %v7249 = vadd.f32 %v7179, %v7207
  %v7250 = vadd.f32 %v7180, %v7207
  %v7251 = vadd.f32 %v7181, %v7207
  %v7252 = vadd.f32 %v7182, %v7207
  %v7253 = vadd.f32 %v7183, %v7207
  %v7254 = vadd.f32 %v7184, %v7207
  %v7255 = vadd.f32 %v7185, %v7207
  %v7256 = vadd.f32 %v7186, %v7207
  %v7257 = vadd.f32 %v7187, %v7207
  %v7258 = vadd.f32 %v7188, %v7207
  %v7259 = vadd.f32 %v7189, %v7207
  %v7260 = vadd.f32 %v7190, %v7207
  %v7261 = vadd.f32 %v7191, %v7207
  %v7262 = vadd.f32 %v7192, %v7207
  %v7263 = vadd.f32 %v7193, %v7207
  %v7264 = vadd.f32 %v7194, %v7207
  %v7265 = vadd.f32 %v7195, %v7207
  %v7266 = vadd.f32 %v7196, %v7207
  %v7267 = vadd.f32 %v7197, %v7207
  %v7268 = vadd.f32 %v7198, %v7207
  %v7269 = vadd.f32 %v7199, %v7207
  %v7270 = vadd.f32 %v7200, %v7207
  %v7271 = vadd.f32 %v7201, %v7207
  %v7272 = vadd.f32 %v7202, %v7207
  %v7273 = vmax.f32 %v7209, 0.0
  %v7274 = vmax.f32 %v7210, 0.0
  %v7275 = vmax.f32 %v7211, 0.0
  %v7276 = vmax.f32 %v7212, 0.0
  %v7277 = vmax.f32 %v7213, 0.0
  %v7278 = vmax.f32 %v7214, 0.0
  %v7279 = vmax.f32 %v7215, 0.0
  %v7280 = vmax.f32 %v7216, 0.0
  %v7281 = vmax.f32 %v7217, 0.0
  %v7282 = vmax.f32 %v7218, 0.0
  %v7283 = vmax.f32 %v7219, 0.0
  %v7284 = vmax.f32 %v7220, 0.0
  %v7285 = vmax.f32 %v7221, 0.0
  %v7286 = vmax.f32 %v7222, 0.0
  %v7287 = vmax.f32 %v7223, 0.0
  %v7288 = vmax.f32 %v7224, 0.0
  %v7289 = vmax.f32 %v7225, 0.0
  %v7290 = vmax.f32 %v7226, 0.0
  %v7291 = vmax.f32 %v7227, 0.0
  %v7292 = vmax.f32 %v7228, 0.0
  %v7293 = vmax.f32 %v7229, 0.0
  %v7294 = vmax.f32 %v7230, 0.0
  %v7295 = vmax.f32 %v7231, 0.0
  %v7296 = vmax.f32 %v7232, 0.0
  %v7297 = vmax.f32 %v7233, 0.0
  %v7298 = vmax.f32 %v7234, 0.0
  %v7299 = vmax.f32 %v7235, 0.0
  %v7300 = vmax.f32 %v7236, 0.0
  %v7301 = vmax.f32 %v7237, 0.0
  %v7302 = vmax.f32 %v7238, 0.0
  %v7303 = vmax.f32 %v7239, 0.0
  %v7304 = vmax.f32 %v7240, 0.0
  %v7305 = vmax.f32 %v7241, 0.0
  %v7306 = vmax.f32 %v7242, 0.0
  %v7307 = vmax.f32 %v7243, 0.0
  %v7308 = vmax.f32 %v7244, 0.0
  %v7309 = vmax.f32 %v7245, 0.0
  %v7310 = vmax.f32 %v7246, 0.0
  %v7311 = vmax.f32 %v7247, 0.0
  %v7312 = vmax.f32 %v7248, 0.0
  %v7313 = vmax.f32 %v7249, 0.0
  %v7314 = vmax.f32 %v7250, 0.0
  %v7315 = vmax.f32 %v7251, 0.0
  %v7316 = vmax.f32 %v7252, 0.0
  %v7317 = vmax.f32 %v7253, 0.0
  %v7318 = vmax.f32 %v7254, 0.0
  %v7319 = vmax.f32 %v7255, 0.0
  %v7320 = vmax.f32 %v7256, 0.0
  %v7321 = vmax.f32 %v7257, 0.0
  %v7322 = vmax.f32 %v7258, 0.0
  %v7323 = vmax.f32 %v7259, 0.0
  %v7324 = vmax.f32 %v7260, 0.0
  %v7325 = vmax.f32 %v7261, 0.0
  %v7326 = vmax.f32 %v7262, 0.0
  %v7327 = vmax.f32 %v7263, 0.0
  %v7328 = vmax.f32 %v7264, 0.0
  %v7329 = vmax.f32 %v7265, 0.0
  %v7330 = vmax.f32 %v7266, 0.0
  %v7331 = vmax.f32 %v7267, 0.0
  %v7332 = vmax.f32 %v7268, 0.0
  %v7333 = vmax.f32 %v7269, 0.0
  %v7334 = vmax.f32 %v7270, 0.0
  %v7335 = vmax.f32 %v7271, 0.0
  %v7336 = vmax.f32 %v7272, 0.0
  %7401 = vrot.lane.b32.xlu0 %v7273, 48
  %v7402 = vpop.permute.xlu0 %7401
  %7403 = vrot.lane.b32.xlu0 %v7274, 48
  %v7404 = vpop.permute.xlu0 %7403
  %7405 = vrot.lane.b32.xlu0 %v7275, 48
  %v7406 = vpop.permute.xlu0 %7405
  %7407 = vrot.lane.b32.xlu0 %v7276, 48
  %v7408 = vpop.permute.xlu0 %7407
  %7409 = vrot.lane.b32.xlu0 %v7277, 48
  %v7410 = vpop.permute.xlu0 %7409
  %7411 = vrot.lane.b32.xlu0 %v7278, 48
  %v7412 = vpop.permute.xlu0 %7411
  %7413 = vrot.lane.b32.xlu0 %v7279, 48
  %v7414 = vpop.permute.xlu0 %7413
  %7415 = vrot.lane.b32.xlu0 %v7280, 48
  %v7416 = vpop.permute.xlu0 %7415
  %7417 = vrot.lane.b32.xlu0 %v7281, 48
  %v7418 = vpop.permute.xlu0 %7417
  %7419 = vrot.lane.b32.xlu0 %v7282, 48
  %v7420 = vpop.permute.xlu0 %7419
  %7421 = vrot.lane.b32.xlu0 %v7283, 48
  %v7422 = vpop.permute.xlu0 %7421
  %7423 = vrot.lane.b32.xlu0 %v7284, 48
  %v7424 = vpop.permute.xlu0 %7423
  %7425 = vrot.lane.b32.xlu0 %v7285, 48
  %v7426 = vpop.permute.xlu0 %7425
  %7427 = vrot.lane.b32.xlu0 %v7286, 48
  %v7428 = vpop.permute.xlu0 %7427
  %7429 = vrot.lane.b32.xlu0 %v7287, 48
  %v7430 = vpop.permute.xlu0 %7429
  %7431 = vrot.lane.b32.xlu0 %v7288, 48
  %v7432 = vpop.permute.xlu0 %7431
  %7433 = vrot.lane.b32.xlu0 %v7289, 48
  %v7434 = vpop.permute.xlu0 %7433
  %7435 = vrot.lane.b32.xlu0 %v7290, 48
  %v7436 = vpop.permute.xlu0 %7435
  %7437 = vrot.lane.b32.xlu0 %v7291, 48
  %v7438 = vpop.permute.xlu0 %7437
  %7439 = vrot.lane.b32.xlu0 %v7292, 48
  %v7440 = vpop.permute.xlu0 %7439
  %7441 = vrot.lane.b32.xlu0 %v7293, 48
  %v7442 = vpop.permute.xlu0 %7441
  %7443 = vrot.lane.b32.xlu0 %v7294, 48
  %v7444 = vpop.permute.xlu0 %7443
  %7445 = vrot.lane.b32.xlu0 %v7295, 48
  %v7446 = vpop.permute.xlu0 %7445
  %7447 = vrot.lane.b32.xlu0 %v7296, 48
  %v7448 = vpop.permute.xlu0 %7447
  %7449 = vrot.lane.b32.xlu0 %v7297, 48
  %v7450 = vpop.permute.xlu0 %7449
  %7451 = vrot.lane.b32.xlu0 %v7298, 48
  %v7452 = vpop.permute.xlu0 %7451
  %7453 = vrot.lane.b32.xlu0 %v7299, 48
  %v7454 = vpop.permute.xlu0 %7453
  %7455 = vrot.lane.b32.xlu0 %v7300, 48
  %v7456 = vpop.permute.xlu0 %7455
  %7457 = vrot.lane.b32.xlu0 %v7301, 48
  %v7458 = vpop.permute.xlu0 %7457
  %7459 = vrot.lane.b32.xlu0 %v7302, 48
  %v7460 = vpop.permute.xlu0 %7459
  %7461 = vrot.lane.b32.xlu0 %v7303, 48
  %v7462 = vpop.permute.xlu0 %7461
  %7463 = vrot.lane.b32.xlu0 %v7304, 48
  %v7464 = vpop.permute.xlu0 %7463
  %7465 = vrot.lane.b32.xlu0 %v7305, 48
  %v7466 = vpop.permute.xlu0 %7465
  %7467 = vrot.lane.b32.xlu0 %v7306, 48
  %v7468 = vpop.permute.xlu0 %7467
  %7469 = vrot.lane.b32.xlu0 %v7307, 48
  %v7470 = vpop.permute.xlu0 %7469
  %7471 = vrot.lane.b32.xlu0 %v7308, 48
  %v7472 = vpop.permute.xlu0 %7471
  %7473 = vrot.lane.b32.xlu0 %v7309, 48
  %v7474 = vpop.permute.xlu0 %7473
  %7475 = vrot.lane.b32.xlu0 %v7310, 48
  %v7476 = vpop.permute.xlu0 %7475
  %7477 = vrot.lane.b32.xlu0 %v7311, 48
  %v7478 = vpop.permute.xlu0 %7477
  %7479 = vrot.lane.b32.xlu0 %v7312, 48
  %v7480 = vpop.permute.xlu0 %7479
  %7481 = vrot.lane.b32.xlu0 %v7313, 48
  %v7482 = vpop.permute.xlu0 %7481
  %7483 = vrot.lane.b32.xlu0 %v7314, 48
  %v7484 = vpop.permute.xlu0 %7483
  %7485 = vrot.lane.b32.xlu0 %v7315, 48
  %v7486 = vpop.permute.xlu0 %7485
  %7487 = vrot.lane.b32.xlu0 %v7316, 48
  %v7488 = vpop.permute.xlu0 %7487
  %7489 = vrot.lane.b32.xlu0 %v7317, 48
  %v7490 = vpop.permute.xlu0 %7489
  %7491 = vrot.lane.b32.xlu0 %v7318, 48
  %v7492 = vpop.permute.xlu0 %7491
  %7493 = vrot.lane.b32.xlu0 %v7319, 48
  %v7494 = vpop.permute.xlu0 %7493
  %7495 = vrot.lane.b32.xlu0 %v7320, 48
  %v7496 = vpop.permute.xlu0 %7495
  %7497 = vrot.lane.b32.xlu0 %v7321, 48
  %v7498 = vpop.permute.xlu0 %7497
  %7499 = vrot.lane.b32.xlu0 %v7322, 48
  %v7500 = vpop.permute.xlu0 %7499
  %7501 = vrot.lane.b32.xlu0 %v7323, 48
  %v7502 = vpop.permute.xlu0 %7501
  %7503 = vrot.lane.b32.xlu0 %v7324, 48
  %v7504 = vpop.permute.xlu0 %7503
  %7505 = vrot.lane.b32.xlu0 %v7325, 48
  %v7506 = vpop.permute.xlu0 %7505
  %7507 = vrot.lane.b32.xlu0 %v7326, 48
  %v7508 = vpop.permute.xlu0 %7507
  %7509 = vrot.lane.b32.xlu0 %v7327, 48
  %v7510 = vpop.permute.xlu0 %7509
  %7511 = vrot.lane.b32.xlu0 %v7328, 48
  %v7512 = vpop.permute.xlu0 %7511
  %7513 = vrot.lane.b32.xlu0 %v7329, 48
  %v7514 = vpop.permute.xlu0 %7513
  %7515 = vrot.lane.b32.xlu0 %v7330, 48
  %v7516 = vpop.permute.xlu0 %7515
  %7517 = vrot.lane.b32.xlu0 %v7331, 48
  %v7518 = vpop.permute.xlu0 %7517
  %7519 = vrot.lane.b32.xlu0 %v7332, 48
  %v7520 = vpop.permute.xlu0 %7519
  %7521 = vrot.lane.b32.xlu0 %v7333, 48
  %v7522 = vpop.permute.xlu0 %7521
  %7523 = vrot.lane.b32.xlu0 %v7334, 48
  %v7524 = vpop.permute.xlu0 %7523
  %7525 = vrot.lane.b32.xlu0 %v7335, 48
  %v7526 = vpop.permute.xlu0 %7525
  %7527 = vrot.lane.b32.xlu0 %v7336, 48
  %v7528 = vpop.permute.xlu0 %7527
  %vm7593 = vcmask 130048
  %7594 = vst.msk [vmem:[%s16] sm:$0xff] %vm7593, %v7402
  %7595 = vst.msk [vmem:[%s16 + $0x8] sm:$0xff] %vm7593, %v7404
  %7596 = vst.msk [vmem:[%s16 + $0x10] sm:$0xff] %vm7593, %v7406
  %7597 = vst.msk [vmem:[%s16 + $0x18] sm:$0xff] %vm7593, %v7408
  %7598 = vst.msk [vmem:[%s16 + $0x20] sm:$0xff] %vm7593, %v7410
  %7599 = vst.msk [vmem:[%s16 + $0x28] sm:$0xff] %vm7593, %v7412
  %7600 = vst.msk [vmem:[%s16 + $0x30] sm:$0xff] %vm7593, %v7414
  %7601 = vst.msk [vmem:[%s16 + $0x38] sm:$0xff] %vm7593, %v7416
  %7602 = vst.msk [vmem:[%s16 + $0x40] sm:$0xff] %vm7593, %v7418
  %7603 = vst.msk [vmem:[%s16 + $0x48] sm:$0xff] %vm7593, %v7420
  %7604 = vst.msk [vmem:[%s16 + $0x50] sm:$0xff] %vm7593, %v7422
  %7605 = vst.msk [vmem:[%s16 + $0x58] sm:$0xff] %vm7593, %v7424
  %7606 = vst.msk [vmem:[%s16 + $0x60] sm:$0xff] %vm7593, %v7426
  %7607 = vst.msk [vmem:[%s16 + $0x68] sm:$0xff] %vm7593, %v7428
  %7608 = vst.msk [vmem:[%s16 + $0x70] sm:$0xff] %vm7593, %v7430
  %7609 = vst.msk [vmem:[%s16 + $0x78] sm:$0xff] %vm7593, %v7432
  %7610 = vst.msk [vmem:[%s16 + $0x80] sm:$0xff] %vm7593, %v7434
  %7611 = vst.msk [vmem:[%s16 + $0x88] sm:$0xff] %vm7593, %v7436
  %7612 = vst.msk [vmem:[%s16 + $0x90] sm:$0xff] %vm7593, %v7438
  %7613 = vst.msk [vmem:[%s16 + $0x98] sm:$0xff] %vm7593, %v7440
  %7614 = vst.msk [vmem:[%s16 + $0xa0] sm:$0xff] %vm7593, %v7442
  %7615 = vst.msk [vmem:[%s16 + $0xa8] sm:$0xff] %vm7593, %v7444
  %7616 = vst.msk [vmem:[%s16 + $0xb0] sm:$0xff] %vm7593, %v7446
  %7617 = vst.msk [vmem:[%s16 + $0xb8] sm:$0xff] %vm7593, %v7448
  %7618 = vst.msk [vmem:[%s16 + $0xc0] sm:$0xff] %vm7593, %v7450
  %7619 = vst.msk [vmem:[%s16 + $0xc8] sm:$0xff] %vm7593, %v7452
  %7620 = vst.msk [vmem:[%s16 + $0xd0] sm:$0xff] %vm7593, %v7454
  %7621 = vst.msk [vmem:[%s16 + $0xd8] sm:$0xff] %vm7593, %v7456
  %7622 = vst.msk [vmem:[%s16 + $0xe0] sm:$0xff] %vm7593, %v7458
  %7623 = vst.msk [vmem:[%s16 + $0xe8] sm:$0xff] %vm7593, %v7460
  %7624 = vst.msk [vmem:[%s16 + $0xf0] sm:$0xff] %vm7593, %v7462
  %7625 = vst.msk [vmem:[%s16 + $0xf8] sm:$0xff] %vm7593, %v7464
  %7626 = vst.msk [vmem:[%s16 + $0x100] sm:$0xff] %vm7593, %v7466
  %7627 = vst.msk [vmem:[%s16 + $0x108] sm:$0xff] %vm7593, %v7468
  %7628 = vst.msk [vmem:[%s16 + $0x110] sm:$0xff] %vm7593, %v7470
  %7629 = vst.msk [vmem:[%s16 + $0x118] sm:$0xff] %vm7593, %v7472
  %7630 = vst.msk [vmem:[%s16 + $0x120] sm:$0xff] %vm7593, %v7474
  %7631 = vst.msk [vmem:[%s16 + $0x128] sm:$0xff] %vm7593, %v7476
  %7632 = vst.msk [vmem:[%s16 + $0x130] sm:$0xff] %vm7593, %v7478
  %7633 = vst.msk [vmem:[%s16 + $0x138] sm:$0xff] %vm7593, %v7480
  %7634 = vst.msk [vmem:[%s16 + $0x140] sm:$0xff] %vm7593, %v7482
  %7635 = vst.msk [vmem:[%s16 + $0x148] sm:$0xff] %vm7593, %v7484
  %7636 = vst.msk [vmem:[%s16 + $0x150] sm:$0xff] %vm7593, %v7486
  %7637 = vst.msk [vmem:[%s16 + $0x158] sm:$0xff] %vm7593, %v7488
  %7638 = vst.msk [vmem:[%s16 + $0x160] sm:$0xff] %vm7593, %v7490
  %7639 = vst.msk [vmem:[%s16 + $0x168] sm:$0xff] %vm7593, %v7492
  %7640 = vst.msk [vmem:[%s16 + $0x170] sm:$0xff] %vm7593, %v7494
  %7641 = vst.msk [vmem:[%s16 + $0x178] sm:$0xff] %vm7593, %v7496
  %7642 = vst.msk [vmem:[%s16 + $0x180] sm:$0xff] %vm7593, %v7498
  %7643 = vst.msk [vmem:[%s16 + $0x188] sm:$0xff] %vm7593, %v7500
  %7644 = vst.msk [vmem:[%s16 + $0x190] sm:$0xff] %vm7593, %v7502
  %7645 = vst.msk [vmem:[%s16 + $0x198] sm:$0xff] %vm7593, %v7504
  %7646 = vst.msk [vmem:[%s16 + $0x1a0] sm:$0xff] %vm7593, %v7506
  %7647 = vst.msk [vmem:[%s16 + $0x1a8] sm:$0xff] %vm7593, %v7508
  %7648 = vst.msk [vmem:[%s16 + $0x1b0] sm:$0xff] %vm7593, %v7510
  %7649 = vst.msk [vmem:[%s16 + $0x1b8] sm:$0xff] %vm7593, %v7512
  %7650 = vst.msk [vmem:[%s16 + $0x1c0] sm:$0xff] %vm7593, %v7514
  %7651 = vst.msk [vmem:[%s16 + $0x1c8] sm:$0xff] %vm7593, %v7516
  %7652 = vst.msk [vmem:[%s16 + $0x1d0] sm:$0xff] %vm7593, %v7518
  %7653 = vst.msk [vmem:[%s16 + $0x1d8] sm:$0xff] %vm7593, %v7520
  %7654 = vst.msk [vmem:[%s16 + $0x1e0] sm:$0xff] %vm7593, %v7522
  %7655 = vst.msk [vmem:[%s16 + $0x1e8] sm:$0xff] %vm7593, %v7524
  %7656 = vst.msk [vmem:[%s16 + $0x1f0] sm:$0xff] %vm7593, %v7526
  %7657 = vst.msk [vmem:[%s16 + $0x1f8] sm:$0xff] %vm7593, %v7528
  // Predicated region
  $region66: #{decoder_block_forward.1} parent=0 // pred_check
    _
  $region67: #{decoder_block_forward.1} parent=0 // pred_check_branch
    %7659 = sbr.rel (0) target = $region69
  $region68: #{decoder_block_forward.1} parent=0 // pred_region
    _
  $region69: #{decoder_block_forward.1} parent=0 // pred_fallthru
    _
  // Predicated region
  $region70: #{decoder_block_forward.1} parent=0 // pred_check
    _
  $region71: #{decoder_block_forward.1} parent=0 // pred_check_branch
    %7661 = sbr.rel (0) target = $region73
  $region72: #{decoder_block_forward.1} parent=0 // pred_region
    _
  $region73: #{decoder_block_forward.1} parent=0 // pred_fallthru
    _
  // Predicated region
  $region74: #{decoder_block_forward.1} parent=0 // pred_check
    _
  $region75: #{decoder_block_forward.1} parent=0 // pred_check_branch
    %7663 = sbr.rel (0) target = $region77
  $region76: #{decoder_block_forward.1} parent=0 // pred_region
    _
  $region77: #{decoder_block_forward.1} parent=0 // pred_fallthru
    _
  // Predicated region
  $region78: #{decoder_block_forward.1} parent=0 // pred_check
    _
  $region79: #{decoder_block_forward.1} parent=0 // pred_check_branch
    %7665 = sbr.rel (0) target = $region81
  $region80: #{decoder_block_forward.1} parent=0 // pred_region
    _
  $region81: #{decoder_block_forward.1} parent=0 // pred_fallthru
    _

</llo_original>
